<compile_context>
chip_gen: v5e
topology: v5e:2x2
jax: 0.10.0
libtpu: 0.0.40
codegen_flags: <defaults>
</compile_context>

<pallas_src>
import jax
import jax.numpy as jnp
import numpy as np
from jax.experimental import pallas as pl
from jax.experimental.pallas import tpu as pltpu

TB = 8            # images per grid step
C1 = 6            # conv1 output channels
C2 = 16           # conv2 output channels
K1 = 5 * 5 * 3    # conv1 patch features
K2 = 5 * 5 * C1   # conv2 patch features
NPAD = 128        # lane-padded width of the MLP / logits

_COMPILER_PARAMS = pltpu.CompilerParams(
    dimension_semantics=("parallel",),
    vmem_limit_bytes=48 * 1024 * 1024,
)


# ----------------------------- Pallas kernels ------------------------------ #

def _conv_pool_kernel(p_ref, w_ref, b_ref, o_ref):
    """max_pool2x2(relu(conv + b)) for one batch tile.

    p_ref: [4, R, K]   im2col patches; axis 0 enumerates the 2x2 pool offsets,
                       rows within an offset are (image, pooled_row, pooled_col).
    w_ref: [K, N], b_ref: [1, N], o_ref: [R, N].
    """
    R = o_ref.shape[0]
    p = p_ref[...].reshape(4 * R, p_ref.shape[2])           # one MXU pass
    y = jnp.dot(p, w_ref[...], preferred_element_type=jnp.float32)
    m = jnp.maximum(jnp.maximum(y[0:R], y[R:2 * R]),
                    jnp.maximum(y[2 * R:3 * R], y[3 * R:4 * R]))
    o_ref[...] = jnp.maximum(m + b_ref[...], 0.0)


def _conv_pool_mlp_kernel(p_ref, w2_ref, b2_ref, w3_ref, b3_ref,
                          w4_ref, b4_ref, w5_ref, b5_ref, o_ref):
    """conv2 + pool + flatten + fc1 -> relu -> fc2 -> relu -> fc3 for one tile.

    p_ref:  [4, 25, tb, K2]  conv2 patches; axis 0 = pool offsets, axis 1 = the
            25 pooled spatial positions (u*5+v), axis 2 = images of the tile.
    w3_ref: [25, C2, 128]    fc1 weights as one [C2, 128] block per position.
    o_ref:  [tb, 128]        lane-dense padded logits.
    """
    tb = o_ref.shape[0]
    R = 25 * tb
    p = p_ref[...].reshape(4 * R, p_ref.shape[3])
    y = jnp.dot(p, w2_ref[...], preferred_element_type=jnp.float32)
    m = jnp.maximum(jnp.maximum(y[0:R], y[R:2 * R]),
                    jnp.maximum(y[2 * R:3 * R], y[3 * R:4 * R]))
    h2 = jnp.maximum(m + b2_ref[...], 0.0)                  # [25*tb, C2], rows (pos, image)

    # fc1 == flatten + matmul, done as a sum over the 25 spatial positions
    # (avoids an in-kernel sublane->lane reshape of h2).
    acc = None
    for r in range(25):
        part = jnp.dot(h2[r * tb:(r + 1) * tb, :], w3_ref[r],
                       preferred_element_type=jnp.float32)
        acc = part if acc is None else acc + part
    z = jnp.maximum(acc + b3_ref[...], 0.0)
    z = jnp.maximum(jnp.dot(z, w4_ref[...], preferred_element_type=jnp.float32)
                    + b4_ref[...], 0.0)
    o_ref[...] = (jnp.dot(z, w5_ref[...], preferred_element_type=jnp.float32)
                  + b5_ref[...])


# ------------------------------ JAX glue ----------------------------------- #

def _im2col(x, kh, kw):
    """NHWC valid-conv unfold; feature order (kh, kw, c)."""
    _, h, w, _ = x.shape
    oh, ow = h - kh + 1, w - kw + 1
    cols = [x[:, i:i + oh, j:j + ow, :] for i in range(kh) for j in range(kw)]
    return jnp.concatenate(cols, axis=-1)


def prepare_params(params):
    """One-time rearrangement of PyTorch-layout weights for the kernels."""
    f32 = jnp.float32
    w1 = jnp.transpose(params["conv1_w"].astype(f32), (2, 3, 1, 0)).reshape(K1, C1)
    b1 = params["conv1_b"].astype(f32).reshape(1, C1)
    w2 = jnp.transpose(params["conv2_w"].astype(f32), (2, 3, 1, 0)).reshape(K2, C2)
    b2 = params["conv2_b"].astype(f32).reshape(1, C2)
    # torch flattens NCHW: flat index = c*25 + (u*5 + v); kernel indexes by (u,v).
    w3 = jnp.transpose(params["fc1_w"].astype(f32).reshape(120, C2, 25), (2, 1, 0))
    w3 = jnp.pad(w3, ((0, 0), (0, 0), (0, NPAD - 120)))              # [25, 16, 128]
    b3 = jnp.pad(params["fc1_b"].astype(f32), (0, NPAD - 120)).reshape(1, NPAD)
    w4 = jnp.pad(params["fc2_w"].astype(f32).T, ((0, NPAD - 120), (0, NPAD - 84)))
    b4 = jnp.pad(params["fc2_b"].astype(f32), (0, NPAD - 84)).reshape(1, NPAD)
    w5 = jnp.pad(params["fc3_w"].astype(f32).T, ((0, NPAD - 84), (0, NPAD - 10)))
    b5 = jnp.pad(params["fc3_b"].astype(f32), (0, NPAD - 10)).reshape(1, NPAD)
    return dict(w1=w1, b1=b1, w2=w2, b2=b2, w3=w3, b3=b3, w4=w4, b4=b4, w5=w5, b5=b5)


def lenet_forward(prepared, x_nchw):
    """Forward pass.  x_nchw: [B, 3, 28, 28]."""
    B = x_nchw.shape[0]
    Bp = ((B + TB - 1) // TB) * TB

    x = jnp.transpose(x_nchw.astype(jnp.float32), (0, 2, 3, 1))       # NHWC
    x = jnp.pad(x, ((0, Bp - B), (2, 2), (2, 2), (0, 0)))             # [Bp, 32, 32, 3]

    # conv1 patches arranged by 2x2 pool offset: [4, Bp*196, 75] (no duplication,
    # the four offsets partition the 28x28 conv output).
    pat1 = _im2col(x, 5, 5)                                           # [Bp, 28, 28, 75]
    p1 = jnp.stack([pat1[:, dh::2, dw::2, :].reshape(Bp * 196, K1)
                    for dh in range(2) for dw in range(2)], axis=0)

    h1 = pl.pallas_call(
        _conv_pool_kernel,
        out_shape=jax.ShapeDtypeStruct((Bp * 196, C1), jnp.float32),
        grid=(Bp // TB,),
        in_specs=[
            pl.BlockSpec((4, TB * 196, K1), lambda i: (0, i, 0)),
            pl.BlockSpec((K1, C1), lambda i: (0, 0)),
            pl.BlockSpec((1, C1), lambda i: (0, 0)),
        ],
        out_specs=pl.BlockSpec((TB * 196, C1), lambda i: (i, 0)),
        compiler_params=_COMPILER_PARAMS,
    )(p1, prepared["w1"], prepared["b1"])

    # conv2 patches: [4, 25, Bp, 150] = (offset, pooled position, image, features)
    h1r = h1.reshape(Bp, 14, 14, C1)
    pat2 = _im2col(h1r, 5, 5)                                         # [Bp, 10, 10, 150]
    p2 = jnp.stack([jnp.transpose(pat2[:, dh::2, dw::2, :], (1, 2, 0, 3))
                    for dh in range(2) for dw in range(2)], axis=0)
    p2 = p2.reshape(4, 25, Bp, K2)

    out = pl.pallas_call(
        _conv_pool_mlp_kernel,
        out_shape=jax.ShapeDtypeStruct((Bp, NPAD), jnp.float32),
        grid=(Bp // TB,),
        in_specs=[
            pl.BlockSpec((4, 25, TB, K2), lambda i: (0, 0, i, 0)),
            pl.BlockSpec((K2, C2), lambda i: (0, 0)),
            pl.BlockSpec((1, C2), lambda i: (0, 0)),
            pl.BlockSpec((25, C2, NPAD), lambda i: (0, 0, 0)),
            pl.BlockSpec((1, NPAD), lambda i: (0, 0)),
            pl.BlockSpec((NPAD, NPAD), lambda i: (0, 0)),
            pl.BlockSpec((1, NPAD), lambda i: (0, 0)),
            pl.BlockSpec((NPAD, NPAD), lambda i: (0, 0)),
            pl.BlockSpec((1, NPAD), lambda i: (0, 0)),
        ],
        out_specs=pl.BlockSpec((TB, NPAD), lambda i: (i, 0)),
        compiler_params=_COMPILER_PARAMS,
    )(p2, prepared["w2"], prepared["b2"], prepared["w3"], prepared["b3"],
      prepared["w4"], prepared["b4"], prepared["w5"], prepared["b5"])

    return out[:B, :10]


# Pure-JAX reference (correctness check only; not part of the kernel path).
def lenet_reference(params, x_nchw):
    hp = jax.lax.Precision.HIGHEST
    dn = ("NCHW", "OIHW", "NCHW")
    x = jax.lax.conv_general_dilated(x_nchw, params["conv1_w"], (1, 1),
                                     ((2, 2), (2, 2)), dimension_numbers=dn,
                                     precision=hp)
    x = jax.nn.relu(x + params["conv1_b"][None, :, None, None])
    x = jax.lax.reduce_window(x, -jnp.inf, jax.lax.max, (1, 1, 2, 2), (1, 1, 2, 2), "VALID")
    x = jax.lax.conv_general_dilated(x, params["conv2_w"], (1, 1), "VALID",
                                     dimension_numbers=dn, precision=hp)
    x = jax.nn.relu(x + params["conv2_b"][None, :, None, None])
    x = jax.lax.reduce_window(x, -jnp.inf, jax.lax.max, (1, 1, 2, 2), (1, 1, 2, 2), "VALID")
    x = x.reshape(x.shape[0], -1)
    x = jax.nn.relu(jnp.dot(x, params["fc1_w"].T, precision=hp) + params["fc1_b"])
    x = jax.nn.relu(jnp.dot(x, params["fc2_w"].T, precision=hp) + params["fc2_b"])
    return jnp.dot(x, params["fc3_w"].T, precision=hp) + params["fc3_b"]


def init_params(key, input_dim=3):
    ks = jax.random.split(key, 10)
    s = 0.05
    return {
        "conv1_w": jax.random.normal(ks[0], (6, input_dim, 5, 5), jnp.float32) * s,
        "conv1_b": jax.random.normal(ks[1], (6,), jnp.float32) * s,
        "conv2_w": jax.random.normal(ks[2], (16, 6, 5, 5), jnp.float32) * s,
        "conv2_b": jax.random.normal(ks[3], (16,), jnp.float32) * s,
        "fc1_w":   jax.random.normal(ks[4], (120, 16 * 5 * 5), jnp.float32) * s,
        "fc1_b":   jax.random.normal(ks[5], (120,), jnp.float32) * s,
        "fc2_w":   jax.random.normal(ks[6], (84, 120), jnp.float32) * s,
        "fc2_b":   jax.random.normal(ks[7], (84,), jnp.float32) * s,
        "fc3_w":   jax.random.normal(ks[8], (10, 84), jnp.float32) * s,
        "fc3_b":   jax.random.normal(ks[9], (10,), jnp.float32) * s,
    }


if __name__ == "__main__":
    key = jax.random.PRNGKey(0)
    kp, kx = jax.random.split(key)
    B, C, H, W = 2, 3, 28, 28           # 28x28 is required by fc1 = 16*5*5
    params = init_params(kp, input_dim=C)
    prepared = prepare_params(params)   # weight rearrangement hoisted out of forward
    x = jax.random.normal(kx, (B, C, H, W), jnp.float32)

    fwd = jax.jit(lenet_forward)
    out = jax.block_until_ready(fwd(prepared, x))
    assert out.shape == (B, 10) and out.dtype == jnp.float32

    ref = jax.block_until_ready(lenet_reference(params, x))
    np.testing.assert_allclose(np.asarray(out), np.asarray(ref), rtol=2e-2, atol=2e-2)

    print("KERNEL_OK")
</pallas_src>

<mosaic_0001>
module attributes {stable_mosaic.version = 11 : i64} {
  func.func @_conv_pool_kernel(%arg0: i32, %arg1: memref<4x1568x75xf32, #tpu.memory_space<vmem>>, %arg2: memref<75x6xf32, #tpu.memory_space<vmem>>, %arg3: memref<1x6xf32, #tpu.memory_space<vmem>>, %arg4: memref<1568x6xf32, #tpu.memory_space<vmem>>) attributes {dimension_semantics = [#tpu.dimension_semantics<parallel>], iteration_bounds = array<i64: 1>, scalar_prefetch = 0 : i64, scratch_operands = 0 : i64, tpu.core_type = #tpu.core_type<tc>, window_params = [{transform_indices = @transform_0, window_bounds = array<i64: 4, 1568, 75>}, {pipeline_mode = #tpu.pipeline_mode<synchronous>, transform_indices = @transform_1, window_bounds = array<i64: 75, 6>}, {pipeline_mode = #tpu.pipeline_mode<synchronous>, transform_indices = @transform_2, window_bounds = array<i64: 1, 6>}, {transform_indices = @transform_3, window_bounds = array<i64: 1568, 6>}]} {
    %c0 = arith.constant 0 : index
    %c0_0 = arith.constant 0 : index
    %c0_1 = arith.constant 0 : index
    %0 = vector.load %arg1[%c0, %c0_0, %c0_1] : memref<4x1568x75xf32, #tpu.memory_space<vmem>>, vector<4x1568x75xf32>
    %1 = vector.shape_cast %0 : vector<4x1568x75xf32> to vector<6272x75xf32>
    %c0_2 = arith.constant 0 : index
    %c0_3 = arith.constant 0 : index
    %2 = vector.load %arg2[%c0_2, %c0_3] : memref<75x6xf32, #tpu.memory_space<vmem>>, vector<75x6xf32>
    %cst = arith.constant dense<0.000000e+00> : vector<6272x6xf32>
    %3 = tpu.matmul %1, %2, %cst {dimension_numbers = #tpu.dot_dimension_numbers<[1], [0], [0], [1], [0, 0, 1, 1], [], []>} : vector<6272x75xf32>, vector<75x6xf32>, vector<6272x6xf32> -> vector<6272x6xf32>
    %4 = vector.extract_strided_slice %3 {offsets = [0, 0], sizes = [1568, 6], strides = [1, 1]} : vector<6272x6xf32> to vector<1568x6xf32>
    %5 = vector.extract_strided_slice %3 {offsets = [1568, 0], sizes = [1568, 6], strides = [1, 1]} : vector<6272x6xf32> to vector<1568x6xf32>
    %6 = arith.maximumf %4, %5 : vector<1568x6xf32>
    %7 = vector.extract_strided_slice %3 {offsets = [3136, 0], sizes = [1568, 6], strides = [1, 1]} : vector<6272x6xf32> to vector<1568x6xf32>
    %8 = vector.extract_strided_slice %3 {offsets = [4704, 0], sizes = [1568, 6], strides = [1, 1]} : vector<6272x6xf32> to vector<1568x6xf32>
    %9 = arith.maximumf %7, %8 : vector<1568x6xf32>
    %10 = arith.maximumf %6, %9 : vector<1568x6xf32>
    %c0_4 = arith.constant 0 : index
    %c0_5 = arith.constant 0 : index
    %11 = vector.load %arg3[%c0_4, %c0_5] : memref<1x6xf32, #tpu.memory_space<vmem>>, vector<1x6xf32>
    %12 = vector.broadcast %11 : vector<1x6xf32> to vector<1568x6xf32>
    %13 = arith.addf %10, %12 : vector<1568x6xf32>
    %cst_6 = arith.constant 0.000000e+00 : f32
    %14 = vector.broadcast %cst_6 : f32 to vector<1568x6xf32>
    %15 = arith.maximumf %13, %14 : vector<1568x6xf32>
    %c0_7 = arith.constant 0 : index
    %c0_8 = arith.constant 0 : index
    %16 = vector.load %arg4[%c0_7, %c0_8] : memref<1568x6xf32, #tpu.memory_space<vmem>>, vector<1568x6xf32>
    tpu.vector_store %arg4[%c0_7, %c0_8], %15 {strides = array<i32>} : memref<1568x6xf32, #tpu.memory_space<vmem>>, vector<1568x6xf32>,
    return
  }
  func.func @transform_0(%arg0: i32) -> (i32, i32, i32) {
    %c0_i32 = arith.constant 0 : i32
    %c0_i32_0 = arith.constant 0 : i32
    %c0_i32_1 = arith.constant 0 : i32
    return %c0_i32, %arg0, %c0_i32_0 : i32, i32, i32
  }
  func.func @transform_1(%arg0: i32) -> (i32, i32) {
    %c0_i32 = arith.constant 0 : i32
    %c0_i32_0 = arith.constant 0 : i32
    %c0_i32_1 = arith.constant 0 : i32
    return %c0_i32, %c0_i32_0 : i32, i32
  }
  func.func @transform_2(%arg0: i32) -> (i32, i32) {
    %c0_i32 = arith.constant 0 : i32
    %c0_i32_0 = arith.constant 0 : i32
    %c0_i32_1 = arith.constant 0 : i32
    return %c0_i32, %c0_i32_0 : i32, i32
  }
  func.func @transform_3(%arg0: i32) -> (i32, i32) {
    %c0_i32 = arith.constant 0 : i32
    %c0_i32_0 = arith.constant 0 : i32
    return %arg0, %c0_i32 : i32, i32
  }
}

module attributes {stable_mosaic.version = 11 : i64} {
  func.func @_conv_pool_mlp_kernel(%arg0: i32, %arg1: memref<4x25x8x150xf32, #tpu.memory_space<vmem>>, %arg2: memref<150x16xf32, #tpu.memory_space<vmem>>, %arg3: memref<1x16xf32, #tpu.memory_space<vmem>>, %arg4: memref<25x16x128xf32, #tpu.memory_space<vmem>>, %arg5: memref<1x128xf32, #tpu.memory_space<vmem>>, %arg6: memref<128x128xf32, #tpu.memory_space<vmem>>, %arg7: memref<1x128xf32, #tpu.memory_space<vmem>>, %arg8: memref<128x128xf32, #tpu.memory_space<vmem>>, %arg9: memref<1x128xf32, #tpu.memory_space<vmem>>, %arg10: memref<8x128xf32, #tpu.memory_space<vmem>>) attributes {dimension_semantics = [#tpu.dimension_semantics<parallel>], iteration_bounds = array<i64: 1>, scalar_prefetch = 0 : i64, scratch_operands = 0 : i64, tpu.core_type = #tpu.core_type<tc>, window_params = [{transform_indices = @transform_0, window_bounds = array<i64: 4, 25, 8, 150>}, {pipeline_mode = #tpu.pipeline_mode<synchronous>, transform_indices = @transform_1, window_bounds = array<i64: 150, 16>}, {pipeline_mode = #tpu.pipeline_mode<synchronous>, transform_indices = @transform_2, window_bounds = array<i64: 1, 16>}, {pipeline_mode = #tpu.pipeline_mode<synchronous>, transform_indices = @transform_3, window_bounds = array<i64: 25, 16, 128>}, {pipeline_mode = #tpu.pipeline_mode<synchronous>, transform_indices = @transform_4, window_bounds = array<i64: 1, 128>}, {pipeline_mode = #tpu.pipeline_mode<synchronous>, transform_indices = @transform_5, window_bounds = array<i64: 128, 128>}, {pipeline_mode = #tpu.pipeline_mode<synchronous>, transform_indices = @transform_6, window_bounds = array<i64: 1, 128>}, {pipeline_mode = #tpu.pipeline_mode<synchronous>, transform_indices = @transform_7, window_bounds = array<i64: 128, 128>}, {pipeline_mode = #tpu.pipeline_mode<synchronous>, transform_indices = @transform_8, window_bounds = array<i64: 1, 128>}, {transform_indices = @transform_9, window_bounds = array<i64: 8, 128>}]} {
    %c0 = arith.constant 0 : index
    %c0_0 = arith.constant 0 : index
    %c0_1 = arith.constant 0 : index
    %c0_2 = arith.constant 0 : index
    %0 = vector.load %arg1[%c0, %c0_0, %c0_1, %c0_2] : memref<4x25x8x150xf32, #tpu.memory_space<vmem>>, vector<4x25x8x150xf32>
    %1 = vector.shape_cast %0 : vector<4x25x8x150xf32> to vector<800x150xf32>
    %c0_3 = arith.constant 0 : index
    %c0_4 = arith.constant 0 : index
    %2 = vector.load %arg2[%c0_3, %c0_4] : memref<150x16xf32, #tpu.memory_space<vmem>>, vector<150x16xf32>
    %cst = arith.constant dense<0.000000e+00> : vector<800x16xf32>
    %3 = tpu.matmul %1, %2, %cst {dimension_numbers = #tpu.dot_dimension_numbers<[1], [0], [0], [1], [0, 0, 1, 1], [], []>} : vector<800x150xf32>, vector<150x16xf32>, vector<800x16xf32> -> vector<800x16xf32>
    %4 = vector.extract_strided_slice %3 {offsets = [0, 0], sizes = [200, 16], strides = [1, 1]} : vector<800x16xf32> to vector<200x16xf32>
    %5 = vector.extract_strided_slice %3 {offsets = [200, 0], sizes = [200, 16], strides = [1, 1]} : vector<800x16xf32> to vector<200x16xf32>
    %6 = arith.maximumf %4, %5 : vector<200x16xf32>
    %7 = vector.extract_strided_slice %3 {offsets = [400, 0], sizes = [200, 16], strides = [1, 1]} : vector<800x16xf32> to vector<200x16xf32>
    %8 = vector.extract_strided_slice %3 {offsets = [600, 0], sizes = [200, 16], strides = [1, 1]} : vector<800x16xf32> to vector<200x16xf32>
    %9 = arith.maximumf %7, %8 : vector<200x16xf32>
    %10 = arith.maximumf %6, %9 : vector<200x16xf32>
    %c0_5 = arith.constant 0 : index
    %c0_6 = arith.constant 0 : index
    %11 = vector.load %arg3[%c0_5, %c0_6] : memref<1x16xf32, #tpu.memory_space<vmem>>, vector<1x16xf32>
    %12 = vector.broadcast %11 : vector<1x16xf32> to vector<200x16xf32>
    %13 = arith.addf %10, %12 : vector<200x16xf32>
    %cst_7 = arith.constant 0.000000e+00 : f32
    %14 = vector.broadcast %cst_7 : f32 to vector<200x16xf32>
    %15 = arith.maximumf %13, %14 : vector<200x16xf32>
    %16 = vector.extract_strided_slice %15 {offsets = [0, 0], sizes = [8, 16], strides = [1, 1]} : vector<200x16xf32> to vector<8x16xf32>
    %c0_8 = arith.constant 0 : index
    %c0_9 = arith.constant 0 : index
    %c0_10 = arith.constant 0 : index
    %17 = vector.load %arg4[%c0_8, %c0_9, %c0_10] : memref<25x16x128xf32, #tpu.memory_space<vmem>>, vector<1x16x128xf32>
    %18 = vector.shape_cast %17 : vector<1x16x128xf32> to vector<16x128xf32>
    %cst_11 = arith.constant dense<0.000000e+00> : vector<8x128xf32>
    %19 = tpu.matmul %16, %18, %cst_11 {dimension_numbers = #tpu.dot_dimension_numbers<[1], [0], [0], [1], [0, 0, 1, 1], [], []>} : vector<8x16xf32>, vector<16x128xf32>, vector<8x128xf32> -> vector<8x128xf32>
    %20 = vector.extract_strided_slice %15 {offsets = [8, 0], sizes = [8, 16], strides = [1, 1]} : vector<200x16xf32> to vector<8x16xf32>
    %c1 = arith.constant 1 : index
    %c0_12 = arith.constant 0 : index
    %c0_13 = arith.constant 0 : index
    %21 = vector.load %arg4[%c1, %c0_12, %c0_13] : memref<25x16x128xf32, #tpu.memory_space<vmem>>, vector<1x16x128xf32>
    %22 = vector.shape_cast %21 : vector<1x16x128xf32> to vector<16x128xf32>
    %cst_14 = arith.constant dense<0.000000e+00> : vector<8x128xf32>
    %23 = tpu.matmul %20, %22, %cst_14 {dimension_numbers = #tpu.dot_dimension_numbers<[1], [0], [0], [1], [0, 0, 1, 1], [], []>} : vector<8x16xf32>, vector<16x128xf32>, vector<8x128xf32> -> vector<8x128xf32>
    %24 = arith.addf %19, %23 : vector<8x128xf32>
    %25 = vector.extract_strided_slice %15 {offsets = [16, 0], sizes = [8, 16], strides = [1, 1]} : vector<200x16xf32> to vector<8x16xf32>
    %c2 = arith.constant 2 : index
    %c0_15 = arith.constant 0 : index
    %c0_16 = arith.constant 0 : index
    %26 = vector.load %arg4[%c2, %c0_15, %c0_16] : memref<25x16x128xf32, #tpu.memory_space<vmem>>, vector<1x16x128xf32>
    %27 = vector.shape_cast %26 : vector<1x16x128xf32> to vector<16x128xf32>
    %cst_17 = arith.constant dense<0.000000e+00> : vector<8x128xf32>
    %28 = tpu.matmul %25, %27, %cst_17 {dimension_numbers = #tpu.dot_dimension_numbers<[1], [0], [0], [1], [0, 0, 1, 1], [], []>} : vector<8x16xf32>, vector<16x128xf32>, vector<8x128xf32> -> vector<8x128xf32>
    %29 = arith.addf %24, %28 : vector<8x128xf32>
    %30 = vector.extract_strided_slice %15 {offsets = [24, 0], sizes = [8, 16], strides = [1, 1]} : vector<200x16xf32> to vector<8x16xf32>
    %c3 = arith.constant 3 : index
    %c0_18 = arith.constant 0 : index
    %c0_19 = arith.constant 0 : index
    %31 = vector.load %arg4[%c3, %c0_18, %c0_19] : memref<25x16x128xf32, #tpu.memory_space<vmem>>, vector<1x16x128xf32>
    %32 = vector.shape_cast %31 : vector<1x16x128xf32> to vector<16x128xf32>
    %cst_20 = arith.constant dense<0.000000e+00> : vector<8x128xf32>
    %33 = tpu.matmul %30, %32, %cst_20 {dimension_numbers = #tpu.dot_dimension_numbers<[1], [0], [0], [1], [0, 0, 1, 1], [], []>} : vector<8x16xf32>, vector<16x128xf32>, vector<8x128xf32> -> vector<8x128xf32>
    %34 = arith.addf %29, %33 : vector<8x128xf32>
    %35 = vector.extract_strided_slice %15 {offsets = [32, 0], sizes = [8, 16], strides = [1, 1]} : vector<200x16xf32> to vector<8x16xf32>
    %c4 = arith.constant 4 : index
    %c0_21 = arith.constant 0 : index
    %c0_22 = arith.constant 0 : index
    %36 = vector.load %arg4[%c4, %c0_21, %c0_22] : memref<25x16x128xf32, #tpu.memory_space<vmem>>, vector<1x16x128xf32>
    %37 = vector.shape_cast %36 : vector<1x16x128xf32> to vector<16x128xf32>
    %cst_23 = arith.constant dense<0.000000e+00> : vector<8x128xf32>
    %38 = tpu.matmul %35, %37, %cst_23 {dimension_numbers = #tpu.dot_dimension_numbers<[1], [0], [0], [1], [0, 0, 1, 1], [], []>} : vector<8x16xf32>, vector<16x128xf32>, vector<8x128xf32> -> vector<8x128xf32>
    %39 = arith.addf %34, %38 : vector<8x128xf32>
    %40 = vector.extract_strided_slice %15 {offsets = [40, 0], sizes = [8, 16], strides = [1, 1]} : vector<200x16xf32> to vector<8x16xf32>
    %c5 = arith.constant 5 : index
    %c0_24 = arith.constant 0 : index
    %c0_25 = arith.constant 0 : index
    %41 = vector.load %arg4[%c5, %c0_24, %c0_25] : memref<25x16x128xf32, #tpu.memory_space<vmem>>, vector<1x16x128xf32>
    %42 = vector.shape_cast %41 : vector<1x16x128xf32> to vector<16x128xf32>
    %cst_26 = arith.constant dense<0.000000e+00> : vector<8x128xf32>
    %43 = tpu.matmul %40, %42, %cst_26 {dimension_numbers = #tpu.dot_dimension_numbers<[1], [0], [0], [1], [0, 0, 1, 1], [], []>} : vector<8x16xf32>, vector<16x128xf32>, vector<8x128xf32> -> vector<8x128xf32>
    %44 = arith.addf %39, %43 : vector<8x128xf32>
    %45 = vector.extract_strided_slice %15 {offsets = [48, 0], sizes = [8, 16], strides = [1, 1]} : vector<200x16xf32> to vector<8x16xf32>
    %c6 = arith.constant 6 : index
    %c0_27 = arith.constant 0 : index
    %c0_28 = arith.constant 0 : index
    %46 = vector.load %arg4[%c6, %c0_27, %c0_28] : memref<25x16x128xf32, #tpu.memory_space<vmem>>, vector<1x16x128xf32>
    %47 = vector.shape_cast %46 : vector<1x16x128xf32> to vector<16x128xf32>
    %cst_29 = arith.constant dense<0.000000e+00> : vector<8x128xf32>
    %48 = tpu.matmul %45, %47, %cst_29 {dimension_numbers = #tpu.dot_dimension_numbers<[1], [0], [0], [1], [0, 0, 1, 1], [], []>} : vector<8x16xf32>, vector<16x128xf32>, vector<8x128xf32> -> vector<8x128xf32>
    %49 = arith.addf %44, %48 : vector<8x128xf32>
    %50 = vector.extract_strided_slice %15 {offsets = [56, 0], sizes = [8, 16], strides = [1, 1]} : vector<200x16xf32> to vector<8x16xf32>
    %c7 = arith.constant 7 : index
    %c0_30 = arith.constant 0 : index
    %c0_31 = arith.constant 0 : index
    %51 = vector.load %arg4[%c7, %c0_30, %c0_31] : memref<25x16x128xf32, #tpu.memory_space<vmem>>, vector<1x16x128xf32>
    %52 = vector.shape_cast %51 : vector<1x16x128xf32> to vector<16x128xf32>
    %cst_32 = arith.constant dense<0.000000e+00> : vector<8x128xf32>
    %53 = tpu.matmul %50, %52, %cst_32 {dimension_numbers = #tpu.dot_dimension_numbers<[1], [0], [0], [1], [0, 0, 1, 1], [], []>} : vector<8x16xf32>, vector<16x128xf32>, vector<8x128xf32> -> vector<8x128xf32>
    %54 = arith.addf %49, %53 : vector<8x128xf32>
    %55 = vector.extract_strided_slice %15 {offsets = [64, 0], sizes = [8, 16], strides = [1, 1]} : vector<200x16xf32> to vector<8x16xf32>
    %c8 = arith.constant 8 : index
    %c0_33 = arith.constant 0 : index
    %c0_34 = arith.constant 0 : index
    %56 = vector.load %arg4[%c8, %c0_33, %c0_34] : memref<25x16x128xf32, #tpu.memory_space<vmem>>, vector<1x16x128xf32>
    %57 = vector.shape_cast %56 : vector<1x16x128xf32> to vector<16x128xf32>
    %cst_35 = arith.constant dense<0.000000e+00> : vector<8x128xf32>
    %58 = tpu.matmul %55, %57, %cst_35 {dimension_numbers = #tpu.dot_dimension_numbers<[1], [0], [0], [1], [0, 0, 1, 1], [], []>} : vector<8x16xf32>, vector<16x128xf32>, vector<8x128xf32> -> vector<8x128xf32>
    %59 = arith.addf %54, %58 : vector<8x128xf32>
    %60 = vector.extract_strided_slice %15 {offsets = [72, 0], sizes = [8, 16], strides = [1, 1]} : vector<200x16xf32> to vector<8x16xf32>
    %c9 = arith.constant 9 : index
    %c0_36 = arith.constant 0 : index
    %c0_37 = arith.constant 0 : index
    %61 = vector.load %arg4[%c9, %c0_36, %c0_37] : memref<25x16x128xf32, #tpu.memory_space<vmem>>, vector<1x16x128xf32>
    %62 = vector.shape_cast %61 : vector<1x16x128xf32> to vector<16x128xf32>
    %cst_38 = arith.constant dense<0.000000e+00> : vector<8x128xf32>
    %63 = tpu.matmul %60, %62, %cst_38 {dimension_numbers = #tpu.dot_dimension_numbers<[1], [0], [0], [1], [0, 0, 1, 1], [], []>} : vector<8x16xf32>, vector<16x128xf32>, vector<8x128xf32> -> vector<8x128xf32>
    %64 = arith.addf %59, %63 : vector<8x128xf32>
    %65 = vector.extract_strided_slice %15 {offsets = [80, 0], sizes = [8, 16], strides = [1, 1]} : vector<200x16xf32> to vector<8x16xf32>
    %c10 = arith.constant 10 : index
    %c0_39 = arith.constant 0 : index
    %c0_40 = arith.constant 0 : index
    %66 = vector.load %arg4[%c10, %c0_39, %c0_40] : memref<25x16x128xf32, #tpu.memory_space<vmem>>, vector<1x16x128xf32>
    %67 = vector.shape_cast %66 : vector<1x16x128xf32> to vector<16x128xf32>
    %cst_41 = arith.constant dense<0.000000e+00> : vector<8x128xf32>
    %68 = tpu.matmul %65, %67, %cst_41 {dimension_numbers = #tpu.dot_dimension_numbers<[1], [0], [0], [1], [0, 0, 1, 1], [], []>} : vector<8x16xf32>, vector<16x128xf32>, vector<8x128xf32> -> vector<8x128xf32>
    %69 = arith.addf %64, %68 : vector<8x128xf32>
    %70 = vector.extract_strided_slice %15 {offsets = [88, 0], sizes = [8, 16], strides = [1, 1]} : vector<200x16xf32> to vector<8x16xf32>
    %c11 = arith.constant 11 : index
    %c0_42 = arith.constant 0 : index
    %c0_43 = arith.constant 0 : index
    %71 = vector.load %arg4[%c11, %c0_42, %c0_43] : memref<25x16x128xf32, #tpu.memory_space<vmem>>, vector<1x16x128xf32>
    %72 = vector.shape_cast %71 : vector<1x16x128xf32> to vector<16x128xf32>
    %cst_44 = arith.constant dense<0.000000e+00> : vector<8x128xf32>
    %73 = tpu.matmul %70, %72, %cst_44 {dimension_numbers = #tpu.dot_dimension_numbers<[1], [0], [0], [1], [0, 0, 1, 1], [], []>} : vector<8x16xf32>, vector<16x128xf32>, vector<8x128xf32> -> vector<8x128xf32>
    %74 = arith.addf %69, %73 : vector<8x128xf32>
    %75 = vector.extract_strided_slice %15 {offsets = [96, 0], sizes = [8, 16], strides = [1, 1]} : vector<200x16xf32> to vector<8x16xf32>
    %c12 = arith.constant 12 : index
    %c0_45 = arith.constant 0 : index
    %c0_46 = arith.constant 0 : index
    %76 = vector.load %arg4[%c12, %c0_45, %c0_46] : memref<25x16x128xf32, #tpu.memory_space<vmem>>, vector<1x16x128xf32>
    %77 = vector.shape_cast %76 : vector<1x16x128xf32> to vector<16x128xf32>
    %cst_47 = arith.constant dense<0.000000e+00> : vector<8x128xf32>
    %78 = tpu.matmul %75, %77, %cst_47 {dimension_numbers = #tpu.dot_dimension_numbers<[1], [0], [0], [1], [0, 0, 1, 1], [], []>} : vector<8x16xf32>, vector<16x128xf32>, vector<8x128xf32> -> vector<8x128xf32>
    %79 = arith.addf %74, %78 : vector<8x128xf32>
    %80 = vector.extract_strided_slice %15 {offsets = [104, 0], sizes = [8, 16], strides = [1, 1]} : vector<200x16xf32> to vector<8x16xf32>
    %c13 = arith.constant 13 : index
    %c0_48 = arith.constant 0 : index
    %c0_49 = arith.constant 0 : index
    %81 = vector.load %arg4[%c13, %c0_48, %c0_49] : memref<25x16x128xf32, #tpu.memory_space<vmem>>, vector<1x16x128xf32>
    %82 = vector.shape_cast %81 : vector<1x16x128xf32> to vector<16x128xf32>
    %cst_50 = arith.constant dense<0.000000e+00> : vector<8x128xf32>
    %83 = tpu.matmul %80, %82, %cst_50 {dimension_numbers = #tpu.dot_dimension_numbers<[1], [0], [0], [1], [0, 0, 1, 1], [], []>} : vector<8x16xf32>, vector<16x128xf32>, vector<8x128xf32> -> vector<8x128xf32>
    %84 = arith.addf %79, %83 : vector<8x128xf32>
    %85 = vector.extract_strided_slice %15 {offsets = [112, 0], sizes = [8, 16], strides = [1, 1]} : vector<200x16xf32> to vector<8x16xf32>
    %c14 = arith.constant 14 : index
    %c0_51 = arith.constant 0 : index
    %c0_52 = arith.constant 0 : index
    %86 = vector.load %arg4[%c14, %c0_51, %c0_52] : memref<25x16x128xf32, #tpu.memory_space<vmem>>, vector<1x16x128xf32>
    %87 = vector.shape_cast %86 : vector<1x16x128xf32> to vector<16x128xf32>
    %cst_53 = arith.constant dense<0.000000e+00> : vector<8x128xf32>
    %88 = tpu.matmul %85, %87, %cst_53 {dimension_numbers = #tpu.dot_dimension_numbers<[1], [0], [0], [1], [0, 0, 1, 1], [], []>} : vector<8x16xf32>, vector<16x128xf32>, vector<8x128xf32> -> vector<8x128xf32>
    %89 = arith.addf %84, %88 : vector<8x128xf32>
    %90 = vector.extract_strided_slice %15 {offsets = [120, 0], sizes = [8, 16], strides = [1, 1]} : vector<200x16xf32> to vector<8x16xf32>
    %c15 = arith.constant 15 : index
    %c0_54 = arith.constant 0 : index
    %c0_55 = arith.constant 0 : index
    %91 = vector.load %arg4[%c15, %c0_54, %c0_55] : memref<25x16x128xf32, #tpu.memory_space<vmem>>, vector<1x16x128xf32>
    %92 = vector.shape_cast %91 : vector<1x16x128xf32> to vector<16x128xf32>
    %cst_56 = arith.constant dense<0.000000e+00> : vector<8x128xf32>
    %93 = tpu.matmul %90, %92, %cst_56 {dimension_numbers = #tpu.dot_dimension_numbers<[1], [0], [0], [1], [0, 0, 1, 1], [], []>} : vector<8x16xf32>, vector<16x128xf32>, vector<8x128xf32> -> vector<8x128xf32>
    %94 = arith.addf %89, %93 : vector<8x128xf32>
    %95 = vector.extract_strided_slice %15 {offsets = [128, 0], sizes = [8, 16], strides = [1, 1]} : vector<200x16xf32> to vector<8x16xf32>
    %c16 = arith.constant 16 : index
    %c0_57 = arith.constant 0 : index
    %c0_58 = arith.constant 0 : index
    %96 = vector.load %arg4[%c16, %c0_57, %c0_58] : memref<25x16x128xf32, #tpu.memory_space<vmem>>, vector<1x16x128xf32>
    %97 = vector.shape_cast %96 : vector<1x16x128xf32> to vector<16x128xf32>
    %cst_59 = arith.constant dense<0.000000e+00> : vector<8x128xf32>
    %98 = tpu.matmul %95, %97, %cst_59 {dimension_numbers = #tpu.dot_dimension_numbers<[1], [0], [0], [1], [0, 0, 1, 1], [], []>} : vector<8x16xf32>, vector<16x128xf32>, vector<8x128xf32> -> vector<8x128xf32>
    %99 = arith.addf %94, %98 : vector<8x128xf32>
    %100 = vector.extract_strided_slice %15 {offsets = [136, 0], sizes = [8, 16], strides = [1, 1]} : vector<200x16xf32> to vector<8x16xf32>
    %c17 = arith.constant 17 : index
    %c0_60 = arith.constant 0 : index
    %c0_61 = arith.constant 0 : index
    %101 = vector.load %arg4[%c17, %c0_60, %c0_61] : memref<25x16x128xf32, #tpu.memory_space<vmem>>, vector<1x16x128xf32>
    %102 = vector.shape_cast %101 : vector<1x16x128xf32> to vector<16x128xf32>
    %cst_62 = arith.constant dense<0.000000e+00> : vector<8x128xf32>
    %103 = tpu.matmul %100, %102, %cst_62 {dimension_numbers = #tpu.dot_dimension_numbers<[1], [0], [0], [1], [0, 0, 1, 1], [], []>} : vector<8x16xf32>, vector<16x128xf32>, vector<8x128xf32> -> vector<8x128xf32>
    %104 = arith.addf %99, %103 : vector<8x128xf32>
    %105 = vector.extract_strided_slice %15 {offsets = [144, 0], sizes = [8, 16], strides = [1, 1]} : vector<200x16xf32> to vector<8x16xf32>
    %c18 = arith.constant 18 : index
    %c0_63 = arith.constant 0 : index
    %c0_64 = arith.constant 0 : index
    %106 = vector.load %arg4[%c18, %c0_63, %c0_64] : memref<25x16x128xf32, #tpu.memory_space<vmem>>, vector<1x16x128xf32>
    %107 = vector.shape_cast %106 : vector<1x16x128xf32> to vector<16x128xf32>
    %cst_65 = arith.constant dense<0.000000e+00> : vector<8x128xf32>
    %108 = tpu.matmul %105, %107, %cst_65 {dimension_numbers = #tpu.dot_dimension_numbers<[1], [0], [0], [1], [0, 0, 1, 1], [], []>} : vector<8x16xf32>, vector<16x128xf32>, vector<8x128xf32> -> vector<8x128xf32>
    %109 = arith.addf %104, %108 : vector<8x128xf32>
    %110 = vector.extract_strided_slice %15 {offsets = [152, 0], sizes = [8, 16], strides = [1, 1]} : vector<200x16xf32> to vector<8x16xf32>
    %c19 = arith.constant 19 : index
    %c0_66 = arith.constant 0 : index
    %c0_67 = arith.constant 0 : index
    %111 = vector.load %arg4[%c19, %c0_66, %c0_67] : memref<25x16x128xf32, #tpu.memory_space<vmem>>, vector<1x16x128xf32>
    %112 = vector.shape_cast %111 : vector<1x16x128xf32> to vector<16x128xf32>
    %cst_68 = arith.constant dense<0.000000e+00> : vector<8x128xf32>
    %113 = tpu.matmul %110, %112, %cst_68 {dimension_numbers = #tpu.dot_dimension_numbers<[1], [0], [0], [1], [0, 0, 1, 1], [], []>} : vector<8x16xf32>, vector<16x128xf32>, vector<8x128xf32> -> vector<8x128xf32>
    %114 = arith.addf %109, %113 : vector<8x128xf32>
    %115 = vector.extract_strided_slice %15 {offsets = [160, 0], sizes = [8, 16], strides = [1, 1]} : vector<200x16xf32> to vector<8x16xf32>
    %c20 = arith.constant 20 : index
    %c0_69 = arith.constant 0 : index
    %c0_70 = arith.constant 0 : index
    %116 = vector.load %arg4[%c20, %c0_69, %c0_70] : memref<25x16x128xf32, #tpu.memory_space<vmem>>, vector<1x16x128xf32>
    %117 = vector.shape_cast %116 : vector<1x16x128xf32> to vector<16x128xf32>
    %cst_71 = arith.constant dense<0.000000e+00> : vector<8x128xf32>
    %118 = tpu.matmul %115, %117, %cst_71 {dimension_numbers = #tpu.dot_dimension_numbers<[1], [0], [0], [1], [0, 0, 1, 1], [], []>} : vector<8x16xf32>, vector<16x128xf32>, vector<8x128xf32> -> vector<8x128xf32>
    %119 = arith.addf %114, %118 : vector<8x128xf32>
    %120 = vector.extract_strided_slice %15 {offsets = [168, 0], sizes = [8, 16], strides = [1, 1]} : vector<200x16xf32> to vector<8x16xf32>
    %c21 = arith.constant 21 : index
    %c0_72 = arith.constant 0 : index
    %c0_73 = arith.constant 0 : index
    %121 = vector.load %arg4[%c21, %c0_72, %c0_73] : memref<25x16x128xf32, #tpu.memory_space<vmem>>, vector<1x16x128xf32>
    %122 = vector.shape_cast %121 : vector<1x16x128xf32> to vector<16x128xf32>
    %cst_74 = arith.constant dense<0.000000e+00> : vector<8x128xf32>
    %123 = tpu.matmul %120, %122, %cst_74 {dimension_numbers = #tpu.dot_dimension_numbers<[1], [0], [0], [1], [0, 0, 1, 1], [], []>} : vector<8x16xf32>, vector<16x128xf32>, vector<8x128xf32> -> vector<8x128xf32>
    %124 = arith.addf %119, %123 : vector<8x128xf32>
    %125 = vector.extract_strided_slice %15 {offsets = [176, 0], sizes = [8, 16], strides = [1, 1]} : vector<200x16xf32> to vector<8x16xf32>
    %c22 = arith.constant 22 : index
    %c0_75 = arith.constant 0 : index
    %c0_76 = arith.constant 0 : index
    %126 = vector.load %arg4[%c22, %c0_75, %c0_76] : memref<25x16x128xf32, #tpu.memory_space<vmem>>, vector<1x16x128xf32>
    %127 = vector.shape_cast %126 : vector<1x16x128xf32> to vector<16x128xf32>
    %cst_77 = arith.constant dense<0.000000e+00> : vector<8x128xf32>
    %128 = tpu.matmul %125, %127, %cst_77 {dimension_numbers = #tpu.dot_dimension_numbers<[1], [0], [0], [1], [0, 0, 1, 1], [], []>} : vector<8x16xf32>, vector<16x128xf32>, vector<8x128xf32> -> vector<8x128xf32>
    %129 = arith.addf %124, %128 : vector<8x128xf32>
    %130 = vector.extract_strided_slice %15 {offsets = [184, 0], sizes = [8, 16], strides = [1, 1]} : vector<200x16xf32> to vector<8x16xf32>
    %c23 = arith.constant 23 : index
    %c0_78 = arith.constant 0 : index
    %c0_79 = arith.constant 0 : index
    %131 = vector.load %arg4[%c23, %c0_78, %c0_79] : memref<25x16x128xf32, #tpu.memory_space<vmem>>, vector<1x16x128xf32>
    %132 = vector.shape_cast %131 : vector<1x16x128xf32> to vector<16x128xf32>
    %cst_80 = arith.constant dense<0.000000e+00> : vector<8x128xf32>
    %133 = tpu.matmul %130, %132, %cst_80 {dimension_numbers = #tpu.dot_dimension_numbers<[1], [0], [0], [1], [0, 0, 1, 1], [], []>} : vector<8x16xf32>, vector<16x128xf32>, vector<8x128xf32> -> vector<8x128xf32>
    %134 = arith.addf %129, %133 : vector<8x128xf32>
    %135 = vector.extract_strided_slice %15 {offsets = [192, 0], sizes = [8, 16], strides = [1, 1]} : vector<200x16xf32> to vector<8x16xf32>
    %c24 = arith.constant 24 : index
    %c0_81 = arith.constant 0 : index
    %c0_82 = arith.constant 0 : index
    %136 = vector.load %arg4[%c24, %c0_81, %c0_82] : memref<25x16x128xf32, #tpu.memory_space<vmem>>, vector<1x16x128xf32>
    %137 = vector.shape_cast %136 : vector<1x16x128xf32> to vector<16x128xf32>
    %cst_83 = arith.constant dense<0.000000e+00> : vector<8x128xf32>
    %138 = tpu.matmul %135, %137, %cst_83 {dimension_numbers = #tpu.dot_dimension_numbers<[1], [0], [0], [1], [0, 0, 1, 1], [], []>} : vector<8x16xf32>, vector<16x128xf32>, vector<8x128xf32> -> vector<8x128xf32>
    %139 = arith.addf %134, %138 : vector<8x128xf32>
    %c0_84 = arith.constant 0 : index
    %c0_85 = arith.constant 0 : index
    %140 = vector.load %arg5[%c0_84, %c0_85] : memref<1x128xf32, #tpu.memory_space<vmem>>, vector<1x128xf32>
    %141 = vector.broadcast %140 : vector<1x128xf32> to vector<8x128xf32>
    %142 = arith.addf %139, %141 : vector<8x128xf32>
    %cst_86 = arith.constant 0.000000e+00 : f32
    %143 = vector.broadcast %cst_86 : f32 to vector<8x128xf32>
    %144 = arith.maximumf %142, %143 : vector<8x128xf32>
    %c0_87 = arith.constant 0 : index
    %c0_88 = arith.constant 0 : index
    %145 = vector.load %arg6[%c0_87, %c0_88] : memref<128x128xf32, #tpu.memory_space<vmem>>, vector<128x128xf32>
    %cst_89 = arith.constant dense<0.000000e+00> : vector<8x128xf32>
    %146 = tpu.matmul %144, %145, %cst_89 {dimension_numbers = #tpu.dot_dimension_numbers<[1], [0], [0], [1], [0, 0, 1, 1], [], []>} : vector<8x128xf32>, vector<128x128xf32>, vector<8x128xf32> -> vector<8x128xf32>
    %c0_90 = arith.constant 0 : index
    %c0_91 = arith.constant 0 : index
    %147 = vector.load %arg7[%c0_90, %c0_91] : memref<1x128xf32, #tpu.memory_space<vmem>>, vector<1x128xf32>
    %148 = vector.broadcast %147 : vector<1x128xf32> to vector<8x128xf32>
    %149 = arith.addf %146, %148 : vector<8x128xf32>
    %cst_92 = arith.constant 0.000000e+00 : f32
    %150 = vector.broadcast %cst_92 : f32 to vector<8x128xf32>
    %151 = arith.maximumf %149, %150 : vector<8x128xf32>
    %c0_93 = arith.constant 0 : index
    %c0_94 = arith.constant 0 : index
    %152 = vector.load %arg8[%c0_93, %c0_94] : memref<128x128xf32, #tpu.memory_space<vmem>>, vector<128x128xf32>
    %cst_95 = arith.constant dense<0.000000e+00> : vector<8x128xf32>
    %153 = tpu.matmul %151, %152, %cst_95 {dimension_numbers = #tpu.dot_dimension_numbers<[1], [0], [0], [1], [0, 0, 1, 1], [], []>} : vector<8x128xf32>, vector<128x128xf32>, vector<8x128xf32> -> vector<8x128xf32>
    %c0_96 = arith.constant 0 : index
    %c0_97 = arith.constant 0 : index
    %154 = vector.load %arg9[%c0_96, %c0_97] : memref<1x128xf32, #tpu.memory_space<vmem>>, vector<1x128xf32>
    %155 = vector.broadcast %154 : vector<1x128xf32> to vector<8x128xf32>
    %156 = arith.addf %153, %155 : vector<8x128xf32>
    %c0_98 = arith.constant 0 : index
    %c0_99 = arith.constant 0 : index
    %157 = vector.load %arg10[%c0_98, %c0_99] : memref<8x128xf32, #tpu.memory_space<vmem>>, vector<8x128xf32>
    tpu.vector_store %arg10[%c0_98, %c0_99], %156 {strides = array<i32>} : memref<8x128xf32, #tpu.memory_space<vmem>>, vector<8x128xf32>,
    return
  }
  func.func @transform_0(%arg0: i32) -> (i32, i32, i32, i32) {
    %c0_i32 = arith.constant 0 : i32
    %c0_i32_0 = arith.constant 0 : i32
    %c0_i32_1 = arith.constant 0 : i32
    %c0_i32_2 = arith.constant 0 : i32
    return %c0_i32, %c0_i32_0, %arg0, %c0_i32_1 : i32, i32, i32, i32
  }
  func.func @transform_1(%arg0: i32) -> (i32, i32) {
    %c0_i32 = arith.constant 0 : i32
    %c0_i32_0 = arith.constant 0 : i32
    %c0_i32_1 = arith.constant 0 : i32
    return %c0_i32, %c0_i32_0 : i32, i32
  }
  func.func @transform_2(%arg0: i32) -> (i32, i32) {
    %c0_i32 = arith.constant 0 : i32
    %c0_i32_0 = arith.constant 0 : i32
    %c0_i32_1 = arith.constant 0 : i32
    return %c0_i32, %c0_i32_0 : i32, i32
  }
  func.func @transform_3(%arg0: i32) -> (i32, i32, i32) {
    %c0_i32 = arith.constant 0 : i32
    %c0_i32_0 = arith.constant 0 : i32
    %c0_i32_1 = arith.constant 0 : i32
    %c0_i32_2 = arith.constant 0 : i32
    return %c0_i32, %c0_i32_0, %c0_i32_1 : i32, i32, i32
  }
  func.func @transform_4(%arg0: i32) -> (i32, i32) {
    %c0_i32 = arith.constant 0 : i32
    %c0_i32_0 = arith.constant 0 : i32
    %c0_i32_1 = arith.constant 0 : i32
    return %c0_i32, %c0_i32_0 : i32, i32
  }
  func.func @transform_5(%arg0: i32) -> (i32, i32) {
    %c0_i32 = arith.constant 0 : i32
    %c0_i32_0 = arith.constant 0 : i32
    %c0_i32_1 = arith.constant 0 : i32
    return %c0_i32, %c0_i32_0 : i32, i32
  }
  func.func @transform_6(%arg0: i32) -> (i32, i32) {
    %c0_i32 = arith.constant 0 : i32
    %c0_i32_0 = arith.constant 0 : i32
    %c0_i32_1 = arith.constant 0 : i32
    return %c0_i32, %c0_i32_0 : i32, i32
  }
  func.func @transform_7(%arg0: i32) -> (i32, i32) {
    %c0_i32 = arith.constant 0 : i32
    %c0_i32_0 = arith.constant 0 : i32
    %c0_i32_1 = arith.constant 0 : i32
    return %c0_i32, %c0_i32_0 : i32, i32
  }
  func.func @transform_8(%arg0: i32) -> (i32, i32) {
    %c0_i32 = arith.constant 0 : i32
    %c0_i32_0 = arith.constant 0 : i32
    %c0_i32_1 = arith.constant 0 : i32
    return %c0_i32, %c0_i32_0 : i32, i32
  }
  func.func @transform_9(%arg0: i32) -> (i32, i32) {
    %c0_i32 = arith.constant 0 : i32
    %c0_i32_0 = arith.constant 0 : i32
    return %arg0, %c0_i32 : i32, i32
  }
}

</mosaic_0001>

<llo_original>
// kernel: lenet_forward.2
$region0: #{lenet_forward.2}
  #allocation0 [shape = 'u32[]', space=smem, size = 0x4, offset = 0x4, fixed_abs, tag = 'smem constant byte address 0x4 - core index']
  #allocation1 [shape = 'u32[72,128]{1,0:T(1,128)}', space=vmem, size = 0x9000, scoped, tag = 'internal scratch']
  %s0 = inlined_call_operand.vmem [shape: f32[4,1568,75], index: 0, kind: input, shape index: {}]
  %s1 = inlined_call_operand.vmem [shape: f32[75,6], index: 1, kind: input, shape index: {}]
  %s2 = inlined_call_operand.vmem [shape: f32[1,6], index: 2, kind: input, shape index: {}]
  %s3 = inlined_call_operand.vmem [shape: f32[1568,6], index: 3, kind: output, shape index: {}]
  %s4 = sld [smem:[#allocation0]]
  $region22: #{lenet_forward.2} parent=0
    _
  %s6 = ssub.s32 1, %s4
  %s7 = scalar_select 0, %s6, %s4
  // Predicated region
  $region2: #{lenet_forward.2} parent=0 // pred_check
    _
  $region3: #{lenet_forward.2} parent=0 // pred_check_branch
    %9 = sbr.rel (0) target = $region5
  $region4: #{lenet_forward.2} parent=0 // pred_region
    _
  $region5: #{lenet_forward.2} parent=0 // pred_fallthru
    _
  // Predicated region
  $region6: #{lenet_forward.2} parent=0 // pred_check
    _
  $region7: #{lenet_forward.2} parent=0 // pred_check_branch
    %11 = sbr.rel (0) target = $region9
  $region8: #{lenet_forward.2} parent=0 // pred_region
    _
  $region9: #{lenet_forward.2} parent=0 // pred_fallthru
    _
  // Predicated region
  $region10: #{lenet_forward.2} parent=0 // pred_check
    _
  $region11: #{lenet_forward.2} parent=0 // pred_check_branch
    %13 = sbr.rel (0) target = $region13
  $region12: #{lenet_forward.2} parent=0 // pred_region
    _
  $region13: #{lenet_forward.2} parent=0 // pred_fallthru
    _
  %v14 = vld [vmem:[%s0] sm:$0xff]
  %v15 = vld [vmem:[%s0 + $0x8] sm:$0xff]
  %v16 = vld [vmem:[%s0 + $0x10] sm:$0xff]
  %v17 = vld [vmem:[%s0 + $0x18] sm:$0xff]
  %v18 = vld [vmem:[%s0 + $0x20] sm:$0xff]
  %v19 = vld [vmem:[%s0 + $0x28] sm:$0xff]
  %v20 = vld [vmem:[%s0 + $0x30] sm:$0xff]
  %v21 = vld [vmem:[%s0 + $0x38] sm:$0xff]
  %v22 = vld [vmem:[%s0 + $0x40] sm:$0xff]
  %v23 = vld [vmem:[%s0 + $0x48] sm:$0xff]
  %v24 = vld [vmem:[%s0 + $0x50] sm:$0xff]
  %v25 = vld [vmem:[%s0 + $0x58] sm:$0xff]
  %v26 = vld [vmem:[%s0 + $0x60] sm:$0xff]
  %v27 = vld [vmem:[%s0 + $0x68] sm:$0xff]
  %v28 = vld [vmem:[%s0 + $0x70] sm:$0xff]
  %v29 = vld [vmem:[%s0 + $0x78] sm:$0xff]
  %v30 = vld [vmem:[%s0 + $0x80] sm:$0xff]
  %v31 = vld [vmem:[%s0 + $0x88] sm:$0xff]
  %v32 = vld [vmem:[%s0 + $0x90] sm:$0xff]
  %v33 = vld [vmem:[%s0 + $0x98] sm:$0xff]
  %v34 = vld [vmem:[%s0 + $0xa0] sm:$0xff]
  %v35 = vld [vmem:[%s0 + $0xa8] sm:$0xff]
  %v36 = vld [vmem:[%s0 + $0xb0] sm:$0xff]
  %v37 = vld [vmem:[%s0 + $0xb8] sm:$0xff]
  %v38 = vld [vmem:[%s0 + $0xc0] sm:$0xff]
  %v39 = vld [vmem:[%s0 + $0xc8] sm:$0xff]
  %v40 = vld [vmem:[%s0 + $0xd0] sm:$0xff]
  %v41 = vld [vmem:[%s0 + $0xd8] sm:$0xff]
  %v42 = vld [vmem:[%s0 + $0xe0] sm:$0xff]
  %v43 = vld [vmem:[%s0 + $0xe8] sm:$0xff]
  %v44 = vld [vmem:[%s0 + $0xf0] sm:$0xff]
  %v45 = vld [vmem:[%s0 + $0xf8] sm:$0xff]
  %v46 = vld [vmem:[%s0 + $0x100] sm:$0xff]
  %v47 = vld [vmem:[%s0 + $0x108] sm:$0xff]
  %v48 = vld [vmem:[%s0 + $0x110] sm:$0xff]
  %v49 = vld [vmem:[%s0 + $0x118] sm:$0xff]
  %v50 = vld [vmem:[%s0 + $0x120] sm:$0xff]
  %v51 = vld [vmem:[%s0 + $0x128] sm:$0xff]
  %v52 = vld [vmem:[%s0 + $0x130] sm:$0xff]
  %v53 = vld [vmem:[%s0 + $0x138] sm:$0xff]
  %v54 = vld [vmem:[%s0 + $0x140] sm:$0xff]
  %v55 = vld [vmem:[%s0 + $0x148] sm:$0xff]
  %v56 = vld [vmem:[%s0 + $0x150] sm:$0xff]
  %v57 = vld [vmem:[%s0 + $0x158] sm:$0xff]
  %v58 = vld [vmem:[%s0 + $0x160] sm:$0xff]
  %v59 = vld [vmem:[%s0 + $0x168] sm:$0xff]
  %v60 = vld [vmem:[%s0 + $0x170] sm:$0xff]
  %v61 = vld [vmem:[%s0 + $0x178] sm:$0xff]
  %v62 = vld [vmem:[%s0 + $0x180] sm:$0xff]
  %v63 = vld [vmem:[%s0 + $0x188] sm:$0xff]
  %v64 = vld [vmem:[%s0 + $0x190] sm:$0xff]
  %v65 = vld [vmem:[%s0 + $0x198] sm:$0xff]
  %v66 = vld [vmem:[%s0 + $0x1a0] sm:$0xff]
  %v67 = vld [vmem:[%s0 + $0x1a8] sm:$0xff]
  %v68 = vld [vmem:[%s0 + $0x1b0] sm:$0xff]
  %v69 = vld [vmem:[%s0 + $0x1b8] sm:$0xff]
  %v70 = vld [vmem:[%s0 + $0x1c0] sm:$0xff]
  %v71 = vld [vmem:[%s0 + $0x1c8] sm:$0xff]
  %v72 = vld [vmem:[%s0 + $0x1d0] sm:$0xff]
  %v73 = vld [vmem:[%s0 + $0x1d8] sm:$0xff]
  %v74 = vld [vmem:[%s0 + $0x1e0] sm:$0xff]
  %v75 = vld [vmem:[%s0 + $0x1e8] sm:$0xff]
  %v76 = vld [vmem:[%s0 + $0x1f0] sm:$0xff]
  %v77 = vld [vmem:[%s0 + $0x1f8] sm:$0xff]
  %v78 = vld [vmem:[%s0 + $0x200] sm:$0xff]
  %v79 = vld [vmem:[%s0 + $0x208] sm:$0xff]
  %v80 = vld [vmem:[%s0 + $0x210] sm:$0xff]
  %v81 = vld [vmem:[%s0 + $0x218] sm:$0xff]
  %v82 = vld [vmem:[%s0 + $0x220] sm:$0xff]
  %v83 = vld [vmem:[%s0 + $0x228] sm:$0xff]
  %v84 = vld [vmem:[%s0 + $0x230] sm:$0xff]
  %v85 = vld [vmem:[%s0 + $0x238] sm:$0xff]
  %v86 = vld [vmem:[%s0 + $0x240] sm:$0xff]
  %v87 = vld [vmem:[%s0 + $0x248] sm:$0xff]
  %v88 = vld [vmem:[%s0 + $0x250] sm:$0xff]
  %v89 = vld [vmem:[%s0 + $0x258] sm:$0xff]
  %v90 = vld [vmem:[%s0 + $0x260] sm:$0xff]
  %v91 = vld [vmem:[%s0 + $0x268] sm:$0xff]
  %v92 = vld [vmem:[%s0 + $0x270] sm:$0xff]
  %v93 = vld [vmem:[%s0 + $0x278] sm:$0xff]
  %v94 = vld [vmem:[%s0 + $0x280] sm:$0xff]
  %v95 = vld [vmem:[%s0 + $0x288] sm:$0xff]
  %v96 = vld [vmem:[%s0 + $0x290] sm:$0xff]
  %v97 = vld [vmem:[%s0 + $0x298] sm:$0xff]
  %v98 = vld [vmem:[%s0 + $0x2a0] sm:$0xff]
  %v99 = vld [vmem:[%s0 + $0x2a8] sm:$0xff]
  %v100 = vld [vmem:[%s0 + $0x2b0] sm:$0xff]
  %v101 = vld [vmem:[%s0 + $0x2b8] sm:$0xff]
  %v102 = vld [vmem:[%s0 + $0x2c0] sm:$0xff]
  %v103 = vld [vmem:[%s0 + $0x2c8] sm:$0xff]
  %v104 = vld [vmem:[%s0 + $0x2d0] sm:$0xff]
  %v105 = vld [vmem:[%s0 + $0x2d8] sm:$0xff]
  %v106 = vld [vmem:[%s0 + $0x2e0] sm:$0xff]
  %v107 = vld [vmem:[%s0 + $0x2e8] sm:$0xff]
  %v108 = vld [vmem:[%s0 + $0x2f0] sm:$0xff]
  %v109 = vld [vmem:[%s0 + $0x2f8] sm:$0xff]
  %v110 = vld [vmem:[%s0 + $0x300] sm:$0xff]
  %v111 = vld [vmem:[%s0 + $0x308] sm:$0xff]
  %v112 = vld [vmem:[%s0 + $0x310] sm:$0xff]
  %v113 = vld [vmem:[%s0 + $0x318] sm:$0xff]
  %v114 = vld [vmem:[%s0 + $0x320] sm:$0xff]
  %v115 = vld [vmem:[%s0 + $0x328] sm:$0xff]
  %v116 = vld [vmem:[%s0 + $0x330] sm:$0xff]
  %v117 = vld [vmem:[%s0 + $0x338] sm:$0xff]
  %v118 = vld [vmem:[%s0 + $0x340] sm:$0xff]
  %v119 = vld [vmem:[%s0 + $0x348] sm:$0xff]
  %v120 = vld [vmem:[%s0 + $0x350] sm:$0xff]
  %v121 = vld [vmem:[%s0 + $0x358] sm:$0xff]
  %v122 = vld [vmem:[%s0 + $0x360] sm:$0xff]
  %v123 = vld [vmem:[%s0 + $0x368] sm:$0xff]
  %v124 = vld [vmem:[%s0 + $0x370] sm:$0xff]
  %v125 = vld [vmem:[%s0 + $0x378] sm:$0xff]
  %v126 = vld [vmem:[%s0 + $0x380] sm:$0xff]
  %v127 = vld [vmem:[%s0 + $0x388] sm:$0xff]
  %v128 = vld [vmem:[%s0 + $0x390] sm:$0xff]
  %v129 = vld [vmem:[%s0 + $0x398] sm:$0xff]
  %v130 = vld [vmem:[%s0 + $0x3a0] sm:$0xff]
  %v131 = vld [vmem:[%s0 + $0x3a8] sm:$0xff]
  %v132 = vld [vmem:[%s0 + $0x3b0] sm:$0xff]
  %v133 = vld [vmem:[%s0 + $0x3b8] sm:$0xff]
  %v134 = vld [vmem:[%s0 + $0x3c0] sm:$0xff]
  %v135 = vld [vmem:[%s0 + $0x3c8] sm:$0xff]
  %v136 = vld [vmem:[%s0 + $0x3d0] sm:$0xff]
  %v137 = vld [vmem:[%s0 + $0x3d8] sm:$0xff]
  %v138 = vld [vmem:[%s0 + $0x3e0] sm:$0xff]
  %v139 = vld [vmem:[%s0 + $0x3e8] sm:$0xff]
  %v140 = vld [vmem:[%s0 + $0x3f0] sm:$0xff]
  %v141 = vld [vmem:[%s0 + $0x3f8] sm:$0xff]
  %v142 = vld [vmem:[%s0 + $0x400] sm:$0xff]
  %v143 = vld [vmem:[%s0 + $0x408] sm:$0xff]
  %v144 = vld [vmem:[%s0 + $0x410] sm:$0xff]
  %v145 = vld [vmem:[%s0 + $0x418] sm:$0xff]
  %v146 = vld [vmem:[%s0 + $0x420] sm:$0xff]
  %v147 = vld [vmem:[%s0 + $0x428] sm:$0xff]
  %v148 = vld [vmem:[%s0 + $0x430] sm:$0xff]
  %v149 = vld [vmem:[%s0 + $0x438] sm:$0xff]
  %v150 = vld [vmem:[%s0 + $0x440] sm:$0xff]
  %v151 = vld [vmem:[%s0 + $0x448] sm:$0xff]
  %v152 = vld [vmem:[%s0 + $0x450] sm:$0xff]
  %v153 = vld [vmem:[%s0 + $0x458] sm:$0xff]
  %v154 = vld [vmem:[%s0 + $0x460] sm:$0xff]
  %v155 = vld [vmem:[%s0 + $0x468] sm:$0xff]
  %v156 = vld [vmem:[%s0 + $0x470] sm:$0xff]
  %v157 = vld [vmem:[%s0 + $0x478] sm:$0xff]
  %v158 = vld [vmem:[%s0 + $0x480] sm:$0xff]
  %v159 = vld [vmem:[%s0 + $0x488] sm:$0xff]
  %v160 = vld [vmem:[%s0 + $0x490] sm:$0xff]
  %v161 = vld [vmem:[%s0 + $0x498] sm:$0xff]
  %v162 = vld [vmem:[%s0 + $0x4a0] sm:$0xff]
  %v163 = vld [vmem:[%s0 + $0x4a8] sm:$0xff]
  %v164 = vld [vmem:[%s0 + $0x4b0] sm:$0xff]
  %v165 = vld [vmem:[%s0 + $0x4b8] sm:$0xff]
  %v166 = vld [vmem:[%s0 + $0x4c0] sm:$0xff]
  %v167 = vld [vmem:[%s0 + $0x4c8] sm:$0xff]
  %v168 = vld [vmem:[%s0 + $0x4d0] sm:$0xff]
  %v169 = vld [vmem:[%s0 + $0x4d8] sm:$0xff]
  %v170 = vld [vmem:[%s0 + $0x4e0] sm:$0xff]
  %v171 = vld [vmem:[%s0 + $0x4e8] sm:$0xff]
  %v172 = vld [vmem:[%s0 + $0x4f0] sm:$0xff]
  %v173 = vld [vmem:[%s0 + $0x4f8] sm:$0xff]
  %v174 = vld [vmem:[%s0 + $0x500] sm:$0xff]
  %v175 = vld [vmem:[%s0 + $0x508] sm:$0xff]
  %v176 = vld [vmem:[%s0 + $0x510] sm:$0xff]
  %v177 = vld [vmem:[%s0 + $0x518] sm:$0xff]
  %v178 = vld [vmem:[%s0 + $0x520] sm:$0xff]
  %v179 = vld [vmem:[%s0 + $0x528] sm:$0xff]
  %v180 = vld [vmem:[%s0 + $0x530] sm:$0xff]
  %v181 = vld [vmem:[%s0 + $0x538] sm:$0xff]
  %v182 = vld [vmem:[%s0 + $0x540] sm:$0xff]
  %v183 = vld [vmem:[%s0 + $0x548] sm:$0xff]
  %v184 = vld [vmem:[%s0 + $0x550] sm:$0xff]
  %v185 = vld [vmem:[%s0 + $0x558] sm:$0xff]
  %v186 = vld [vmem:[%s0 + $0x560] sm:$0xff]
  %v187 = vld [vmem:[%s0 + $0x568] sm:$0xff]
  %v188 = vld [vmem:[%s0 + $0x570] sm:$0xff]
  %v189 = vld [vmem:[%s0 + $0x578] sm:$0xff]
  %v190 = vld [vmem:[%s0 + $0x580] sm:$0xff]
  %v191 = vld [vmem:[%s0 + $0x588] sm:$0xff]
  %v192 = vld [vmem:[%s0 + $0x590] sm:$0xff]
  %v193 = vld [vmem:[%s0 + $0x598] sm:$0xff]
  %v194 = vld [vmem:[%s0 + $0x5a0] sm:$0xff]
  %v195 = vld [vmem:[%s0 + $0x5a8] sm:$0xff]
  %v196 = vld [vmem:[%s0 + $0x5b0] sm:$0xff]
  %v197 = vld [vmem:[%s0 + $0x5b8] sm:$0xff]
  %v198 = vld [vmem:[%s0 + $0x5c0] sm:$0xff]
  %v199 = vld [vmem:[%s0 + $0x5c8] sm:$0xff]
  %v200 = vld [vmem:[%s0 + $0x5d0] sm:$0xff]
  %v201 = vld [vmem:[%s0 + $0x5d8] sm:$0xff]
  %v202 = vld [vmem:[%s0 + $0x5e0] sm:$0xff]
  %v203 = vld [vmem:[%s0 + $0x5e8] sm:$0xff]
  %v204 = vld [vmem:[%s0 + $0x5f0] sm:$0xff]
  %v205 = vld [vmem:[%s0 + $0x5f8] sm:$0xff]
  %v206 = vld [vmem:[%s0 + $0x600] sm:$0xff]
  %v207 = vld [vmem:[%s0 + $0x608] sm:$0xff]
  %v208 = vld [vmem:[%s0 + $0x610] sm:$0xff]
  %v209 = vld [vmem:[%s0 + $0x618] sm:$0xff]
  %v210 = vld [vmem:[%s0 + $0x620] sm:$0xff]
  %v211 = vld [vmem:[%s0 + $0x628] sm:$0xff]
  %v212 = vld [vmem:[%s0 + $0x630] sm:$0xff]
  %v213 = vld [vmem:[%s0 + $0x638] sm:$0xff]
  %v214 = vld [vmem:[%s0 + $0x640] sm:$0xff]
  %v215 = vld [vmem:[%s0 + $0x648] sm:$0xff]
  %v216 = vld [vmem:[%s0 + $0x650] sm:$0xff]
  %v217 = vld [vmem:[%s0 + $0x658] sm:$0xff]
  %v218 = vld [vmem:[%s0 + $0x660] sm:$0xff]
  %v219 = vld [vmem:[%s0 + $0x668] sm:$0xff]
  %v220 = vld [vmem:[%s0 + $0x670] sm:$0xff]
  %v221 = vld [vmem:[%s0 + $0x678] sm:$0xff]
  %v222 = vld [vmem:[%s0 + $0x680] sm:$0xff]
  %v223 = vld [vmem:[%s0 + $0x688] sm:$0xff]
  %v224 = vld [vmem:[%s0 + $0x690] sm:$0xff]
  %v225 = vld [vmem:[%s0 + $0x698] sm:$0xff]
  %v226 = vld [vmem:[%s0 + $0x6a0] sm:$0xff]
  %v227 = vld [vmem:[%s0 + $0x6a8] sm:$0xff]
  %v228 = vld [vmem:[%s0 + $0x6b0] sm:$0xff]
  %v229 = vld [vmem:[%s0 + $0x6b8] sm:$0xff]
  %v230 = vld [vmem:[%s0 + $0x6c0] sm:$0xff]
  %v231 = vld [vmem:[%s0 + $0x6c8] sm:$0xff]
  %v232 = vld [vmem:[%s0 + $0x6d0] sm:$0xff]
  %v233 = vld [vmem:[%s0 + $0x6d8] sm:$0xff]
  %v234 = vld [vmem:[%s0 + $0x6e0] sm:$0xff]
  %v235 = vld [vmem:[%s0 + $0x6e8] sm:$0xff]
  %v236 = vld [vmem:[%s0 + $0x6f0] sm:$0xff]
  %v237 = vld [vmem:[%s0 + $0x6f8] sm:$0xff]
  %v238 = vld [vmem:[%s0 + $0x700] sm:$0xff]
  %v239 = vld [vmem:[%s0 + $0x708] sm:$0xff]
  %v240 = vld [vmem:[%s0 + $0x710] sm:$0xff]
  %v241 = vld [vmem:[%s0 + $0x718] sm:$0xff]
  %v242 = vld [vmem:[%s0 + $0x720] sm:$0xff]
  %v243 = vld [vmem:[%s0 + $0x728] sm:$0xff]
  %v244 = vld [vmem:[%s0 + $0x730] sm:$0xff]
  %v245 = vld [vmem:[%s0 + $0x738] sm:$0xff]
  %v246 = vld [vmem:[%s0 + $0x740] sm:$0xff]
  %v247 = vld [vmem:[%s0 + $0x748] sm:$0xff]
  %v248 = vld [vmem:[%s0 + $0x750] sm:$0xff]
  %v249 = vld [vmem:[%s0 + $0x758] sm:$0xff]
  %v250 = vld [vmem:[%s0 + $0x760] sm:$0xff]
  %v251 = vld [vmem:[%s0 + $0x768] sm:$0xff]
  %v252 = vld [vmem:[%s0 + $0x770] sm:$0xff]
  %v253 = vld [vmem:[%s0 + $0x778] sm:$0xff]
  %v254 = vld [vmem:[%s0 + $0x780] sm:$0xff]
  %v255 = vld [vmem:[%s0 + $0x788] sm:$0xff]
  %v256 = vld [vmem:[%s0 + $0x790] sm:$0xff]
  %v257 = vld [vmem:[%s0 + $0x798] sm:$0xff]
  %v258 = vld [vmem:[%s0 + $0x7a0] sm:$0xff]
  %v259 = vld [vmem:[%s0 + $0x7a8] sm:$0xff]
  %v260 = vld [vmem:[%s0 + $0x7b0] sm:$0xff]
  %v261 = vld [vmem:[%s0 + $0x7b8] sm:$0xff]
  %v262 = vld [vmem:[%s0 + $0x7c0] sm:$0xff]
  %v263 = vld [vmem:[%s0 + $0x7c8] sm:$0xff]
  %v264 = vld [vmem:[%s0 + $0x7d0] sm:$0xff]
  %v265 = vld [vmem:[%s0 + $0x7d8] sm:$0xff]
  %v266 = vld [vmem:[%s0 + $0x7e0] sm:$0xff]
  %v267 = vld [vmem:[%s0 + $0x7e8] sm:$0xff]
  %v268 = vld [vmem:[%s0 + $0x7f0] sm:$0xff]
  %v269 = vld [vmem:[%s0 + $0x7f8] sm:$0xff]
  %v270 = vld [vmem:[%s0 + $0x800] sm:$0xff]
  %v271 = vld [vmem:[%s0 + $0x808] sm:$0xff]
  %v272 = vld [vmem:[%s0 + $0x810] sm:$0xff]
  %v273 = vld [vmem:[%s0 + $0x818] sm:$0xff]
  %v274 = vld [vmem:[%s0 + $0x820] sm:$0xff]
  %v275 = vld [vmem:[%s0 + $0x828] sm:$0xff]
  %v276 = vld [vmem:[%s0 + $0x830] sm:$0xff]
  %v277 = vld [vmem:[%s0 + $0x838] sm:$0xff]
  %v278 = vld [vmem:[%s0 + $0x840] sm:$0xff]
  %v279 = vld [vmem:[%s0 + $0x848] sm:$0xff]
  %v280 = vld [vmem:[%s0 + $0x850] sm:$0xff]
  %v281 = vld [vmem:[%s0 + $0x858] sm:$0xff]
  %v282 = vld [vmem:[%s0 + $0x860] sm:$0xff]
  %v283 = vld [vmem:[%s0 + $0x868] sm:$0xff]
  %v284 = vld [vmem:[%s0 + $0x870] sm:$0xff]
  %v285 = vld [vmem:[%s0 + $0x878] sm:$0xff]
  %v286 = vld [vmem:[%s0 + $0x880] sm:$0xff]
  %v287 = vld [vmem:[%s0 + $0x888] sm:$0xff]
  %v288 = vld [vmem:[%s0 + $0x890] sm:$0xff]
  %v289 = vld [vmem:[%s0 + $0x898] sm:$0xff]
  %v290 = vld [vmem:[%s0 + $0x8a0] sm:$0xff]
  %v291 = vld [vmem:[%s0 + $0x8a8] sm:$0xff]
  %v292 = vld [vmem:[%s0 + $0x8b0] sm:$0xff]
  %v293 = vld [vmem:[%s0 + $0x8b8] sm:$0xff]
  %v294 = vld [vmem:[%s0 + $0x8c0] sm:$0xff]
  %v295 = vld [vmem:[%s0 + $0x8c8] sm:$0xff]
  %v296 = vld [vmem:[%s0 + $0x8d0] sm:$0xff]
  %v297 = vld [vmem:[%s0 + $0x8d8] sm:$0xff]
  %v298 = vld [vmem:[%s0 + $0x8e0] sm:$0xff]
  %v299 = vld [vmem:[%s0 + $0x8e8] sm:$0xff]
  %v300 = vld [vmem:[%s0 + $0x8f0] sm:$0xff]
  %v301 = vld [vmem:[%s0 + $0x8f8] sm:$0xff]
  %v302 = vld [vmem:[%s0 + $0x900] sm:$0xff]
  %v303 = vld [vmem:[%s0 + $0x908] sm:$0xff]
  %v304 = vld [vmem:[%s0 + $0x910] sm:$0xff]
  %v305 = vld [vmem:[%s0 + $0x918] sm:$0xff]
  %v306 = vld [vmem:[%s0 + $0x920] sm:$0xff]
  %v307 = vld [vmem:[%s0 + $0x928] sm:$0xff]
  %v308 = vld [vmem:[%s0 + $0x930] sm:$0xff]
  %v309 = vld [vmem:[%s0 + $0x938] sm:$0xff]
  %v310 = vld [vmem:[%s0 + $0x940] sm:$0xff]
  %v311 = vld [vmem:[%s0 + $0x948] sm:$0xff]
  %v312 = vld [vmem:[%s0 + $0x950] sm:$0xff]
  %v313 = vld [vmem:[%s0 + $0x958] sm:$0xff]
  %v314 = vld [vmem:[%s0 + $0x960] sm:$0xff]
  %v315 = vld [vmem:[%s0 + $0x968] sm:$0xff]
  %v316 = vld [vmem:[%s0 + $0x970] sm:$0xff]
  %v317 = vld [vmem:[%s0 + $0x978] sm:$0xff]
  %v318 = vld [vmem:[%s0 + $0x980] sm:$0xff]
  %v319 = vld [vmem:[%s0 + $0x988] sm:$0xff]
  %v320 = vld [vmem:[%s0 + $0x990] sm:$0xff]
  %v321 = vld [vmem:[%s0 + $0x998] sm:$0xff]
  %v322 = vld [vmem:[%s0 + $0x9a0] sm:$0xff]
  %v323 = vld [vmem:[%s0 + $0x9a8] sm:$0xff]
  %v324 = vld [vmem:[%s0 + $0x9b0] sm:$0xff]
  %v325 = vld [vmem:[%s0 + $0x9b8] sm:$0xff]
  %v326 = vld [vmem:[%s0 + $0x9c0] sm:$0xff]
  %v327 = vld [vmem:[%s0 + $0x9c8] sm:$0xff]
  %v328 = vld [vmem:[%s0 + $0x9d0] sm:$0xff]
  %v329 = vld [vmem:[%s0 + $0x9d8] sm:$0xff]
  %v330 = vld [vmem:[%s0 + $0x9e0] sm:$0xff]
  %v331 = vld [vmem:[%s0 + $0x9e8] sm:$0xff]
  %v332 = vld [vmem:[%s0 + $0x9f0] sm:$0xff]
  %v333 = vld [vmem:[%s0 + $0x9f8] sm:$0xff]
  %v334 = vld [vmem:[%s0 + $0xa00] sm:$0xff]
  %v335 = vld [vmem:[%s0 + $0xa08] sm:$0xff]
  %v336 = vld [vmem:[%s0 + $0xa10] sm:$0xff]
  %v337 = vld [vmem:[%s0 + $0xa18] sm:$0xff]
  %v338 = vld [vmem:[%s0 + $0xa20] sm:$0xff]
  %v339 = vld [vmem:[%s0 + $0xa28] sm:$0xff]
  %v340 = vld [vmem:[%s0 + $0xa30] sm:$0xff]
  %v341 = vld [vmem:[%s0 + $0xa38] sm:$0xff]
  %v342 = vld [vmem:[%s0 + $0xa40] sm:$0xff]
  %v343 = vld [vmem:[%s0 + $0xa48] sm:$0xff]
  %v344 = vld [vmem:[%s0 + $0xa50] sm:$0xff]
  %v345 = vld [vmem:[%s0 + $0xa58] sm:$0xff]
  %v346 = vld [vmem:[%s0 + $0xa60] sm:$0xff]
  %v347 = vld [vmem:[%s0 + $0xa68] sm:$0xff]
  %v348 = vld [vmem:[%s0 + $0xa70] sm:$0xff]
  %v349 = vld [vmem:[%s0 + $0xa78] sm:$0xff]
  %v350 = vld [vmem:[%s0 + $0xa80] sm:$0xff]
  %v351 = vld [vmem:[%s0 + $0xa88] sm:$0xff]
  %v352 = vld [vmem:[%s0 + $0xa90] sm:$0xff]
  %v353 = vld [vmem:[%s0 + $0xa98] sm:$0xff]
  %v354 = vld [vmem:[%s0 + $0xaa0] sm:$0xff]
  %v355 = vld [vmem:[%s0 + $0xaa8] sm:$0xff]
  %v356 = vld [vmem:[%s0 + $0xab0] sm:$0xff]
  %v357 = vld [vmem:[%s0 + $0xab8] sm:$0xff]
  %v358 = vld [vmem:[%s0 + $0xac0] sm:$0xff]
  %v359 = vld [vmem:[%s0 + $0xac8] sm:$0xff]
  %v360 = vld [vmem:[%s0 + $0xad0] sm:$0xff]
  %v361 = vld [vmem:[%s0 + $0xad8] sm:$0xff]
  %v362 = vld [vmem:[%s0 + $0xae0] sm:$0xff]
  %v363 = vld [vmem:[%s0 + $0xae8] sm:$0xff]
  %v364 = vld [vmem:[%s0 + $0xaf0] sm:$0xff]
  %v365 = vld [vmem:[%s0 + $0xaf8] sm:$0xff]
  %v366 = vld [vmem:[%s0 + $0xb00] sm:$0xff]
  %v367 = vld [vmem:[%s0 + $0xb08] sm:$0xff]
  %v368 = vld [vmem:[%s0 + $0xb10] sm:$0xff]
  %v369 = vld [vmem:[%s0 + $0xb18] sm:$0xff]
  %v370 = vld [vmem:[%s0 + $0xb20] sm:$0xff]
  %v371 = vld [vmem:[%s0 + $0xb28] sm:$0xff]
  %v372 = vld [vmem:[%s0 + $0xb30] sm:$0xff]
  %v373 = vld [vmem:[%s0 + $0xb38] sm:$0xff]
  %v374 = vld [vmem:[%s0 + $0xb40] sm:$0xff]
  %v375 = vld [vmem:[%s0 + $0xb48] sm:$0xff]
  %v376 = vld [vmem:[%s0 + $0xb50] sm:$0xff]
  %v377 = vld [vmem:[%s0 + $0xb58] sm:$0xff]
  %v378 = vld [vmem:[%s0 + $0xb60] sm:$0xff]
  %v379 = vld [vmem:[%s0 + $0xb68] sm:$0xff]
  %v380 = vld [vmem:[%s0 + $0xb70] sm:$0xff]
  %v381 = vld [vmem:[%s0 + $0xb78] sm:$0xff]
  %v382 = vld [vmem:[%s0 + $0xb80] sm:$0xff]
  %v383 = vld [vmem:[%s0 + $0xb88] sm:$0xff]
  %v384 = vld [vmem:[%s0 + $0xb90] sm:$0xff]
  %v385 = vld [vmem:[%s0 + $0xb98] sm:$0xff]
  %v386 = vld [vmem:[%s0 + $0xba0] sm:$0xff]
  %v387 = vld [vmem:[%s0 + $0xba8] sm:$0xff]
  %v388 = vld [vmem:[%s0 + $0xbb0] sm:$0xff]
  %v389 = vld [vmem:[%s0 + $0xbb8] sm:$0xff]
  %v390 = vld [vmem:[%s0 + $0xbc0] sm:$0xff]
  %v391 = vld [vmem:[%s0 + $0xbc8] sm:$0xff]
  %v392 = vld [vmem:[%s0 + $0xbd0] sm:$0xff]
  %v393 = vld [vmem:[%s0 + $0xbd8] sm:$0xff]
  %v394 = vld [vmem:[%s0 + $0xbe0] sm:$0xff]
  %v395 = vld [vmem:[%s0 + $0xbe8] sm:$0xff]
  %v396 = vld [vmem:[%s0 + $0xbf0] sm:$0xff]
  %v397 = vld [vmem:[%s0 + $0xbf8] sm:$0xff]
  %v398 = vld [vmem:[%s0 + $0xc00] sm:$0xff]
  %v399 = vld [vmem:[%s0 + $0xc08] sm:$0xff]
  %v400 = vld [vmem:[%s0 + $0xc10] sm:$0xff]
  %v401 = vld [vmem:[%s0 + $0xc18] sm:$0xff]
  %v402 = vld [vmem:[%s0 + $0xc20] sm:$0xff]
  %v403 = vld [vmem:[%s0 + $0xc28] sm:$0xff]
  %v404 = vld [vmem:[%s0 + $0xc30] sm:$0xff]
  %v405 = vld [vmem:[%s0 + $0xc38] sm:$0xff]
  %v406 = vld [vmem:[%s0 + $0xc40] sm:$0xff]
  %v407 = vld [vmem:[%s0 + $0xc48] sm:$0xff]
  %v408 = vld [vmem:[%s0 + $0xc50] sm:$0xff]
  %v409 = vld [vmem:[%s0 + $0xc58] sm:$0xff]
  %v410 = vld [vmem:[%s0 + $0xc60] sm:$0xff]
  %v411 = vld [vmem:[%s0 + $0xc68] sm:$0xff]
  %v412 = vld [vmem:[%s0 + $0xc70] sm:$0xff]
  %v413 = vld [vmem:[%s0 + $0xc78] sm:$0xff]
  %v414 = vld [vmem:[%s0 + $0xc80] sm:$0xff]
  %v415 = vld [vmem:[%s0 + $0xc88] sm:$0xff]
  %v416 = vld [vmem:[%s0 + $0xc90] sm:$0xff]
  %v417 = vld [vmem:[%s0 + $0xc98] sm:$0xff]
  %v418 = vld [vmem:[%s0 + $0xca0] sm:$0xff]
  %v419 = vld [vmem:[%s0 + $0xca8] sm:$0xff]
  %v420 = vld [vmem:[%s0 + $0xcb0] sm:$0xff]
  %v421 = vld [vmem:[%s0 + $0xcb8] sm:$0xff]
  %v422 = vld [vmem:[%s0 + $0xcc0] sm:$0xff]
  %v423 = vld [vmem:[%s0 + $0xcc8] sm:$0xff]
  %v424 = vld [vmem:[%s0 + $0xcd0] sm:$0xff]
  %v425 = vld [vmem:[%s0 + $0xcd8] sm:$0xff]
  %v426 = vld [vmem:[%s0 + $0xce0] sm:$0xff]
  %v427 = vld [vmem:[%s0 + $0xce8] sm:$0xff]
  %v428 = vld [vmem:[%s0 + $0xcf0] sm:$0xff]
  %v429 = vld [vmem:[%s0 + $0xcf8] sm:$0xff]
  %v430 = vld [vmem:[%s0 + $0xd00] sm:$0xff]
  %v431 = vld [vmem:[%s0 + $0xd08] sm:$0xff]
  %v432 = vld [vmem:[%s0 + $0xd10] sm:$0xff]
  %v433 = vld [vmem:[%s0 + $0xd18] sm:$0xff]
  %v434 = vld [vmem:[%s0 + $0xd20] sm:$0xff]
  %v435 = vld [vmem:[%s0 + $0xd28] sm:$0xff]
  %v436 = vld [vmem:[%s0 + $0xd30] sm:$0xff]
  %v437 = vld [vmem:[%s0 + $0xd38] sm:$0xff]
  %v438 = vld [vmem:[%s0 + $0xd40] sm:$0xff]
  %v439 = vld [vmem:[%s0 + $0xd48] sm:$0xff]
  %v440 = vld [vmem:[%s0 + $0xd50] sm:$0xff]
  %v441 = vld [vmem:[%s0 + $0xd58] sm:$0xff]
  %v442 = vld [vmem:[%s0 + $0xd60] sm:$0xff]
  %v443 = vld [vmem:[%s0 + $0xd68] sm:$0xff]
  %v444 = vld [vmem:[%s0 + $0xd70] sm:$0xff]
  %v445 = vld [vmem:[%s0 + $0xd78] sm:$0xff]
  %v446 = vld [vmem:[%s0 + $0xd80] sm:$0xff]
  %v447 = vld [vmem:[%s0 + $0xd88] sm:$0xff]
  %v448 = vld [vmem:[%s0 + $0xd90] sm:$0xff]
  %v449 = vld [vmem:[%s0 + $0xd98] sm:$0xff]
  %v450 = vld [vmem:[%s0 + $0xda0] sm:$0xff]
  %v451 = vld [vmem:[%s0 + $0xda8] sm:$0xff]
  %v452 = vld [vmem:[%s0 + $0xdb0] sm:$0xff]
  %v453 = vld [vmem:[%s0 + $0xdb8] sm:$0xff]
  %v454 = vld [vmem:[%s0 + $0xdc0] sm:$0xff]
  %v455 = vld [vmem:[%s0 + $0xdc8] sm:$0xff]
  %v456 = vld [vmem:[%s0 + $0xdd0] sm:$0xff]
  %v457 = vld [vmem:[%s0 + $0xdd8] sm:$0xff]
  %v458 = vld [vmem:[%s0 + $0xde0] sm:$0xff]
  %v459 = vld [vmem:[%s0 + $0xde8] sm:$0xff]
  %v460 = vld [vmem:[%s0 + $0xdf0] sm:$0xff]
  %v461 = vld [vmem:[%s0 + $0xdf8] sm:$0xff]
  %v462 = vld [vmem:[%s0 + $0xe00] sm:$0xff]
  %v463 = vld [vmem:[%s0 + $0xe08] sm:$0xff]
  %v464 = vld [vmem:[%s0 + $0xe10] sm:$0xff]
  %v465 = vld [vmem:[%s0 + $0xe18] sm:$0xff]
  %v466 = vld [vmem:[%s0 + $0xe20] sm:$0xff]
  %v467 = vld [vmem:[%s0 + $0xe28] sm:$0xff]
  %v468 = vld [vmem:[%s0 + $0xe30] sm:$0xff]
  %v469 = vld [vmem:[%s0 + $0xe38] sm:$0xff]
  %v470 = vld [vmem:[%s0 + $0xe40] sm:$0xff]
  %v471 = vld [vmem:[%s0 + $0xe48] sm:$0xff]
  %v472 = vld [vmem:[%s0 + $0xe50] sm:$0xff]
  %v473 = vld [vmem:[%s0 + $0xe58] sm:$0xff]
  %v474 = vld [vmem:[%s0 + $0xe60] sm:$0xff]
  %v475 = vld [vmem:[%s0 + $0xe68] sm:$0xff]
  %v476 = vld [vmem:[%s0 + $0xe70] sm:$0xff]
  %v477 = vld [vmem:[%s0 + $0xe78] sm:$0xff]
  %v478 = vld [vmem:[%s0 + $0xe80] sm:$0xff]
  %v479 = vld [vmem:[%s0 + $0xe88] sm:$0xff]
  %v480 = vld [vmem:[%s0 + $0xe90] sm:$0xff]
  %v481 = vld [vmem:[%s0 + $0xe98] sm:$0xff]
  %v482 = vld [vmem:[%s0 + $0xea0] sm:$0xff]
  %v483 = vld [vmem:[%s0 + $0xea8] sm:$0xff]
  %v484 = vld [vmem:[%s0 + $0xeb0] sm:$0xff]
  %v485 = vld [vmem:[%s0 + $0xeb8] sm:$0xff]
  %v486 = vld [vmem:[%s0 + $0xec0] sm:$0xff]
  %v487 = vld [vmem:[%s0 + $0xec8] sm:$0xff]
  %v488 = vld [vmem:[%s0 + $0xed0] sm:$0xff]
  %v489 = vld [vmem:[%s0 + $0xed8] sm:$0xff]
  %v490 = vld [vmem:[%s0 + $0xee0] sm:$0xff]
  %v491 = vld [vmem:[%s0 + $0xee8] sm:$0xff]
  %v492 = vld [vmem:[%s0 + $0xef0] sm:$0xff]
  %v493 = vld [vmem:[%s0 + $0xef8] sm:$0xff]
  %v494 = vld [vmem:[%s0 + $0xf00] sm:$0xff]
  %v495 = vld [vmem:[%s0 + $0xf08] sm:$0xff]
  %v496 = vld [vmem:[%s0 + $0xf10] sm:$0xff]
  %v497 = vld [vmem:[%s0 + $0xf18] sm:$0xff]
  %v498 = vld [vmem:[%s0 + $0xf20] sm:$0xff]
  %v499 = vld [vmem:[%s0 + $0xf28] sm:$0xff]
  %v500 = vld [vmem:[%s0 + $0xf30] sm:$0xff]
  %v501 = vld [vmem:[%s0 + $0xf38] sm:$0xff]
  %v502 = vld [vmem:[%s0 + $0xf40] sm:$0xff]
  %v503 = vld [vmem:[%s0 + $0xf48] sm:$0xff]
  %v504 = vld [vmem:[%s0 + $0xf50] sm:$0xff]
  %v505 = vld [vmem:[%s0 + $0xf58] sm:$0xff]
  %v506 = vld [vmem:[%s0 + $0xf60] sm:$0xff]
  %v507 = vld [vmem:[%s0 + $0xf68] sm:$0xff]
  %v508 = vld [vmem:[%s0 + $0xf70] sm:$0xff]
  %v509 = vld [vmem:[%s0 + $0xf78] sm:$0xff]
  %v510 = vld [vmem:[%s0 + $0xf80] sm:$0xff]
  %v511 = vld [vmem:[%s0 + $0xf88] sm:$0xff]
  %v512 = vld [vmem:[%s0 + $0xf90] sm:$0xff]
  %v513 = vld [vmem:[%s0 + $0xf98] sm:$0xff]
  %v514 = vld [vmem:[%s0 + $0xfa0] sm:$0xff]
  %v515 = vld [vmem:[%s0 + $0xfa8] sm:$0xff]
  %v516 = vld [vmem:[%s0 + $0xfb0] sm:$0xff]
  %v517 = vld [vmem:[%s0 + $0xfb8] sm:$0xff]
  %v518 = vld [vmem:[%s0 + $0xfc0] sm:$0xff]
  %v519 = vld [vmem:[%s0 + $0xfc8] sm:$0xff]
  %v520 = vld [vmem:[%s0 + $0xfd0] sm:$0xff]
  %v521 = vld [vmem:[%s0 + $0xfd8] sm:$0xff]
  %v522 = vld [vmem:[%s0 + $0xfe0] sm:$0xff]
  %v523 = vld [vmem:[%s0 + $0xfe8] sm:$0xff]
  %v524 = vld [vmem:[%s0 + $0xff0] sm:$0xff]
  %v525 = vld [vmem:[%s0 + $0xff8] sm:$0xff]
  %v526 = vld [vmem:[%s0 + $0x1000] sm:$0xff]
  %v527 = vld [vmem:[%s0 + $0x1008] sm:$0xff]
  %v528 = vld [vmem:[%s0 + $0x1010] sm:$0xff]
  %v529 = vld [vmem:[%s0 + $0x1018] sm:$0xff]
  %v530 = vld [vmem:[%s0 + $0x1020] sm:$0xff]
  %v531 = vld [vmem:[%s0 + $0x1028] sm:$0xff]
  %v532 = vld [vmem:[%s0 + $0x1030] sm:$0xff]
  %v533 = vld [vmem:[%s0 + $0x1038] sm:$0xff]
  %v534 = vld [vmem:[%s0 + $0x1040] sm:$0xff]
  %v535 = vld [vmem:[%s0 + $0x1048] sm:$0xff]
  %v536 = vld [vmem:[%s0 + $0x1050] sm:$0xff]
  %v537 = vld [vmem:[%s0 + $0x1058] sm:$0xff]
  %v538 = vld [vmem:[%s0 + $0x1060] sm:$0xff]
  %v539 = vld [vmem:[%s0 + $0x1068] sm:$0xff]
  %v540 = vld [vmem:[%s0 + $0x1070] sm:$0xff]
  %v541 = vld [vmem:[%s0 + $0x1078] sm:$0xff]
  %v542 = vld [vmem:[%s0 + $0x1080] sm:$0xff]
  %v543 = vld [vmem:[%s0 + $0x1088] sm:$0xff]
  %v544 = vld [vmem:[%s0 + $0x1090] sm:$0xff]
  %v545 = vld [vmem:[%s0 + $0x1098] sm:$0xff]
  %v546 = vld [vmem:[%s0 + $0x10a0] sm:$0xff]
  %v547 = vld [vmem:[%s0 + $0x10a8] sm:$0xff]
  %v548 = vld [vmem:[%s0 + $0x10b0] sm:$0xff]
  %v549 = vld [vmem:[%s0 + $0x10b8] sm:$0xff]
  %v550 = vld [vmem:[%s0 + $0x10c0] sm:$0xff]
  %v551 = vld [vmem:[%s0 + $0x10c8] sm:$0xff]
  %v552 = vld [vmem:[%s0 + $0x10d0] sm:$0xff]
  %v553 = vld [vmem:[%s0 + $0x10d8] sm:$0xff]
  %v554 = vld [vmem:[%s0 + $0x10e0] sm:$0xff]
  %v555 = vld [vmem:[%s0 + $0x10e8] sm:$0xff]
  %v556 = vld [vmem:[%s0 + $0x10f0] sm:$0xff]
  %v557 = vld [vmem:[%s0 + $0x10f8] sm:$0xff]
  %v558 = vld [vmem:[%s0 + $0x1100] sm:$0xff]
  %v559 = vld [vmem:[%s0 + $0x1108] sm:$0xff]
  %v560 = vld [vmem:[%s0 + $0x1110] sm:$0xff]
  %v561 = vld [vmem:[%s0 + $0x1118] sm:$0xff]
  %v562 = vld [vmem:[%s0 + $0x1120] sm:$0xff]
  %v563 = vld [vmem:[%s0 + $0x1128] sm:$0xff]
  %v564 = vld [vmem:[%s0 + $0x1130] sm:$0xff]
  %v565 = vld [vmem:[%s0 + $0x1138] sm:$0xff]
  %v566 = vld [vmem:[%s0 + $0x1140] sm:$0xff]
  %v567 = vld [vmem:[%s0 + $0x1148] sm:$0xff]
  %v568 = vld [vmem:[%s0 + $0x1150] sm:$0xff]
  %v569 = vld [vmem:[%s0 + $0x1158] sm:$0xff]
  %v570 = vld [vmem:[%s0 + $0x1160] sm:$0xff]
  %v571 = vld [vmem:[%s0 + $0x1168] sm:$0xff]
  %v572 = vld [vmem:[%s0 + $0x1170] sm:$0xff]
  %v573 = vld [vmem:[%s0 + $0x1178] sm:$0xff]
  %v574 = vld [vmem:[%s0 + $0x1180] sm:$0xff]
  %v575 = vld [vmem:[%s0 + $0x1188] sm:$0xff]
  %v576 = vld [vmem:[%s0 + $0x1190] sm:$0xff]
  %v577 = vld [vmem:[%s0 + $0x1198] sm:$0xff]
  %v578 = vld [vmem:[%s0 + $0x11a0] sm:$0xff]
  %v579 = vld [vmem:[%s0 + $0x11a8] sm:$0xff]
  %v580 = vld [vmem:[%s0 + $0x11b0] sm:$0xff]
  %v581 = vld [vmem:[%s0 + $0x11b8] sm:$0xff]
  %v582 = vld [vmem:[%s0 + $0x11c0] sm:$0xff]
  %v583 = vld [vmem:[%s0 + $0x11c8] sm:$0xff]
  %v584 = vld [vmem:[%s0 + $0x11d0] sm:$0xff]
  %v585 = vld [vmem:[%s0 + $0x11d8] sm:$0xff]
  %v586 = vld [vmem:[%s0 + $0x11e0] sm:$0xff]
  %v587 = vld [vmem:[%s0 + $0x11e8] sm:$0xff]
  %v588 = vld [vmem:[%s0 + $0x11f0] sm:$0xff]
  %v589 = vld [vmem:[%s0 + $0x11f8] sm:$0xff]
  %v590 = vld [vmem:[%s0 + $0x1200] sm:$0xff]
  %v591 = vld [vmem:[%s0 + $0x1208] sm:$0xff]
  %v592 = vld [vmem:[%s0 + $0x1210] sm:$0xff]
  %v593 = vld [vmem:[%s0 + $0x1218] sm:$0xff]
  %v594 = vld [vmem:[%s0 + $0x1220] sm:$0xff]
  %v595 = vld [vmem:[%s0 + $0x1228] sm:$0xff]
  %v596 = vld [vmem:[%s0 + $0x1230] sm:$0xff]
  %v597 = vld [vmem:[%s0 + $0x1238] sm:$0xff]
  %v598 = vld [vmem:[%s0 + $0x1240] sm:$0xff]
  %v599 = vld [vmem:[%s0 + $0x1248] sm:$0xff]
  %v600 = vld [vmem:[%s0 + $0x1250] sm:$0xff]
  %v601 = vld [vmem:[%s0 + $0x1258] sm:$0xff]
  %v602 = vld [vmem:[%s0 + $0x1260] sm:$0xff]
  %v603 = vld [vmem:[%s0 + $0x1268] sm:$0xff]
  %v604 = vld [vmem:[%s0 + $0x1270] sm:$0xff]
  %v605 = vld [vmem:[%s0 + $0x1278] sm:$0xff]
  %v606 = vld [vmem:[%s0 + $0x1280] sm:$0xff]
  %v607 = vld [vmem:[%s0 + $0x1288] sm:$0xff]
  %v608 = vld [vmem:[%s0 + $0x1290] sm:$0xff]
  %v609 = vld [vmem:[%s0 + $0x1298] sm:$0xff]
  %v610 = vld [vmem:[%s0 + $0x12a0] sm:$0xff]
  %v611 = vld [vmem:[%s0 + $0x12a8] sm:$0xff]
  %v612 = vld [vmem:[%s0 + $0x12b0] sm:$0xff]
  %v613 = vld [vmem:[%s0 + $0x12b8] sm:$0xff]
  %v614 = vld [vmem:[%s0 + $0x12c0] sm:$0xff]
  %v615 = vld [vmem:[%s0 + $0x12c8] sm:$0xff]
  %v616 = vld [vmem:[%s0 + $0x12d0] sm:$0xff]
  %v617 = vld [vmem:[%s0 + $0x12d8] sm:$0xff]
  %v618 = vld [vmem:[%s0 + $0x12e0] sm:$0xff]
  %v619 = vld [vmem:[%s0 + $0x12e8] sm:$0xff]
  %v620 = vld [vmem:[%s0 + $0x12f0] sm:$0xff]
  %v621 = vld [vmem:[%s0 + $0x12f8] sm:$0xff]
  %v622 = vld [vmem:[%s0 + $0x1300] sm:$0xff]
  %v623 = vld [vmem:[%s0 + $0x1308] sm:$0xff]
  %v624 = vld [vmem:[%s0 + $0x1310] sm:$0xff]
  %v625 = vld [vmem:[%s0 + $0x1318] sm:$0xff]
  %v626 = vld [vmem:[%s0 + $0x1320] sm:$0xff]
  %v627 = vld [vmem:[%s0 + $0x1328] sm:$0xff]
  %v628 = vld [vmem:[%s0 + $0x1330] sm:$0xff]
  %v629 = vld [vmem:[%s0 + $0x1338] sm:$0xff]
  %v630 = vld [vmem:[%s0 + $0x1340] sm:$0xff]
  %v631 = vld [vmem:[%s0 + $0x1348] sm:$0xff]
  %v632 = vld [vmem:[%s0 + $0x1350] sm:$0xff]
  %v633 = vld [vmem:[%s0 + $0x1358] sm:$0xff]
  %v634 = vld [vmem:[%s0 + $0x1360] sm:$0xff]
  %v635 = vld [vmem:[%s0 + $0x1368] sm:$0xff]
  %v636 = vld [vmem:[%s0 + $0x1370] sm:$0xff]
  %v637 = vld [vmem:[%s0 + $0x1378] sm:$0xff]
  %v638 = vld [vmem:[%s0 + $0x1380] sm:$0xff]
  %v639 = vld [vmem:[%s0 + $0x1388] sm:$0xff]
  %v640 = vld [vmem:[%s0 + $0x1390] sm:$0xff]
  %v641 = vld [vmem:[%s0 + $0x1398] sm:$0xff]
  %v642 = vld [vmem:[%s0 + $0x13a0] sm:$0xff]
  %v643 = vld [vmem:[%s0 + $0x13a8] sm:$0xff]
  %v644 = vld [vmem:[%s0 + $0x13b0] sm:$0xff]
  %v645 = vld [vmem:[%s0 + $0x13b8] sm:$0xff]
  %v646 = vld [vmem:[%s0 + $0x13c0] sm:$0xff]
  %v647 = vld [vmem:[%s0 + $0x13c8] sm:$0xff]
  %v648 = vld [vmem:[%s0 + $0x13d0] sm:$0xff]
  %v649 = vld [vmem:[%s0 + $0x13d8] sm:$0xff]
  %v650 = vld [vmem:[%s0 + $0x13e0] sm:$0xff]
  %v651 = vld [vmem:[%s0 + $0x13e8] sm:$0xff]
  %v652 = vld [vmem:[%s0 + $0x13f0] sm:$0xff]
  %v653 = vld [vmem:[%s0 + $0x13f8] sm:$0xff]
  %v654 = vld [vmem:[%s0 + $0x1400] sm:$0xff]
  %v655 = vld [vmem:[%s0 + $0x1408] sm:$0xff]
  %v656 = vld [vmem:[%s0 + $0x1410] sm:$0xff]
  %v657 = vld [vmem:[%s0 + $0x1418] sm:$0xff]
  %v658 = vld [vmem:[%s0 + $0x1420] sm:$0xff]
  %v659 = vld [vmem:[%s0 + $0x1428] sm:$0xff]
  %v660 = vld [vmem:[%s0 + $0x1430] sm:$0xff]
  %v661 = vld [vmem:[%s0 + $0x1438] sm:$0xff]
  %v662 = vld [vmem:[%s0 + $0x1440] sm:$0xff]
  %v663 = vld [vmem:[%s0 + $0x1448] sm:$0xff]
  %v664 = vld [vmem:[%s0 + $0x1450] sm:$0xff]
  %v665 = vld [vmem:[%s0 + $0x1458] sm:$0xff]
  %v666 = vld [vmem:[%s0 + $0x1460] sm:$0xff]
  %v667 = vld [vmem:[%s0 + $0x1468] sm:$0xff]
  %v668 = vld [vmem:[%s0 + $0x1470] sm:$0xff]
  %v669 = vld [vmem:[%s0 + $0x1478] sm:$0xff]
  %v670 = vld [vmem:[%s0 + $0x1480] sm:$0xff]
  %v671 = vld [vmem:[%s0 + $0x1488] sm:$0xff]
  %v672 = vld [vmem:[%s0 + $0x1490] sm:$0xff]
  %v673 = vld [vmem:[%s0 + $0x1498] sm:$0xff]
  %v674 = vld [vmem:[%s0 + $0x14a0] sm:$0xff]
  %v675 = vld [vmem:[%s0 + $0x14a8] sm:$0xff]
  %v676 = vld [vmem:[%s0 + $0x14b0] sm:$0xff]
  %v677 = vld [vmem:[%s0 + $0x14b8] sm:$0xff]
  %v678 = vld [vmem:[%s0 + $0x14c0] sm:$0xff]
  %v679 = vld [vmem:[%s0 + $0x14c8] sm:$0xff]
  %v680 = vld [vmem:[%s0 + $0x14d0] sm:$0xff]
  %v681 = vld [vmem:[%s0 + $0x14d8] sm:$0xff]
  %v682 = vld [vmem:[%s0 + $0x14e0] sm:$0xff]
  %v683 = vld [vmem:[%s0 + $0x14e8] sm:$0xff]
  %v684 = vld [vmem:[%s0 + $0x14f0] sm:$0xff]
  %v685 = vld [vmem:[%s0 + $0x14f8] sm:$0xff]
  %v686 = vld [vmem:[%s0 + $0x1500] sm:$0xff]
  %v687 = vld [vmem:[%s0 + $0x1508] sm:$0xff]
  %v688 = vld [vmem:[%s0 + $0x1510] sm:$0xff]
  %v689 = vld [vmem:[%s0 + $0x1518] sm:$0xff]
  %v690 = vld [vmem:[%s0 + $0x1520] sm:$0xff]
  %v691 = vld [vmem:[%s0 + $0x1528] sm:$0xff]
  %v692 = vld [vmem:[%s0 + $0x1530] sm:$0xff]
  %v693 = vld [vmem:[%s0 + $0x1538] sm:$0xff]
  %v694 = vld [vmem:[%s0 + $0x1540] sm:$0xff]
  %v695 = vld [vmem:[%s0 + $0x1548] sm:$0xff]
  %v696 = vld [vmem:[%s0 + $0x1550] sm:$0xff]
  %v697 = vld [vmem:[%s0 + $0x1558] sm:$0xff]
  %v698 = vld [vmem:[%s0 + $0x1560] sm:$0xff]
  %v699 = vld [vmem:[%s0 + $0x1568] sm:$0xff]
  %v700 = vld [vmem:[%s0 + $0x1570] sm:$0xff]
  %v701 = vld [vmem:[%s0 + $0x1578] sm:$0xff]
  %v702 = vld [vmem:[%s0 + $0x1580] sm:$0xff]
  %v703 = vld [vmem:[%s0 + $0x1588] sm:$0xff]
  %v704 = vld [vmem:[%s0 + $0x1590] sm:$0xff]
  %v705 = vld [vmem:[%s0 + $0x1598] sm:$0xff]
  %v706 = vld [vmem:[%s0 + $0x15a0] sm:$0xff]
  %v707 = vld [vmem:[%s0 + $0x15a8] sm:$0xff]
  %v708 = vld [vmem:[%s0 + $0x15b0] sm:$0xff]
  %v709 = vld [vmem:[%s0 + $0x15b8] sm:$0xff]
  %v710 = vld [vmem:[%s0 + $0x15c0] sm:$0xff]
  %v711 = vld [vmem:[%s0 + $0x15c8] sm:$0xff]
  %v712 = vld [vmem:[%s0 + $0x15d0] sm:$0xff]
  %v713 = vld [vmem:[%s0 + $0x15d8] sm:$0xff]
  %v714 = vld [vmem:[%s0 + $0x15e0] sm:$0xff]
  %v715 = vld [vmem:[%s0 + $0x15e8] sm:$0xff]
  %v716 = vld [vmem:[%s0 + $0x15f0] sm:$0xff]
  %v717 = vld [vmem:[%s0 + $0x15f8] sm:$0xff]
  %v718 = vld [vmem:[%s0 + $0x1600] sm:$0xff]
  %v719 = vld [vmem:[%s0 + $0x1608] sm:$0xff]
  %v720 = vld [vmem:[%s0 + $0x1610] sm:$0xff]
  %v721 = vld [vmem:[%s0 + $0x1618] sm:$0xff]
  %v722 = vld [vmem:[%s0 + $0x1620] sm:$0xff]
  %v723 = vld [vmem:[%s0 + $0x1628] sm:$0xff]
  %v724 = vld [vmem:[%s0 + $0x1630] sm:$0xff]
  %v725 = vld [vmem:[%s0 + $0x1638] sm:$0xff]
  %v726 = vld [vmem:[%s0 + $0x1640] sm:$0xff]
  %v727 = vld [vmem:[%s0 + $0x1648] sm:$0xff]
  %v728 = vld [vmem:[%s0 + $0x1650] sm:$0xff]
  %v729 = vld [vmem:[%s0 + $0x1658] sm:$0xff]
  %v730 = vld [vmem:[%s0 + $0x1660] sm:$0xff]
  %v731 = vld [vmem:[%s0 + $0x1668] sm:$0xff]
  %v732 = vld [vmem:[%s0 + $0x1670] sm:$0xff]
  %v733 = vld [vmem:[%s0 + $0x1678] sm:$0xff]
  %v734 = vld [vmem:[%s0 + $0x1680] sm:$0xff]
  %v735 = vld [vmem:[%s0 + $0x1688] sm:$0xff]
  %v736 = vld [vmem:[%s0 + $0x1690] sm:$0xff]
  %v737 = vld [vmem:[%s0 + $0x1698] sm:$0xff]
  %v738 = vld [vmem:[%s0 + $0x16a0] sm:$0xff]
  %v739 = vld [vmem:[%s0 + $0x16a8] sm:$0xff]
  %v740 = vld [vmem:[%s0 + $0x16b0] sm:$0xff]
  %v741 = vld [vmem:[%s0 + $0x16b8] sm:$0xff]
  %v742 = vld [vmem:[%s0 + $0x16c0] sm:$0xff]
  %v743 = vld [vmem:[%s0 + $0x16c8] sm:$0xff]
  %v744 = vld [vmem:[%s0 + $0x16d0] sm:$0xff]
  %v745 = vld [vmem:[%s0 + $0x16d8] sm:$0xff]
  %v746 = vld [vmem:[%s0 + $0x16e0] sm:$0xff]
  %v747 = vld [vmem:[%s0 + $0x16e8] sm:$0xff]
  %v748 = vld [vmem:[%s0 + $0x16f0] sm:$0xff]
  %v749 = vld [vmem:[%s0 + $0x16f8] sm:$0xff]
  %v750 = vld [vmem:[%s0 + $0x1700] sm:$0xff]
  %v751 = vld [vmem:[%s0 + $0x1708] sm:$0xff]
  %v752 = vld [vmem:[%s0 + $0x1710] sm:$0xff]
  %v753 = vld [vmem:[%s0 + $0x1718] sm:$0xff]
  %v754 = vld [vmem:[%s0 + $0x1720] sm:$0xff]
  %v755 = vld [vmem:[%s0 + $0x1728] sm:$0xff]
  %v756 = vld [vmem:[%s0 + $0x1730] sm:$0xff]
  %v757 = vld [vmem:[%s0 + $0x1738] sm:$0xff]
  %v758 = vld [vmem:[%s0 + $0x1740] sm:$0xff]
  %v759 = vld [vmem:[%s0 + $0x1748] sm:$0xff]
  %v760 = vld [vmem:[%s0 + $0x1750] sm:$0xff]
  %v761 = vld [vmem:[%s0 + $0x1758] sm:$0xff]
  %v762 = vld [vmem:[%s0 + $0x1760] sm:$0xff]
  %v763 = vld [vmem:[%s0 + $0x1768] sm:$0xff]
  %v764 = vld [vmem:[%s0 + $0x1770] sm:$0xff]
  %v765 = vld [vmem:[%s0 + $0x1778] sm:$0xff]
  %v766 = vld [vmem:[%s0 + $0x1780] sm:$0xff]
  %v767 = vld [vmem:[%s0 + $0x1788] sm:$0xff]
  %v768 = vld [vmem:[%s0 + $0x1790] sm:$0xff]
  %v769 = vld [vmem:[%s0 + $0x1798] sm:$0xff]
  %v770 = vld [vmem:[%s0 + $0x17a0] sm:$0xff]
  %v771 = vld [vmem:[%s0 + $0x17a8] sm:$0xff]
  %v772 = vld [vmem:[%s0 + $0x17b0] sm:$0xff]
  %v773 = vld [vmem:[%s0 + $0x17b8] sm:$0xff]
  %v774 = vld [vmem:[%s0 + $0x17c0] sm:$0xff]
  %v775 = vld [vmem:[%s0 + $0x17c8] sm:$0xff]
  %v776 = vld [vmem:[%s0 + $0x17d0] sm:$0xff]
  %v777 = vld [vmem:[%s0 + $0x17d8] sm:$0xff]
  %v778 = vld [vmem:[%s0 + $0x17e0] sm:$0xff]
  %v779 = vld [vmem:[%s0 + $0x17e8] sm:$0xff]
  %v780 = vld [vmem:[%s0 + $0x17f0] sm:$0xff]
  %v781 = vld [vmem:[%s0 + $0x17f8] sm:$0xff]
  %v782 = vld [vmem:[%s0 + $0x1800] sm:$0xff]
  %v783 = vld [vmem:[%s0 + $0x1808] sm:$0xff]
  %v784 = vld [vmem:[%s0 + $0x1810] sm:$0xff]
  %v785 = vld [vmem:[%s0 + $0x1818] sm:$0xff]
  %v786 = vld [vmem:[%s0 + $0x1820] sm:$0xff]
  %v787 = vld [vmem:[%s0 + $0x1828] sm:$0xff]
  %v788 = vld [vmem:[%s0 + $0x1830] sm:$0xff]
  %v789 = vld [vmem:[%s0 + $0x1838] sm:$0xff]
  %v790 = vld [vmem:[%s0 + $0x1840] sm:$0xff]
  %v791 = vld [vmem:[%s0 + $0x1848] sm:$0xff]
  %v792 = vld [vmem:[%s0 + $0x1850] sm:$0xff]
  %v793 = vld [vmem:[%s0 + $0x1858] sm:$0xff]
  %v794 = vld [vmem:[%s0 + $0x1860] sm:$0xff]
  %v795 = vld [vmem:[%s0 + $0x1868] sm:$0xff]
  %v796 = vld [vmem:[%s0 + $0x1870] sm:$0xff]
  %v797 = vld [vmem:[%s0 + $0x1878] sm:$0xff]
  %v798 = vld [vmem:[%s1] sm:$0xff]
  %v799 = vld [vmem:[%s1 + $0x8] sm:$0xff]
  %v800 = vld [vmem:[%s1 + $0x10] sm:$0xff]
  %v801 = vld [vmem:[%s1 + $0x18] sm:$0xff]
  %v802 = vld [vmem:[%s1 + $0x20] sm:$0xff]
  %v803 = vld [vmem:[%s1 + $0x28] sm:$0xff]
  %v804 = vld [vmem:[%s1 + $0x30] sm:$0xff]
  %v805 = vld [vmem:[%s1 + $0x38] sm:$0xff]
  %v806 = vld [vmem:[%s1 + $0x40] sm:$0xff]
  %v807 = vld [vmem:[%s1 + $0x48] sm:$0x7]
  %vm808 = vcmask 613376
  %v810 = vsel %vm808, %v14, 0
  %v813 = vsel %vm808, %v15, 0
  %v816 = vsel %vm808, %v16, 0
  %v819 = vsel %vm808, %v17, 0
  %v822 = vsel %vm808, %v18, 0
  %v825 = vsel %vm808, %v19, 0
  %v828 = vsel %vm808, %v20, 0
  %v831 = vsel %vm808, %v21, 0
  %v834 = vsel %vm808, %v22, 0
  %v837 = vsel %vm808, %v23, 0
  %v840 = vsel %vm808, %v24, 0
  %v843 = vsel %vm808, %v25, 0
  %v846 = vsel %vm808, %v26, 0
  %v849 = vsel %vm808, %v27, 0
  %v852 = vsel %vm808, %v28, 0
  %v855 = vsel %vm808, %v29, 0
  %v858 = vsel %vm808, %v30, 0
  %v861 = vsel %vm808, %v31, 0
  %v864 = vsel %vm808, %v32, 0
  %v867 = vsel %vm808, %v33, 0
  %v870 = vsel %vm808, %v34, 0
  %v873 = vsel %vm808, %v35, 0
  %v876 = vsel %vm808, %v36, 0
  %v879 = vsel %vm808, %v37, 0
  %v882 = vsel %vm808, %v38, 0
  %v885 = vsel %vm808, %v39, 0
  %v888 = vsel %vm808, %v40, 0
  %v891 = vsel %vm808, %v41, 0
  %v894 = vsel %vm808, %v42, 0
  %v897 = vsel %vm808, %v43, 0
  %v900 = vsel %vm808, %v44, 0
  %v903 = vsel %vm808, %v45, 0
  %v906 = vsel %vm808, %v46, 0
  %v909 = vsel %vm808, %v47, 0
  %v912 = vsel %vm808, %v48, 0
  %v915 = vsel %vm808, %v49, 0
  %v918 = vsel %vm808, %v50, 0
  %v921 = vsel %vm808, %v51, 0
  %v924 = vsel %vm808, %v52, 0
  %v927 = vsel %vm808, %v53, 0
  %v930 = vsel %vm808, %v54, 0
  %v933 = vsel %vm808, %v55, 0
  %v936 = vsel %vm808, %v56, 0
  %v939 = vsel %vm808, %v57, 0
  %v942 = vsel %vm808, %v58, 0
  %v945 = vsel %vm808, %v59, 0
  %v948 = vsel %vm808, %v60, 0
  %v951 = vsel %vm808, %v61, 0
  %v954 = vsel %vm808, %v62, 0
  %v957 = vsel %vm808, %v63, 0
  %v960 = vsel %vm808, %v64, 0
  %v963 = vsel %vm808, %v65, 0
  %v966 = vsel %vm808, %v66, 0
  %v969 = vsel %vm808, %v67, 0
  %v972 = vsel %vm808, %v68, 0
  %v975 = vsel %vm808, %v69, 0
  %v978 = vsel %vm808, %v70, 0
  %v981 = vsel %vm808, %v71, 0
  %v984 = vsel %vm808, %v72, 0
  %v987 = vsel %vm808, %v73, 0
  %v990 = vsel %vm808, %v74, 0
  %v993 = vsel %vm808, %v75, 0
  %v996 = vsel %vm808, %v76, 0
  %v999 = vsel %vm808, %v77, 0
  %v1002 = vsel %vm808, %v78, 0
  %v1005 = vsel %vm808, %v79, 0
  %v1008 = vsel %vm808, %v80, 0
  %v1011 = vsel %vm808, %v81, 0
  %v1014 = vsel %vm808, %v82, 0
  %v1017 = vsel %vm808, %v83, 0
  %v1020 = vsel %vm808, %v84, 0
  %v1023 = vsel %vm808, %v85, 0
  %v1026 = vsel %vm808, %v86, 0
  %v1029 = vsel %vm808, %v87, 0
  %v1032 = vsel %vm808, %v88, 0
  %v1035 = vsel %vm808, %v89, 0
  %v1038 = vsel %vm808, %v90, 0
  %v1041 = vsel %vm808, %v91, 0
  %v1044 = vsel %vm808, %v92, 0
  %v1047 = vsel %vm808, %v93, 0
  %v1050 = vsel %vm808, %v94, 0
  %v1053 = vsel %vm808, %v95, 0
  %v1056 = vsel %vm808, %v96, 0
  %v1059 = vsel %vm808, %v97, 0
  %v1062 = vsel %vm808, %v98, 0
  %v1065 = vsel %vm808, %v99, 0
  %v1068 = vsel %vm808, %v100, 0
  %v1071 = vsel %vm808, %v101, 0
  %v1074 = vsel %vm808, %v102, 0
  %v1077 = vsel %vm808, %v103, 0
  %v1080 = vsel %vm808, %v104, 0
  %v1083 = vsel %vm808, %v105, 0
  %v1086 = vsel %vm808, %v106, 0
  %v1089 = vsel %vm808, %v107, 0
  %v1092 = vsel %vm808, %v108, 0
  %v1095 = vsel %vm808, %v109, 0
  %v1098 = vsel %vm808, %v110, 0
  %v1101 = vsel %vm808, %v111, 0
  %v1104 = vsel %vm808, %v112, 0
  %v1107 = vsel %vm808, %v113, 0
  %v1110 = vsel %vm808, %v114, 0
  %v1113 = vsel %vm808, %v115, 0
  %v1116 = vsel %vm808, %v116, 0
  %v1119 = vsel %vm808, %v117, 0
  %v1122 = vsel %vm808, %v118, 0
  %v1125 = vsel %vm808, %v119, 0
  %v1128 = vsel %vm808, %v120, 0
  %v1131 = vsel %vm808, %v121, 0
  %v1134 = vsel %vm808, %v122, 0
  %v1137 = vsel %vm808, %v123, 0
  %v1140 = vsel %vm808, %v124, 0
  %v1143 = vsel %vm808, %v125, 0
  %v1146 = vsel %vm808, %v126, 0
  %v1149 = vsel %vm808, %v127, 0
  %v1152 = vsel %vm808, %v128, 0
  %v1155 = vsel %vm808, %v129, 0
  %v1158 = vsel %vm808, %v130, 0
  %v1161 = vsel %vm808, %v131, 0
  %v1164 = vsel %vm808, %v132, 0
  %v1167 = vsel %vm808, %v133, 0
  %v1170 = vsel %vm808, %v134, 0
  %v1173 = vsel %vm808, %v135, 0
  %v1176 = vsel %vm808, %v136, 0
  %v1179 = vsel %vm808, %v137, 0
  %v1182 = vsel %vm808, %v138, 0
  %v1185 = vsel %vm808, %v139, 0
  %v1188 = vsel %vm808, %v140, 0
  %v1191 = vsel %vm808, %v141, 0
  %v1194 = vsel %vm808, %v142, 0
  %v1197 = vsel %vm808, %v143, 0
  %v1200 = vsel %vm808, %v144, 0
  %v1203 = vsel %vm808, %v145, 0
  %v1206 = vsel %vm808, %v146, 0
  %v1209 = vsel %vm808, %v147, 0
  %v1212 = vsel %vm808, %v148, 0
  %v1215 = vsel %vm808, %v149, 0
  %v1218 = vsel %vm808, %v150, 0
  %v1221 = vsel %vm808, %v151, 0
  %v1224 = vsel %vm808, %v152, 0
  %v1227 = vsel %vm808, %v153, 0
  %v1230 = vsel %vm808, %v154, 0
  %v1233 = vsel %vm808, %v155, 0
  %v1236 = vsel %vm808, %v156, 0
  %v1239 = vsel %vm808, %v157, 0
  %v1242 = vsel %vm808, %v158, 0
  %v1245 = vsel %vm808, %v159, 0
  %v1248 = vsel %vm808, %v160, 0
  %v1251 = vsel %vm808, %v161, 0
  %v1254 = vsel %vm808, %v162, 0
  %v1257 = vsel %vm808, %v163, 0
  %v1260 = vsel %vm808, %v164, 0
  %v1263 = vsel %vm808, %v165, 0
  %v1266 = vsel %vm808, %v166, 0
  %v1269 = vsel %vm808, %v167, 0
  %v1272 = vsel %vm808, %v168, 0
  %v1275 = vsel %vm808, %v169, 0
  %v1278 = vsel %vm808, %v170, 0
  %v1281 = vsel %vm808, %v171, 0
  %v1284 = vsel %vm808, %v172, 0
  %v1287 = vsel %vm808, %v173, 0
  %v1290 = vsel %vm808, %v174, 0
  %v1293 = vsel %vm808, %v175, 0
  %v1296 = vsel %vm808, %v176, 0
  %v1299 = vsel %vm808, %v177, 0
  %v1302 = vsel %vm808, %v178, 0
  %v1305 = vsel %vm808, %v179, 0
  %v1308 = vsel %vm808, %v180, 0
  %v1311 = vsel %vm808, %v181, 0
  %v1314 = vsel %vm808, %v182, 0
  %v1317 = vsel %vm808, %v183, 0
  %v1320 = vsel %vm808, %v184, 0
  %v1323 = vsel %vm808, %v185, 0
  %v1326 = vsel %vm808, %v186, 0
  %v1329 = vsel %vm808, %v187, 0
  %v1332 = vsel %vm808, %v188, 0
  %v1335 = vsel %vm808, %v189, 0
  %v1338 = vsel %vm808, %v190, 0
  %v1341 = vsel %vm808, %v191, 0
  %v1344 = vsel %vm808, %v192, 0
  %v1347 = vsel %vm808, %v193, 0
  %v1350 = vsel %vm808, %v194, 0
  %v1353 = vsel %vm808, %v195, 0
  %v1356 = vsel %vm808, %v196, 0
  %v1359 = vsel %vm808, %v197, 0
  %v1362 = vsel %vm808, %v198, 0
  %v1365 = vsel %vm808, %v199, 0
  %v1368 = vsel %vm808, %v200, 0
  %v1371 = vsel %vm808, %v201, 0
  %v1374 = vsel %vm808, %v202, 0
  %v1377 = vsel %vm808, %v203, 0
  %v1380 = vsel %vm808, %v204, 0
  %v1383 = vsel %vm808, %v205, 0
  %v1386 = vsel %vm808, %v206, 0
  %v1389 = vsel %vm808, %v207, 0
  %v1392 = vsel %vm808, %v208, 0
  %v1395 = vsel %vm808, %v209, 0
  %v1398 = vsel %vm808, %v210, 0
  %v1401 = vsel %vm808, %v211, 0
  %v1404 = vsel %vm808, %v212, 0
  %v1407 = vsel %vm808, %v213, 0
  %v1410 = vsel %vm808, %v214, 0
  %v1413 = vsel %vm808, %v215, 0
  %v1416 = vsel %vm808, %v216, 0
  %v1419 = vsel %vm808, %v217, 0
  %v1422 = vsel %vm808, %v218, 0
  %v1425 = vsel %vm808, %v219, 0
  %v1428 = vsel %vm808, %v220, 0
  %v1431 = vsel %vm808, %v221, 0
  %v1434 = vsel %vm808, %v222, 0
  %v1437 = vsel %vm808, %v223, 0
  %v1440 = vsel %vm808, %v224, 0
  %v1443 = vsel %vm808, %v225, 0
  %v1446 = vsel %vm808, %v226, 0
  %v1449 = vsel %vm808, %v227, 0
  %v1452 = vsel %vm808, %v228, 0
  %v1455 = vsel %vm808, %v229, 0
  %v1458 = vsel %vm808, %v230, 0
  %v1461 = vsel %vm808, %v231, 0
  %v1464 = vsel %vm808, %v232, 0
  %v1467 = vsel %vm808, %v233, 0
  %v1470 = vsel %vm808, %v234, 0
  %v1473 = vsel %vm808, %v235, 0
  %v1476 = vsel %vm808, %v236, 0
  %v1479 = vsel %vm808, %v237, 0
  %v1482 = vsel %vm808, %v238, 0
  %v1485 = vsel %vm808, %v239, 0
  %v1488 = vsel %vm808, %v240, 0
  %v1491 = vsel %vm808, %v241, 0
  %v1494 = vsel %vm808, %v242, 0
  %v1497 = vsel %vm808, %v243, 0
  %v1500 = vsel %vm808, %v244, 0
  %v1503 = vsel %vm808, %v245, 0
  %v1506 = vsel %vm808, %v246, 0
  %v1509 = vsel %vm808, %v247, 0
  %v1512 = vsel %vm808, %v248, 0
  %v1515 = vsel %vm808, %v249, 0
  %v1518 = vsel %vm808, %v250, 0
  %v1521 = vsel %vm808, %v251, 0
  %v1524 = vsel %vm808, %v252, 0
  %v1527 = vsel %vm808, %v253, 0
  %v1530 = vsel %vm808, %v254, 0
  %v1533 = vsel %vm808, %v255, 0
  %v1536 = vsel %vm808, %v256, 0
  %v1539 = vsel %vm808, %v257, 0
  %v1542 = vsel %vm808, %v258, 0
  %v1545 = vsel %vm808, %v259, 0
  %v1548 = vsel %vm808, %v260, 0
  %v1551 = vsel %vm808, %v261, 0
  %v1554 = vsel %vm808, %v262, 0
  %v1557 = vsel %vm808, %v263, 0
  %v1560 = vsel %vm808, %v264, 0
  %v1563 = vsel %vm808, %v265, 0
  %v1566 = vsel %vm808, %v266, 0
  %v1569 = vsel %vm808, %v267, 0
  %v1572 = vsel %vm808, %v268, 0
  %v1575 = vsel %vm808, %v269, 0
  %v1578 = vsel %vm808, %v270, 0
  %v1581 = vsel %vm808, %v271, 0
  %v1584 = vsel %vm808, %v272, 0
  %v1587 = vsel %vm808, %v273, 0
  %v1590 = vsel %vm808, %v274, 0
  %v1593 = vsel %vm808, %v275, 0
  %v1596 = vsel %vm808, %v276, 0
  %v1599 = vsel %vm808, %v277, 0
  %v1602 = vsel %vm808, %v278, 0
  %v1605 = vsel %vm808, %v279, 0
  %v1608 = vsel %vm808, %v280, 0
  %v1611 = vsel %vm808, %v281, 0
  %v1614 = vsel %vm808, %v282, 0
  %v1617 = vsel %vm808, %v283, 0
  %v1620 = vsel %vm808, %v284, 0
  %v1623 = vsel %vm808, %v285, 0
  %v1626 = vsel %vm808, %v286, 0
  %v1629 = vsel %vm808, %v287, 0
  %v1632 = vsel %vm808, %v288, 0
  %v1635 = vsel %vm808, %v289, 0
  %v1638 = vsel %vm808, %v290, 0
  %v1641 = vsel %vm808, %v291, 0
  %v1644 = vsel %vm808, %v292, 0
  %v1647 = vsel %vm808, %v293, 0
  %v1650 = vsel %vm808, %v294, 0
  %v1653 = vsel %vm808, %v295, 0
  %v1656 = vsel %vm808, %v296, 0
  %v1659 = vsel %vm808, %v297, 0
  %v1662 = vsel %vm808, %v298, 0
  %v1665 = vsel %vm808, %v299, 0
  %v1668 = vsel %vm808, %v300, 0
  %v1671 = vsel %vm808, %v301, 0
  %v1674 = vsel %vm808, %v302, 0
  %v1677 = vsel %vm808, %v303, 0
  %v1680 = vsel %vm808, %v304, 0
  %v1683 = vsel %vm808, %v305, 0
  %v1686 = vsel %vm808, %v306, 0
  %v1689 = vsel %vm808, %v307, 0
  %v1692 = vsel %vm808, %v308, 0
  %v1695 = vsel %vm808, %v309, 0
  %v1698 = vsel %vm808, %v310, 0
  %v1701 = vsel %vm808, %v311, 0
  %v1704 = vsel %vm808, %v312, 0
  %v1707 = vsel %vm808, %v313, 0
  %v1710 = vsel %vm808, %v314, 0
  %v1713 = vsel %vm808, %v315, 0
  %v1716 = vsel %vm808, %v316, 0
  %v1719 = vsel %vm808, %v317, 0
  %v1722 = vsel %vm808, %v318, 0
  %v1725 = vsel %vm808, %v319, 0
  %v1728 = vsel %vm808, %v320, 0
  %v1731 = vsel %vm808, %v321, 0
  %v1734 = vsel %vm808, %v322, 0
  %v1737 = vsel %vm808, %v323, 0
  %v1740 = vsel %vm808, %v324, 0
  %v1743 = vsel %vm808, %v325, 0
  %v1746 = vsel %vm808, %v326, 0
  %v1749 = vsel %vm808, %v327, 0
  %v1752 = vsel %vm808, %v328, 0
  %v1755 = vsel %vm808, %v329, 0
  %v1758 = vsel %vm808, %v330, 0
  %v1761 = vsel %vm808, %v331, 0
  %v1764 = vsel %vm808, %v332, 0
  %v1767 = vsel %vm808, %v333, 0
  %v1770 = vsel %vm808, %v334, 0
  %v1773 = vsel %vm808, %v335, 0
  %v1776 = vsel %vm808, %v336, 0
  %v1779 = vsel %vm808, %v337, 0
  %v1782 = vsel %vm808, %v338, 0
  %v1785 = vsel %vm808, %v339, 0
  %v1788 = vsel %vm808, %v340, 0
  %v1791 = vsel %vm808, %v341, 0
  %v1794 = vsel %vm808, %v342, 0
  %v1797 = vsel %vm808, %v343, 0
  %v1800 = vsel %vm808, %v344, 0
  %v1803 = vsel %vm808, %v345, 0
  %v1806 = vsel %vm808, %v346, 0
  %v1809 = vsel %vm808, %v347, 0
  %v1812 = vsel %vm808, %v348, 0
  %v1815 = vsel %vm808, %v349, 0
  %v1818 = vsel %vm808, %v350, 0
  %v1821 = vsel %vm808, %v351, 0
  %v1824 = vsel %vm808, %v352, 0
  %v1827 = vsel %vm808, %v353, 0
  %v1830 = vsel %vm808, %v354, 0
  %v1833 = vsel %vm808, %v355, 0
  %v1836 = vsel %vm808, %v356, 0
  %v1839 = vsel %vm808, %v357, 0
  %v1842 = vsel %vm808, %v358, 0
  %v1845 = vsel %vm808, %v359, 0
  %v1848 = vsel %vm808, %v360, 0
  %v1851 = vsel %vm808, %v361, 0
  %v1854 = vsel %vm808, %v362, 0
  %v1857 = vsel %vm808, %v363, 0
  %v1860 = vsel %vm808, %v364, 0
  %v1863 = vsel %vm808, %v365, 0
  %v1866 = vsel %vm808, %v366, 0
  %v1869 = vsel %vm808, %v367, 0
  %v1872 = vsel %vm808, %v368, 0
  %v1875 = vsel %vm808, %v369, 0
  %v1878 = vsel %vm808, %v370, 0
  %v1881 = vsel %vm808, %v371, 0
  %v1884 = vsel %vm808, %v372, 0
  %v1887 = vsel %vm808, %v373, 0
  %v1890 = vsel %vm808, %v374, 0
  %v1893 = vsel %vm808, %v375, 0
  %v1896 = vsel %vm808, %v376, 0
  %v1899 = vsel %vm808, %v377, 0
  %v1902 = vsel %vm808, %v378, 0
  %v1905 = vsel %vm808, %v379, 0
  %v1908 = vsel %vm808, %v380, 0
  %v1911 = vsel %vm808, %v381, 0
  %v1914 = vsel %vm808, %v382, 0
  %v1917 = vsel %vm808, %v383, 0
  %v1920 = vsel %vm808, %v384, 0
  %v1923 = vsel %vm808, %v385, 0
  %v1926 = vsel %vm808, %v386, 0
  %v1929 = vsel %vm808, %v387, 0
  %v1932 = vsel %vm808, %v388, 0
  %v1935 = vsel %vm808, %v389, 0
  %v1938 = vsel %vm808, %v390, 0
  %v1941 = vsel %vm808, %v391, 0
  %v1944 = vsel %vm808, %v392, 0
  %v1947 = vsel %vm808, %v393, 0
  %v1950 = vsel %vm808, %v394, 0
  %v1953 = vsel %vm808, %v395, 0
  %v1956 = vsel %vm808, %v396, 0
  %v1959 = vsel %vm808, %v397, 0
  %v1962 = vsel %vm808, %v398, 0
  %v1965 = vsel %vm808, %v399, 0
  %v1968 = vsel %vm808, %v400, 0
  %v1971 = vsel %vm808, %v401, 0
  %v1974 = vsel %vm808, %v402, 0
  %v1977 = vsel %vm808, %v403, 0
  %v1980 = vsel %vm808, %v404, 0
  %v1983 = vsel %vm808, %v405, 0
  %v1986 = vsel %vm808, %v406, 0
  %v1989 = vsel %vm808, %v407, 0
  %v1992 = vsel %vm808, %v408, 0
  %v1995 = vsel %vm808, %v409, 0
  %v1998 = vsel %vm808, %v410, 0
  %v2001 = vsel %vm808, %v411, 0
  %v2004 = vsel %vm808, %v412, 0
  %v2007 = vsel %vm808, %v413, 0
  %v2010 = vsel %vm808, %v414, 0
  %v2013 = vsel %vm808, %v415, 0
  %v2016 = vsel %vm808, %v416, 0
  %v2019 = vsel %vm808, %v417, 0
  %v2022 = vsel %vm808, %v418, 0
  %v2025 = vsel %vm808, %v419, 0
  %v2028 = vsel %vm808, %v420, 0
  %v2031 = vsel %vm808, %v421, 0
  %v2034 = vsel %vm808, %v422, 0
  %v2037 = vsel %vm808, %v423, 0
  %v2040 = vsel %vm808, %v424, 0
  %v2043 = vsel %vm808, %v425, 0
  %v2046 = vsel %vm808, %v426, 0
  %v2049 = vsel %vm808, %v427, 0
  %v2052 = vsel %vm808, %v428, 0
  %v2055 = vsel %vm808, %v429, 0
  %v2058 = vsel %vm808, %v430, 0
  %v2061 = vsel %vm808, %v431, 0
  %v2064 = vsel %vm808, %v432, 0
  %v2067 = vsel %vm808, %v433, 0
  %v2070 = vsel %vm808, %v434, 0
  %v2073 = vsel %vm808, %v435, 0
  %v2076 = vsel %vm808, %v436, 0
  %v2079 = vsel %vm808, %v437, 0
  %v2082 = vsel %vm808, %v438, 0
  %v2085 = vsel %vm808, %v439, 0
  %v2088 = vsel %vm808, %v440, 0
  %v2091 = vsel %vm808, %v441, 0
  %v2094 = vsel %vm808, %v442, 0
  %v2097 = vsel %vm808, %v443, 0
  %v2100 = vsel %vm808, %v444, 0
  %v2103 = vsel %vm808, %v445, 0
  %v2106 = vsel %vm808, %v446, 0
  %v2109 = vsel %vm808, %v447, 0
  %v2112 = vsel %vm808, %v448, 0
  %v2115 = vsel %vm808, %v449, 0
  %v2118 = vsel %vm808, %v450, 0
  %v2121 = vsel %vm808, %v451, 0
  %v2124 = vsel %vm808, %v452, 0
  %v2127 = vsel %vm808, %v453, 0
  %v2130 = vsel %vm808, %v454, 0
  %v2133 = vsel %vm808, %v455, 0
  %v2136 = vsel %vm808, %v456, 0
  %v2139 = vsel %vm808, %v457, 0
  %v2142 = vsel %vm808, %v458, 0
  %v2145 = vsel %vm808, %v459, 0
  %v2148 = vsel %vm808, %v460, 0
  %v2151 = vsel %vm808, %v461, 0
  %v2154 = vsel %vm808, %v462, 0
  %v2157 = vsel %vm808, %v463, 0
  %v2160 = vsel %vm808, %v464, 0
  %v2163 = vsel %vm808, %v465, 0
  %v2166 = vsel %vm808, %v466, 0
  %v2169 = vsel %vm808, %v467, 0
  %v2172 = vsel %vm808, %v468, 0
  %v2175 = vsel %vm808, %v469, 0
  %v2178 = vsel %vm808, %v470, 0
  %v2181 = vsel %vm808, %v471, 0
  %v2184 = vsel %vm808, %v472, 0
  %v2187 = vsel %vm808, %v473, 0
  %v2190 = vsel %vm808, %v474, 0
  %v2193 = vsel %vm808, %v475, 0
  %v2196 = vsel %vm808, %v476, 0
  %v2199 = vsel %vm808, %v477, 0
  %v2202 = vsel %vm808, %v478, 0
  %v2205 = vsel %vm808, %v479, 0
  %v2208 = vsel %vm808, %v480, 0
  %v2211 = vsel %vm808, %v481, 0
  %v2214 = vsel %vm808, %v482, 0
  %v2217 = vsel %vm808, %v483, 0
  %v2220 = vsel %vm808, %v484, 0
  %v2223 = vsel %vm808, %v485, 0
  %v2226 = vsel %vm808, %v486, 0
  %v2229 = vsel %vm808, %v487, 0
  %v2232 = vsel %vm808, %v488, 0
  %v2235 = vsel %vm808, %v489, 0
  %v2238 = vsel %vm808, %v490, 0
  %v2241 = vsel %vm808, %v491, 0
  %v2244 = vsel %vm808, %v492, 0
  %v2247 = vsel %vm808, %v493, 0
  %v2250 = vsel %vm808, %v494, 0
  %v2253 = vsel %vm808, %v495, 0
  %v2256 = vsel %vm808, %v496, 0
  %v2259 = vsel %vm808, %v497, 0
  %v2262 = vsel %vm808, %v498, 0
  %v2265 = vsel %vm808, %v499, 0
  %v2268 = vsel %vm808, %v500, 0
  %v2271 = vsel %vm808, %v501, 0
  %v2274 = vsel %vm808, %v502, 0
  %v2277 = vsel %vm808, %v503, 0
  %v2280 = vsel %vm808, %v504, 0
  %v2283 = vsel %vm808, %v505, 0
  %v2286 = vsel %vm808, %v506, 0
  %v2289 = vsel %vm808, %v507, 0
  %v2292 = vsel %vm808, %v508, 0
  %v2295 = vsel %vm808, %v509, 0
  %v2298 = vsel %vm808, %v510, 0
  %v2301 = vsel %vm808, %v511, 0
  %v2304 = vsel %vm808, %v512, 0
  %v2307 = vsel %vm808, %v513, 0
  %v2310 = vsel %vm808, %v514, 0
  %v2313 = vsel %vm808, %v515, 0
  %v2316 = vsel %vm808, %v516, 0
  %v2319 = vsel %vm808, %v517, 0
  %v2322 = vsel %vm808, %v518, 0
  %v2325 = vsel %vm808, %v519, 0
  %v2328 = vsel %vm808, %v520, 0
  %v2331 = vsel %vm808, %v521, 0
  %v2334 = vsel %vm808, %v522, 0
  %v2337 = vsel %vm808, %v523, 0
  %v2340 = vsel %vm808, %v524, 0
  %v2343 = vsel %vm808, %v525, 0
  %v2346 = vsel %vm808, %v526, 0
  %v2349 = vsel %vm808, %v527, 0
  %v2352 = vsel %vm808, %v528, 0
  %v2355 = vsel %vm808, %v529, 0
  %v2358 = vsel %vm808, %v530, 0
  %v2361 = vsel %vm808, %v531, 0
  %v2364 = vsel %vm808, %v532, 0
  %v2367 = vsel %vm808, %v533, 0
  %v2370 = vsel %vm808, %v534, 0
  %v2373 = vsel %vm808, %v535, 0
  %v2376 = vsel %vm808, %v536, 0
  %v2379 = vsel %vm808, %v537, 0
  %v2382 = vsel %vm808, %v538, 0
  %v2385 = vsel %vm808, %v539, 0
  %v2388 = vsel %vm808, %v540, 0
  %v2391 = vsel %vm808, %v541, 0
  %v2394 = vsel %vm808, %v542, 0
  %v2397 = vsel %vm808, %v543, 0
  %v2400 = vsel %vm808, %v544, 0
  %v2403 = vsel %vm808, %v545, 0
  %v2406 = vsel %vm808, %v546, 0
  %v2409 = vsel %vm808, %v547, 0
  %v2412 = vsel %vm808, %v548, 0
  %v2415 = vsel %vm808, %v549, 0
  %v2418 = vsel %vm808, %v550, 0
  %v2421 = vsel %vm808, %v551, 0
  %v2424 = vsel %vm808, %v552, 0
  %v2427 = vsel %vm808, %v553, 0
  %v2430 = vsel %vm808, %v554, 0
  %v2433 = vsel %vm808, %v555, 0
  %v2436 = vsel %vm808, %v556, 0
  %v2439 = vsel %vm808, %v557, 0
  %v2442 = vsel %vm808, %v558, 0
  %v2445 = vsel %vm808, %v559, 0
  %v2448 = vsel %vm808, %v560, 0
  %v2451 = vsel %vm808, %v561, 0
  %v2454 = vsel %vm808, %v562, 0
  %v2457 = vsel %vm808, %v563, 0
  %v2460 = vsel %vm808, %v564, 0
  %v2463 = vsel %vm808, %v565, 0
  %v2466 = vsel %vm808, %v566, 0
  %v2469 = vsel %vm808, %v567, 0
  %v2472 = vsel %vm808, %v568, 0
  %v2475 = vsel %vm808, %v569, 0
  %v2478 = vsel %vm808, %v570, 0
  %v2481 = vsel %vm808, %v571, 0
  %v2484 = vsel %vm808, %v572, 0
  %v2487 = vsel %vm808, %v573, 0
  %v2490 = vsel %vm808, %v574, 0
  %v2493 = vsel %vm808, %v575, 0
  %v2496 = vsel %vm808, %v576, 0
  %v2499 = vsel %vm808, %v577, 0
  %v2502 = vsel %vm808, %v578, 0
  %v2505 = vsel %vm808, %v579, 0
  %v2508 = vsel %vm808, %v580, 0
  %v2511 = vsel %vm808, %v581, 0
  %v2514 = vsel %vm808, %v582, 0
  %v2517 = vsel %vm808, %v583, 0
  %v2520 = vsel %vm808, %v584, 0
  %v2523 = vsel %vm808, %v585, 0
  %v2526 = vsel %vm808, %v586, 0
  %v2529 = vsel %vm808, %v587, 0
  %v2532 = vsel %vm808, %v588, 0
  %v2535 = vsel %vm808, %v589, 0
  %v2538 = vsel %vm808, %v590, 0
  %v2541 = vsel %vm808, %v591, 0
  %v2544 = vsel %vm808, %v592, 0
  %v2547 = vsel %vm808, %v593, 0
  %v2550 = vsel %vm808, %v594, 0
  %v2553 = vsel %vm808, %v595, 0
  %v2556 = vsel %vm808, %v596, 0
  %v2559 = vsel %vm808, %v597, 0
  %v2562 = vsel %vm808, %v598, 0
  %v2565 = vsel %vm808, %v599, 0
  %v2568 = vsel %vm808, %v600, 0
  %v2571 = vsel %vm808, %v601, 0
  %v2574 = vsel %vm808, %v602, 0
  %v2577 = vsel %vm808, %v603, 0
  %v2580 = vsel %vm808, %v604, 0
  %v2583 = vsel %vm808, %v605, 0
  %v2586 = vsel %vm808, %v606, 0
  %v2589 = vsel %vm808, %v607, 0
  %v2592 = vsel %vm808, %v608, 0
  %v2595 = vsel %vm808, %v609, 0
  %v2598 = vsel %vm808, %v610, 0
  %v2601 = vsel %vm808, %v611, 0
  %v2604 = vsel %vm808, %v612, 0
  %v2607 = vsel %vm808, %v613, 0
  %v2610 = vsel %vm808, %v614, 0
  %v2613 = vsel %vm808, %v615, 0
  %v2616 = vsel %vm808, %v616, 0
  %v2619 = vsel %vm808, %v617, 0
  %v2622 = vsel %vm808, %v618, 0
  %v2625 = vsel %vm808, %v619, 0
  %v2628 = vsel %vm808, %v620, 0
  %v2631 = vsel %vm808, %v621, 0
  %v2634 = vsel %vm808, %v622, 0
  %v2637 = vsel %vm808, %v623, 0
  %v2640 = vsel %vm808, %v624, 0
  %v2643 = vsel %vm808, %v625, 0
  %v2646 = vsel %vm808, %v626, 0
  %v2649 = vsel %vm808, %v627, 0
  %v2652 = vsel %vm808, %v628, 0
  %v2655 = vsel %vm808, %v629, 0
  %v2658 = vsel %vm808, %v630, 0
  %v2661 = vsel %vm808, %v631, 0
  %v2664 = vsel %vm808, %v632, 0
  %v2667 = vsel %vm808, %v633, 0
  %v2670 = vsel %vm808, %v634, 0
  %v2673 = vsel %vm808, %v635, 0
  %v2676 = vsel %vm808, %v636, 0
  %v2679 = vsel %vm808, %v637, 0
  %v2682 = vsel %vm808, %v638, 0
  %v2685 = vsel %vm808, %v639, 0
  %v2688 = vsel %vm808, %v640, 0
  %v2691 = vsel %vm808, %v641, 0
  %v2694 = vsel %vm808, %v642, 0
  %v2697 = vsel %vm808, %v643, 0
  %v2700 = vsel %vm808, %v644, 0
  %v2703 = vsel %vm808, %v645, 0
  %v2706 = vsel %vm808, %v646, 0
  %v2709 = vsel %vm808, %v647, 0
  %v2712 = vsel %vm808, %v648, 0
  %v2715 = vsel %vm808, %v649, 0
  %v2718 = vsel %vm808, %v650, 0
  %v2721 = vsel %vm808, %v651, 0
  %v2724 = vsel %vm808, %v652, 0
  %v2727 = vsel %vm808, %v653, 0
  %v2730 = vsel %vm808, %v654, 0
  %v2733 = vsel %vm808, %v655, 0
  %v2736 = vsel %vm808, %v656, 0
  %v2739 = vsel %vm808, %v657, 0
  %v2742 = vsel %vm808, %v658, 0
  %v2745 = vsel %vm808, %v659, 0
  %v2748 = vsel %vm808, %v660, 0
  %v2751 = vsel %vm808, %v661, 0
  %v2754 = vsel %vm808, %v662, 0
  %v2757 = vsel %vm808, %v663, 0
  %v2760 = vsel %vm808, %v664, 0
  %v2763 = vsel %vm808, %v665, 0
  %v2766 = vsel %vm808, %v666, 0
  %v2769 = vsel %vm808, %v667, 0
  %v2772 = vsel %vm808, %v668, 0
  %v2775 = vsel %vm808, %v669, 0
  %v2778 = vsel %vm808, %v670, 0
  %v2781 = vsel %vm808, %v671, 0
  %v2784 = vsel %vm808, %v672, 0
  %v2787 = vsel %vm808, %v673, 0
  %v2790 = vsel %vm808, %v674, 0
  %v2793 = vsel %vm808, %v675, 0
  %v2796 = vsel %vm808, %v676, 0
  %v2799 = vsel %vm808, %v677, 0
  %v2802 = vsel %vm808, %v678, 0
  %v2805 = vsel %vm808, %v679, 0
  %v2808 = vsel %vm808, %v680, 0
  %v2811 = vsel %vm808, %v681, 0
  %v2814 = vsel %vm808, %v682, 0
  %v2817 = vsel %vm808, %v683, 0
  %v2820 = vsel %vm808, %v684, 0
  %v2823 = vsel %vm808, %v685, 0
  %v2826 = vsel %vm808, %v686, 0
  %v2829 = vsel %vm808, %v687, 0
  %v2832 = vsel %vm808, %v688, 0
  %v2835 = vsel %vm808, %v689, 0
  %v2838 = vsel %vm808, %v690, 0
  %v2841 = vsel %vm808, %v691, 0
  %v2844 = vsel %vm808, %v692, 0
  %v2847 = vsel %vm808, %v693, 0
  %v2850 = vsel %vm808, %v694, 0
  %v2853 = vsel %vm808, %v695, 0
  %v2856 = vsel %vm808, %v696, 0
  %v2859 = vsel %vm808, %v697, 0
  %v2862 = vsel %vm808, %v698, 0
  %v2865 = vsel %vm808, %v699, 0
  %v2868 = vsel %vm808, %v700, 0
  %v2871 = vsel %vm808, %v701, 0
  %v2874 = vsel %vm808, %v702, 0
  %v2877 = vsel %vm808, %v703, 0
  %v2880 = vsel %vm808, %v704, 0
  %v2883 = vsel %vm808, %v705, 0
  %v2886 = vsel %vm808, %v706, 0
  %v2889 = vsel %vm808, %v707, 0
  %v2892 = vsel %vm808, %v708, 0
  %v2895 = vsel %vm808, %v709, 0
  %v2898 = vsel %vm808, %v710, 0
  %v2901 = vsel %vm808, %v711, 0
  %v2904 = vsel %vm808, %v712, 0
  %v2907 = vsel %vm808, %v713, 0
  %v2910 = vsel %vm808, %v714, 0
  %v2913 = vsel %vm808, %v715, 0
  %v2916 = vsel %vm808, %v716, 0
  %v2919 = vsel %vm808, %v717, 0
  %v2922 = vsel %vm808, %v718, 0
  %v2925 = vsel %vm808, %v719, 0
  %v2928 = vsel %vm808, %v720, 0
  %v2931 = vsel %vm808, %v721, 0
  %v2934 = vsel %vm808, %v722, 0
  %v2937 = vsel %vm808, %v723, 0
  %v2940 = vsel %vm808, %v724, 0
  %v2943 = vsel %vm808, %v725, 0
  %v2946 = vsel %vm808, %v726, 0
  %v2949 = vsel %vm808, %v727, 0
  %v2952 = vsel %vm808, %v728, 0
  %v2955 = vsel %vm808, %v729, 0
  %v2958 = vsel %vm808, %v730, 0
  %v2961 = vsel %vm808, %v731, 0
  %v2964 = vsel %vm808, %v732, 0
  %v2967 = vsel %vm808, %v733, 0
  %v2970 = vsel %vm808, %v734, 0
  %v2973 = vsel %vm808, %v735, 0
  %v2976 = vsel %vm808, %v736, 0
  %v2979 = vsel %vm808, %v737, 0
  %v2982 = vsel %vm808, %v738, 0
  %v2985 = vsel %vm808, %v739, 0
  %v2988 = vsel %vm808, %v740, 0
  %v2991 = vsel %vm808, %v741, 0
  %v2994 = vsel %vm808, %v742, 0
  %v2997 = vsel %vm808, %v743, 0
  %v3000 = vsel %vm808, %v744, 0
  %v3003 = vsel %vm808, %v745, 0
  %v3006 = vsel %vm808, %v746, 0
  %v3009 = vsel %vm808, %v747, 0
  %v3012 = vsel %vm808, %v748, 0
  %v3015 = vsel %vm808, %v749, 0
  %v3018 = vsel %vm808, %v750, 0
  %v3021 = vsel %vm808, %v751, 0
  %v3024 = vsel %vm808, %v752, 0
  %v3027 = vsel %vm808, %v753, 0
  %v3030 = vsel %vm808, %v754, 0
  %v3033 = vsel %vm808, %v755, 0
  %v3036 = vsel %vm808, %v756, 0
  %v3039 = vsel %vm808, %v757, 0
  %v3042 = vsel %vm808, %v758, 0
  %v3045 = vsel %vm808, %v759, 0
  %v3048 = vsel %vm808, %v760, 0
  %v3051 = vsel %vm808, %v761, 0
  %v3054 = vsel %vm808, %v762, 0
  %v3057 = vsel %vm808, %v763, 0
  %v3060 = vsel %vm808, %v764, 0
  %v3063 = vsel %vm808, %v765, 0
  %v3066 = vsel %vm808, %v766, 0
  %v3069 = vsel %vm808, %v767, 0
  %v3072 = vsel %vm808, %v768, 0
  %v3075 = vsel %vm808, %v769, 0
  %v3078 = vsel %vm808, %v770, 0
  %v3081 = vsel %vm808, %v771, 0
  %v3084 = vsel %vm808, %v772, 0
  %v3087 = vsel %vm808, %v773, 0
  %v3090 = vsel %vm808, %v774, 0
  %v3093 = vsel %vm808, %v775, 0
  %v3096 = vsel %vm808, %v776, 0
  %v3099 = vsel %vm808, %v777, 0
  %v3102 = vsel %vm808, %v778, 0
  %v3105 = vsel %vm808, %v779, 0
  %v3108 = vsel %vm808, %v780, 0
  %v3111 = vsel %vm808, %v781, 0
  %v3114 = vsel %vm808, %v782, 0
  %v3117 = vsel %vm808, %v783, 0
  %v3120 = vsel %vm808, %v784, 0
  %v3123 = vsel %vm808, %v785, 0
  %v3126 = vsel %vm808, %v786, 0
  %v3129 = vsel %vm808, %v787, 0
  %v3132 = vsel %vm808, %v788, 0
  %v3135 = vsel %vm808, %v789, 0
  %v3138 = vsel %vm808, %v790, 0
  %v3141 = vsel %vm808, %v791, 0
  %v3144 = vsel %vm808, %v792, 0
  %v3147 = vsel %vm808, %v793, 0
  %v3150 = vsel %vm808, %v794, 0
  %v3153 = vsel %vm808, %v795, 0
  %v3156 = vsel %vm808, %v796, 0
  %v3159 = vsel %vm808, %v797, 0
  %vm3161 = vcmask 1042432
  %v3163 = vsel %vm3161, %v807, 0
  %3165 = vmatpush.msra.mxu0 0.0
  %3166 = vmatpush.msra.mxu0 0.0
  %3167 = vmatpush.msra.mxu0 0.0
  %3168 = vmatpush.msra.mxu0 0.0
  %3169 = vmatpush.msra.mxu0 0.0
  %3170 = vmatpush.msra.mxu0 0.0
  %3171 = vmatpush.msra.mxu0 %v3163
  %3172 = vmatpush.msra.mxu0 %v806
  %3173 = vmatpush.msra.mxu0 %v805
  %3174 = vmatpush.msra.mxu0 %v804
  %3175 = vmatpush.msra.mxu0 %v803
  %3176 = vmatpush.msra.mxu0 %v802
  %3177 = vmatpush.msra.mxu0 %v801
  %3178 = vmatpush.msra.mxu0 %v800
  %3179 = vmatpush.msra.mxu0 %v799
  %3180 = vmatpush.msra.mxu0 %v798
  %3181 = vmatmul.f32.gmra.mxu0 %v810
  %v3182 = vpop.f32.mrf.mxu0
  %v3183 = vadd.f32 0.0, %v3182
  %3184 = vmatmul.f32.gmra.mxu0 %v813
  %v3185 = vpop.f32.mrf.mxu0
  %v3186 = vadd.f32 0.0, %v3185
  %3187 = vmatmul.f32.gmra.mxu0 %v816
  %v3188 = vpop.f32.mrf.mxu0
  %v3189 = vadd.f32 0.0, %v3188
  %3190 = vmatmul.f32.gmra.mxu0 %v819
  %v3191 = vpop.f32.mrf.mxu0
  %v3192 = vadd.f32 0.0, %v3191
  %3193 = vmatmul.f32.gmra.mxu0 %v822
  %v3194 = vpop.f32.mrf.mxu0
  %v3195 = vadd.f32 0.0, %v3194
  %3196 = vmatmul.f32.gmra.mxu0 %v825
  %v3197 = vpop.f32.mrf.mxu0
  %v3198 = vadd.f32 0.0, %v3197
  %3199 = vmatmul.f32.gmra.mxu0 %v828
  %v3200 = vpop.f32.mrf.mxu0
  %v3201 = vadd.f32 0.0, %v3200
  %3202 = vmatmul.f32.gmra.mxu0 %v831
  %v3203 = vpop.f32.mrf.mxu0
  %v3204 = vadd.f32 0.0, %v3203
  %3205 = vmatmul.f32.gmra.mxu0 %v834
  %v3206 = vpop.f32.mrf.mxu0
  %v3207 = vadd.f32 0.0, %v3206
  %3208 = vmatmul.f32.gmra.mxu0 %v837
  %v3209 = vpop.f32.mrf.mxu0
  %v3210 = vadd.f32 0.0, %v3209
  %3211 = vmatmul.f32.gmra.mxu0 %v840
  %v3212 = vpop.f32.mrf.mxu0
  %v3213 = vadd.f32 0.0, %v3212
  %3214 = vmatmul.f32.gmra.mxu0 %v843
  %v3215 = vpop.f32.mrf.mxu0
  %v3216 = vadd.f32 0.0, %v3215
  %3217 = vmatmul.f32.gmra.mxu0 %v846
  %v3218 = vpop.f32.mrf.mxu0
  %v3219 = vadd.f32 0.0, %v3218
  %3220 = vmatmul.f32.gmra.mxu0 %v849
  %v3221 = vpop.f32.mrf.mxu0
  %v3222 = vadd.f32 0.0, %v3221
  %3223 = vmatmul.f32.gmra.mxu0 %v852
  %v3224 = vpop.f32.mrf.mxu0
  %v3225 = vadd.f32 0.0, %v3224
  %3226 = vmatmul.f32.gmra.mxu0 %v855
  %v3227 = vpop.f32.mrf.mxu0
  %v3228 = vadd.f32 0.0, %v3227
  %3229 = vmatmul.f32.gmra.mxu0 %v858
  %v3230 = vpop.f32.mrf.mxu0
  %v3231 = vadd.f32 0.0, %v3230
  %3232 = vmatmul.f32.gmra.mxu0 %v861
  %v3233 = vpop.f32.mrf.mxu0
  %v3234 = vadd.f32 0.0, %v3233
  %3235 = vmatmul.f32.gmra.mxu0 %v864
  %v3236 = vpop.f32.mrf.mxu0
  %v3237 = vadd.f32 0.0, %v3236
  %3238 = vmatmul.f32.gmra.mxu0 %v867
  %v3239 = vpop.f32.mrf.mxu0
  %v3240 = vadd.f32 0.0, %v3239
  %3241 = vmatmul.f32.gmra.mxu0 %v870
  %v3242 = vpop.f32.mrf.mxu0
  %v3243 = vadd.f32 0.0, %v3242
  %3244 = vmatmul.f32.gmra.mxu0 %v873
  %v3245 = vpop.f32.mrf.mxu0
  %v3246 = vadd.f32 0.0, %v3245
  %3247 = vmatmul.f32.gmra.mxu0 %v876
  %v3248 = vpop.f32.mrf.mxu0
  %v3249 = vadd.f32 0.0, %v3248
  %3250 = vmatmul.f32.gmra.mxu0 %v879
  %v3251 = vpop.f32.mrf.mxu0
  %v3252 = vadd.f32 0.0, %v3251
  %3253 = vmatmul.f32.gmra.mxu0 %v882
  %v3254 = vpop.f32.mrf.mxu0
  %v3255 = vadd.f32 0.0, %v3254
  %3256 = vmatmul.f32.gmra.mxu0 %v885
  %v3257 = vpop.f32.mrf.mxu0
  %v3258 = vadd.f32 0.0, %v3257
  %3259 = vmatmul.f32.gmra.mxu0 %v888
  %v3260 = vpop.f32.mrf.mxu0
  %v3261 = vadd.f32 0.0, %v3260
  %3262 = vmatmul.f32.gmra.mxu0 %v891
  %v3263 = vpop.f32.mrf.mxu0
  %v3264 = vadd.f32 0.0, %v3263
  %3265 = vmatmul.f32.gmra.mxu0 %v894
  %v3266 = vpop.f32.mrf.mxu0
  %v3267 = vadd.f32 0.0, %v3266
  %3268 = vmatmul.f32.gmra.mxu0 %v897
  %v3269 = vpop.f32.mrf.mxu0
  %v3270 = vadd.f32 0.0, %v3269
  %3271 = vmatmul.f32.gmra.mxu0 %v900
  %v3272 = vpop.f32.mrf.mxu0
  %v3273 = vadd.f32 0.0, %v3272
  %3274 = vmatmul.f32.gmra.mxu0 %v903
  %v3275 = vpop.f32.mrf.mxu0
  %v3276 = vadd.f32 0.0, %v3275
  %3277 = vmatmul.f32.gmra.mxu0 %v906
  %v3278 = vpop.f32.mrf.mxu0
  %v3279 = vadd.f32 0.0, %v3278
  %3280 = vmatmul.f32.gmra.mxu0 %v909
  %v3281 = vpop.f32.mrf.mxu0
  %v3282 = vadd.f32 0.0, %v3281
  %3283 = vmatmul.f32.gmra.mxu0 %v912
  %v3284 = vpop.f32.mrf.mxu0
  %v3285 = vadd.f32 0.0, %v3284
  %3286 = vmatmul.f32.gmra.mxu0 %v915
  %v3287 = vpop.f32.mrf.mxu0
  %v3288 = vadd.f32 0.0, %v3287
  %3289 = vmatmul.f32.gmra.mxu0 %v918
  %v3290 = vpop.f32.mrf.mxu0
  %v3291 = vadd.f32 0.0, %v3290
  %3292 = vmatmul.f32.gmra.mxu0 %v921
  %v3293 = vpop.f32.mrf.mxu0
  %v3294 = vadd.f32 0.0, %v3293
  %3295 = vmatmul.f32.gmra.mxu0 %v924
  %v3296 = vpop.f32.mrf.mxu0
  %v3297 = vadd.f32 0.0, %v3296
  %3298 = vmatmul.f32.gmra.mxu0 %v927
  %v3299 = vpop.f32.mrf.mxu0
  %v3300 = vadd.f32 0.0, %v3299
  %3301 = vmatmul.f32.gmra.mxu0 %v930
  %v3302 = vpop.f32.mrf.mxu0
  %v3303 = vadd.f32 0.0, %v3302
  %3304 = vmatmul.f32.gmra.mxu0 %v933
  %v3305 = vpop.f32.mrf.mxu0
  %v3306 = vadd.f32 0.0, %v3305
  %3307 = vmatmul.f32.gmra.mxu0 %v936
  %v3308 = vpop.f32.mrf.mxu0
  %v3309 = vadd.f32 0.0, %v3308
  %3310 = vmatmul.f32.gmra.mxu0 %v939
  %v3311 = vpop.f32.mrf.mxu0
  %v3312 = vadd.f32 0.0, %v3311
  %3313 = vmatmul.f32.gmra.mxu0 %v942
  %v3314 = vpop.f32.mrf.mxu0
  %v3315 = vadd.f32 0.0, %v3314
  %3316 = vmatmul.f32.gmra.mxu0 %v945
  %v3317 = vpop.f32.mrf.mxu0
  %v3318 = vadd.f32 0.0, %v3317
  %3319 = vmatmul.f32.gmra.mxu0 %v948
  %v3320 = vpop.f32.mrf.mxu0
  %v3321 = vadd.f32 0.0, %v3320
  %3322 = vmatmul.f32.gmra.mxu0 %v951
  %v3323 = vpop.f32.mrf.mxu0
  %v3324 = vadd.f32 0.0, %v3323
  %3325 = vmatmul.f32.gmra.mxu0 %v954
  %v3326 = vpop.f32.mrf.mxu0
  %v3327 = vadd.f32 0.0, %v3326
  %3328 = vmatmul.f32.gmra.mxu0 %v957
  %v3329 = vpop.f32.mrf.mxu0
  %v3330 = vadd.f32 0.0, %v3329
  %3331 = vmatmul.f32.gmra.mxu0 %v960
  %v3332 = vpop.f32.mrf.mxu0
  %v3333 = vadd.f32 0.0, %v3332
  %3334 = vmatmul.f32.gmra.mxu0 %v963
  %v3335 = vpop.f32.mrf.mxu0
  %v3336 = vadd.f32 0.0, %v3335
  %3337 = vmatmul.f32.gmra.mxu0 %v966
  %v3338 = vpop.f32.mrf.mxu0
  %v3339 = vadd.f32 0.0, %v3338
  %3340 = vmatmul.f32.gmra.mxu0 %v969
  %v3341 = vpop.f32.mrf.mxu0
  %v3342 = vadd.f32 0.0, %v3341
  %3343 = vmatmul.f32.gmra.mxu0 %v972
  %v3344 = vpop.f32.mrf.mxu0
  %v3345 = vadd.f32 0.0, %v3344
  %3346 = vmatmul.f32.gmra.mxu0 %v975
  %v3347 = vpop.f32.mrf.mxu0
  %v3348 = vadd.f32 0.0, %v3347
  %3349 = vmatmul.f32.gmra.mxu0 %v978
  %v3350 = vpop.f32.mrf.mxu0
  %v3351 = vadd.f32 0.0, %v3350
  %3352 = vmatmul.f32.gmra.mxu0 %v981
  %v3353 = vpop.f32.mrf.mxu0
  %v3354 = vadd.f32 0.0, %v3353
  %3355 = vmatmul.f32.gmra.mxu0 %v984
  %v3356 = vpop.f32.mrf.mxu0
  %v3357 = vadd.f32 0.0, %v3356
  %3358 = vmatmul.f32.gmra.mxu0 %v987
  %v3359 = vpop.f32.mrf.mxu0
  %v3360 = vadd.f32 0.0, %v3359
  %3361 = vmatmul.f32.gmra.mxu0 %v990
  %v3362 = vpop.f32.mrf.mxu0
  %v3363 = vadd.f32 0.0, %v3362
  %3364 = vmatmul.f32.gmra.mxu0 %v993
  %v3365 = vpop.f32.mrf.mxu0
  %v3366 = vadd.f32 0.0, %v3365
  %3367 = vmatmul.f32.gmra.mxu0 %v996
  %v3368 = vpop.f32.mrf.mxu0
  %v3369 = vadd.f32 0.0, %v3368
  %3370 = vmatmul.f32.gmra.mxu0 %v999
  %v3371 = vpop.f32.mrf.mxu0
  %v3372 = vadd.f32 0.0, %v3371
  %3373 = vmatmul.f32.gmra.mxu0 %v1002
  %v3374 = vpop.f32.mrf.mxu0
  %v3375 = vadd.f32 0.0, %v3374
  %3376 = vmatmul.f32.gmra.mxu0 %v1005
  %v3377 = vpop.f32.mrf.mxu0
  %v3378 = vadd.f32 0.0, %v3377
  %3379 = vmatmul.f32.gmra.mxu0 %v1008
  %v3380 = vpop.f32.mrf.mxu0
  %v3381 = vadd.f32 0.0, %v3380
  %3382 = vmatmul.f32.gmra.mxu0 %v1011
  %v3383 = vpop.f32.mrf.mxu0
  %v3384 = vadd.f32 0.0, %v3383
  %3385 = vmatmul.f32.gmra.mxu0 %v1014
  %v3386 = vpop.f32.mrf.mxu0
  %v3387 = vadd.f32 0.0, %v3386
  %3388 = vmatmul.f32.gmra.mxu0 %v1017
  %v3389 = vpop.f32.mrf.mxu0
  %v3390 = vadd.f32 0.0, %v3389
  %3391 = vmatmul.f32.gmra.mxu0 %v1020
  %v3392 = vpop.f32.mrf.mxu0
  %v3393 = vadd.f32 0.0, %v3392
  %3394 = vmatmul.f32.gmra.mxu0 %v1023
  %v3395 = vpop.f32.mrf.mxu0
  %v3396 = vadd.f32 0.0, %v3395
  %3397 = vmatmul.f32.gmra.mxu0 %v1026
  %v3398 = vpop.f32.mrf.mxu0
  %v3399 = vadd.f32 0.0, %v3398
  %3400 = vmatmul.f32.gmra.mxu0 %v1029
  %v3401 = vpop.f32.mrf.mxu0
  %v3402 = vadd.f32 0.0, %v3401
  %3403 = vmatmul.f32.gmra.mxu0 %v1032
  %v3404 = vpop.f32.mrf.mxu0
  %v3405 = vadd.f32 0.0, %v3404
  %3406 = vmatmul.f32.gmra.mxu0 %v1035
  %v3407 = vpop.f32.mrf.mxu0
  %v3408 = vadd.f32 0.0, %v3407
  %3409 = vmatmul.f32.gmra.mxu0 %v1038
  %v3410 = vpop.f32.mrf.mxu0
  %v3411 = vadd.f32 0.0, %v3410
  %3412 = vmatmul.f32.gmra.mxu0 %v1041
  %v3413 = vpop.f32.mrf.mxu0
  %v3414 = vadd.f32 0.0, %v3413
  %3415 = vmatmul.f32.gmra.mxu0 %v1044
  %v3416 = vpop.f32.mrf.mxu0
  %v3417 = vadd.f32 0.0, %v3416
  %3418 = vmatmul.f32.gmra.mxu0 %v1047
  %v3419 = vpop.f32.mrf.mxu0
  %v3420 = vadd.f32 0.0, %v3419
  %3421 = vmatmul.f32.gmra.mxu0 %v1050
  %v3422 = vpop.f32.mrf.mxu0
  %v3423 = vadd.f32 0.0, %v3422
  %3424 = vmatmul.f32.gmra.mxu0 %v1053
  %v3425 = vpop.f32.mrf.mxu0
  %v3426 = vadd.f32 0.0, %v3425
  %3427 = vmatmul.f32.gmra.mxu0 %v1056
  %v3428 = vpop.f32.mrf.mxu0
  %v3429 = vadd.f32 0.0, %v3428
  %3430 = vmatmul.f32.gmra.mxu0 %v1059
  %v3431 = vpop.f32.mrf.mxu0
  %v3432 = vadd.f32 0.0, %v3431
  %3433 = vmatmul.f32.gmra.mxu0 %v1062
  %v3434 = vpop.f32.mrf.mxu0
  %v3435 = vadd.f32 0.0, %v3434
  %3436 = vmatmul.f32.gmra.mxu0 %v1065
  %v3437 = vpop.f32.mrf.mxu0
  %v3438 = vadd.f32 0.0, %v3437
  %3439 = vmatmul.f32.gmra.mxu0 %v1068
  %v3440 = vpop.f32.mrf.mxu0
  %v3441 = vadd.f32 0.0, %v3440
  %3442 = vmatmul.f32.gmra.mxu0 %v1071
  %v3443 = vpop.f32.mrf.mxu0
  %v3444 = vadd.f32 0.0, %v3443
  %3445 = vmatmul.f32.gmra.mxu0 %v1074
  %v3446 = vpop.f32.mrf.mxu0
  %v3447 = vadd.f32 0.0, %v3446
  %3448 = vmatmul.f32.gmra.mxu0 %v1077
  %v3449 = vpop.f32.mrf.mxu0
  %v3450 = vadd.f32 0.0, %v3449
  %3451 = vmatmul.f32.gmra.mxu0 %v1080
  %v3452 = vpop.f32.mrf.mxu0
  %v3453 = vadd.f32 0.0, %v3452
  %3454 = vmatmul.f32.gmra.mxu0 %v1083
  %v3455 = vpop.f32.mrf.mxu0
  %v3456 = vadd.f32 0.0, %v3455
  %3457 = vmatmul.f32.gmra.mxu0 %v1086
  %v3458 = vpop.f32.mrf.mxu0
  %v3459 = vadd.f32 0.0, %v3458
  %3460 = vmatmul.f32.gmra.mxu0 %v1089
  %v3461 = vpop.f32.mrf.mxu0
  %v3462 = vadd.f32 0.0, %v3461
  %3463 = vmatmul.f32.gmra.mxu0 %v1092
  %v3464 = vpop.f32.mrf.mxu0
  %v3465 = vadd.f32 0.0, %v3464
  %3466 = vmatmul.f32.gmra.mxu0 %v1095
  %v3467 = vpop.f32.mrf.mxu0
  %v3468 = vadd.f32 0.0, %v3467
  %3469 = vmatmul.f32.gmra.mxu0 %v1098
  %v3470 = vpop.f32.mrf.mxu0
  %v3471 = vadd.f32 0.0, %v3470
  %3472 = vmatmul.f32.gmra.mxu0 %v1101
  %v3473 = vpop.f32.mrf.mxu0
  %v3474 = vadd.f32 0.0, %v3473
  %3475 = vmatmul.f32.gmra.mxu0 %v1104
  %v3476 = vpop.f32.mrf.mxu0
  %v3477 = vadd.f32 0.0, %v3476
  %3478 = vmatmul.f32.gmra.mxu0 %v1107
  %v3479 = vpop.f32.mrf.mxu0
  %v3480 = vadd.f32 0.0, %v3479
  %3481 = vmatmul.f32.gmra.mxu0 %v1110
  %v3482 = vpop.f32.mrf.mxu0
  %v3483 = vadd.f32 0.0, %v3482
  %3484 = vmatmul.f32.gmra.mxu0 %v1113
  %v3485 = vpop.f32.mrf.mxu0
  %v3486 = vadd.f32 0.0, %v3485
  %3487 = vmatmul.f32.gmra.mxu0 %v1116
  %v3488 = vpop.f32.mrf.mxu0
  %v3489 = vadd.f32 0.0, %v3488
  %3490 = vmatmul.f32.gmra.mxu0 %v1119
  %v3491 = vpop.f32.mrf.mxu0
  %v3492 = vadd.f32 0.0, %v3491
  %3493 = vmatmul.f32.gmra.mxu0 %v1122
  %v3494 = vpop.f32.mrf.mxu0
  %v3495 = vadd.f32 0.0, %v3494
  %3496 = vmatmul.f32.gmra.mxu0 %v1125
  %v3497 = vpop.f32.mrf.mxu0
  %v3498 = vadd.f32 0.0, %v3497
  %3499 = vmatmul.f32.gmra.mxu0 %v1128
  %v3500 = vpop.f32.mrf.mxu0
  %v3501 = vadd.f32 0.0, %v3500
  %3502 = vmatmul.f32.gmra.mxu0 %v1131
  %v3503 = vpop.f32.mrf.mxu0
  %v3504 = vadd.f32 0.0, %v3503
  %3505 = vmatmul.f32.gmra.mxu0 %v1134
  %v3506 = vpop.f32.mrf.mxu0
  %v3507 = vadd.f32 0.0, %v3506
  %3508 = vmatmul.f32.gmra.mxu0 %v1137
  %v3509 = vpop.f32.mrf.mxu0
  %v3510 = vadd.f32 0.0, %v3509
  %3511 = vmatmul.f32.gmra.mxu0 %v1140
  %v3512 = vpop.f32.mrf.mxu0
  %v3513 = vadd.f32 0.0, %v3512
  %3514 = vmatmul.f32.gmra.mxu0 %v1143
  %v3515 = vpop.f32.mrf.mxu0
  %v3516 = vadd.f32 0.0, %v3515
  %3517 = vmatmul.f32.gmra.mxu0 %v1146
  %v3518 = vpop.f32.mrf.mxu0
  %v3519 = vadd.f32 0.0, %v3518
  %3520 = vmatmul.f32.gmra.mxu0 %v1149
  %v3521 = vpop.f32.mrf.mxu0
  %v3522 = vadd.f32 0.0, %v3521
  %3523 = vmatmul.f32.gmra.mxu0 %v1152
  %v3524 = vpop.f32.mrf.mxu0
  %v3525 = vadd.f32 0.0, %v3524
  %3526 = vmatmul.f32.gmra.mxu0 %v1155
  %v3527 = vpop.f32.mrf.mxu0
  %v3528 = vadd.f32 0.0, %v3527
  %3529 = vmatmul.f32.gmra.mxu0 %v1158
  %v3530 = vpop.f32.mrf.mxu0
  %v3531 = vadd.f32 0.0, %v3530
  %3532 = vmatmul.f32.gmra.mxu0 %v1161
  %v3533 = vpop.f32.mrf.mxu0
  %v3534 = vadd.f32 0.0, %v3533
  %3535 = vmatmul.f32.gmra.mxu0 %v1164
  %v3536 = vpop.f32.mrf.mxu0
  %v3537 = vadd.f32 0.0, %v3536
  %3538 = vmatmul.f32.gmra.mxu0 %v1167
  %v3539 = vpop.f32.mrf.mxu0
  %v3540 = vadd.f32 0.0, %v3539
  %3541 = vmatmul.f32.gmra.mxu0 %v1170
  %v3542 = vpop.f32.mrf.mxu0
  %v3543 = vadd.f32 0.0, %v3542
  %3544 = vmatmul.f32.gmra.mxu0 %v1173
  %v3545 = vpop.f32.mrf.mxu0
  %v3546 = vadd.f32 0.0, %v3545
  %3547 = vmatmul.f32.gmra.mxu0 %v1176
  %v3548 = vpop.f32.mrf.mxu0
  %v3549 = vadd.f32 0.0, %v3548
  %3550 = vmatmul.f32.gmra.mxu0 %v1179
  %v3551 = vpop.f32.mrf.mxu0
  %v3552 = vadd.f32 0.0, %v3551
  %3553 = vmatmul.f32.gmra.mxu0 %v1182
  %v3554 = vpop.f32.mrf.mxu0
  %v3555 = vadd.f32 0.0, %v3554
  %3556 = vmatmul.f32.gmra.mxu0 %v1185
  %v3557 = vpop.f32.mrf.mxu0
  %v3558 = vadd.f32 0.0, %v3557
  %3559 = vmatmul.f32.gmra.mxu0 %v1188
  %v3560 = vpop.f32.mrf.mxu0
  %v3561 = vadd.f32 0.0, %v3560
  %3562 = vmatmul.f32.gmra.mxu0 %v1191
  %v3563 = vpop.f32.mrf.mxu0
  %v3564 = vadd.f32 0.0, %v3563
  %3565 = vmatmul.f32.gmra.mxu0 %v1194
  %v3566 = vpop.f32.mrf.mxu0
  %v3567 = vadd.f32 0.0, %v3566
  %3568 = vmatmul.f32.gmra.mxu0 %v1197
  %v3569 = vpop.f32.mrf.mxu0
  %v3570 = vadd.f32 0.0, %v3569
  %3571 = vmatmul.f32.gmra.mxu0 %v1200
  %v3572 = vpop.f32.mrf.mxu0
  %v3573 = vadd.f32 0.0, %v3572
  %3574 = vmatmul.f32.gmra.mxu0 %v1203
  %v3575 = vpop.f32.mrf.mxu0
  %v3576 = vadd.f32 0.0, %v3575
  %3577 = vmatmul.f32.gmra.mxu0 %v1206
  %v3578 = vpop.f32.mrf.mxu0
  %v3579 = vadd.f32 0.0, %v3578
  %3580 = vmatmul.f32.gmra.mxu0 %v1209
  %v3581 = vpop.f32.mrf.mxu0
  %v3582 = vadd.f32 0.0, %v3581
  %3583 = vmatmul.f32.gmra.mxu0 %v1212
  %v3584 = vpop.f32.mrf.mxu0
  %v3585 = vadd.f32 0.0, %v3584
  %3586 = vmatmul.f32.gmra.mxu0 %v1215
  %v3587 = vpop.f32.mrf.mxu0
  %v3588 = vadd.f32 0.0, %v3587
  %3589 = vmatmul.f32.gmra.mxu0 %v1218
  %v3590 = vpop.f32.mrf.mxu0
  %v3591 = vadd.f32 0.0, %v3590
  %3592 = vmatmul.f32.gmra.mxu0 %v1221
  %v3593 = vpop.f32.mrf.mxu0
  %v3594 = vadd.f32 0.0, %v3593
  %3595 = vmatmul.f32.gmra.mxu0 %v1224
  %v3596 = vpop.f32.mrf.mxu0
  %v3597 = vadd.f32 0.0, %v3596
  %3598 = vmatmul.f32.gmra.mxu0 %v1227
  %v3599 = vpop.f32.mrf.mxu0
  %v3600 = vadd.f32 0.0, %v3599
  %3601 = vmatmul.f32.gmra.mxu0 %v1230
  %v3602 = vpop.f32.mrf.mxu0
  %v3603 = vadd.f32 0.0, %v3602
  %3604 = vmatmul.f32.gmra.mxu0 %v1233
  %v3605 = vpop.f32.mrf.mxu0
  %v3606 = vadd.f32 0.0, %v3605
  %3607 = vmatmul.f32.gmra.mxu0 %v1236
  %v3608 = vpop.f32.mrf.mxu0
  %v3609 = vadd.f32 0.0, %v3608
  %3610 = vmatmul.f32.gmra.mxu0 %v1239
  %v3611 = vpop.f32.mrf.mxu0
  %v3612 = vadd.f32 0.0, %v3611
  %3613 = vmatmul.f32.gmra.mxu0 %v1242
  %v3614 = vpop.f32.mrf.mxu0
  %v3615 = vadd.f32 0.0, %v3614
  %3616 = vmatmul.f32.gmra.mxu0 %v1245
  %v3617 = vpop.f32.mrf.mxu0
  %v3618 = vadd.f32 0.0, %v3617
  %3619 = vmatmul.f32.gmra.mxu0 %v1248
  %v3620 = vpop.f32.mrf.mxu0
  %v3621 = vadd.f32 0.0, %v3620
  %3622 = vmatmul.f32.gmra.mxu0 %v1251
  %v3623 = vpop.f32.mrf.mxu0
  %v3624 = vadd.f32 0.0, %v3623
  %3625 = vmatmul.f32.gmra.mxu0 %v1254
  %v3626 = vpop.f32.mrf.mxu0
  %v3627 = vadd.f32 0.0, %v3626
  %3628 = vmatmul.f32.gmra.mxu0 %v1257
  %v3629 = vpop.f32.mrf.mxu0
  %v3630 = vadd.f32 0.0, %v3629
  %3631 = vmatmul.f32.gmra.mxu0 %v1260
  %v3632 = vpop.f32.mrf.mxu0
  %v3633 = vadd.f32 0.0, %v3632
  %3634 = vmatmul.f32.gmra.mxu0 %v1263
  %v3635 = vpop.f32.mrf.mxu0
  %v3636 = vadd.f32 0.0, %v3635
  %3637 = vmatmul.f32.gmra.mxu0 %v1266
  %v3638 = vpop.f32.mrf.mxu0
  %v3639 = vadd.f32 0.0, %v3638
  %3640 = vmatmul.f32.gmra.mxu0 %v1269
  %v3641 = vpop.f32.mrf.mxu0
  %v3642 = vadd.f32 0.0, %v3641
  %3643 = vmatmul.f32.gmra.mxu0 %v1272
  %v3644 = vpop.f32.mrf.mxu0
  %v3645 = vadd.f32 0.0, %v3644
  %3646 = vmatmul.f32.gmra.mxu0 %v1275
  %v3647 = vpop.f32.mrf.mxu0
  %v3648 = vadd.f32 0.0, %v3647
  %3649 = vmatmul.f32.gmra.mxu0 %v1278
  %v3650 = vpop.f32.mrf.mxu0
  %v3651 = vadd.f32 0.0, %v3650
  %3652 = vmatmul.f32.gmra.mxu0 %v1281
  %v3653 = vpop.f32.mrf.mxu0
  %v3654 = vadd.f32 0.0, %v3653
  %3655 = vmatmul.f32.gmra.mxu0 %v1284
  %v3656 = vpop.f32.mrf.mxu0
  %v3657 = vadd.f32 0.0, %v3656
  %3658 = vmatmul.f32.gmra.mxu0 %v1287
  %v3659 = vpop.f32.mrf.mxu0
  %v3660 = vadd.f32 0.0, %v3659
  %3661 = vmatmul.f32.gmra.mxu0 %v1290
  %v3662 = vpop.f32.mrf.mxu0
  %v3663 = vadd.f32 0.0, %v3662
  %3664 = vmatmul.f32.gmra.mxu0 %v1293
  %v3665 = vpop.f32.mrf.mxu0
  %v3666 = vadd.f32 0.0, %v3665
  %3667 = vmatmul.f32.gmra.mxu0 %v1296
  %v3668 = vpop.f32.mrf.mxu0
  %v3669 = vadd.f32 0.0, %v3668
  %3670 = vmatmul.f32.gmra.mxu0 %v1299
  %v3671 = vpop.f32.mrf.mxu0
  %v3672 = vadd.f32 0.0, %v3671
  %3673 = vmatmul.f32.gmra.mxu0 %v1302
  %v3674 = vpop.f32.mrf.mxu0
  %v3675 = vadd.f32 0.0, %v3674
  %3676 = vmatmul.f32.gmra.mxu0 %v1305
  %v3677 = vpop.f32.mrf.mxu0
  %v3678 = vadd.f32 0.0, %v3677
  %3679 = vmatmul.f32.gmra.mxu0 %v1308
  %v3680 = vpop.f32.mrf.mxu0
  %v3681 = vadd.f32 0.0, %v3680
  %3682 = vmatmul.f32.gmra.mxu0 %v1311
  %v3683 = vpop.f32.mrf.mxu0
  %v3684 = vadd.f32 0.0, %v3683
  %3685 = vmatmul.f32.gmra.mxu0 %v1314
  %v3686 = vpop.f32.mrf.mxu0
  %v3687 = vadd.f32 0.0, %v3686
  %3688 = vmatmul.f32.gmra.mxu0 %v1317
  %v3689 = vpop.f32.mrf.mxu0
  %v3690 = vadd.f32 0.0, %v3689
  %3691 = vmatmul.f32.gmra.mxu0 %v1320
  %v3692 = vpop.f32.mrf.mxu0
  %v3693 = vadd.f32 0.0, %v3692
  %3694 = vmatmul.f32.gmra.mxu0 %v1323
  %v3695 = vpop.f32.mrf.mxu0
  %v3696 = vadd.f32 0.0, %v3695
  %3697 = vmatmul.f32.gmra.mxu0 %v1326
  %v3698 = vpop.f32.mrf.mxu0
  %v3699 = vadd.f32 0.0, %v3698
  %3700 = vmatmul.f32.gmra.mxu0 %v1329
  %v3701 = vpop.f32.mrf.mxu0
  %v3702 = vadd.f32 0.0, %v3701
  %3703 = vmatmul.f32.gmra.mxu0 %v1332
  %v3704 = vpop.f32.mrf.mxu0
  %v3705 = vadd.f32 0.0, %v3704
  %3706 = vmatmul.f32.gmra.mxu0 %v1335
  %v3707 = vpop.f32.mrf.mxu0
  %v3708 = vadd.f32 0.0, %v3707
  %3709 = vmatmul.f32.gmra.mxu0 %v1338
  %v3710 = vpop.f32.mrf.mxu0
  %v3711 = vadd.f32 0.0, %v3710
  %3712 = vmatmul.f32.gmra.mxu0 %v1341
  %v3713 = vpop.f32.mrf.mxu0
  %v3714 = vadd.f32 0.0, %v3713
  %3715 = vmatmul.f32.gmra.mxu0 %v1344
  %v3716 = vpop.f32.mrf.mxu0
  %v3717 = vadd.f32 0.0, %v3716
  %3718 = vmatmul.f32.gmra.mxu0 %v1347
  %v3719 = vpop.f32.mrf.mxu0
  %v3720 = vadd.f32 0.0, %v3719
  %3721 = vmatmul.f32.gmra.mxu0 %v1350
  %v3722 = vpop.f32.mrf.mxu0
  %v3723 = vadd.f32 0.0, %v3722
  %3724 = vmatmul.f32.gmra.mxu0 %v1353
  %v3725 = vpop.f32.mrf.mxu0
  %v3726 = vadd.f32 0.0, %v3725
  %3727 = vmatmul.f32.gmra.mxu0 %v1356
  %v3728 = vpop.f32.mrf.mxu0
  %v3729 = vadd.f32 0.0, %v3728
  %3730 = vmatmul.f32.gmra.mxu0 %v1359
  %v3731 = vpop.f32.mrf.mxu0
  %v3732 = vadd.f32 0.0, %v3731
  %3733 = vmatmul.f32.gmra.mxu0 %v1362
  %v3734 = vpop.f32.mrf.mxu0
  %v3735 = vadd.f32 0.0, %v3734
  %3736 = vmatmul.f32.gmra.mxu0 %v1365
  %v3737 = vpop.f32.mrf.mxu0
  %v3738 = vadd.f32 0.0, %v3737
  %3739 = vmatmul.f32.gmra.mxu0 %v1368
  %v3740 = vpop.f32.mrf.mxu0
  %v3741 = vadd.f32 0.0, %v3740
  %3742 = vmatmul.f32.gmra.mxu0 %v1371
  %v3743 = vpop.f32.mrf.mxu0
  %v3744 = vadd.f32 0.0, %v3743
  %3745 = vmatmul.f32.gmra.mxu0 %v1374
  %v3746 = vpop.f32.mrf.mxu0
  %v3747 = vadd.f32 0.0, %v3746
  %3748 = vmatmul.f32.gmra.mxu0 %v1377
  %v3749 = vpop.f32.mrf.mxu0
  %v3750 = vadd.f32 0.0, %v3749
  %3751 = vmatmul.f32.gmra.mxu0 %v1380
  %v3752 = vpop.f32.mrf.mxu0
  %v3753 = vadd.f32 0.0, %v3752
  %3754 = vmatmul.f32.gmra.mxu0 %v1383
  %v3755 = vpop.f32.mrf.mxu0
  %v3756 = vadd.f32 0.0, %v3755
  %3757 = vmatmul.f32.gmra.mxu0 %v1386
  %v3758 = vpop.f32.mrf.mxu0
  %v3759 = vadd.f32 0.0, %v3758
  %3760 = vmatmul.f32.gmra.mxu0 %v1389
  %v3761 = vpop.f32.mrf.mxu0
  %v3762 = vadd.f32 0.0, %v3761
  %3763 = vmatmul.f32.gmra.mxu0 %v1392
  %v3764 = vpop.f32.mrf.mxu0
  %v3765 = vadd.f32 0.0, %v3764
  %3766 = vmatmul.f32.gmra.mxu0 %v1395
  %v3767 = vpop.f32.mrf.mxu0
  %v3768 = vadd.f32 0.0, %v3767
  %3769 = vmatmul.f32.gmra.mxu0 %v1398
  %v3770 = vpop.f32.mrf.mxu0
  %v3771 = vadd.f32 0.0, %v3770
  %3772 = vmatmul.f32.gmra.mxu0 %v1401
  %v3773 = vpop.f32.mrf.mxu0
  %v3774 = vadd.f32 0.0, %v3773
  %3775 = vmatmul.f32.gmra.mxu0 %v1404
  %v3776 = vpop.f32.mrf.mxu0
  %v3777 = vadd.f32 0.0, %v3776
  %3778 = vmatmul.f32.gmra.mxu0 %v1407
  %v3779 = vpop.f32.mrf.mxu0
  %v3780 = vadd.f32 0.0, %v3779
  %3781 = vmatmul.f32.gmra.mxu0 %v1410
  %v3782 = vpop.f32.mrf.mxu0
  %v3783 = vadd.f32 0.0, %v3782
  %3784 = vmatmul.f32.gmra.mxu0 %v1413
  %v3785 = vpop.f32.mrf.mxu0
  %v3786 = vadd.f32 0.0, %v3785
  %3787 = vmatmul.f32.gmra.mxu0 %v1416
  %v3788 = vpop.f32.mrf.mxu0
  %v3789 = vadd.f32 0.0, %v3788
  %3790 = vmatmul.f32.gmra.mxu0 %v1419
  %v3791 = vpop.f32.mrf.mxu0
  %v3792 = vadd.f32 0.0, %v3791
  %3793 = vmatmul.f32.gmra.mxu0 %v1422
  %v3794 = vpop.f32.mrf.mxu0
  %v3795 = vadd.f32 0.0, %v3794
  %3796 = vmatmul.f32.gmra.mxu0 %v1425
  %v3797 = vpop.f32.mrf.mxu0
  %v3798 = vadd.f32 0.0, %v3797
  %3799 = vmatmul.f32.gmra.mxu0 %v1428
  %v3800 = vpop.f32.mrf.mxu0
  %v3801 = vadd.f32 0.0, %v3800
  %3802 = vmatmul.f32.gmra.mxu0 %v1431
  %v3803 = vpop.f32.mrf.mxu0
  %v3804 = vadd.f32 0.0, %v3803
  %3805 = vmatmul.f32.gmra.mxu0 %v1434
  %v3806 = vpop.f32.mrf.mxu0
  %v3807 = vadd.f32 0.0, %v3806
  %3808 = vmatmul.f32.gmra.mxu0 %v1437
  %v3809 = vpop.f32.mrf.mxu0
  %v3810 = vadd.f32 0.0, %v3809
  %3811 = vmatmul.f32.gmra.mxu0 %v1440
  %v3812 = vpop.f32.mrf.mxu0
  %v3813 = vadd.f32 0.0, %v3812
  %3814 = vmatmul.f32.gmra.mxu0 %v1443
  %v3815 = vpop.f32.mrf.mxu0
  %v3816 = vadd.f32 0.0, %v3815
  %3817 = vmatmul.f32.gmra.mxu0 %v1446
  %v3818 = vpop.f32.mrf.mxu0
  %v3819 = vadd.f32 0.0, %v3818
  %3820 = vmatmul.f32.gmra.mxu0 %v1449
  %v3821 = vpop.f32.mrf.mxu0
  %v3822 = vadd.f32 0.0, %v3821
  %3823 = vmatmul.f32.gmra.mxu0 %v1452
  %v3824 = vpop.f32.mrf.mxu0
  %v3825 = vadd.f32 0.0, %v3824
  %3826 = vmatmul.f32.gmra.mxu0 %v1455
  %v3827 = vpop.f32.mrf.mxu0
  %v3828 = vadd.f32 0.0, %v3827
  %3829 = vmatmul.f32.gmra.mxu0 %v1458
  %v3830 = vpop.f32.mrf.mxu0
  %v3831 = vadd.f32 0.0, %v3830
  %3832 = vmatmul.f32.gmra.mxu0 %v1461
  %v3833 = vpop.f32.mrf.mxu0
  %v3834 = vadd.f32 0.0, %v3833
  %3835 = vmatmul.f32.gmra.mxu0 %v1464
  %v3836 = vpop.f32.mrf.mxu0
  %v3837 = vadd.f32 0.0, %v3836
  %3838 = vmatmul.f32.gmra.mxu0 %v1467
  %v3839 = vpop.f32.mrf.mxu0
  %v3840 = vadd.f32 0.0, %v3839
  %3841 = vmatmul.f32.gmra.mxu0 %v1470
  %v3842 = vpop.f32.mrf.mxu0
  %v3843 = vadd.f32 0.0, %v3842
  %3844 = vmatmul.f32.gmra.mxu0 %v1473
  %v3845 = vpop.f32.mrf.mxu0
  %v3846 = vadd.f32 0.0, %v3845
  %3847 = vmatmul.f32.gmra.mxu0 %v1476
  %v3848 = vpop.f32.mrf.mxu0
  %v3849 = vadd.f32 0.0, %v3848
  %3850 = vmatmul.f32.gmra.mxu0 %v1479
  %v3851 = vpop.f32.mrf.mxu0
  %v3852 = vadd.f32 0.0, %v3851
  %3853 = vmatmul.f32.gmra.mxu0 %v1482
  %v3854 = vpop.f32.mrf.mxu0
  %v3855 = vadd.f32 0.0, %v3854
  %3856 = vmatmul.f32.gmra.mxu0 %v1485
  %v3857 = vpop.f32.mrf.mxu0
  %v3858 = vadd.f32 0.0, %v3857
  %3859 = vmatmul.f32.gmra.mxu0 %v1488
  %v3860 = vpop.f32.mrf.mxu0
  %v3861 = vadd.f32 0.0, %v3860
  %3862 = vmatmul.f32.gmra.mxu0 %v1491
  %v3863 = vpop.f32.mrf.mxu0
  %v3864 = vadd.f32 0.0, %v3863
  %3865 = vmatmul.f32.gmra.mxu0 %v1494
  %v3866 = vpop.f32.mrf.mxu0
  %v3867 = vadd.f32 0.0, %v3866
  %3868 = vmatmul.f32.gmra.mxu0 %v1497
  %v3869 = vpop.f32.mrf.mxu0
  %v3870 = vadd.f32 0.0, %v3869
  %3871 = vmatmul.f32.gmra.mxu0 %v1500
  %v3872 = vpop.f32.mrf.mxu0
  %v3873 = vadd.f32 0.0, %v3872
  %3874 = vmatmul.f32.gmra.mxu0 %v1503
  %v3875 = vpop.f32.mrf.mxu0
  %v3876 = vadd.f32 0.0, %v3875
  %3877 = vmatmul.f32.gmra.mxu0 %v1506
  %v3878 = vpop.f32.mrf.mxu0
  %v3879 = vadd.f32 0.0, %v3878
  %3880 = vmatmul.f32.gmra.mxu0 %v1509
  %v3881 = vpop.f32.mrf.mxu0
  %v3882 = vadd.f32 0.0, %v3881
  %3883 = vmatmul.f32.gmra.mxu0 %v1512
  %v3884 = vpop.f32.mrf.mxu0
  %v3885 = vadd.f32 0.0, %v3884
  %3886 = vmatmul.f32.gmra.mxu0 %v1515
  %v3887 = vpop.f32.mrf.mxu0
  %v3888 = vadd.f32 0.0, %v3887
  %3889 = vmatmul.f32.gmra.mxu0 %v1518
  %v3890 = vpop.f32.mrf.mxu0
  %v3891 = vadd.f32 0.0, %v3890
  %3892 = vmatmul.f32.gmra.mxu0 %v1521
  %v3893 = vpop.f32.mrf.mxu0
  %v3894 = vadd.f32 0.0, %v3893
  %3895 = vmatmul.f32.gmra.mxu0 %v1524
  %v3896 = vpop.f32.mrf.mxu0
  %v3897 = vadd.f32 0.0, %v3896
  %3898 = vmatmul.f32.gmra.mxu0 %v1527
  %v3899 = vpop.f32.mrf.mxu0
  %v3900 = vadd.f32 0.0, %v3899
  %3901 = vmatmul.f32.gmra.mxu0 %v1530
  %v3902 = vpop.f32.mrf.mxu0
  %v3903 = vadd.f32 0.0, %v3902
  %3904 = vmatmul.f32.gmra.mxu0 %v1533
  %v3905 = vpop.f32.mrf.mxu0
  %v3906 = vadd.f32 0.0, %v3905
  %3907 = vmatmul.f32.gmra.mxu0 %v1536
  %v3908 = vpop.f32.mrf.mxu0
  %v3909 = vadd.f32 0.0, %v3908
  %3910 = vmatmul.f32.gmra.mxu0 %v1539
  %v3911 = vpop.f32.mrf.mxu0
  %v3912 = vadd.f32 0.0, %v3911
  %3913 = vmatmul.f32.gmra.mxu0 %v1542
  %v3914 = vpop.f32.mrf.mxu0
  %v3915 = vadd.f32 0.0, %v3914
  %3916 = vmatmul.f32.gmra.mxu0 %v1545
  %v3917 = vpop.f32.mrf.mxu0
  %v3918 = vadd.f32 0.0, %v3917
  %3919 = vmatmul.f32.gmra.mxu0 %v1548
  %v3920 = vpop.f32.mrf.mxu0
  %v3921 = vadd.f32 0.0, %v3920
  %3922 = vmatmul.f32.gmra.mxu0 %v1551
  %v3923 = vpop.f32.mrf.mxu0
  %v3924 = vadd.f32 0.0, %v3923
  %3925 = vmatmul.f32.gmra.mxu0 %v1554
  %v3926 = vpop.f32.mrf.mxu0
  %v3927 = vadd.f32 0.0, %v3926
  %3928 = vmatmul.f32.gmra.mxu0 %v1557
  %v3929 = vpop.f32.mrf.mxu0
  %v3930 = vadd.f32 0.0, %v3929
  %3931 = vmatmul.f32.gmra.mxu0 %v1560
  %v3932 = vpop.f32.mrf.mxu0
  %v3933 = vadd.f32 0.0, %v3932
  %3934 = vmatmul.f32.gmra.mxu0 %v1563
  %v3935 = vpop.f32.mrf.mxu0
  %v3936 = vadd.f32 0.0, %v3935
  %3937 = vmatmul.f32.gmra.mxu0 %v1566
  %v3938 = vpop.f32.mrf.mxu0
  %v3939 = vadd.f32 0.0, %v3938
  %3940 = vmatmul.f32.gmra.mxu0 %v1569
  %v3941 = vpop.f32.mrf.mxu0
  %v3942 = vadd.f32 0.0, %v3941
  %3943 = vmatmul.f32.gmra.mxu0 %v1572
  %v3944 = vpop.f32.mrf.mxu0
  %v3945 = vadd.f32 0.0, %v3944
  %3946 = vmatmul.f32.gmra.mxu0 %v1575
  %v3947 = vpop.f32.mrf.mxu0
  %v3948 = vadd.f32 0.0, %v3947
  %3949 = vmatmul.f32.gmra.mxu0 %v1578
  %v3950 = vpop.f32.mrf.mxu0
  %v3951 = vadd.f32 0.0, %v3950
  %3952 = vmatmul.f32.gmra.mxu0 %v1581
  %v3953 = vpop.f32.mrf.mxu0
  %v3954 = vadd.f32 0.0, %v3953
  %3955 = vmatmul.f32.gmra.mxu0 %v1584
  %v3956 = vpop.f32.mrf.mxu0
  %v3957 = vadd.f32 0.0, %v3956
  %3958 = vmatmul.f32.gmra.mxu0 %v1587
  %v3959 = vpop.f32.mrf.mxu0
  %v3960 = vadd.f32 0.0, %v3959
  %3961 = vmatmul.f32.gmra.mxu0 %v1590
  %v3962 = vpop.f32.mrf.mxu0
  %v3963 = vadd.f32 0.0, %v3962
  %3964 = vmatmul.f32.gmra.mxu0 %v1593
  %v3965 = vpop.f32.mrf.mxu0
  %v3966 = vadd.f32 0.0, %v3965
  %3967 = vmatmul.f32.gmra.mxu0 %v1596
  %v3968 = vpop.f32.mrf.mxu0
  %v3969 = vadd.f32 0.0, %v3968
  %3970 = vmatmul.f32.gmra.mxu0 %v1599
  %v3971 = vpop.f32.mrf.mxu0
  %v3972 = vadd.f32 0.0, %v3971
  %3973 = vmatmul.f32.gmra.mxu0 %v1602
  %v3974 = vpop.f32.mrf.mxu0
  %v3975 = vadd.f32 0.0, %v3974
  %3976 = vmatmul.f32.gmra.mxu0 %v1605
  %v3977 = vpop.f32.mrf.mxu0
  %v3978 = vadd.f32 0.0, %v3977
  %3979 = vmatmul.f32.gmra.mxu0 %v1608
  %v3980 = vpop.f32.mrf.mxu0
  %v3981 = vadd.f32 0.0, %v3980
  %3982 = vmatmul.f32.gmra.mxu0 %v1611
  %v3983 = vpop.f32.mrf.mxu0
  %v3984 = vadd.f32 0.0, %v3983
  %3985 = vmatmul.f32.gmra.mxu0 %v1614
  %v3986 = vpop.f32.mrf.mxu0
  %v3987 = vadd.f32 0.0, %v3986
  %3988 = vmatmul.f32.gmra.mxu0 %v1617
  %v3989 = vpop.f32.mrf.mxu0
  %v3990 = vadd.f32 0.0, %v3989
  %3991 = vmatmul.f32.gmra.mxu0 %v1620
  %v3992 = vpop.f32.mrf.mxu0
  %v3993 = vadd.f32 0.0, %v3992
  %3994 = vmatmul.f32.gmra.mxu0 %v1623
  %v3995 = vpop.f32.mrf.mxu0
  %v3996 = vadd.f32 0.0, %v3995
  %3997 = vmatmul.f32.gmra.mxu0 %v1626
  %v3998 = vpop.f32.mrf.mxu0
  %v3999 = vadd.f32 0.0, %v3998
  %4000 = vmatmul.f32.gmra.mxu0 %v1629
  %v4001 = vpop.f32.mrf.mxu0
  %v4002 = vadd.f32 0.0, %v4001
  %4003 = vmatmul.f32.gmra.mxu0 %v1632
  %v4004 = vpop.f32.mrf.mxu0
  %v4005 = vadd.f32 0.0, %v4004
  %4006 = vmatmul.f32.gmra.mxu0 %v1635
  %v4007 = vpop.f32.mrf.mxu0
  %v4008 = vadd.f32 0.0, %v4007
  %4009 = vmatmul.f32.gmra.mxu0 %v1638
  %v4010 = vpop.f32.mrf.mxu0
  %v4011 = vadd.f32 0.0, %v4010
  %4012 = vmatmul.f32.gmra.mxu0 %v1641
  %v4013 = vpop.f32.mrf.mxu0
  %v4014 = vadd.f32 0.0, %v4013
  %4015 = vmatmul.f32.gmra.mxu0 %v1644
  %v4016 = vpop.f32.mrf.mxu0
  %v4017 = vadd.f32 0.0, %v4016
  %4018 = vmatmul.f32.gmra.mxu0 %v1647
  %v4019 = vpop.f32.mrf.mxu0
  %v4020 = vadd.f32 0.0, %v4019
  %4021 = vmatmul.f32.gmra.mxu0 %v1650
  %v4022 = vpop.f32.mrf.mxu0
  %v4023 = vadd.f32 0.0, %v4022
  %4024 = vmatmul.f32.gmra.mxu0 %v1653
  %v4025 = vpop.f32.mrf.mxu0
  %v4026 = vadd.f32 0.0, %v4025
  %4027 = vmatmul.f32.gmra.mxu0 %v1656
  %v4028 = vpop.f32.mrf.mxu0
  %v4029 = vadd.f32 0.0, %v4028
  %4030 = vmatmul.f32.gmra.mxu0 %v1659
  %v4031 = vpop.f32.mrf.mxu0
  %v4032 = vadd.f32 0.0, %v4031
  %4033 = vmatmul.f32.gmra.mxu0 %v1662
  %v4034 = vpop.f32.mrf.mxu0
  %v4035 = vadd.f32 0.0, %v4034
  %4036 = vmatmul.f32.gmra.mxu0 %v1665
  %v4037 = vpop.f32.mrf.mxu0
  %v4038 = vadd.f32 0.0, %v4037
  %4039 = vmatmul.f32.gmra.mxu0 %v1668
  %v4040 = vpop.f32.mrf.mxu0
  %v4041 = vadd.f32 0.0, %v4040
  %4042 = vmatmul.f32.gmra.mxu0 %v1671
  %v4043 = vpop.f32.mrf.mxu0
  %v4044 = vadd.f32 0.0, %v4043
  %4045 = vmatmul.f32.gmra.mxu0 %v1674
  %v4046 = vpop.f32.mrf.mxu0
  %v4047 = vadd.f32 0.0, %v4046
  %4048 = vmatmul.f32.gmra.mxu0 %v1677
  %v4049 = vpop.f32.mrf.mxu0
  %v4050 = vadd.f32 0.0, %v4049
  %4051 = vmatmul.f32.gmra.mxu0 %v1680
  %v4052 = vpop.f32.mrf.mxu0
  %v4053 = vadd.f32 0.0, %v4052
  %4054 = vmatmul.f32.gmra.mxu0 %v1683
  %v4055 = vpop.f32.mrf.mxu0
  %v4056 = vadd.f32 0.0, %v4055
  %4057 = vmatmul.f32.gmra.mxu0 %v1686
  %v4058 = vpop.f32.mrf.mxu0
  %v4059 = vadd.f32 0.0, %v4058
  %4060 = vmatmul.f32.gmra.mxu0 %v1689
  %v4061 = vpop.f32.mrf.mxu0
  %v4062 = vadd.f32 0.0, %v4061
  %4063 = vmatmul.f32.gmra.mxu0 %v1692
  %v4064 = vpop.f32.mrf.mxu0
  %v4065 = vadd.f32 0.0, %v4064
  %4066 = vmatmul.f32.gmra.mxu0 %v1695
  %v4067 = vpop.f32.mrf.mxu0
  %v4068 = vadd.f32 0.0, %v4067
  %4069 = vmatmul.f32.gmra.mxu0 %v1698
  %v4070 = vpop.f32.mrf.mxu0
  %v4071 = vadd.f32 0.0, %v4070
  %4072 = vmatmul.f32.gmra.mxu0 %v1701
  %v4073 = vpop.f32.mrf.mxu0
  %v4074 = vadd.f32 0.0, %v4073
  %4075 = vmatmul.f32.gmra.mxu0 %v1704
  %v4076 = vpop.f32.mrf.mxu0
  %v4077 = vadd.f32 0.0, %v4076
  %4078 = vmatmul.f32.gmra.mxu0 %v1707
  %v4079 = vpop.f32.mrf.mxu0
  %v4080 = vadd.f32 0.0, %v4079
  %4081 = vmatmul.f32.gmra.mxu0 %v1710
  %v4082 = vpop.f32.mrf.mxu0
  %v4083 = vadd.f32 0.0, %v4082
  %4084 = vmatmul.f32.gmra.mxu0 %v1713
  %v4085 = vpop.f32.mrf.mxu0
  %v4086 = vadd.f32 0.0, %v4085
  %4087 = vmatmul.f32.gmra.mxu0 %v1716
  %v4088 = vpop.f32.mrf.mxu0
  %v4089 = vadd.f32 0.0, %v4088
  %4090 = vmatmul.f32.gmra.mxu0 %v1719
  %v4091 = vpop.f32.mrf.mxu0
  %v4092 = vadd.f32 0.0, %v4091
  %4093 = vmatmul.f32.gmra.mxu0 %v1722
  %v4094 = vpop.f32.mrf.mxu0
  %v4095 = vadd.f32 0.0, %v4094
  %4096 = vmatmul.f32.gmra.mxu0 %v1725
  %v4097 = vpop.f32.mrf.mxu0
  %v4098 = vadd.f32 0.0, %v4097
  %4099 = vmatmul.f32.gmra.mxu0 %v1728
  %v4100 = vpop.f32.mrf.mxu0
  %v4101 = vadd.f32 0.0, %v4100
  %4102 = vmatmul.f32.gmra.mxu0 %v1731
  %v4103 = vpop.f32.mrf.mxu0
  %v4104 = vadd.f32 0.0, %v4103
  %4105 = vmatmul.f32.gmra.mxu0 %v1734
  %v4106 = vpop.f32.mrf.mxu0
  %v4107 = vadd.f32 0.0, %v4106
  %4108 = vmatmul.f32.gmra.mxu0 %v1737
  %v4109 = vpop.f32.mrf.mxu0
  %v4110 = vadd.f32 0.0, %v4109
  %4111 = vmatmul.f32.gmra.mxu0 %v1740
  %v4112 = vpop.f32.mrf.mxu0
  %v4113 = vadd.f32 0.0, %v4112
  %4114 = vmatmul.f32.gmra.mxu0 %v1743
  %v4115 = vpop.f32.mrf.mxu0
  %v4116 = vadd.f32 0.0, %v4115
  %4117 = vmatmul.f32.gmra.mxu0 %v1746
  %v4118 = vpop.f32.mrf.mxu0
  %v4119 = vadd.f32 0.0, %v4118
  %4120 = vmatmul.f32.gmra.mxu0 %v1749
  %v4121 = vpop.f32.mrf.mxu0
  %v4122 = vadd.f32 0.0, %v4121
  %4123 = vmatmul.f32.gmra.mxu0 %v1752
  %v4124 = vpop.f32.mrf.mxu0
  %v4125 = vadd.f32 0.0, %v4124
  %4126 = vmatmul.f32.gmra.mxu0 %v1755
  %v4127 = vpop.f32.mrf.mxu0
  %v4128 = vadd.f32 0.0, %v4127
  %4129 = vmatmul.f32.gmra.mxu0 %v1758
  %v4130 = vpop.f32.mrf.mxu0
  %v4131 = vadd.f32 0.0, %v4130
  %4132 = vmatmul.f32.gmra.mxu0 %v1761
  %v4133 = vpop.f32.mrf.mxu0
  %v4134 = vadd.f32 0.0, %v4133
  %4135 = vmatmul.f32.gmra.mxu0 %v1764
  %v4136 = vpop.f32.mrf.mxu0
  %v4137 = vadd.f32 0.0, %v4136
  %4138 = vmatmul.f32.gmra.mxu0 %v1767
  %v4139 = vpop.f32.mrf.mxu0
  %v4140 = vadd.f32 0.0, %v4139
  %4141 = vmatmul.f32.gmra.mxu0 %v1770
  %v4142 = vpop.f32.mrf.mxu0
  %v4143 = vadd.f32 0.0, %v4142
  %4144 = vmatmul.f32.gmra.mxu0 %v1773
  %v4145 = vpop.f32.mrf.mxu0
  %v4146 = vadd.f32 0.0, %v4145
  %4147 = vmatmul.f32.gmra.mxu0 %v1776
  %v4148 = vpop.f32.mrf.mxu0
  %v4149 = vadd.f32 0.0, %v4148
  %4150 = vmatmul.f32.gmra.mxu0 %v1779
  %v4151 = vpop.f32.mrf.mxu0
  %v4152 = vadd.f32 0.0, %v4151
  %4153 = vmatmul.f32.gmra.mxu0 %v1782
  %v4154 = vpop.f32.mrf.mxu0
  %v4155 = vadd.f32 0.0, %v4154
  %4156 = vmatmul.f32.gmra.mxu0 %v1785
  %v4157 = vpop.f32.mrf.mxu0
  %v4158 = vadd.f32 0.0, %v4157
  %4159 = vmatmul.f32.gmra.mxu0 %v1788
  %v4160 = vpop.f32.mrf.mxu0
  %v4161 = vadd.f32 0.0, %v4160
  %4162 = vmatmul.f32.gmra.mxu0 %v1791
  %v4163 = vpop.f32.mrf.mxu0
  %v4164 = vadd.f32 0.0, %v4163
  %4165 = vmatmul.f32.gmra.mxu0 %v1794
  %v4166 = vpop.f32.mrf.mxu0
  %v4167 = vadd.f32 0.0, %v4166
  %4168 = vmatmul.f32.gmra.mxu0 %v1797
  %v4169 = vpop.f32.mrf.mxu0
  %v4170 = vadd.f32 0.0, %v4169
  %4171 = vmatmul.f32.gmra.mxu0 %v1800
  %v4172 = vpop.f32.mrf.mxu0
  %v4173 = vadd.f32 0.0, %v4172
  %4174 = vmatmul.f32.gmra.mxu0 %v1803
  %v4175 = vpop.f32.mrf.mxu0
  %v4176 = vadd.f32 0.0, %v4175
  %4177 = vmatmul.f32.gmra.mxu0 %v1806
  %v4178 = vpop.f32.mrf.mxu0
  %v4179 = vadd.f32 0.0, %v4178
  %4180 = vmatmul.f32.gmra.mxu0 %v1809
  %v4181 = vpop.f32.mrf.mxu0
  %v4182 = vadd.f32 0.0, %v4181
  %4183 = vmatmul.f32.gmra.mxu0 %v1812
  %v4184 = vpop.f32.mrf.mxu0
  %v4185 = vadd.f32 0.0, %v4184
  %4186 = vmatmul.f32.gmra.mxu0 %v1815
  %v4187 = vpop.f32.mrf.mxu0
  %v4188 = vadd.f32 0.0, %v4187
  %4189 = vmatmul.f32.gmra.mxu0 %v1818
  %v4190 = vpop.f32.mrf.mxu0
  %v4191 = vadd.f32 0.0, %v4190
  %4192 = vmatmul.f32.gmra.mxu0 %v1821
  %v4193 = vpop.f32.mrf.mxu0
  %v4194 = vadd.f32 0.0, %v4193
  %4195 = vmatmul.f32.gmra.mxu0 %v1824
  %v4196 = vpop.f32.mrf.mxu0
  %v4197 = vadd.f32 0.0, %v4196
  %4198 = vmatmul.f32.gmra.mxu0 %v1827
  %v4199 = vpop.f32.mrf.mxu0
  %v4200 = vadd.f32 0.0, %v4199
  %4201 = vmatmul.f32.gmra.mxu0 %v1830
  %v4202 = vpop.f32.mrf.mxu0
  %v4203 = vadd.f32 0.0, %v4202
  %4204 = vmatmul.f32.gmra.mxu0 %v1833
  %v4205 = vpop.f32.mrf.mxu0
  %v4206 = vadd.f32 0.0, %v4205
  %4207 = vmatmul.f32.gmra.mxu0 %v1836
  %v4208 = vpop.f32.mrf.mxu0
  %v4209 = vadd.f32 0.0, %v4208
  %4210 = vmatmul.f32.gmra.mxu0 %v1839
  %v4211 = vpop.f32.mrf.mxu0
  %v4212 = vadd.f32 0.0, %v4211
  %4213 = vmatmul.f32.gmra.mxu0 %v1842
  %v4214 = vpop.f32.mrf.mxu0
  %v4215 = vadd.f32 0.0, %v4214
  %4216 = vmatmul.f32.gmra.mxu0 %v1845
  %v4217 = vpop.f32.mrf.mxu0
  %v4218 = vadd.f32 0.0, %v4217
  %4219 = vmatmul.f32.gmra.mxu0 %v1848
  %v4220 = vpop.f32.mrf.mxu0
  %v4221 = vadd.f32 0.0, %v4220
  %4222 = vmatmul.f32.gmra.mxu0 %v1851
  %v4223 = vpop.f32.mrf.mxu0
  %v4224 = vadd.f32 0.0, %v4223
  %4225 = vmatmul.f32.gmra.mxu0 %v1854
  %v4226 = vpop.f32.mrf.mxu0
  %v4227 = vadd.f32 0.0, %v4226
  %4228 = vmatmul.f32.gmra.mxu0 %v1857
  %v4229 = vpop.f32.mrf.mxu0
  %v4230 = vadd.f32 0.0, %v4229
  %4231 = vmatmul.f32.gmra.mxu0 %v1860
  %v4232 = vpop.f32.mrf.mxu0
  %v4233 = vadd.f32 0.0, %v4232
  %4234 = vmatmul.f32.gmra.mxu0 %v1863
  %v4235 = vpop.f32.mrf.mxu0
  %v4236 = vadd.f32 0.0, %v4235
  %4237 = vmatmul.f32.gmra.mxu0 %v1866
  %v4238 = vpop.f32.mrf.mxu0
  %v4239 = vadd.f32 0.0, %v4238
  %4240 = vmatmul.f32.gmra.mxu0 %v1869
  %v4241 = vpop.f32.mrf.mxu0
  %v4242 = vadd.f32 0.0, %v4241
  %4243 = vmatmul.f32.gmra.mxu0 %v1872
  %v4244 = vpop.f32.mrf.mxu0
  %v4245 = vadd.f32 0.0, %v4244
  %4246 = vmatmul.f32.gmra.mxu0 %v1875
  %v4247 = vpop.f32.mrf.mxu0
  %v4248 = vadd.f32 0.0, %v4247
  %4249 = vmatmul.f32.gmra.mxu0 %v1878
  %v4250 = vpop.f32.mrf.mxu0
  %v4251 = vadd.f32 0.0, %v4250
  %4252 = vmatmul.f32.gmra.mxu0 %v1881
  %v4253 = vpop.f32.mrf.mxu0
  %v4254 = vadd.f32 0.0, %v4253
  %4255 = vmatmul.f32.gmra.mxu0 %v1884
  %v4256 = vpop.f32.mrf.mxu0
  %v4257 = vadd.f32 0.0, %v4256
  %4258 = vmatmul.f32.gmra.mxu0 %v1887
  %v4259 = vpop.f32.mrf.mxu0
  %v4260 = vadd.f32 0.0, %v4259
  %4261 = vmatmul.f32.gmra.mxu0 %v1890
  %v4262 = vpop.f32.mrf.mxu0
  %v4263 = vadd.f32 0.0, %v4262
  %4264 = vmatmul.f32.gmra.mxu0 %v1893
  %v4265 = vpop.f32.mrf.mxu0
  %v4266 = vadd.f32 0.0, %v4265
  %4267 = vmatmul.f32.gmra.mxu0 %v1896
  %v4268 = vpop.f32.mrf.mxu0
  %v4269 = vadd.f32 0.0, %v4268
  %4270 = vmatmul.f32.gmra.mxu0 %v1899
  %v4271 = vpop.f32.mrf.mxu0
  %v4272 = vadd.f32 0.0, %v4271
  %4273 = vmatmul.f32.gmra.mxu0 %v1902
  %v4274 = vpop.f32.mrf.mxu0
  %v4275 = vadd.f32 0.0, %v4274
  %4276 = vmatmul.f32.gmra.mxu0 %v1905
  %v4277 = vpop.f32.mrf.mxu0
  %v4278 = vadd.f32 0.0, %v4277
  %4279 = vmatmul.f32.gmra.mxu0 %v1908
  %v4280 = vpop.f32.mrf.mxu0
  %v4281 = vadd.f32 0.0, %v4280
  %4282 = vmatmul.f32.gmra.mxu0 %v1911
  %v4283 = vpop.f32.mrf.mxu0
  %v4284 = vadd.f32 0.0, %v4283
  %4285 = vmatmul.f32.gmra.mxu0 %v1914
  %v4286 = vpop.f32.mrf.mxu0
  %v4287 = vadd.f32 0.0, %v4286
  %4288 = vmatmul.f32.gmra.mxu0 %v1917
  %v4289 = vpop.f32.mrf.mxu0
  %v4290 = vadd.f32 0.0, %v4289
  %4291 = vmatmul.f32.gmra.mxu0 %v1920
  %v4292 = vpop.f32.mrf.mxu0
  %v4293 = vadd.f32 0.0, %v4292
  %4294 = vmatmul.f32.gmra.mxu0 %v1923
  %v4295 = vpop.f32.mrf.mxu0
  %v4296 = vadd.f32 0.0, %v4295
  %4297 = vmatmul.f32.gmra.mxu0 %v1926
  %v4298 = vpop.f32.mrf.mxu0
  %v4299 = vadd.f32 0.0, %v4298
  %4300 = vmatmul.f32.gmra.mxu0 %v1929
  %v4301 = vpop.f32.mrf.mxu0
  %v4302 = vadd.f32 0.0, %v4301
  %4303 = vmatmul.f32.gmra.mxu0 %v1932
  %v4304 = vpop.f32.mrf.mxu0
  %v4305 = vadd.f32 0.0, %v4304
  %4306 = vmatmul.f32.gmra.mxu0 %v1935
  %v4307 = vpop.f32.mrf.mxu0
  %v4308 = vadd.f32 0.0, %v4307
  %4309 = vmatmul.f32.gmra.mxu0 %v1938
  %v4310 = vpop.f32.mrf.mxu0
  %v4311 = vadd.f32 0.0, %v4310
  %4312 = vmatmul.f32.gmra.mxu0 %v1941
  %v4313 = vpop.f32.mrf.mxu0
  %v4314 = vadd.f32 0.0, %v4313
  %4315 = vmatmul.f32.gmra.mxu0 %v1944
  %v4316 = vpop.f32.mrf.mxu0
  %v4317 = vadd.f32 0.0, %v4316
  %4318 = vmatmul.f32.gmra.mxu0 %v1947
  %v4319 = vpop.f32.mrf.mxu0
  %v4320 = vadd.f32 0.0, %v4319
  %4321 = vmatmul.f32.gmra.mxu0 %v1950
  %v4322 = vpop.f32.mrf.mxu0
  %v4323 = vadd.f32 0.0, %v4322
  %4324 = vmatmul.f32.gmra.mxu0 %v1953
  %v4325 = vpop.f32.mrf.mxu0
  %v4326 = vadd.f32 0.0, %v4325
  %4327 = vmatmul.f32.gmra.mxu0 %v1956
  %v4328 = vpop.f32.mrf.mxu0
  %v4329 = vadd.f32 0.0, %v4328
  %4330 = vmatmul.f32.gmra.mxu0 %v1959
  %v4331 = vpop.f32.mrf.mxu0
  %v4332 = vadd.f32 0.0, %v4331
  %4333 = vmatmul.f32.gmra.mxu0 %v1962
  %v4334 = vpop.f32.mrf.mxu0
  %v4335 = vadd.f32 0.0, %v4334
  %4336 = vmatmul.f32.gmra.mxu0 %v1965
  %v4337 = vpop.f32.mrf.mxu0
  %v4338 = vadd.f32 0.0, %v4337
  %4339 = vmatmul.f32.gmra.mxu0 %v1968
  %v4340 = vpop.f32.mrf.mxu0
  %v4341 = vadd.f32 0.0, %v4340
  %4342 = vmatmul.f32.gmra.mxu0 %v1971
  %v4343 = vpop.f32.mrf.mxu0
  %v4344 = vadd.f32 0.0, %v4343
  %4345 = vmatmul.f32.gmra.mxu0 %v1974
  %v4346 = vpop.f32.mrf.mxu0
  %v4347 = vadd.f32 0.0, %v4346
  %4348 = vmatmul.f32.gmra.mxu0 %v1977
  %v4349 = vpop.f32.mrf.mxu0
  %v4350 = vadd.f32 0.0, %v4349
  %4351 = vmatmul.f32.gmra.mxu0 %v1980
  %v4352 = vpop.f32.mrf.mxu0
  %v4353 = vadd.f32 0.0, %v4352
  %4354 = vmatmul.f32.gmra.mxu0 %v1983
  %v4355 = vpop.f32.mrf.mxu0
  %v4356 = vadd.f32 0.0, %v4355
  %4357 = vmatmul.f32.gmra.mxu0 %v1986
  %v4358 = vpop.f32.mrf.mxu0
  %v4359 = vadd.f32 0.0, %v4358
  %4360 = vmatmul.f32.gmra.mxu0 %v1989
  %v4361 = vpop.f32.mrf.mxu0
  %v4362 = vadd.f32 0.0, %v4361
  %4363 = vmatmul.f32.gmra.mxu0 %v1992
  %v4364 = vpop.f32.mrf.mxu0
  %v4365 = vadd.f32 0.0, %v4364
  %4366 = vmatmul.f32.gmra.mxu0 %v1995
  %v4367 = vpop.f32.mrf.mxu0
  %v4368 = vadd.f32 0.0, %v4367
  %4369 = vmatmul.f32.gmra.mxu0 %v1998
  %v4370 = vpop.f32.mrf.mxu0
  %v4371 = vadd.f32 0.0, %v4370
  %4372 = vmatmul.f32.gmra.mxu0 %v2001
  %v4373 = vpop.f32.mrf.mxu0
  %v4374 = vadd.f32 0.0, %v4373
  %4375 = vmatmul.f32.gmra.mxu0 %v2004
  %v4376 = vpop.f32.mrf.mxu0
  %v4377 = vadd.f32 0.0, %v4376
  %4378 = vmatmul.f32.gmra.mxu0 %v2007
  %v4379 = vpop.f32.mrf.mxu0
  %v4380 = vadd.f32 0.0, %v4379
  %4381 = vmatmul.f32.gmra.mxu0 %v2010
  %v4382 = vpop.f32.mrf.mxu0
  %v4383 = vadd.f32 0.0, %v4382
  %4384 = vmatmul.f32.gmra.mxu0 %v2013
  %v4385 = vpop.f32.mrf.mxu0
  %v4386 = vadd.f32 0.0, %v4385
  %4387 = vmatmul.f32.gmra.mxu0 %v2016
  %v4388 = vpop.f32.mrf.mxu0
  %v4389 = vadd.f32 0.0, %v4388
  %4390 = vmatmul.f32.gmra.mxu0 %v2019
  %v4391 = vpop.f32.mrf.mxu0
  %v4392 = vadd.f32 0.0, %v4391
  %4393 = vmatmul.f32.gmra.mxu0 %v2022
  %v4394 = vpop.f32.mrf.mxu0
  %v4395 = vadd.f32 0.0, %v4394
  %4396 = vmatmul.f32.gmra.mxu0 %v2025
  %v4397 = vpop.f32.mrf.mxu0
  %v4398 = vadd.f32 0.0, %v4397
  %4399 = vmatmul.f32.gmra.mxu0 %v2028
  %v4400 = vpop.f32.mrf.mxu0
  %v4401 = vadd.f32 0.0, %v4400
  %4402 = vmatmul.f32.gmra.mxu0 %v2031
  %v4403 = vpop.f32.mrf.mxu0
  %v4404 = vadd.f32 0.0, %v4403
  %4405 = vmatmul.f32.gmra.mxu0 %v2034
  %v4406 = vpop.f32.mrf.mxu0
  %v4407 = vadd.f32 0.0, %v4406
  %4408 = vmatmul.f32.gmra.mxu0 %v2037
  %v4409 = vpop.f32.mrf.mxu0
  %v4410 = vadd.f32 0.0, %v4409
  %4411 = vmatmul.f32.gmra.mxu0 %v2040
  %v4412 = vpop.f32.mrf.mxu0
  %v4413 = vadd.f32 0.0, %v4412
  %4414 = vmatmul.f32.gmra.mxu0 %v2043
  %v4415 = vpop.f32.mrf.mxu0
  %v4416 = vadd.f32 0.0, %v4415
  %4417 = vmatmul.f32.gmra.mxu0 %v2046
  %v4418 = vpop.f32.mrf.mxu0
  %v4419 = vadd.f32 0.0, %v4418
  %4420 = vmatmul.f32.gmra.mxu0 %v2049
  %v4421 = vpop.f32.mrf.mxu0
  %v4422 = vadd.f32 0.0, %v4421
  %4423 = vmatmul.f32.gmra.mxu0 %v2052
  %v4424 = vpop.f32.mrf.mxu0
  %v4425 = vadd.f32 0.0, %v4424
  %4426 = vmatmul.f32.gmra.mxu0 %v2055
  %v4427 = vpop.f32.mrf.mxu0
  %v4428 = vadd.f32 0.0, %v4427
  %4429 = vmatmul.f32.gmra.mxu0 %v2058
  %v4430 = vpop.f32.mrf.mxu0
  %v4431 = vadd.f32 0.0, %v4430
  %4432 = vmatmul.f32.gmra.mxu0 %v2061
  %v4433 = vpop.f32.mrf.mxu0
  %v4434 = vadd.f32 0.0, %v4433
  %4435 = vmatmul.f32.gmra.mxu0 %v2064
  %v4436 = vpop.f32.mrf.mxu0
  %v4437 = vadd.f32 0.0, %v4436
  %4438 = vmatmul.f32.gmra.mxu0 %v2067
  %v4439 = vpop.f32.mrf.mxu0
  %v4440 = vadd.f32 0.0, %v4439
  %4441 = vmatmul.f32.gmra.mxu0 %v2070
  %v4442 = vpop.f32.mrf.mxu0
  %v4443 = vadd.f32 0.0, %v4442
  %4444 = vmatmul.f32.gmra.mxu0 %v2073
  %v4445 = vpop.f32.mrf.mxu0
  %v4446 = vadd.f32 0.0, %v4445
  %4447 = vmatmul.f32.gmra.mxu0 %v2076
  %v4448 = vpop.f32.mrf.mxu0
  %v4449 = vadd.f32 0.0, %v4448
  %4450 = vmatmul.f32.gmra.mxu0 %v2079
  %v4451 = vpop.f32.mrf.mxu0
  %v4452 = vadd.f32 0.0, %v4451
  %4453 = vmatmul.f32.gmra.mxu0 %v2082
  %v4454 = vpop.f32.mrf.mxu0
  %v4455 = vadd.f32 0.0, %v4454
  %4456 = vmatmul.f32.gmra.mxu0 %v2085
  %v4457 = vpop.f32.mrf.mxu0
  %v4458 = vadd.f32 0.0, %v4457
  %4459 = vmatmul.f32.gmra.mxu0 %v2088
  %v4460 = vpop.f32.mrf.mxu0
  %v4461 = vadd.f32 0.0, %v4460
  %4462 = vmatmul.f32.gmra.mxu0 %v2091
  %v4463 = vpop.f32.mrf.mxu0
  %v4464 = vadd.f32 0.0, %v4463
  %4465 = vmatmul.f32.gmra.mxu0 %v2094
  %v4466 = vpop.f32.mrf.mxu0
  %v4467 = vadd.f32 0.0, %v4466
  %4468 = vmatmul.f32.gmra.mxu0 %v2097
  %v4469 = vpop.f32.mrf.mxu0
  %v4470 = vadd.f32 0.0, %v4469
  %4471 = vmatmul.f32.gmra.mxu0 %v2100
  %v4472 = vpop.f32.mrf.mxu0
  %v4473 = vadd.f32 0.0, %v4472
  %4474 = vmatmul.f32.gmra.mxu0 %v2103
  %v4475 = vpop.f32.mrf.mxu0
  %v4476 = vadd.f32 0.0, %v4475
  %4477 = vmatmul.f32.gmra.mxu0 %v2106
  %v4478 = vpop.f32.mrf.mxu0
  %v4479 = vadd.f32 0.0, %v4478
  %4480 = vmatmul.f32.gmra.mxu0 %v2109
  %v4481 = vpop.f32.mrf.mxu0
  %v4482 = vadd.f32 0.0, %v4481
  %4483 = vmatmul.f32.gmra.mxu0 %v2112
  %v4484 = vpop.f32.mrf.mxu0
  %v4485 = vadd.f32 0.0, %v4484
  %4486 = vmatmul.f32.gmra.mxu0 %v2115
  %v4487 = vpop.f32.mrf.mxu0
  %v4488 = vadd.f32 0.0, %v4487
  %4489 = vmatmul.f32.gmra.mxu0 %v2118
  %v4490 = vpop.f32.mrf.mxu0
  %v4491 = vadd.f32 0.0, %v4490
  %4492 = vmatmul.f32.gmra.mxu0 %v2121
  %v4493 = vpop.f32.mrf.mxu0
  %v4494 = vadd.f32 0.0, %v4493
  %4495 = vmatmul.f32.gmra.mxu0 %v2124
  %v4496 = vpop.f32.mrf.mxu0
  %v4497 = vadd.f32 0.0, %v4496
  %4498 = vmatmul.f32.gmra.mxu0 %v2127
  %v4499 = vpop.f32.mrf.mxu0
  %v4500 = vadd.f32 0.0, %v4499
  %4501 = vmatmul.f32.gmra.mxu0 %v2130
  %v4502 = vpop.f32.mrf.mxu0
  %v4503 = vadd.f32 0.0, %v4502
  %4504 = vmatmul.f32.gmra.mxu0 %v2133
  %v4505 = vpop.f32.mrf.mxu0
  %v4506 = vadd.f32 0.0, %v4505
  %4507 = vmatmul.f32.gmra.mxu0 %v2136
  %v4508 = vpop.f32.mrf.mxu0
  %v4509 = vadd.f32 0.0, %v4508
  %4510 = vmatmul.f32.gmra.mxu0 %v2139
  %v4511 = vpop.f32.mrf.mxu0
  %v4512 = vadd.f32 0.0, %v4511
  %4513 = vmatmul.f32.gmra.mxu0 %v2142
  %v4514 = vpop.f32.mrf.mxu0
  %v4515 = vadd.f32 0.0, %v4514
  %4516 = vmatmul.f32.gmra.mxu0 %v2145
  %v4517 = vpop.f32.mrf.mxu0
  %v4518 = vadd.f32 0.0, %v4517
  %4519 = vmatmul.f32.gmra.mxu0 %v2148
  %v4520 = vpop.f32.mrf.mxu0
  %v4521 = vadd.f32 0.0, %v4520
  %4522 = vmatmul.f32.gmra.mxu0 %v2151
  %v4523 = vpop.f32.mrf.mxu0
  %v4524 = vadd.f32 0.0, %v4523
  %4525 = vmatmul.f32.gmra.mxu0 %v2154
  %v4526 = vpop.f32.mrf.mxu0
  %v4527 = vadd.f32 0.0, %v4526
  %4528 = vmatmul.f32.gmra.mxu0 %v2157
  %v4529 = vpop.f32.mrf.mxu0
  %v4530 = vadd.f32 0.0, %v4529
  %4531 = vmatmul.f32.gmra.mxu0 %v2160
  %v4532 = vpop.f32.mrf.mxu0
  %v4533 = vadd.f32 0.0, %v4532
  %4534 = vmatmul.f32.gmra.mxu0 %v2163
  %v4535 = vpop.f32.mrf.mxu0
  %v4536 = vadd.f32 0.0, %v4535
  %4537 = vmatmul.f32.gmra.mxu0 %v2166
  %v4538 = vpop.f32.mrf.mxu0
  %v4539 = vadd.f32 0.0, %v4538
  %4540 = vmatmul.f32.gmra.mxu0 %v2169
  %v4541 = vpop.f32.mrf.mxu0
  %v4542 = vadd.f32 0.0, %v4541
  %4543 = vmatmul.f32.gmra.mxu0 %v2172
  %v4544 = vpop.f32.mrf.mxu0
  %v4545 = vadd.f32 0.0, %v4544
  %4546 = vmatmul.f32.gmra.mxu0 %v2175
  %v4547 = vpop.f32.mrf.mxu0
  %v4548 = vadd.f32 0.0, %v4547
  %4549 = vmatmul.f32.gmra.mxu0 %v2178
  %v4550 = vpop.f32.mrf.mxu0
  %v4551 = vadd.f32 0.0, %v4550
  %4552 = vmatmul.f32.gmra.mxu0 %v2181
  %v4553 = vpop.f32.mrf.mxu0
  %v4554 = vadd.f32 0.0, %v4553
  %4555 = vmatmul.f32.gmra.mxu0 %v2184
  %v4556 = vpop.f32.mrf.mxu0
  %v4557 = vadd.f32 0.0, %v4556
  %4558 = vmatmul.f32.gmra.mxu0 %v2187
  %v4559 = vpop.f32.mrf.mxu0
  %v4560 = vadd.f32 0.0, %v4559
  %4561 = vmatmul.f32.gmra.mxu0 %v2190
  %v4562 = vpop.f32.mrf.mxu0
  %v4563 = vadd.f32 0.0, %v4562
  %4564 = vmatmul.f32.gmra.mxu0 %v2193
  %v4565 = vpop.f32.mrf.mxu0
  %v4566 = vadd.f32 0.0, %v4565
  %4567 = vmatmul.f32.gmra.mxu0 %v2196
  %v4568 = vpop.f32.mrf.mxu0
  %v4569 = vadd.f32 0.0, %v4568
  %4570 = vmatmul.f32.gmra.mxu0 %v2199
  %v4571 = vpop.f32.mrf.mxu0
  %v4572 = vadd.f32 0.0, %v4571
  %4573 = vmatmul.f32.gmra.mxu0 %v2202
  %v4574 = vpop.f32.mrf.mxu0
  %v4575 = vadd.f32 0.0, %v4574
  %4576 = vmatmul.f32.gmra.mxu0 %v2205
  %v4577 = vpop.f32.mrf.mxu0
  %v4578 = vadd.f32 0.0, %v4577
  %4579 = vmatmul.f32.gmra.mxu0 %v2208
  %v4580 = vpop.f32.mrf.mxu0
  %v4581 = vadd.f32 0.0, %v4580
  %4582 = vmatmul.f32.gmra.mxu0 %v2211
  %v4583 = vpop.f32.mrf.mxu0
  %v4584 = vadd.f32 0.0, %v4583
  %4585 = vmatmul.f32.gmra.mxu0 %v2214
  %v4586 = vpop.f32.mrf.mxu0
  %v4587 = vadd.f32 0.0, %v4586
  %4588 = vmatmul.f32.gmra.mxu0 %v2217
  %v4589 = vpop.f32.mrf.mxu0
  %v4590 = vadd.f32 0.0, %v4589
  %4591 = vmatmul.f32.gmra.mxu0 %v2220
  %v4592 = vpop.f32.mrf.mxu0
  %v4593 = vadd.f32 0.0, %v4592
  %4594 = vmatmul.f32.gmra.mxu0 %v2223
  %v4595 = vpop.f32.mrf.mxu0
  %v4596 = vadd.f32 0.0, %v4595
  %4597 = vmatmul.f32.gmra.mxu0 %v2226
  %v4598 = vpop.f32.mrf.mxu0
  %v4599 = vadd.f32 0.0, %v4598
  %4600 = vmatmul.f32.gmra.mxu0 %v2229
  %v4601 = vpop.f32.mrf.mxu0
  %v4602 = vadd.f32 0.0, %v4601
  %4603 = vmatmul.f32.gmra.mxu0 %v2232
  %v4604 = vpop.f32.mrf.mxu0
  %v4605 = vadd.f32 0.0, %v4604
  %4606 = vmatmul.f32.gmra.mxu0 %v2235
  %v4607 = vpop.f32.mrf.mxu0
  %v4608 = vadd.f32 0.0, %v4607
  %4609 = vmatmul.f32.gmra.mxu0 %v2238
  %v4610 = vpop.f32.mrf.mxu0
  %v4611 = vadd.f32 0.0, %v4610
  %4612 = vmatmul.f32.gmra.mxu0 %v2241
  %v4613 = vpop.f32.mrf.mxu0
  %v4614 = vadd.f32 0.0, %v4613
  %4615 = vmatmul.f32.gmra.mxu0 %v2244
  %v4616 = vpop.f32.mrf.mxu0
  %v4617 = vadd.f32 0.0, %v4616
  %4618 = vmatmul.f32.gmra.mxu0 %v2247
  %v4619 = vpop.f32.mrf.mxu0
  %v4620 = vadd.f32 0.0, %v4619
  %4621 = vmatmul.f32.gmra.mxu0 %v2250
  %v4622 = vpop.f32.mrf.mxu0
  %v4623 = vadd.f32 0.0, %v4622
  %4624 = vmatmul.f32.gmra.mxu0 %v2253
  %v4625 = vpop.f32.mrf.mxu0
  %v4626 = vadd.f32 0.0, %v4625
  %4627 = vmatmul.f32.gmra.mxu0 %v2256
  %v4628 = vpop.f32.mrf.mxu0
  %v4629 = vadd.f32 0.0, %v4628
  %4630 = vmatmul.f32.gmra.mxu0 %v2259
  %v4631 = vpop.f32.mrf.mxu0
  %v4632 = vadd.f32 0.0, %v4631
  %4633 = vmatmul.f32.gmra.mxu0 %v2262
  %v4634 = vpop.f32.mrf.mxu0
  %v4635 = vadd.f32 0.0, %v4634
  %4636 = vmatmul.f32.gmra.mxu0 %v2265
  %v4637 = vpop.f32.mrf.mxu0
  %v4638 = vadd.f32 0.0, %v4637
  %4639 = vmatmul.f32.gmra.mxu0 %v2268
  %v4640 = vpop.f32.mrf.mxu0
  %v4641 = vadd.f32 0.0, %v4640
  %4642 = vmatmul.f32.gmra.mxu0 %v2271
  %v4643 = vpop.f32.mrf.mxu0
  %v4644 = vadd.f32 0.0, %v4643
  %4645 = vmatmul.f32.gmra.mxu0 %v2274
  %v4646 = vpop.f32.mrf.mxu0
  %v4647 = vadd.f32 0.0, %v4646
  %4648 = vmatmul.f32.gmra.mxu0 %v2277
  %v4649 = vpop.f32.mrf.mxu0
  %v4650 = vadd.f32 0.0, %v4649
  %4651 = vmatmul.f32.gmra.mxu0 %v2280
  %v4652 = vpop.f32.mrf.mxu0
  %v4653 = vadd.f32 0.0, %v4652
  %4654 = vmatmul.f32.gmra.mxu0 %v2283
  %v4655 = vpop.f32.mrf.mxu0
  %v4656 = vadd.f32 0.0, %v4655
  %4657 = vmatmul.f32.gmra.mxu0 %v2286
  %v4658 = vpop.f32.mrf.mxu0
  %v4659 = vadd.f32 0.0, %v4658
  %4660 = vmatmul.f32.gmra.mxu0 %v2289
  %v4661 = vpop.f32.mrf.mxu0
  %v4662 = vadd.f32 0.0, %v4661
  %4663 = vmatmul.f32.gmra.mxu0 %v2292
  %v4664 = vpop.f32.mrf.mxu0
  %v4665 = vadd.f32 0.0, %v4664
  %4666 = vmatmul.f32.gmra.mxu0 %v2295
  %v4667 = vpop.f32.mrf.mxu0
  %v4668 = vadd.f32 0.0, %v4667
  %4669 = vmatmul.f32.gmra.mxu0 %v2298
  %v4670 = vpop.f32.mrf.mxu0
  %v4671 = vadd.f32 0.0, %v4670
  %4672 = vmatmul.f32.gmra.mxu0 %v2301
  %v4673 = vpop.f32.mrf.mxu0
  %v4674 = vadd.f32 0.0, %v4673
  %4675 = vmatmul.f32.gmra.mxu0 %v2304
  %v4676 = vpop.f32.mrf.mxu0
  %v4677 = vadd.f32 0.0, %v4676
  %4678 = vmatmul.f32.gmra.mxu0 %v2307
  %v4679 = vpop.f32.mrf.mxu0
  %v4680 = vadd.f32 0.0, %v4679
  %4681 = vmatmul.f32.gmra.mxu0 %v2310
  %v4682 = vpop.f32.mrf.mxu0
  %v4683 = vadd.f32 0.0, %v4682
  %4684 = vmatmul.f32.gmra.mxu0 %v2313
  %v4685 = vpop.f32.mrf.mxu0
  %v4686 = vadd.f32 0.0, %v4685
  %4687 = vmatmul.f32.gmra.mxu0 %v2316
  %v4688 = vpop.f32.mrf.mxu0
  %v4689 = vadd.f32 0.0, %v4688
  %4690 = vmatmul.f32.gmra.mxu0 %v2319
  %v4691 = vpop.f32.mrf.mxu0
  %v4692 = vadd.f32 0.0, %v4691
  %4693 = vmatmul.f32.gmra.mxu0 %v2322
  %v4694 = vpop.f32.mrf.mxu0
  %v4695 = vadd.f32 0.0, %v4694
  %4696 = vmatmul.f32.gmra.mxu0 %v2325
  %v4697 = vpop.f32.mrf.mxu0
  %v4698 = vadd.f32 0.0, %v4697
  %4699 = vmatmul.f32.gmra.mxu0 %v2328
  %v4700 = vpop.f32.mrf.mxu0
  %v4701 = vadd.f32 0.0, %v4700
  %4702 = vmatmul.f32.gmra.mxu0 %v2331
  %v4703 = vpop.f32.mrf.mxu0
  %v4704 = vadd.f32 0.0, %v4703
  %4705 = vmatmul.f32.gmra.mxu0 %v2334
  %v4706 = vpop.f32.mrf.mxu0
  %v4707 = vadd.f32 0.0, %v4706
  %4708 = vmatmul.f32.gmra.mxu0 %v2337
  %v4709 = vpop.f32.mrf.mxu0
  %v4710 = vadd.f32 0.0, %v4709
  %4711 = vmatmul.f32.gmra.mxu0 %v2340
  %v4712 = vpop.f32.mrf.mxu0
  %v4713 = vadd.f32 0.0, %v4712
  %4714 = vmatmul.f32.gmra.mxu0 %v2343
  %v4715 = vpop.f32.mrf.mxu0
  %v4716 = vadd.f32 0.0, %v4715
  %4717 = vmatmul.f32.gmra.mxu0 %v2346
  %v4718 = vpop.f32.mrf.mxu0
  %v4719 = vadd.f32 0.0, %v4718
  %4720 = vmatmul.f32.gmra.mxu0 %v2349
  %v4721 = vpop.f32.mrf.mxu0
  %v4722 = vadd.f32 0.0, %v4721
  %4723 = vmatmul.f32.gmra.mxu0 %v2352
  %v4724 = vpop.f32.mrf.mxu0
  %v4725 = vadd.f32 0.0, %v4724
  %4726 = vmatmul.f32.gmra.mxu0 %v2355
  %v4727 = vpop.f32.mrf.mxu0
  %v4728 = vadd.f32 0.0, %v4727
  %4729 = vmatmul.f32.gmra.mxu0 %v2358
  %v4730 = vpop.f32.mrf.mxu0
  %v4731 = vadd.f32 0.0, %v4730
  %4732 = vmatmul.f32.gmra.mxu0 %v2361
  %v4733 = vpop.f32.mrf.mxu0
  %v4734 = vadd.f32 0.0, %v4733
  %4735 = vmatmul.f32.gmra.mxu0 %v2364
  %v4736 = vpop.f32.mrf.mxu0
  %v4737 = vadd.f32 0.0, %v4736
  %4738 = vmatmul.f32.gmra.mxu0 %v2367
  %v4739 = vpop.f32.mrf.mxu0
  %v4740 = vadd.f32 0.0, %v4739
  %4741 = vmatmul.f32.gmra.mxu0 %v2370
  %v4742 = vpop.f32.mrf.mxu0
  %v4743 = vadd.f32 0.0, %v4742
  %4744 = vmatmul.f32.gmra.mxu0 %v2373
  %v4745 = vpop.f32.mrf.mxu0
  %v4746 = vadd.f32 0.0, %v4745
  %4747 = vmatmul.f32.gmra.mxu0 %v2376
  %v4748 = vpop.f32.mrf.mxu0
  %v4749 = vadd.f32 0.0, %v4748
  %4750 = vmatmul.f32.gmra.mxu0 %v2379
  %v4751 = vpop.f32.mrf.mxu0
  %v4752 = vadd.f32 0.0, %v4751
  %4753 = vmatmul.f32.gmra.mxu0 %v2382
  %v4754 = vpop.f32.mrf.mxu0
  %v4755 = vadd.f32 0.0, %v4754
  %4756 = vmatmul.f32.gmra.mxu0 %v2385
  %v4757 = vpop.f32.mrf.mxu0
  %v4758 = vadd.f32 0.0, %v4757
  %4759 = vmatmul.f32.gmra.mxu0 %v2388
  %v4760 = vpop.f32.mrf.mxu0
  %v4761 = vadd.f32 0.0, %v4760
  %4762 = vmatmul.f32.gmra.mxu0 %v2391
  %v4763 = vpop.f32.mrf.mxu0
  %v4764 = vadd.f32 0.0, %v4763
  %4765 = vmatmul.f32.gmra.mxu0 %v2394
  %v4766 = vpop.f32.mrf.mxu0
  %v4767 = vadd.f32 0.0, %v4766
  %4768 = vmatmul.f32.gmra.mxu0 %v2397
  %v4769 = vpop.f32.mrf.mxu0
  %v4770 = vadd.f32 0.0, %v4769
  %4771 = vmatmul.f32.gmra.mxu0 %v2400
  %v4772 = vpop.f32.mrf.mxu0
  %v4773 = vadd.f32 0.0, %v4772
  %4774 = vmatmul.f32.gmra.mxu0 %v2403
  %v4775 = vpop.f32.mrf.mxu0
  %v4776 = vadd.f32 0.0, %v4775
  %4777 = vmatmul.f32.gmra.mxu0 %v2406
  %v4778 = vpop.f32.mrf.mxu0
  %v4779 = vadd.f32 0.0, %v4778
  %4780 = vmatmul.f32.gmra.mxu0 %v2409
  %v4781 = vpop.f32.mrf.mxu0
  %v4782 = vadd.f32 0.0, %v4781
  %4783 = vmatmul.f32.gmra.mxu0 %v2412
  %v4784 = vpop.f32.mrf.mxu0
  %v4785 = vadd.f32 0.0, %v4784
  %4786 = vmatmul.f32.gmra.mxu0 %v2415
  %v4787 = vpop.f32.mrf.mxu0
  %v4788 = vadd.f32 0.0, %v4787
  %4789 = vmatmul.f32.gmra.mxu0 %v2418
  %v4790 = vpop.f32.mrf.mxu0
  %v4791 = vadd.f32 0.0, %v4790
  %4792 = vmatmul.f32.gmra.mxu0 %v2421
  %v4793 = vpop.f32.mrf.mxu0
  %v4794 = vadd.f32 0.0, %v4793
  %4795 = vmatmul.f32.gmra.mxu0 %v2424
  %v4796 = vpop.f32.mrf.mxu0
  %v4797 = vadd.f32 0.0, %v4796
  %4798 = vmatmul.f32.gmra.mxu0 %v2427
  %v4799 = vpop.f32.mrf.mxu0
  %v4800 = vadd.f32 0.0, %v4799
  %4801 = vmatmul.f32.gmra.mxu0 %v2430
  %v4802 = vpop.f32.mrf.mxu0
  %v4803 = vadd.f32 0.0, %v4802
  %4804 = vmatmul.f32.gmra.mxu0 %v2433
  %v4805 = vpop.f32.mrf.mxu0
  %v4806 = vadd.f32 0.0, %v4805
  %4807 = vmatmul.f32.gmra.mxu0 %v2436
  %v4808 = vpop.f32.mrf.mxu0
  %v4809 = vadd.f32 0.0, %v4808
  %4810 = vmatmul.f32.gmra.mxu0 %v2439
  %v4811 = vpop.f32.mrf.mxu0
  %v4812 = vadd.f32 0.0, %v4811
  %4813 = vmatmul.f32.gmra.mxu0 %v2442
  %v4814 = vpop.f32.mrf.mxu0
  %v4815 = vadd.f32 0.0, %v4814
  %4816 = vmatmul.f32.gmra.mxu0 %v2445
  %v4817 = vpop.f32.mrf.mxu0
  %v4818 = vadd.f32 0.0, %v4817
  %4819 = vmatmul.f32.gmra.mxu0 %v2448
  %v4820 = vpop.f32.mrf.mxu0
  %v4821 = vadd.f32 0.0, %v4820
  %4822 = vmatmul.f32.gmra.mxu0 %v2451
  %v4823 = vpop.f32.mrf.mxu0
  %v4824 = vadd.f32 0.0, %v4823
  %4825 = vmatmul.f32.gmra.mxu0 %v2454
  %v4826 = vpop.f32.mrf.mxu0
  %v4827 = vadd.f32 0.0, %v4826
  %4828 = vmatmul.f32.gmra.mxu0 %v2457
  %v4829 = vpop.f32.mrf.mxu0
  %v4830 = vadd.f32 0.0, %v4829
  %4831 = vmatmul.f32.gmra.mxu0 %v2460
  %v4832 = vpop.f32.mrf.mxu0
  %v4833 = vadd.f32 0.0, %v4832
  %4834 = vmatmul.f32.gmra.mxu0 %v2463
  %v4835 = vpop.f32.mrf.mxu0
  %v4836 = vadd.f32 0.0, %v4835
  %4837 = vmatmul.f32.gmra.mxu0 %v2466
  %v4838 = vpop.f32.mrf.mxu0
  %v4839 = vadd.f32 0.0, %v4838
  %4840 = vmatmul.f32.gmra.mxu0 %v2469
  %v4841 = vpop.f32.mrf.mxu0
  %v4842 = vadd.f32 0.0, %v4841
  %4843 = vmatmul.f32.gmra.mxu0 %v2472
  %v4844 = vpop.f32.mrf.mxu0
  %v4845 = vadd.f32 0.0, %v4844
  %4846 = vmatmul.f32.gmra.mxu0 %v2475
  %v4847 = vpop.f32.mrf.mxu0
  %v4848 = vadd.f32 0.0, %v4847
  %4849 = vmatmul.f32.gmra.mxu0 %v2478
  %v4850 = vpop.f32.mrf.mxu0
  %v4851 = vadd.f32 0.0, %v4850
  %4852 = vmatmul.f32.gmra.mxu0 %v2481
  %v4853 = vpop.f32.mrf.mxu0
  %v4854 = vadd.f32 0.0, %v4853
  %4855 = vmatmul.f32.gmra.mxu0 %v2484
  %v4856 = vpop.f32.mrf.mxu0
  %v4857 = vadd.f32 0.0, %v4856
  %4858 = vmatmul.f32.gmra.mxu0 %v2487
  %v4859 = vpop.f32.mrf.mxu0
  %v4860 = vadd.f32 0.0, %v4859
  %4861 = vmatmul.f32.gmra.mxu0 %v2490
  %v4862 = vpop.f32.mrf.mxu0
  %v4863 = vadd.f32 0.0, %v4862
  %4864 = vmatmul.f32.gmra.mxu0 %v2493
  %v4865 = vpop.f32.mrf.mxu0
  %v4866 = vadd.f32 0.0, %v4865
  %4867 = vmatmul.f32.gmra.mxu0 %v2496
  %v4868 = vpop.f32.mrf.mxu0
  %v4869 = vadd.f32 0.0, %v4868
  %4870 = vmatmul.f32.gmra.mxu0 %v2499
  %v4871 = vpop.f32.mrf.mxu0
  %v4872 = vadd.f32 0.0, %v4871
  %4873 = vmatmul.f32.gmra.mxu0 %v2502
  %v4874 = vpop.f32.mrf.mxu0
  %v4875 = vadd.f32 0.0, %v4874
  %4876 = vmatmul.f32.gmra.mxu0 %v2505
  %v4877 = vpop.f32.mrf.mxu0
  %v4878 = vadd.f32 0.0, %v4877
  %4879 = vmatmul.f32.gmra.mxu0 %v2508
  %v4880 = vpop.f32.mrf.mxu0
  %v4881 = vadd.f32 0.0, %v4880
  %4882 = vmatmul.f32.gmra.mxu0 %v2511
  %v4883 = vpop.f32.mrf.mxu0
  %v4884 = vadd.f32 0.0, %v4883
  %4885 = vmatmul.f32.gmra.mxu0 %v2514
  %v4886 = vpop.f32.mrf.mxu0
  %v4887 = vadd.f32 0.0, %v4886
  %4888 = vmatmul.f32.gmra.mxu0 %v2517
  %v4889 = vpop.f32.mrf.mxu0
  %v4890 = vadd.f32 0.0, %v4889
  %4891 = vmatmul.f32.gmra.mxu0 %v2520
  %v4892 = vpop.f32.mrf.mxu0
  %v4893 = vadd.f32 0.0, %v4892
  %4894 = vmatmul.f32.gmra.mxu0 %v2523
  %v4895 = vpop.f32.mrf.mxu0
  %v4896 = vadd.f32 0.0, %v4895
  %4897 = vmatmul.f32.gmra.mxu0 %v2526
  %v4898 = vpop.f32.mrf.mxu0
  %v4899 = vadd.f32 0.0, %v4898
  %4900 = vmatmul.f32.gmra.mxu0 %v2529
  %v4901 = vpop.f32.mrf.mxu0
  %v4902 = vadd.f32 0.0, %v4901
  %4903 = vmatmul.f32.gmra.mxu0 %v2532
  %v4904 = vpop.f32.mrf.mxu0
  %v4905 = vadd.f32 0.0, %v4904
  %4906 = vmatmul.f32.gmra.mxu0 %v2535
  %v4907 = vpop.f32.mrf.mxu0
  %v4908 = vadd.f32 0.0, %v4907
  %4909 = vmatmul.f32.gmra.mxu0 %v2538
  %v4910 = vpop.f32.mrf.mxu0
  %v4911 = vadd.f32 0.0, %v4910
  %4912 = vmatmul.f32.gmra.mxu0 %v2541
  %v4913 = vpop.f32.mrf.mxu0
  %v4914 = vadd.f32 0.0, %v4913
  %4915 = vmatmul.f32.gmra.mxu0 %v2544
  %v4916 = vpop.f32.mrf.mxu0
  %v4917 = vadd.f32 0.0, %v4916
  %4918 = vmatmul.f32.gmra.mxu0 %v2547
  %v4919 = vpop.f32.mrf.mxu0
  %v4920 = vadd.f32 0.0, %v4919
  %4921 = vmatmul.f32.gmra.mxu0 %v2550
  %v4922 = vpop.f32.mrf.mxu0
  %v4923 = vadd.f32 0.0, %v4922
  %4924 = vmatmul.f32.gmra.mxu0 %v2553
  %v4925 = vpop.f32.mrf.mxu0
  %v4926 = vadd.f32 0.0, %v4925
  %4927 = vmatmul.f32.gmra.mxu0 %v2556
  %v4928 = vpop.f32.mrf.mxu0
  %v4929 = vadd.f32 0.0, %v4928
  %4930 = vmatmul.f32.gmra.mxu0 %v2559
  %v4931 = vpop.f32.mrf.mxu0
  %v4932 = vadd.f32 0.0, %v4931
  %4933 = vmatmul.f32.gmra.mxu0 %v2562
  %v4934 = vpop.f32.mrf.mxu0
  %v4935 = vadd.f32 0.0, %v4934
  %4936 = vmatmul.f32.gmra.mxu0 %v2565
  %v4937 = vpop.f32.mrf.mxu0
  %v4938 = vadd.f32 0.0, %v4937
  %4939 = vmatmul.f32.gmra.mxu0 %v2568
  %v4940 = vpop.f32.mrf.mxu0
  %v4941 = vadd.f32 0.0, %v4940
  %4942 = vmatmul.f32.gmra.mxu0 %v2571
  %v4943 = vpop.f32.mrf.mxu0
  %v4944 = vadd.f32 0.0, %v4943
  %4945 = vmatmul.f32.gmra.mxu0 %v2574
  %v4946 = vpop.f32.mrf.mxu0
  %v4947 = vadd.f32 0.0, %v4946
  %4948 = vmatmul.f32.gmra.mxu0 %v2577
  %v4949 = vpop.f32.mrf.mxu0
  %v4950 = vadd.f32 0.0, %v4949
  %4951 = vmatmul.f32.gmra.mxu0 %v2580
  %v4952 = vpop.f32.mrf.mxu0
  %v4953 = vadd.f32 0.0, %v4952
  %4954 = vmatmul.f32.gmra.mxu0 %v2583
  %v4955 = vpop.f32.mrf.mxu0
  %v4956 = vadd.f32 0.0, %v4955
  %4957 = vmatmul.f32.gmra.mxu0 %v2586
  %v4958 = vpop.f32.mrf.mxu0
  %v4959 = vadd.f32 0.0, %v4958
  %4960 = vmatmul.f32.gmra.mxu0 %v2589
  %v4961 = vpop.f32.mrf.mxu0
  %v4962 = vadd.f32 0.0, %v4961
  %4963 = vmatmul.f32.gmra.mxu0 %v2592
  %v4964 = vpop.f32.mrf.mxu0
  %v4965 = vadd.f32 0.0, %v4964
  %4966 = vmatmul.f32.gmra.mxu0 %v2595
  %v4967 = vpop.f32.mrf.mxu0
  %v4968 = vadd.f32 0.0, %v4967
  %4969 = vmatmul.f32.gmra.mxu0 %v2598
  %v4970 = vpop.f32.mrf.mxu0
  %v4971 = vadd.f32 0.0, %v4970
  %4972 = vmatmul.f32.gmra.mxu0 %v2601
  %v4973 = vpop.f32.mrf.mxu0
  %v4974 = vadd.f32 0.0, %v4973
  %4975 = vmatmul.f32.gmra.mxu0 %v2604
  %v4976 = vpop.f32.mrf.mxu0
  %v4977 = vadd.f32 0.0, %v4976
  %4978 = vmatmul.f32.gmra.mxu0 %v2607
  %v4979 = vpop.f32.mrf.mxu0
  %v4980 = vadd.f32 0.0, %v4979
  %4981 = vmatmul.f32.gmra.mxu0 %v2610
  %v4982 = vpop.f32.mrf.mxu0
  %v4983 = vadd.f32 0.0, %v4982
  %4984 = vmatmul.f32.gmra.mxu0 %v2613
  %v4985 = vpop.f32.mrf.mxu0
  %v4986 = vadd.f32 0.0, %v4985
  %4987 = vmatmul.f32.gmra.mxu0 %v2616
  %v4988 = vpop.f32.mrf.mxu0
  %v4989 = vadd.f32 0.0, %v4988
  %4990 = vmatmul.f32.gmra.mxu0 %v2619
  %v4991 = vpop.f32.mrf.mxu0
  %v4992 = vadd.f32 0.0, %v4991
  %4993 = vmatmul.f32.gmra.mxu0 %v2622
  %v4994 = vpop.f32.mrf.mxu0
  %v4995 = vadd.f32 0.0, %v4994
  %4996 = vmatmul.f32.gmra.mxu0 %v2625
  %v4997 = vpop.f32.mrf.mxu0
  %v4998 = vadd.f32 0.0, %v4997
  %4999 = vmatmul.f32.gmra.mxu0 %v2628
  %v5000 = vpop.f32.mrf.mxu0
  %v5001 = vadd.f32 0.0, %v5000
  %5002 = vmatmul.f32.gmra.mxu0 %v2631
  %v5003 = vpop.f32.mrf.mxu0
  %v5004 = vadd.f32 0.0, %v5003
  %5005 = vmatmul.f32.gmra.mxu0 %v2634
  %v5006 = vpop.f32.mrf.mxu0
  %v5007 = vadd.f32 0.0, %v5006
  %5008 = vmatmul.f32.gmra.mxu0 %v2637
  %v5009 = vpop.f32.mrf.mxu0
  %v5010 = vadd.f32 0.0, %v5009
  %5011 = vmatmul.f32.gmra.mxu0 %v2640
  %v5012 = vpop.f32.mrf.mxu0
  %v5013 = vadd.f32 0.0, %v5012
  %5014 = vmatmul.f32.gmra.mxu0 %v2643
  %v5015 = vpop.f32.mrf.mxu0
  %v5016 = vadd.f32 0.0, %v5015
  %5017 = vmatmul.f32.gmra.mxu0 %v2646
  %v5018 = vpop.f32.mrf.mxu0
  %v5019 = vadd.f32 0.0, %v5018
  %5020 = vmatmul.f32.gmra.mxu0 %v2649
  %v5021 = vpop.f32.mrf.mxu0
  %v5022 = vadd.f32 0.0, %v5021
  %5023 = vmatmul.f32.gmra.mxu0 %v2652
  %v5024 = vpop.f32.mrf.mxu0
  %v5025 = vadd.f32 0.0, %v5024
  %5026 = vmatmul.f32.gmra.mxu0 %v2655
  %v5027 = vpop.f32.mrf.mxu0
  %v5028 = vadd.f32 0.0, %v5027
  %5029 = vmatmul.f32.gmra.mxu0 %v2658
  %v5030 = vpop.f32.mrf.mxu0
  %v5031 = vadd.f32 0.0, %v5030
  %5032 = vmatmul.f32.gmra.mxu0 %v2661
  %v5033 = vpop.f32.mrf.mxu0
  %v5034 = vadd.f32 0.0, %v5033
  %5035 = vmatmul.f32.gmra.mxu0 %v2664
  %v5036 = vpop.f32.mrf.mxu0
  %v5037 = vadd.f32 0.0, %v5036
  %5038 = vmatmul.f32.gmra.mxu0 %v2667
  %v5039 = vpop.f32.mrf.mxu0
  %v5040 = vadd.f32 0.0, %v5039
  %5041 = vmatmul.f32.gmra.mxu0 %v2670
  %v5042 = vpop.f32.mrf.mxu0
  %v5043 = vadd.f32 0.0, %v5042
  %5044 = vmatmul.f32.gmra.mxu0 %v2673
  %v5045 = vpop.f32.mrf.mxu0
  %v5046 = vadd.f32 0.0, %v5045
  %5047 = vmatmul.f32.gmra.mxu0 %v2676
  %v5048 = vpop.f32.mrf.mxu0
  %v5049 = vadd.f32 0.0, %v5048
  %5050 = vmatmul.f32.gmra.mxu0 %v2679
  %v5051 = vpop.f32.mrf.mxu0
  %v5052 = vadd.f32 0.0, %v5051
  %5053 = vmatmul.f32.gmra.mxu0 %v2682
  %v5054 = vpop.f32.mrf.mxu0
  %v5055 = vadd.f32 0.0, %v5054
  %5056 = vmatmul.f32.gmra.mxu0 %v2685
  %v5057 = vpop.f32.mrf.mxu0
  %v5058 = vadd.f32 0.0, %v5057
  %5059 = vmatmul.f32.gmra.mxu0 %v2688
  %v5060 = vpop.f32.mrf.mxu0
  %v5061 = vadd.f32 0.0, %v5060
  %5062 = vmatmul.f32.gmra.mxu0 %v2691
  %v5063 = vpop.f32.mrf.mxu0
  %v5064 = vadd.f32 0.0, %v5063
  %5065 = vmatmul.f32.gmra.mxu0 %v2694
  %v5066 = vpop.f32.mrf.mxu0
  %v5067 = vadd.f32 0.0, %v5066
  %5068 = vmatmul.f32.gmra.mxu0 %v2697
  %v5069 = vpop.f32.mrf.mxu0
  %v5070 = vadd.f32 0.0, %v5069
  %5071 = vmatmul.f32.gmra.mxu0 %v2700
  %v5072 = vpop.f32.mrf.mxu0
  %v5073 = vadd.f32 0.0, %v5072
  %5074 = vmatmul.f32.gmra.mxu0 %v2703
  %v5075 = vpop.f32.mrf.mxu0
  %v5076 = vadd.f32 0.0, %v5075
  %5077 = vmatmul.f32.gmra.mxu0 %v2706
  %v5078 = vpop.f32.mrf.mxu0
  %v5079 = vadd.f32 0.0, %v5078
  %5080 = vmatmul.f32.gmra.mxu0 %v2709
  %v5081 = vpop.f32.mrf.mxu0
  %v5082 = vadd.f32 0.0, %v5081
  %5083 = vmatmul.f32.gmra.mxu0 %v2712
  %v5084 = vpop.f32.mrf.mxu0
  %v5085 = vadd.f32 0.0, %v5084
  %5086 = vmatmul.f32.gmra.mxu0 %v2715
  %v5087 = vpop.f32.mrf.mxu0
  %v5088 = vadd.f32 0.0, %v5087
  %5089 = vmatmul.f32.gmra.mxu0 %v2718
  %v5090 = vpop.f32.mrf.mxu0
  %v5091 = vadd.f32 0.0, %v5090
  %5092 = vmatmul.f32.gmra.mxu0 %v2721
  %v5093 = vpop.f32.mrf.mxu0
  %v5094 = vadd.f32 0.0, %v5093
  %5095 = vmatmul.f32.gmra.mxu0 %v2724
  %v5096 = vpop.f32.mrf.mxu0
  %v5097 = vadd.f32 0.0, %v5096
  %5098 = vmatmul.f32.gmra.mxu0 %v2727
  %v5099 = vpop.f32.mrf.mxu0
  %v5100 = vadd.f32 0.0, %v5099
  %5101 = vmatmul.f32.gmra.mxu0 %v2730
  %v5102 = vpop.f32.mrf.mxu0
  %v5103 = vadd.f32 0.0, %v5102
  %5104 = vmatmul.f32.gmra.mxu0 %v2733
  %v5105 = vpop.f32.mrf.mxu0
  %v5106 = vadd.f32 0.0, %v5105
  %5107 = vmatmul.f32.gmra.mxu0 %v2736
  %v5108 = vpop.f32.mrf.mxu0
  %v5109 = vadd.f32 0.0, %v5108
  %5110 = vmatmul.f32.gmra.mxu0 %v2739
  %v5111 = vpop.f32.mrf.mxu0
  %v5112 = vadd.f32 0.0, %v5111
  %5113 = vmatmul.f32.gmra.mxu0 %v2742
  %v5114 = vpop.f32.mrf.mxu0
  %v5115 = vadd.f32 0.0, %v5114
  %5116 = vmatmul.f32.gmra.mxu0 %v2745
  %v5117 = vpop.f32.mrf.mxu0
  %v5118 = vadd.f32 0.0, %v5117
  %5119 = vmatmul.f32.gmra.mxu0 %v2748
  %v5120 = vpop.f32.mrf.mxu0
  %v5121 = vadd.f32 0.0, %v5120
  %5122 = vmatmul.f32.gmra.mxu0 %v2751
  %v5123 = vpop.f32.mrf.mxu0
  %v5124 = vadd.f32 0.0, %v5123
  %5125 = vmatmul.f32.gmra.mxu0 %v2754
  %v5126 = vpop.f32.mrf.mxu0
  %v5127 = vadd.f32 0.0, %v5126
  %5128 = vmatmul.f32.gmra.mxu0 %v2757
  %v5129 = vpop.f32.mrf.mxu0
  %v5130 = vadd.f32 0.0, %v5129
  %5131 = vmatmul.f32.gmra.mxu0 %v2760
  %v5132 = vpop.f32.mrf.mxu0
  %v5133 = vadd.f32 0.0, %v5132
  %5134 = vmatmul.f32.gmra.mxu0 %v2763
  %v5135 = vpop.f32.mrf.mxu0
  %v5136 = vadd.f32 0.0, %v5135
  %5137 = vmatmul.f32.gmra.mxu0 %v2766
  %v5138 = vpop.f32.mrf.mxu0
  %v5139 = vadd.f32 0.0, %v5138
  %5140 = vmatmul.f32.gmra.mxu0 %v2769
  %v5141 = vpop.f32.mrf.mxu0
  %v5142 = vadd.f32 0.0, %v5141
  %5143 = vmatmul.f32.gmra.mxu0 %v2772
  %v5144 = vpop.f32.mrf.mxu0
  %v5145 = vadd.f32 0.0, %v5144
  %5146 = vmatmul.f32.gmra.mxu0 %v2775
  %v5147 = vpop.f32.mrf.mxu0
  %v5148 = vadd.f32 0.0, %v5147
  %5149 = vmatmul.f32.gmra.mxu0 %v2778
  %v5150 = vpop.f32.mrf.mxu0
  %v5151 = vadd.f32 0.0, %v5150
  %5152 = vmatmul.f32.gmra.mxu0 %v2781
  %v5153 = vpop.f32.mrf.mxu0
  %v5154 = vadd.f32 0.0, %v5153
  %5155 = vmatmul.f32.gmra.mxu0 %v2784
  %v5156 = vpop.f32.mrf.mxu0
  %v5157 = vadd.f32 0.0, %v5156
  %5158 = vmatmul.f32.gmra.mxu0 %v2787
  %v5159 = vpop.f32.mrf.mxu0
  %v5160 = vadd.f32 0.0, %v5159
  %5161 = vmatmul.f32.gmra.mxu0 %v2790
  %v5162 = vpop.f32.mrf.mxu0
  %v5163 = vadd.f32 0.0, %v5162
  %5164 = vmatmul.f32.gmra.mxu0 %v2793
  %v5165 = vpop.f32.mrf.mxu0
  %v5166 = vadd.f32 0.0, %v5165
  %5167 = vmatmul.f32.gmra.mxu0 %v2796
  %v5168 = vpop.f32.mrf.mxu0
  %v5169 = vadd.f32 0.0, %v5168
  %5170 = vmatmul.f32.gmra.mxu0 %v2799
  %v5171 = vpop.f32.mrf.mxu0
  %v5172 = vadd.f32 0.0, %v5171
  %5173 = vmatmul.f32.gmra.mxu0 %v2802
  %v5174 = vpop.f32.mrf.mxu0
  %v5175 = vadd.f32 0.0, %v5174
  %5176 = vmatmul.f32.gmra.mxu0 %v2805
  %v5177 = vpop.f32.mrf.mxu0
  %v5178 = vadd.f32 0.0, %v5177
  %5179 = vmatmul.f32.gmra.mxu0 %v2808
  %v5180 = vpop.f32.mrf.mxu0
  %v5181 = vadd.f32 0.0, %v5180
  %5182 = vmatmul.f32.gmra.mxu0 %v2811
  %v5183 = vpop.f32.mrf.mxu0
  %v5184 = vadd.f32 0.0, %v5183
  %5185 = vmatmul.f32.gmra.mxu0 %v2814
  %v5186 = vpop.f32.mrf.mxu0
  %v5187 = vadd.f32 0.0, %v5186
  %5188 = vmatmul.f32.gmra.mxu0 %v2817
  %v5189 = vpop.f32.mrf.mxu0
  %v5190 = vadd.f32 0.0, %v5189
  %5191 = vmatmul.f32.gmra.mxu0 %v2820
  %v5192 = vpop.f32.mrf.mxu0
  %v5193 = vadd.f32 0.0, %v5192
  %5194 = vmatmul.f32.gmra.mxu0 %v2823
  %v5195 = vpop.f32.mrf.mxu0
  %v5196 = vadd.f32 0.0, %v5195
  %5197 = vmatmul.f32.gmra.mxu0 %v2826
  %v5198 = vpop.f32.mrf.mxu0
  %v5199 = vadd.f32 0.0, %v5198
  %5200 = vmatmul.f32.gmra.mxu0 %v2829
  %v5201 = vpop.f32.mrf.mxu0
  %v5202 = vadd.f32 0.0, %v5201
  %5203 = vmatmul.f32.gmra.mxu0 %v2832
  %v5204 = vpop.f32.mrf.mxu0
  %v5205 = vadd.f32 0.0, %v5204
  %5206 = vmatmul.f32.gmra.mxu0 %v2835
  %v5207 = vpop.f32.mrf.mxu0
  %v5208 = vadd.f32 0.0, %v5207
  %5209 = vmatmul.f32.gmra.mxu0 %v2838
  %v5210 = vpop.f32.mrf.mxu0
  %v5211 = vadd.f32 0.0, %v5210
  %5212 = vmatmul.f32.gmra.mxu0 %v2841
  %v5213 = vpop.f32.mrf.mxu0
  %v5214 = vadd.f32 0.0, %v5213
  %5215 = vmatmul.f32.gmra.mxu0 %v2844
  %v5216 = vpop.f32.mrf.mxu0
  %v5217 = vadd.f32 0.0, %v5216
  %5218 = vmatmul.f32.gmra.mxu0 %v2847
  %v5219 = vpop.f32.mrf.mxu0
  %v5220 = vadd.f32 0.0, %v5219
  %5221 = vmatmul.f32.gmra.mxu0 %v2850
  %v5222 = vpop.f32.mrf.mxu0
  %v5223 = vadd.f32 0.0, %v5222
  %5224 = vmatmul.f32.gmra.mxu0 %v2853
  %v5225 = vpop.f32.mrf.mxu0
  %v5226 = vadd.f32 0.0, %v5225
  %5227 = vmatmul.f32.gmra.mxu0 %v2856
  %v5228 = vpop.f32.mrf.mxu0
  %v5229 = vadd.f32 0.0, %v5228
  %5230 = vmatmul.f32.gmra.mxu0 %v2859
  %v5231 = vpop.f32.mrf.mxu0
  %v5232 = vadd.f32 0.0, %v5231
  %5233 = vmatmul.f32.gmra.mxu0 %v2862
  %v5234 = vpop.f32.mrf.mxu0
  %v5235 = vadd.f32 0.0, %v5234
  %5236 = vmatmul.f32.gmra.mxu0 %v2865
  %v5237 = vpop.f32.mrf.mxu0
  %v5238 = vadd.f32 0.0, %v5237
  %5239 = vmatmul.f32.gmra.mxu0 %v2868
  %v5240 = vpop.f32.mrf.mxu0
  %v5241 = vadd.f32 0.0, %v5240
  %5242 = vmatmul.f32.gmra.mxu0 %v2871
  %v5243 = vpop.f32.mrf.mxu0
  %v5244 = vadd.f32 0.0, %v5243
  %5245 = vmatmul.f32.gmra.mxu0 %v2874
  %v5246 = vpop.f32.mrf.mxu0
  %v5247 = vadd.f32 0.0, %v5246
  %5248 = vmatmul.f32.gmra.mxu0 %v2877
  %v5249 = vpop.f32.mrf.mxu0
  %v5250 = vadd.f32 0.0, %v5249
  %5251 = vmatmul.f32.gmra.mxu0 %v2880
  %v5252 = vpop.f32.mrf.mxu0
  %v5253 = vadd.f32 0.0, %v5252
  %5254 = vmatmul.f32.gmra.mxu0 %v2883
  %v5255 = vpop.f32.mrf.mxu0
  %v5256 = vadd.f32 0.0, %v5255
  %5257 = vmatmul.f32.gmra.mxu0 %v2886
  %v5258 = vpop.f32.mrf.mxu0
  %v5259 = vadd.f32 0.0, %v5258
  %5260 = vmatmul.f32.gmra.mxu0 %v2889
  %v5261 = vpop.f32.mrf.mxu0
  %v5262 = vadd.f32 0.0, %v5261
  %5263 = vmatmul.f32.gmra.mxu0 %v2892
  %v5264 = vpop.f32.mrf.mxu0
  %v5265 = vadd.f32 0.0, %v5264
  %5266 = vmatmul.f32.gmra.mxu0 %v2895
  %v5267 = vpop.f32.mrf.mxu0
  %v5268 = vadd.f32 0.0, %v5267
  %5269 = vmatmul.f32.gmra.mxu0 %v2898
  %v5270 = vpop.f32.mrf.mxu0
  %v5271 = vadd.f32 0.0, %v5270
  %5272 = vmatmul.f32.gmra.mxu0 %v2901
  %v5273 = vpop.f32.mrf.mxu0
  %v5274 = vadd.f32 0.0, %v5273
  %5275 = vmatmul.f32.gmra.mxu0 %v2904
  %v5276 = vpop.f32.mrf.mxu0
  %v5277 = vadd.f32 0.0, %v5276
  %5278 = vmatmul.f32.gmra.mxu0 %v2907
  %v5279 = vpop.f32.mrf.mxu0
  %v5280 = vadd.f32 0.0, %v5279
  %5281 = vmatmul.f32.gmra.mxu0 %v2910
  %v5282 = vpop.f32.mrf.mxu0
  %v5283 = vadd.f32 0.0, %v5282
  %5284 = vmatmul.f32.gmra.mxu0 %v2913
  %v5285 = vpop.f32.mrf.mxu0
  %v5286 = vadd.f32 0.0, %v5285
  %5287 = vmatmul.f32.gmra.mxu0 %v2916
  %v5288 = vpop.f32.mrf.mxu0
  %v5289 = vadd.f32 0.0, %v5288
  %5290 = vmatmul.f32.gmra.mxu0 %v2919
  %v5291 = vpop.f32.mrf.mxu0
  %v5292 = vadd.f32 0.0, %v5291
  %5293 = vmatmul.f32.gmra.mxu0 %v2922
  %v5294 = vpop.f32.mrf.mxu0
  %v5295 = vadd.f32 0.0, %v5294
  %5296 = vmatmul.f32.gmra.mxu0 %v2925
  %v5297 = vpop.f32.mrf.mxu0
  %v5298 = vadd.f32 0.0, %v5297
  %5299 = vmatmul.f32.gmra.mxu0 %v2928
  %v5300 = vpop.f32.mrf.mxu0
  %v5301 = vadd.f32 0.0, %v5300
  %5302 = vmatmul.f32.gmra.mxu0 %v2931
  %v5303 = vpop.f32.mrf.mxu0
  %v5304 = vadd.f32 0.0, %v5303
  %5305 = vmatmul.f32.gmra.mxu0 %v2934
  %v5306 = vpop.f32.mrf.mxu0
  %v5307 = vadd.f32 0.0, %v5306
  %5308 = vmatmul.f32.gmra.mxu0 %v2937
  %v5309 = vpop.f32.mrf.mxu0
  %v5310 = vadd.f32 0.0, %v5309
  %5311 = vmatmul.f32.gmra.mxu0 %v2940
  %v5312 = vpop.f32.mrf.mxu0
  %v5313 = vadd.f32 0.0, %v5312
  %5314 = vmatmul.f32.gmra.mxu0 %v2943
  %v5315 = vpop.f32.mrf.mxu0
  %v5316 = vadd.f32 0.0, %v5315
  %5317 = vmatmul.f32.gmra.mxu0 %v2946
  %v5318 = vpop.f32.mrf.mxu0
  %v5319 = vadd.f32 0.0, %v5318
  %5320 = vmatmul.f32.gmra.mxu0 %v2949
  %v5321 = vpop.f32.mrf.mxu0
  %v5322 = vadd.f32 0.0, %v5321
  %5323 = vmatmul.f32.gmra.mxu0 %v2952
  %v5324 = vpop.f32.mrf.mxu0
  %v5325 = vadd.f32 0.0, %v5324
  %5326 = vmatmul.f32.gmra.mxu0 %v2955
  %v5327 = vpop.f32.mrf.mxu0
  %v5328 = vadd.f32 0.0, %v5327
  %5329 = vmatmul.f32.gmra.mxu0 %v2958
  %v5330 = vpop.f32.mrf.mxu0
  %v5331 = vadd.f32 0.0, %v5330
  %5332 = vmatmul.f32.gmra.mxu0 %v2961
  %v5333 = vpop.f32.mrf.mxu0
  %v5334 = vadd.f32 0.0, %v5333
  %5335 = vmatmul.f32.gmra.mxu0 %v2964
  %v5336 = vpop.f32.mrf.mxu0
  %v5337 = vadd.f32 0.0, %v5336
  %5338 = vmatmul.f32.gmra.mxu0 %v2967
  %v5339 = vpop.f32.mrf.mxu0
  %v5340 = vadd.f32 0.0, %v5339
  %5341 = vmatmul.f32.gmra.mxu0 %v2970
  %v5342 = vpop.f32.mrf.mxu0
  %v5343 = vadd.f32 0.0, %v5342
  %5344 = vmatmul.f32.gmra.mxu0 %v2973
  %v5345 = vpop.f32.mrf.mxu0
  %v5346 = vadd.f32 0.0, %v5345
  %5347 = vmatmul.f32.gmra.mxu0 %v2976
  %v5348 = vpop.f32.mrf.mxu0
  %v5349 = vadd.f32 0.0, %v5348
  %5350 = vmatmul.f32.gmra.mxu0 %v2979
  %v5351 = vpop.f32.mrf.mxu0
  %v5352 = vadd.f32 0.0, %v5351
  %5353 = vmatmul.f32.gmra.mxu0 %v2982
  %v5354 = vpop.f32.mrf.mxu0
  %v5355 = vadd.f32 0.0, %v5354
  %5356 = vmatmul.f32.gmra.mxu0 %v2985
  %v5357 = vpop.f32.mrf.mxu0
  %v5358 = vadd.f32 0.0, %v5357
  %5359 = vmatmul.f32.gmra.mxu0 %v2988
  %v5360 = vpop.f32.mrf.mxu0
  %v5361 = vadd.f32 0.0, %v5360
  %5362 = vmatmul.f32.gmra.mxu0 %v2991
  %v5363 = vpop.f32.mrf.mxu0
  %v5364 = vadd.f32 0.0, %v5363
  %5365 = vmatmul.f32.gmra.mxu0 %v2994
  %v5366 = vpop.f32.mrf.mxu0
  %v5367 = vadd.f32 0.0, %v5366
  %5368 = vmatmul.f32.gmra.mxu0 %v2997
  %v5369 = vpop.f32.mrf.mxu0
  %v5370 = vadd.f32 0.0, %v5369
  %5371 = vmatmul.f32.gmra.mxu0 %v3000
  %v5372 = vpop.f32.mrf.mxu0
  %v5373 = vadd.f32 0.0, %v5372
  %5374 = vmatmul.f32.gmra.mxu0 %v3003
  %v5375 = vpop.f32.mrf.mxu0
  %v5376 = vadd.f32 0.0, %v5375
  %5377 = vmatmul.f32.gmra.mxu0 %v3006
  %v5378 = vpop.f32.mrf.mxu0
  %v5379 = vadd.f32 0.0, %v5378
  %5380 = vmatmul.f32.gmra.mxu0 %v3009
  %v5381 = vpop.f32.mrf.mxu0
  %v5382 = vadd.f32 0.0, %v5381
  %5383 = vmatmul.f32.gmra.mxu0 %v3012
  %v5384 = vpop.f32.mrf.mxu0
  %v5385 = vadd.f32 0.0, %v5384
  %5386 = vmatmul.f32.gmra.mxu0 %v3015
  %v5387 = vpop.f32.mrf.mxu0
  %v5388 = vadd.f32 0.0, %v5387
  %5389 = vmatmul.f32.gmra.mxu0 %v3018
  %v5390 = vpop.f32.mrf.mxu0
  %v5391 = vadd.f32 0.0, %v5390
  %5392 = vmatmul.f32.gmra.mxu0 %v3021
  %v5393 = vpop.f32.mrf.mxu0
  %v5394 = vadd.f32 0.0, %v5393
  %5395 = vmatmul.f32.gmra.mxu0 %v3024
  %v5396 = vpop.f32.mrf.mxu0
  %v5397 = vadd.f32 0.0, %v5396
  %5398 = vmatmul.f32.gmra.mxu0 %v3027
  %v5399 = vpop.f32.mrf.mxu0
  %v5400 = vadd.f32 0.0, %v5399
  %5401 = vmatmul.f32.gmra.mxu0 %v3030
  %v5402 = vpop.f32.mrf.mxu0
  %v5403 = vadd.f32 0.0, %v5402
  %5404 = vmatmul.f32.gmra.mxu0 %v3033
  %v5405 = vpop.f32.mrf.mxu0
  %v5406 = vadd.f32 0.0, %v5405
  %5407 = vmatmul.f32.gmra.mxu0 %v3036
  %v5408 = vpop.f32.mrf.mxu0
  %v5409 = vadd.f32 0.0, %v5408
  %5410 = vmatmul.f32.gmra.mxu0 %v3039
  %v5411 = vpop.f32.mrf.mxu0
  %v5412 = vadd.f32 0.0, %v5411
  %5413 = vmatmul.f32.gmra.mxu0 %v3042
  %v5414 = vpop.f32.mrf.mxu0
  %v5415 = vadd.f32 0.0, %v5414
  %5416 = vmatmul.f32.gmra.mxu0 %v3045
  %v5417 = vpop.f32.mrf.mxu0
  %v5418 = vadd.f32 0.0, %v5417
  %5419 = vmatmul.f32.gmra.mxu0 %v3048
  %v5420 = vpop.f32.mrf.mxu0
  %v5421 = vadd.f32 0.0, %v5420
  %5422 = vmatmul.f32.gmra.mxu0 %v3051
  %v5423 = vpop.f32.mrf.mxu0
  %v5424 = vadd.f32 0.0, %v5423
  %5425 = vmatmul.f32.gmra.mxu0 %v3054
  %v5426 = vpop.f32.mrf.mxu0
  %v5427 = vadd.f32 0.0, %v5426
  %5428 = vmatmul.f32.gmra.mxu0 %v3057
  %v5429 = vpop.f32.mrf.mxu0
  %v5430 = vadd.f32 0.0, %v5429
  %5431 = vmatmul.f32.gmra.mxu0 %v3060
  %v5432 = vpop.f32.mrf.mxu0
  %v5433 = vadd.f32 0.0, %v5432
  %5434 = vmatmul.f32.gmra.mxu0 %v3063
  %v5435 = vpop.f32.mrf.mxu0
  %v5436 = vadd.f32 0.0, %v5435
  %5437 = vmatmul.f32.gmra.mxu0 %v3066
  %v5438 = vpop.f32.mrf.mxu0
  %v5439 = vadd.f32 0.0, %v5438
  %5440 = vmatmul.f32.gmra.mxu0 %v3069
  %v5441 = vpop.f32.mrf.mxu0
  %v5442 = vadd.f32 0.0, %v5441
  %5443 = vmatmul.f32.gmra.mxu0 %v3072
  %v5444 = vpop.f32.mrf.mxu0
  %v5445 = vadd.f32 0.0, %v5444
  %5446 = vmatmul.f32.gmra.mxu0 %v3075
  %v5447 = vpop.f32.mrf.mxu0
  %v5448 = vadd.f32 0.0, %v5447
  %5449 = vmatmul.f32.gmra.mxu0 %v3078
  %v5450 = vpop.f32.mrf.mxu0
  %v5451 = vadd.f32 0.0, %v5450
  %5452 = vmatmul.f32.gmra.mxu0 %v3081
  %v5453 = vpop.f32.mrf.mxu0
  %v5454 = vadd.f32 0.0, %v5453
  %5455 = vmatmul.f32.gmra.mxu0 %v3084
  %v5456 = vpop.f32.mrf.mxu0
  %v5457 = vadd.f32 0.0, %v5456
  %5458 = vmatmul.f32.gmra.mxu0 %v3087
  %v5459 = vpop.f32.mrf.mxu0
  %v5460 = vadd.f32 0.0, %v5459
  %5461 = vmatmul.f32.gmra.mxu0 %v3090
  %v5462 = vpop.f32.mrf.mxu0
  %v5463 = vadd.f32 0.0, %v5462
  %5464 = vmatmul.f32.gmra.mxu0 %v3093
  %v5465 = vpop.f32.mrf.mxu0
  %v5466 = vadd.f32 0.0, %v5465
  %5467 = vmatmul.f32.gmra.mxu0 %v3096
  %v5468 = vpop.f32.mrf.mxu0
  %v5469 = vadd.f32 0.0, %v5468
  %5470 = vmatmul.f32.gmra.mxu0 %v3099
  %v5471 = vpop.f32.mrf.mxu0
  %v5472 = vadd.f32 0.0, %v5471
  %5473 = vmatmul.f32.gmra.mxu0 %v3102
  %v5474 = vpop.f32.mrf.mxu0
  %v5475 = vadd.f32 0.0, %v5474
  %5476 = vmatmul.f32.gmra.mxu0 %v3105
  %v5477 = vpop.f32.mrf.mxu0
  %v5478 = vadd.f32 0.0, %v5477
  %5479 = vmatmul.f32.gmra.mxu0 %v3108
  %v5480 = vpop.f32.mrf.mxu0
  %v5481 = vadd.f32 0.0, %v5480
  %5482 = vmatmul.f32.gmra.mxu0 %v3111
  %v5483 = vpop.f32.mrf.mxu0
  %v5484 = vadd.f32 0.0, %v5483
  %5485 = vmatmul.f32.gmra.mxu0 %v3114
  %v5486 = vpop.f32.mrf.mxu0
  %v5487 = vadd.f32 0.0, %v5486
  %5488 = vmatmul.f32.gmra.mxu0 %v3117
  %v5489 = vpop.f32.mrf.mxu0
  %v5490 = vadd.f32 0.0, %v5489
  %5491 = vmatmul.f32.gmra.mxu0 %v3120
  %v5492 = vpop.f32.mrf.mxu0
  %v5493 = vadd.f32 0.0, %v5492
  %5494 = vmatmul.f32.gmra.mxu0 %v3123
  %v5495 = vpop.f32.mrf.mxu0
  %v5496 = vadd.f32 0.0, %v5495
  %5497 = vmatmul.f32.gmra.mxu0 %v3126
  %v5498 = vpop.f32.mrf.mxu0
  %v5499 = vadd.f32 0.0, %v5498
  %5500 = vmatmul.f32.gmra.mxu0 %v3129
  %v5501 = vpop.f32.mrf.mxu0
  %v5502 = vadd.f32 0.0, %v5501
  %5503 = vmatmul.f32.gmra.mxu0 %v3132
  %v5504 = vpop.f32.mrf.mxu0
  %v5505 = vadd.f32 0.0, %v5504
  %5506 = vmatmul.f32.gmra.mxu0 %v3135
  %v5507 = vpop.f32.mrf.mxu0
  %v5508 = vadd.f32 0.0, %v5507
  %5509 = vmatmul.f32.gmra.mxu0 %v3138
  %v5510 = vpop.f32.mrf.mxu0
  %v5511 = vadd.f32 0.0, %v5510
  %5512 = vmatmul.f32.gmra.mxu0 %v3141
  %v5513 = vpop.f32.mrf.mxu0
  %v5514 = vadd.f32 0.0, %v5513
  %5515 = vmatmul.f32.gmra.mxu0 %v3144
  %v5516 = vpop.f32.mrf.mxu0
  %v5517 = vadd.f32 0.0, %v5516
  %5518 = vmatmul.f32.gmra.mxu0 %v3147
  %v5519 = vpop.f32.mrf.mxu0
  %v5520 = vadd.f32 0.0, %v5519
  %5521 = vmatmul.f32.gmra.mxu0 %v3150
  %v5522 = vpop.f32.mrf.mxu0
  %v5523 = vadd.f32 0.0, %v5522
  %5524 = vmatmul.f32.gmra.mxu0 %v3153
  %v5525 = vpop.f32.mrf.mxu0
  %v5526 = vadd.f32 0.0, %v5525
  %5527 = vmatmul.f32.gmra.mxu0 %v3156
  %v5528 = vpop.f32.mrf.mxu0
  %v5529 = vadd.f32 0.0, %v5528
  %5530 = vmatmul.f32.gmra.mxu0 %v3159
  %v5531 = vpop.f32.mrf.mxu0
  %v5532 = vadd.f32 0.0, %v5531
  %5533 = vdwg.mxu0
  %v5534 = vmax.f32 %v3183, %v3771
  %v5535 = vmax.f32 %v3186, %v3774
  %v5536 = vmax.f32 %v3189, %v3777
  %v5537 = vmax.f32 %v3192, %v3780
  %v5538 = vmax.f32 %v3195, %v3783
  %v5539 = vmax.f32 %v3198, %v3786
  %v5540 = vmax.f32 %v3201, %v3789
  %v5541 = vmax.f32 %v3204, %v3792
  %v5542 = vmax.f32 %v3207, %v3795
  %v5543 = vmax.f32 %v3210, %v3798
  %v5544 = vmax.f32 %v3213, %v3801
  %v5545 = vmax.f32 %v3216, %v3804
  %v5546 = vmax.f32 %v3219, %v3807
  %v5547 = vmax.f32 %v3222, %v3810
  %v5548 = vmax.f32 %v3225, %v3813
  %v5549 = vmax.f32 %v3228, %v3816
  %v5550 = vmax.f32 %v3231, %v3819
  %v5551 = vmax.f32 %v3234, %v3822
  %v5552 = vmax.f32 %v3237, %v3825
  %v5553 = vmax.f32 %v3240, %v3828
  %v5554 = vmax.f32 %v3243, %v3831
  %v5555 = vmax.f32 %v3246, %v3834
  %v5556 = vmax.f32 %v3249, %v3837
  %v5557 = vmax.f32 %v3252, %v3840
  %v5558 = vmax.f32 %v3255, %v3843
  %v5559 = vmax.f32 %v3258, %v3846
  %v5560 = vmax.f32 %v3261, %v3849
  %v5561 = vmax.f32 %v3264, %v3852
  %v5562 = vmax.f32 %v3267, %v3855
  %v5563 = vmax.f32 %v3270, %v3858
  %v5564 = vmax.f32 %v3273, %v3861
  %v5565 = vmax.f32 %v3276, %v3864
  %v5566 = vmax.f32 %v3279, %v3867
  %v5567 = vmax.f32 %v3282, %v3870
  %v5568 = vmax.f32 %v3285, %v3873
  %v5569 = vmax.f32 %v3288, %v3876
  %v5570 = vmax.f32 %v3291, %v3879
  %v5571 = vmax.f32 %v3294, %v3882
  %v5572 = vmax.f32 %v3297, %v3885
  %v5573 = vmax.f32 %v3300, %v3888
  %v5574 = vmax.f32 %v3303, %v3891
  %v5575 = vmax.f32 %v3306, %v3894
  %v5576 = vmax.f32 %v3309, %v3897
  %v5577 = vmax.f32 %v3312, %v3900
  %v5578 = vmax.f32 %v3315, %v3903
  %v5579 = vmax.f32 %v3318, %v3906
  %v5580 = vmax.f32 %v3321, %v3909
  %v5581 = vmax.f32 %v3324, %v3912
  %v5582 = vmax.f32 %v3327, %v3915
  %v5583 = vmax.f32 %v3330, %v3918
  %v5584 = vmax.f32 %v3333, %v3921
  %v5585 = vmax.f32 %v3336, %v3924
  %v5586 = vmax.f32 %v3339, %v3927
  %v5587 = vmax.f32 %v3342, %v3930
  %v5588 = vmax.f32 %v3345, %v3933
  %v5589 = vmax.f32 %v3348, %v3936
  %v5590 = vmax.f32 %v3351, %v3939
  %v5591 = vmax.f32 %v3354, %v3942
  %v5592 = vmax.f32 %v3357, %v3945
  %v5593 = vmax.f32 %v3360, %v3948
  %v5594 = vmax.f32 %v3363, %v3951
  %v5595 = vmax.f32 %v3366, %v3954
  %v5596 = vmax.f32 %v3369, %v3957
  %v5597 = vmax.f32 %v3372, %v3960
  %v5598 = vmax.f32 %v3375, %v3963
  %v5599 = vmax.f32 %v3378, %v3966
  %v5600 = vmax.f32 %v3381, %v3969
  %v5601 = vmax.f32 %v3384, %v3972
  %v5602 = vmax.f32 %v3387, %v3975
  %v5603 = vmax.f32 %v3390, %v3978
  %v5604 = vmax.f32 %v3393, %v3981
  %v5605 = vmax.f32 %v3396, %v3984
  %v5606 = vmax.f32 %v3399, %v3987
  %v5607 = vmax.f32 %v3402, %v3990
  %v5608 = vmax.f32 %v3405, %v3993
  %v5609 = vmax.f32 %v3408, %v3996
  %v5610 = vmax.f32 %v3411, %v3999
  %v5611 = vmax.f32 %v3414, %v4002
  %v5612 = vmax.f32 %v3417, %v4005
  %v5613 = vmax.f32 %v3420, %v4008
  %v5614 = vmax.f32 %v3423, %v4011
  %v5615 = vmax.f32 %v3426, %v4014
  %v5616 = vmax.f32 %v3429, %v4017
  %v5617 = vmax.f32 %v3432, %v4020
  %v5618 = vmax.f32 %v3435, %v4023
  %v5619 = vmax.f32 %v3438, %v4026
  %v5620 = vmax.f32 %v3441, %v4029
  %v5621 = vmax.f32 %v3444, %v4032
  %v5622 = vmax.f32 %v3447, %v4035
  %v5623 = vmax.f32 %v3450, %v4038
  %v5624 = vmax.f32 %v3453, %v4041
  %v5625 = vmax.f32 %v3456, %v4044
  %v5626 = vmax.f32 %v3459, %v4047
  %v5627 = vmax.f32 %v3462, %v4050
  %v5628 = vmax.f32 %v3465, %v4053
  %v5629 = vmax.f32 %v3468, %v4056
  %v5630 = vmax.f32 %v3471, %v4059
  %v5631 = vmax.f32 %v3474, %v4062
  %v5632 = vmax.f32 %v3477, %v4065
  %v5633 = vmax.f32 %v3480, %v4068
  %v5634 = vmax.f32 %v3483, %v4071
  %v5635 = vmax.f32 %v3486, %v4074
  %v5636 = vmax.f32 %v3489, %v4077
  %v5637 = vmax.f32 %v3492, %v4080
  %v5638 = vmax.f32 %v3495, %v4083
  %v5639 = vmax.f32 %v3498, %v4086
  %v5640 = vmax.f32 %v3501, %v4089
  %v5641 = vmax.f32 %v3504, %v4092
  %v5642 = vmax.f32 %v3507, %v4095
  %v5643 = vmax.f32 %v3510, %v4098
  %v5644 = vmax.f32 %v3513, %v4101
  %v5645 = vmax.f32 %v3516, %v4104
  %v5646 = vmax.f32 %v3519, %v4107
  %v5647 = vmax.f32 %v3522, %v4110
  %v5648 = vmax.f32 %v3525, %v4113
  %v5649 = vmax.f32 %v3528, %v4116
  %v5650 = vmax.f32 %v3531, %v4119
  %v5651 = vmax.f32 %v3534, %v4122
  %v5652 = vmax.f32 %v3537, %v4125
  %v5653 = vmax.f32 %v3540, %v4128
  %v5654 = vmax.f32 %v3543, %v4131
  %v5655 = vmax.f32 %v3546, %v4134
  %v5656 = vmax.f32 %v3549, %v4137
  %v5657 = vmax.f32 %v3552, %v4140
  %v5658 = vmax.f32 %v3555, %v4143
  %v5659 = vmax.f32 %v3558, %v4146
  %v5660 = vmax.f32 %v3561, %v4149
  %v5661 = vmax.f32 %v3564, %v4152
  %v5662 = vmax.f32 %v3567, %v4155
  %v5663 = vmax.f32 %v3570, %v4158
  %v5664 = vmax.f32 %v3573, %v4161
  %v5665 = vmax.f32 %v3576, %v4164
  %v5666 = vmax.f32 %v3579, %v4167
  %v5667 = vmax.f32 %v3582, %v4170
  %v5668 = vmax.f32 %v3585, %v4173
  %v5669 = vmax.f32 %v3588, %v4176
  %v5670 = vmax.f32 %v3591, %v4179
  %v5671 = vmax.f32 %v3594, %v4182
  %v5672 = vmax.f32 %v3597, %v4185
  %v5673 = vmax.f32 %v3600, %v4188
  %v5674 = vmax.f32 %v3603, %v4191
  %v5675 = vmax.f32 %v3606, %v4194
  %v5676 = vmax.f32 %v3609, %v4197
  %v5677 = vmax.f32 %v3612, %v4200
  %v5678 = vmax.f32 %v3615, %v4203
  %v5679 = vmax.f32 %v3618, %v4206
  %v5680 = vmax.f32 %v3621, %v4209
  %v5681 = vmax.f32 %v3624, %v4212
  %v5682 = vmax.f32 %v3627, %v4215
  %v5683 = vmax.f32 %v3630, %v4218
  %v5684 = vmax.f32 %v3633, %v4221
  %v5685 = vmax.f32 %v3636, %v4224
  %v5686 = vmax.f32 %v3639, %v4227
  %v5687 = vmax.f32 %v3642, %v4230
  %v5688 = vmax.f32 %v3645, %v4233
  %v5689 = vmax.f32 %v3648, %v4236
  %v5690 = vmax.f32 %v3651, %v4239
  %v5691 = vmax.f32 %v3654, %v4242
  %v5692 = vmax.f32 %v3657, %v4245
  %v5693 = vmax.f32 %v3660, %v4248
  %v5694 = vmax.f32 %v3663, %v4251
  %v5695 = vmax.f32 %v3666, %v4254
  %v5696 = vmax.f32 %v3669, %v4257
  %v5697 = vmax.f32 %v3672, %v4260
  %v5698 = vmax.f32 %v3675, %v4263
  %v5699 = vmax.f32 %v3678, %v4266
  %v5700 = vmax.f32 %v3681, %v4269
  %v5701 = vmax.f32 %v3684, %v4272
  %v5702 = vmax.f32 %v3687, %v4275
  %v5703 = vmax.f32 %v3690, %v4278
  %v5704 = vmax.f32 %v3693, %v4281
  %v5705 = vmax.f32 %v3696, %v4284
  %v5706 = vmax.f32 %v3699, %v4287
  %v5707 = vmax.f32 %v3702, %v4290
  %v5708 = vmax.f32 %v3705, %v4293
  %v5709 = vmax.f32 %v3708, %v4296
  %v5710 = vmax.f32 %v3711, %v4299
  %v5711 = vmax.f32 %v3714, %v4302
  %v5712 = vmax.f32 %v3717, %v4305
  %v5713 = vmax.f32 %v3720, %v4308
  %v5714 = vmax.f32 %v3723, %v4311
  %v5715 = vmax.f32 %v3726, %v4314
  %v5716 = vmax.f32 %v3729, %v4317
  %v5717 = vmax.f32 %v3732, %v4320
  %v5718 = vmax.f32 %v3735, %v4323
  %v5719 = vmax.f32 %v3738, %v4326
  %v5720 = vmax.f32 %v3741, %v4329
  %v5721 = vmax.f32 %v3744, %v4332
  %v5722 = vmax.f32 %v3747, %v4335
  %v5723 = vmax.f32 %v3750, %v4338
  %v5724 = vmax.f32 %v3753, %v4341
  %v5725 = vmax.f32 %v3756, %v4344
  %v5726 = vmax.f32 %v3759, %v4347
  %v5727 = vmax.f32 %v3762, %v4350
  %v5728 = vmax.f32 %v3765, %v4353
  %v5729 = vmax.f32 %v3768, %v4356
  %v5730 = vmax.f32 %v4359, %v4947
  %v5731 = vmax.f32 %v4362, %v4950
  %v5732 = vmax.f32 %v4365, %v4953
  %v5733 = vmax.f32 %v4368, %v4956
  %v5734 = vmax.f32 %v4371, %v4959
  %v5735 = vmax.f32 %v4374, %v4962
  %v5736 = vmax.f32 %v4377, %v4965
  %v5737 = vmax.f32 %v4380, %v4968
  %v5738 = vmax.f32 %v4383, %v4971
  %v5739 = vmax.f32 %v4386, %v4974
  %v5740 = vmax.f32 %v4389, %v4977
  %v5741 = vmax.f32 %v4392, %v4980
  %v5742 = vmax.f32 %v4395, %v4983
  %v5743 = vmax.f32 %v4398, %v4986
  %v5744 = vmax.f32 %v4401, %v4989
  %v5745 = vmax.f32 %v4404, %v4992
  %v5746 = vmax.f32 %v4407, %v4995
  %v5747 = vmax.f32 %v4410, %v4998
  %v5748 = vmax.f32 %v4413, %v5001
  %v5749 = vmax.f32 %v4416, %v5004
  %v5750 = vmax.f32 %v4419, %v5007
  %v5751 = vmax.f32 %v4422, %v5010
  %v5752 = vmax.f32 %v4425, %v5013
  %v5753 = vmax.f32 %v4428, %v5016
  %v5754 = vmax.f32 %v4431, %v5019
  %v5755 = vmax.f32 %v4434, %v5022
  %v5756 = vmax.f32 %v4437, %v5025
  %v5757 = vmax.f32 %v4440, %v5028
  %v5758 = vmax.f32 %v4443, %v5031
  %v5759 = vmax.f32 %v4446, %v5034
  %v5760 = vmax.f32 %v4449, %v5037
  %v5761 = vmax.f32 %v4452, %v5040
  %v5762 = vmax.f32 %v4455, %v5043
  %v5763 = vmax.f32 %v4458, %v5046
  %v5764 = vmax.f32 %v4461, %v5049
  %v5765 = vmax.f32 %v4464, %v5052
  %v5766 = vmax.f32 %v4467, %v5055
  %v5767 = vmax.f32 %v4470, %v5058
  %v5768 = vmax.f32 %v4473, %v5061
  %v5769 = vmax.f32 %v4476, %v5064
  %v5770 = vmax.f32 %v4479, %v5067
  %v5771 = vmax.f32 %v4482, %v5070
  %v5772 = vmax.f32 %v4485, %v5073
  %v5773 = vmax.f32 %v4488, %v5076
  %v5774 = vmax.f32 %v4491, %v5079
  %v5775 = vmax.f32 %v4494, %v5082
  %v5776 = vmax.f32 %v4497, %v5085
  %v5777 = vmax.f32 %v4500, %v5088
  %v5778 = vmax.f32 %v4503, %v5091
  %v5779 = vmax.f32 %v4506, %v5094
  %v5780 = vmax.f32 %v4509, %v5097
  %v5781 = vmax.f32 %v4512, %v5100
  %v5782 = vmax.f32 %v4515, %v5103
  %v5783 = vmax.f32 %v4518, %v5106
  %v5784 = vmax.f32 %v4521, %v5109
  %v5785 = vmax.f32 %v4524, %v5112
  %v5786 = vmax.f32 %v4527, %v5115
  %v5787 = vmax.f32 %v4530, %v5118
  %v5788 = vmax.f32 %v4533, %v5121
  %v5789 = vmax.f32 %v4536, %v5124
  %v5790 = vmax.f32 %v4539, %v5127
  %v5791 = vmax.f32 %v4542, %v5130
  %v5792 = vmax.f32 %v4545, %v5133
  %v5793 = vmax.f32 %v4548, %v5136
  %v5794 = vmax.f32 %v4551, %v5139
  %v5795 = vmax.f32 %v4554, %v5142
  %v5796 = vmax.f32 %v4557, %v5145
  %v5797 = vmax.f32 %v4560, %v5148
  %v5798 = vmax.f32 %v4563, %v5151
  %v5799 = vmax.f32 %v4566, %v5154
  %v5800 = vmax.f32 %v4569, %v5157
  %v5801 = vmax.f32 %v4572, %v5160
  %v5802 = vmax.f32 %v4575, %v5163
  %v5803 = vmax.f32 %v4578, %v5166
  %v5804 = vmax.f32 %v4581, %v5169
  %v5805 = vmax.f32 %v4584, %v5172
  %v5806 = vmax.f32 %v4587, %v5175
  %v5807 = vmax.f32 %v4590, %v5178
  %v5808 = vmax.f32 %v4593, %v5181
  %v5809 = vmax.f32 %v4596, %v5184
  %v5810 = vmax.f32 %v4599, %v5187
  %v5811 = vmax.f32 %v4602, %v5190
  %v5812 = vmax.f32 %v4605, %v5193
  %v5813 = vmax.f32 %v4608, %v5196
  %v5814 = vmax.f32 %v4611, %v5199
  %v5815 = vmax.f32 %v4614, %v5202
  %v5816 = vmax.f32 %v4617, %v5205
  %v5817 = vmax.f32 %v4620, %v5208
  %v5818 = vmax.f32 %v4623, %v5211
  %v5819 = vmax.f32 %v4626, %v5214
  %v5820 = vmax.f32 %v4629, %v5217
  %v5821 = vmax.f32 %v4632, %v5220
  %v5822 = vmax.f32 %v4635, %v5223
  %v5823 = vmax.f32 %v4638, %v5226
  %v5824 = vmax.f32 %v4641, %v5229
  %v5825 = vmax.f32 %v4644, %v5232
  %v5826 = vmax.f32 %v4647, %v5235
  %v5827 = vmax.f32 %v4650, %v5238
  %v5828 = vmax.f32 %v4653, %v5241
  %v5829 = vmax.f32 %v4656, %v5244
  %v5830 = vmax.f32 %v4659, %v5247
  %v5831 = vmax.f32 %v4662, %v5250
  %v5832 = vmax.f32 %v4665, %v5253
  %v5833 = vmax.f32 %v4668, %v5256
  %v5834 = vmax.f32 %v4671, %v5259
  %v5835 = vmax.f32 %v4674, %v5262
  %v5836 = vmax.f32 %v4677, %v5265
  %v5837 = vmax.f32 %v4680, %v5268
  %v5838 = vmax.f32 %v4683, %v5271
  %v5839 = vmax.f32 %v4686, %v5274
  %v5840 = vmax.f32 %v4689, %v5277
  %v5841 = vmax.f32 %v4692, %v5280
  %v5842 = vmax.f32 %v4695, %v5283
  %v5843 = vmax.f32 %v4698, %v5286
  %v5844 = vmax.f32 %v4701, %v5289
  %v5845 = vmax.f32 %v4704, %v5292
  %v5846 = vmax.f32 %v4707, %v5295
  %v5847 = vmax.f32 %v4710, %v5298
  %v5848 = vmax.f32 %v4713, %v5301
  %v5849 = vmax.f32 %v4716, %v5304
  %v5850 = vmax.f32 %v4719, %v5307
  %v5851 = vmax.f32 %v4722, %v5310
  %v5852 = vmax.f32 %v4725, %v5313
  %v5853 = vmax.f32 %v4728, %v5316
  %v5854 = vmax.f32 %v4731, %v5319
  %v5855 = vmax.f32 %v4734, %v5322
  %v5856 = vmax.f32 %v4737, %v5325
  %v5857 = vmax.f32 %v4740, %v5328
  %v5858 = vmax.f32 %v4743, %v5331
  %v5859 = vmax.f32 %v4746, %v5334
  %v5860 = vmax.f32 %v4749, %v5337
  %v5861 = vmax.f32 %v4752, %v5340
  %v5862 = vmax.f32 %v4755, %v5343
  %v5863 = vmax.f32 %v4758, %v5346
  %v5864 = vmax.f32 %v4761, %v5349
  %v5865 = vmax.f32 %v4764, %v5352
  %v5866 = vmax.f32 %v4767, %v5355
  %v5867 = vmax.f32 %v4770, %v5358
  %v5868 = vmax.f32 %v4773, %v5361
  %v5869 = vmax.f32 %v4776, %v5364
  %v5870 = vmax.f32 %v4779, %v5367
  %v5871 = vmax.f32 %v4782, %v5370
  %v5872 = vmax.f32 %v4785, %v5373
  %v5873 = vmax.f32 %v4788, %v5376
  %v5874 = vmax.f32 %v4791, %v5379
  %v5875 = vmax.f32 %v4794, %v5382
  %v5876 = vmax.f32 %v4797, %v5385
  %v5877 = vmax.f32 %v4800, %v5388
  %v5878 = vmax.f32 %v4803, %v5391
  %v5879 = vmax.f32 %v4806, %v5394
  %v5880 = vmax.f32 %v4809, %v5397
  %v5881 = vmax.f32 %v4812, %v5400
  %v5882 = vmax.f32 %v4815, %v5403
  %v5883 = vmax.f32 %v4818, %v5406
  %v5884 = vmax.f32 %v4821, %v5409
  %v5885 = vmax.f32 %v4824, %v5412
  %v5886 = vmax.f32 %v4827, %v5415
  %v5887 = vmax.f32 %v4830, %v5418
  %v5888 = vmax.f32 %v4833, %v5421
  %v5889 = vmax.f32 %v4836, %v5424
  %v5890 = vmax.f32 %v4839, %v5427
  %v5891 = vmax.f32 %v4842, %v5430
  %v5892 = vmax.f32 %v4845, %v5433
  %v5893 = vmax.f32 %v4848, %v5436
  %v5894 = vmax.f32 %v4851, %v5439
  %v5895 = vmax.f32 %v4854, %v5442
  %v5896 = vmax.f32 %v4857, %v5445
  %v5897 = vmax.f32 %v4860, %v5448
  %v5898 = vmax.f32 %v4863, %v5451
  %v5899 = vmax.f32 %v4866, %v5454
  %v5900 = vmax.f32 %v4869, %v5457
  %v5901 = vmax.f32 %v4872, %v5460
  %v5902 = vmax.f32 %v4875, %v5463
  %v5903 = vmax.f32 %v4878, %v5466
  %v5904 = vmax.f32 %v4881, %v5469
  %v5905 = vmax.f32 %v4884, %v5472
  %v5906 = vmax.f32 %v4887, %v5475
  %v5907 = vmax.f32 %v4890, %v5478
  %v5908 = vmax.f32 %v4893, %v5481
  %v5909 = vmax.f32 %v4896, %v5484
  %v5910 = vmax.f32 %v4899, %v5487
  %v5911 = vmax.f32 %v4902, %v5490
  %v5912 = vmax.f32 %v4905, %v5493
  %v5913 = vmax.f32 %v4908, %v5496
  %v5914 = vmax.f32 %v4911, %v5499
  %v5915 = vmax.f32 %v4914, %v5502
  %v5916 = vmax.f32 %v4917, %v5505
  %v5917 = vmax.f32 %v4920, %v5508
  %v5918 = vmax.f32 %v4923, %v5511
  %v5919 = vmax.f32 %v4926, %v5514
  %v5920 = vmax.f32 %v4929, %v5517
  %v5921 = vmax.f32 %v4932, %v5520
  %v5922 = vmax.f32 %v4935, %v5523
  %v5923 = vmax.f32 %v4938, %v5526
  %v5924 = vmax.f32 %v4941, %v5529
  %v5925 = vmax.f32 %v4944, %v5532
  %v5926 = vmax.f32 %v5534, %v5730
  %v5927 = vmax.f32 %v5535, %v5731
  %v5928 = vmax.f32 %v5536, %v5732
  %v5929 = vmax.f32 %v5537, %v5733
  %v5930 = vmax.f32 %v5538, %v5734
  %v5931 = vmax.f32 %v5539, %v5735
  %v5932 = vmax.f32 %v5540, %v5736
  %v5933 = vmax.f32 %v5541, %v5737
  %v5934 = vmax.f32 %v5542, %v5738
  %v5935 = vmax.f32 %v5543, %v5739
  %v5936 = vmax.f32 %v5544, %v5740
  %v5937 = vmax.f32 %v5545, %v5741
  %v5938 = vmax.f32 %v5546, %v5742
  %v5939 = vmax.f32 %v5547, %v5743
  %v5940 = vmax.f32 %v5548, %v5744
  %v5941 = vmax.f32 %v5549, %v5745
  %v5942 = vmax.f32 %v5550, %v5746
  %v5943 = vmax.f32 %v5551, %v5747
  %v5944 = vmax.f32 %v5552, %v5748
  %v5945 = vmax.f32 %v5553, %v5749
  %v5946 = vmax.f32 %v5554, %v5750
  %v5947 = vmax.f32 %v5555, %v5751
  %v5948 = vmax.f32 %v5556, %v5752
  %v5949 = vmax.f32 %v5557, %v5753
  %v5950 = vmax.f32 %v5558, %v5754
  %v5951 = vmax.f32 %v5559, %v5755
  %v5952 = vmax.f32 %v5560, %v5756
  %v5953 = vmax.f32 %v5561, %v5757
  %v5954 = vmax.f32 %v5562, %v5758
  %v5955 = vmax.f32 %v5563, %v5759
  %v5956 = vmax.f32 %v5564, %v5760
  %v5957 = vmax.f32 %v5565, %v5761
  %v5958 = vmax.f32 %v5566, %v5762
  %v5959 = vmax.f32 %v5567, %v5763
  %v5960 = vmax.f32 %v5568, %v5764
  %v5961 = vmax.f32 %v5569, %v5765
  %v5962 = vmax.f32 %v5570, %v5766
  %v5963 = vmax.f32 %v5571, %v5767
  %v5964 = vmax.f32 %v5572, %v5768
  %v5965 = vmax.f32 %v5573, %v5769
  %v5966 = vmax.f32 %v5574, %v5770
  %v5967 = vmax.f32 %v5575, %v5771
  %v5968 = vmax.f32 %v5576, %v5772
  %v5969 = vmax.f32 %v5577, %v5773
  %v5970 = vmax.f32 %v5578, %v5774
  %v5971 = vmax.f32 %v5579, %v5775
  %v5972 = vmax.f32 %v5580, %v5776
  %v5973 = vmax.f32 %v5581, %v5777
  %v5974 = vmax.f32 %v5582, %v5778
  %v5975 = vmax.f32 %v5583, %v5779
  %v5976 = vmax.f32 %v5584, %v5780
  %v5977 = vmax.f32 %v5585, %v5781
  %v5978 = vmax.f32 %v5586, %v5782
  %v5979 = vmax.f32 %v5587, %v5783
  %v5980 = vmax.f32 %v5588, %v5784
  %v5981 = vmax.f32 %v5589, %v5785
  %v5982 = vmax.f32 %v5590, %v5786
  %v5983 = vmax.f32 %v5591, %v5787
  %v5984 = vmax.f32 %v5592, %v5788
  %v5985 = vmax.f32 %v5593, %v5789
  %v5986 = vmax.f32 %v5594, %v5790
  %v5987 = vmax.f32 %v5595, %v5791
  %v5988 = vmax.f32 %v5596, %v5792
  %v5989 = vmax.f32 %v5597, %v5793
  %v5990 = vmax.f32 %v5598, %v5794
  %v5991 = vmax.f32 %v5599, %v5795
  %v5992 = vmax.f32 %v5600, %v5796
  %v5993 = vmax.f32 %v5601, %v5797
  %v5994 = vmax.f32 %v5602, %v5798
  %v5995 = vmax.f32 %v5603, %v5799
  %v5996 = vmax.f32 %v5604, %v5800
  %v5997 = vmax.f32 %v5605, %v5801
  %v5998 = vmax.f32 %v5606, %v5802
  %v5999 = vmax.f32 %v5607, %v5803
  %v6000 = vmax.f32 %v5608, %v5804
  %v6001 = vmax.f32 %v5609, %v5805
  %v6002 = vmax.f32 %v5610, %v5806
  %v6003 = vmax.f32 %v5611, %v5807
  %v6004 = vmax.f32 %v5612, %v5808
  %v6005 = vmax.f32 %v5613, %v5809
  %v6006 = vmax.f32 %v5614, %v5810
  %v6007 = vmax.f32 %v5615, %v5811
  %v6008 = vmax.f32 %v5616, %v5812
  %v6009 = vmax.f32 %v5617, %v5813
  %v6010 = vmax.f32 %v5618, %v5814
  %v6011 = vmax.f32 %v5619, %v5815
  %v6012 = vmax.f32 %v5620, %v5816
  %v6013 = vmax.f32 %v5621, %v5817
  %v6014 = vmax.f32 %v5622, %v5818
  %v6015 = vmax.f32 %v5623, %v5819
  %v6016 = vmax.f32 %v5624, %v5820
  %v6017 = vmax.f32 %v5625, %v5821
  %v6018 = vmax.f32 %v5626, %v5822
  %v6019 = vmax.f32 %v5627, %v5823
  %v6020 = vmax.f32 %v5628, %v5824
  %v6021 = vmax.f32 %v5629, %v5825
  %v6022 = vmax.f32 %v5630, %v5826
  %v6023 = vmax.f32 %v5631, %v5827
  %v6024 = vmax.f32 %v5632, %v5828
  %v6025 = vmax.f32 %v5633, %v5829
  %v6026 = vmax.f32 %v5634, %v5830
  %v6027 = vmax.f32 %v5635, %v5831
  %v6028 = vmax.f32 %v5636, %v5832
  %v6029 = vmax.f32 %v5637, %v5833
  %v6030 = vmax.f32 %v5638, %v5834
  %v6031 = vmax.f32 %v5639, %v5835
  %v6032 = vmax.f32 %v5640, %v5836
  %v6033 = vmax.f32 %v5641, %v5837
  %v6034 = vmax.f32 %v5642, %v5838
  %v6035 = vmax.f32 %v5643, %v5839
  %v6036 = vmax.f32 %v5644, %v5840
  %v6037 = vmax.f32 %v5645, %v5841
  %v6038 = vmax.f32 %v5646, %v5842
  %v6039 = vmax.f32 %v5647, %v5843
  %v6040 = vmax.f32 %v5648, %v5844
  %v6041 = vmax.f32 %v5649, %v5845
  %v6042 = vmax.f32 %v5650, %v5846
  %v6043 = vmax.f32 %v5651, %v5847
  %v6044 = vmax.f32 %v5652, %v5848
  %v6045 = vmax.f32 %v5653, %v5849
  %v6046 = vmax.f32 %v5654, %v5850
  %v6047 = vmax.f32 %v5655, %v5851
  %v6048 = vmax.f32 %v5656, %v5852
  %v6049 = vmax.f32 %v5657, %v5853
  %v6050 = vmax.f32 %v5658, %v5854
  %v6051 = vmax.f32 %v5659, %v5855
  %v6052 = vmax.f32 %v5660, %v5856
  %v6053 = vmax.f32 %v5661, %v5857
  %v6054 = vmax.f32 %v5662, %v5858
  %v6055 = vmax.f32 %v5663, %v5859
  %v6056 = vmax.f32 %v5664, %v5860
  %v6057 = vmax.f32 %v5665, %v5861
  %v6058 = vmax.f32 %v5666, %v5862
  %v6059 = vmax.f32 %v5667, %v5863
  %v6060 = vmax.f32 %v5668, %v5864
  %v6061 = vmax.f32 %v5669, %v5865
  %v6062 = vmax.f32 %v5670, %v5866
  %v6063 = vmax.f32 %v5671, %v5867
  %v6064 = vmax.f32 %v5672, %v5868
  %v6065 = vmax.f32 %v5673, %v5869
  %v6066 = vmax.f32 %v5674, %v5870
  %v6067 = vmax.f32 %v5675, %v5871
  %v6068 = vmax.f32 %v5676, %v5872
  %v6069 = vmax.f32 %v5677, %v5873
  %v6070 = vmax.f32 %v5678, %v5874
  %v6071 = vmax.f32 %v5679, %v5875
  %v6072 = vmax.f32 %v5680, %v5876
  %v6073 = vmax.f32 %v5681, %v5877
  %v6074 = vmax.f32 %v5682, %v5878
  %v6075 = vmax.f32 %v5683, %v5879
  %v6076 = vmax.f32 %v5684, %v5880
  %v6077 = vmax.f32 %v5685, %v5881
  %v6078 = vmax.f32 %v5686, %v5882
  %v6079 = vmax.f32 %v5687, %v5883
  %v6080 = vmax.f32 %v5688, %v5884
  %v6081 = vmax.f32 %v5689, %v5885
  %v6082 = vmax.f32 %v5690, %v5886
  %v6083 = vmax.f32 %v5691, %v5887
  %v6084 = vmax.f32 %v5692, %v5888
  %v6085 = vmax.f32 %v5693, %v5889
  %v6086 = vmax.f32 %v5694, %v5890
  %v6087 = vmax.f32 %v5695, %v5891
  %v6088 = vmax.f32 %v5696, %v5892
  %v6089 = vmax.f32 %v5697, %v5893
  %v6090 = vmax.f32 %v5698, %v5894
  %v6091 = vmax.f32 %v5699, %v5895
  %v6092 = vmax.f32 %v5700, %v5896
  %v6093 = vmax.f32 %v5701, %v5897
  %v6094 = vmax.f32 %v5702, %v5898
  %v6095 = vmax.f32 %v5703, %v5899
  %v6096 = vmax.f32 %v5704, %v5900
  %v6097 = vmax.f32 %v5705, %v5901
  %v6098 = vmax.f32 %v5706, %v5902
  %v6099 = vmax.f32 %v5707, %v5903
  %v6100 = vmax.f32 %v5708, %v5904
  %v6101 = vmax.f32 %v5709, %v5905
  %v6102 = vmax.f32 %v5710, %v5906
  %v6103 = vmax.f32 %v5711, %v5907
  %v6104 = vmax.f32 %v5712, %v5908
  %v6105 = vmax.f32 %v5713, %v5909
  %v6106 = vmax.f32 %v5714, %v5910
  %v6107 = vmax.f32 %v5715, %v5911
  %v6108 = vmax.f32 %v5716, %v5912
  %v6109 = vmax.f32 %v5717, %v5913
  %v6110 = vmax.f32 %v5718, %v5914
  %v6111 = vmax.f32 %v5719, %v5915
  %v6112 = vmax.f32 %v5720, %v5916
  %v6113 = vmax.f32 %v5721, %v5917
  %v6114 = vmax.f32 %v5722, %v5918
  %v6115 = vmax.f32 %v5723, %v5919
  %v6116 = vmax.f32 %v5724, %v5920
  %v6117 = vmax.f32 %v5725, %v5921
  %v6118 = vmax.f32 %v5726, %v5922
  %v6119 = vmax.f32 %v5727, %v5923
  %v6120 = vmax.f32 %v5728, %v5924
  %v6121 = vmax.f32 %v5729, %v5925
  %v6122 = vld [vmem:[%s2] sm:$0x1]
  %v6124 = vperm.slane %v6122, 0
  %v6126 = vadd.f32 %v5926, %v6124
  %v6127 = vadd.f32 %v5927, %v6124
  %v6128 = vadd.f32 %v5928, %v6124
  %v6129 = vadd.f32 %v5929, %v6124
  %v6130 = vadd.f32 %v5930, %v6124
  %v6131 = vadd.f32 %v5931, %v6124
  %v6132 = vadd.f32 %v5932, %v6124
  %v6133 = vadd.f32 %v5933, %v6124
  %v6134 = vadd.f32 %v5934, %v6124
  %v6135 = vadd.f32 %v5935, %v6124
  %v6136 = vadd.f32 %v5936, %v6124
  %v6137 = vadd.f32 %v5937, %v6124
  %v6138 = vadd.f32 %v5938, %v6124
  %v6139 = vadd.f32 %v5939, %v6124
  %v6140 = vadd.f32 %v5940, %v6124
  %v6141 = vadd.f32 %v5941, %v6124
  %v6142 = vadd.f32 %v5942, %v6124
  %v6143 = vadd.f32 %v5943, %v6124
  %v6144 = vadd.f32 %v5944, %v6124
  %v6145 = vadd.f32 %v5945, %v6124
  %v6146 = vadd.f32 %v5946, %v6124
  %v6147 = vadd.f32 %v5947, %v6124
  %v6148 = vadd.f32 %v5948, %v6124
  %v6149 = vadd.f32 %v5949, %v6124
  %v6150 = vadd.f32 %v5950, %v6124
  %v6151 = vadd.f32 %v5951, %v6124
  %v6152 = vadd.f32 %v5952, %v6124
  %v6153 = vadd.f32 %v5953, %v6124
  %v6154 = vadd.f32 %v5954, %v6124
  %v6155 = vadd.f32 %v5955, %v6124
  %v6156 = vadd.f32 %v5956, %v6124
  %v6157 = vadd.f32 %v5957, %v6124
  %v6158 = vadd.f32 %v5958, %v6124
  %v6159 = vadd.f32 %v5959, %v6124
  %v6160 = vadd.f32 %v5960, %v6124
  %v6161 = vadd.f32 %v5961, %v6124
  %v6162 = vadd.f32 %v5962, %v6124
  %v6163 = vadd.f32 %v5963, %v6124
  %v6164 = vadd.f32 %v5964, %v6124
  %v6165 = vadd.f32 %v5965, %v6124
  %v6166 = vadd.f32 %v5966, %v6124
  %v6167 = vadd.f32 %v5967, %v6124
  %v6168 = vadd.f32 %v5968, %v6124
  %v6169 = vadd.f32 %v5969, %v6124
  %v6170 = vadd.f32 %v5970, %v6124
  %v6171 = vadd.f32 %v5971, %v6124
  %v6172 = vadd.f32 %v5972, %v6124
  %v6173 = vadd.f32 %v5973, %v6124
  %v6174 = vadd.f32 %v5974, %v6124
  %v6175 = vadd.f32 %v5975, %v6124
  %v6176 = vadd.f32 %v5976, %v6124
  %v6177 = vadd.f32 %v5977, %v6124
  %v6178 = vadd.f32 %v5978, %v6124
  %v6179 = vadd.f32 %v5979, %v6124
  %v6180 = vadd.f32 %v5980, %v6124
  %v6181 = vadd.f32 %v5981, %v6124
  %v6182 = vadd.f32 %v5982, %v6124
  %v6183 = vadd.f32 %v5983, %v6124
  %v6184 = vadd.f32 %v5984, %v6124
  %v6185 = vadd.f32 %v5985, %v6124
  %v6186 = vadd.f32 %v5986, %v6124
  %v6187 = vadd.f32 %v5987, %v6124
  %v6188 = vadd.f32 %v5988, %v6124
  %v6189 = vadd.f32 %v5989, %v6124
  %v6190 = vadd.f32 %v5990, %v6124
  %v6191 = vadd.f32 %v5991, %v6124
  %v6192 = vadd.f32 %v5992, %v6124
  %v6193 = vadd.f32 %v5993, %v6124
  %v6194 = vadd.f32 %v5994, %v6124
  %v6195 = vadd.f32 %v5995, %v6124
  %v6196 = vadd.f32 %v5996, %v6124
  %v6197 = vadd.f32 %v5997, %v6124
  %v6198 = vadd.f32 %v5998, %v6124
  %v6199 = vadd.f32 %v5999, %v6124
  %v6200 = vadd.f32 %v6000, %v6124
  %v6201 = vadd.f32 %v6001, %v6124
  %v6202 = vadd.f32 %v6002, %v6124
  %v6203 = vadd.f32 %v6003, %v6124
  %v6204 = vadd.f32 %v6004, %v6124
  %v6205 = vadd.f32 %v6005, %v6124
  %v6206 = vadd.f32 %v6006, %v6124
  %v6207 = vadd.f32 %v6007, %v6124
  %v6208 = vadd.f32 %v6008, %v6124
  %v6209 = vadd.f32 %v6009, %v6124
  %v6210 = vadd.f32 %v6010, %v6124
  %v6211 = vadd.f32 %v6011, %v6124
  %v6212 = vadd.f32 %v6012, %v6124
  %v6213 = vadd.f32 %v6013, %v6124
  %v6214 = vadd.f32 %v6014, %v6124
  %v6215 = vadd.f32 %v6015, %v6124
  %v6216 = vadd.f32 %v6016, %v6124
  %v6217 = vadd.f32 %v6017, %v6124
  %v6218 = vadd.f32 %v6018, %v6124
  %v6219 = vadd.f32 %v6019, %v6124
  %v6220 = vadd.f32 %v6020, %v6124
  %v6221 = vadd.f32 %v6021, %v6124
  %v6222 = vadd.f32 %v6022, %v6124
  %v6223 = vadd.f32 %v6023, %v6124
  %v6224 = vadd.f32 %v6024, %v6124
  %v6225 = vadd.f32 %v6025, %v6124
  %v6226 = vadd.f32 %v6026, %v6124
  %v6227 = vadd.f32 %v6027, %v6124
  %v6228 = vadd.f32 %v6028, %v6124
  %v6229 = vadd.f32 %v6029, %v6124
  %v6230 = vadd.f32 %v6030, %v6124
  %v6231 = vadd.f32 %v6031, %v6124
  %v6232 = vadd.f32 %v6032, %v6124
  %v6233 = vadd.f32 %v6033, %v6124
  %v6234 = vadd.f32 %v6034, %v6124
  %v6235 = vadd.f32 %v6035, %v6124
  %v6236 = vadd.f32 %v6036, %v6124
  %v6237 = vadd.f32 %v6037, %v6124
  %v6238 = vadd.f32 %v6038, %v6124
  %v6239 = vadd.f32 %v6039, %v6124
  %v6240 = vadd.f32 %v6040, %v6124
  %v6241 = vadd.f32 %v6041, %v6124
  %v6242 = vadd.f32 %v6042, %v6124
  %v6243 = vadd.f32 %v6043, %v6124
  %v6244 = vadd.f32 %v6044, %v6124
  %v6245 = vadd.f32 %v6045, %v6124
  %v6246 = vadd.f32 %v6046, %v6124
  %v6247 = vadd.f32 %v6047, %v6124
  %v6248 = vadd.f32 %v6048, %v6124
  %v6249 = vadd.f32 %v6049, %v6124
  %v6250 = vadd.f32 %v6050, %v6124
  %v6251 = vadd.f32 %v6051, %v6124
  %v6252 = vadd.f32 %v6052, %v6124
  %v6253 = vadd.f32 %v6053, %v6124
  %v6254 = vadd.f32 %v6054, %v6124
  %v6255 = vadd.f32 %v6055, %v6124
  %v6256 = vadd.f32 %v6056, %v6124
  %v6257 = vadd.f32 %v6057, %v6124
  %v6258 = vadd.f32 %v6058, %v6124
  %v6259 = vadd.f32 %v6059, %v6124
  %v6260 = vadd.f32 %v6060, %v6124
  %v6261 = vadd.f32 %v6061, %v6124
  %v6262 = vadd.f32 %v6062, %v6124
  %v6263 = vadd.f32 %v6063, %v6124
  %v6264 = vadd.f32 %v6064, %v6124
  %v6265 = vadd.f32 %v6065, %v6124
  %v6266 = vadd.f32 %v6066, %v6124
  %v6267 = vadd.f32 %v6067, %v6124
  %v6268 = vadd.f32 %v6068, %v6124
  %v6269 = vadd.f32 %v6069, %v6124
  %v6270 = vadd.f32 %v6070, %v6124
  %v6271 = vadd.f32 %v6071, %v6124
  %v6272 = vadd.f32 %v6072, %v6124
  %v6273 = vadd.f32 %v6073, %v6124
  %v6274 = vadd.f32 %v6074, %v6124
  %v6275 = vadd.f32 %v6075, %v6124
  %v6276 = vadd.f32 %v6076, %v6124
  %v6277 = vadd.f32 %v6077, %v6124
  %v6278 = vadd.f32 %v6078, %v6124
  %v6279 = vadd.f32 %v6079, %v6124
  %v6280 = vadd.f32 %v6080, %v6124
  %v6281 = vadd.f32 %v6081, %v6124
  %v6282 = vadd.f32 %v6082, %v6124
  %v6283 = vadd.f32 %v6083, %v6124
  %v6284 = vadd.f32 %v6084, %v6124
  %v6285 = vadd.f32 %v6085, %v6124
  %v6286 = vadd.f32 %v6086, %v6124
  %v6287 = vadd.f32 %v6087, %v6124
  %v6288 = vadd.f32 %v6088, %v6124
  %v6289 = vadd.f32 %v6089, %v6124
  %v6290 = vadd.f32 %v6090, %v6124
  %v6291 = vadd.f32 %v6091, %v6124
  %v6292 = vadd.f32 %v6092, %v6124
  %v6293 = vadd.f32 %v6093, %v6124
  %v6294 = vadd.f32 %v6094, %v6124
  %v6295 = vadd.f32 %v6095, %v6124
  %v6296 = vadd.f32 %v6096, %v6124
  %v6297 = vadd.f32 %v6097, %v6124
  %v6298 = vadd.f32 %v6098, %v6124
  %v6299 = vadd.f32 %v6099, %v6124
  %v6300 = vadd.f32 %v6100, %v6124
  %v6301 = vadd.f32 %v6101, %v6124
  %v6302 = vadd.f32 %v6102, %v6124
  %v6303 = vadd.f32 %v6103, %v6124
  %v6304 = vadd.f32 %v6104, %v6124
  %v6305 = vadd.f32 %v6105, %v6124
  %v6306 = vadd.f32 %v6106, %v6124
  %v6307 = vadd.f32 %v6107, %v6124
  %v6308 = vadd.f32 %v6108, %v6124
  %v6309 = vadd.f32 %v6109, %v6124
  %v6310 = vadd.f32 %v6110, %v6124
  %v6311 = vadd.f32 %v6111, %v6124
  %v6312 = vadd.f32 %v6112, %v6124
  %v6313 = vadd.f32 %v6113, %v6124
  %v6314 = vadd.f32 %v6114, %v6124
  %v6315 = vadd.f32 %v6115, %v6124
  %v6316 = vadd.f32 %v6116, %v6124
  %v6317 = vadd.f32 %v6117, %v6124
  %v6318 = vadd.f32 %v6118, %v6124
  %v6319 = vadd.f32 %v6119, %v6124
  %v6320 = vadd.f32 %v6120, %v6124
  %v6321 = vadd.f32 %v6121, %v6124
  %v6322 = vmax.f32 %v6126, 0.0
  %v6323 = vmax.f32 %v6127, 0.0
  %v6324 = vmax.f32 %v6128, 0.0
  %v6325 = vmax.f32 %v6129, 0.0
  %v6326 = vmax.f32 %v6130, 0.0
  %v6327 = vmax.f32 %v6131, 0.0
  %v6328 = vmax.f32 %v6132, 0.0
  %v6329 = vmax.f32 %v6133, 0.0
  %v6330 = vmax.f32 %v6134, 0.0
  %v6331 = vmax.f32 %v6135, 0.0
  %v6332 = vmax.f32 %v6136, 0.0
  %v6333 = vmax.f32 %v6137, 0.0
  %v6334 = vmax.f32 %v6138, 0.0
  %v6335 = vmax.f32 %v6139, 0.0
  %v6336 = vmax.f32 %v6140, 0.0
  %v6337 = vmax.f32 %v6141, 0.0
  %v6338 = vmax.f32 %v6142, 0.0
  %v6339 = vmax.f32 %v6143, 0.0
  %v6340 = vmax.f32 %v6144, 0.0
  %v6341 = vmax.f32 %v6145, 0.0
  %v6342 = vmax.f32 %v6146, 0.0
  %v6343 = vmax.f32 %v6147, 0.0
  %v6344 = vmax.f32 %v6148, 0.0
  %v6345 = vmax.f32 %v6149, 0.0
  %v6346 = vmax.f32 %v6150, 0.0
  %v6347 = vmax.f32 %v6151, 0.0
  %v6348 = vmax.f32 %v6152, 0.0
  %v6349 = vmax.f32 %v6153, 0.0
  %v6350 = vmax.f32 %v6154, 0.0
  %v6351 = vmax.f32 %v6155, 0.0
  %v6352 = vmax.f32 %v6156, 0.0
  %v6353 = vmax.f32 %v6157, 0.0
  %v6354 = vmax.f32 %v6158, 0.0
  %v6355 = vmax.f32 %v6159, 0.0
  %v6356 = vmax.f32 %v6160, 0.0
  %v6357 = vmax.f32 %v6161, 0.0
  %v6358 = vmax.f32 %v6162, 0.0
  %v6359 = vmax.f32 %v6163, 0.0
  %v6360 = vmax.f32 %v6164, 0.0
  %v6361 = vmax.f32 %v6165, 0.0
  %v6362 = vmax.f32 %v6166, 0.0
  %v6363 = vmax.f32 %v6167, 0.0
  %v6364 = vmax.f32 %v6168, 0.0
  %v6365 = vmax.f32 %v6169, 0.0
  %v6366 = vmax.f32 %v6170, 0.0
  %v6367 = vmax.f32 %v6171, 0.0
  %v6368 = vmax.f32 %v6172, 0.0
  %v6369 = vmax.f32 %v6173, 0.0
  %v6370 = vmax.f32 %v6174, 0.0
  %v6371 = vmax.f32 %v6175, 0.0
  %v6372 = vmax.f32 %v6176, 0.0
  %v6373 = vmax.f32 %v6177, 0.0
  %v6374 = vmax.f32 %v6178, 0.0
  %v6375 = vmax.f32 %v6179, 0.0
  %v6376 = vmax.f32 %v6180, 0.0
  %v6377 = vmax.f32 %v6181, 0.0
  %v6378 = vmax.f32 %v6182, 0.0
  %v6379 = vmax.f32 %v6183, 0.0
  %v6380 = vmax.f32 %v6184, 0.0
  %v6381 = vmax.f32 %v6185, 0.0
  %v6382 = vmax.f32 %v6186, 0.0
  %v6383 = vmax.f32 %v6187, 0.0
  %v6384 = vmax.f32 %v6188, 0.0
  %v6385 = vmax.f32 %v6189, 0.0
  %v6386 = vmax.f32 %v6190, 0.0
  %v6387 = vmax.f32 %v6191, 0.0
  %v6388 = vmax.f32 %v6192, 0.0
  %v6389 = vmax.f32 %v6193, 0.0
  %v6390 = vmax.f32 %v6194, 0.0
  %v6391 = vmax.f32 %v6195, 0.0
  %v6392 = vmax.f32 %v6196, 0.0
  %v6393 = vmax.f32 %v6197, 0.0
  %v6394 = vmax.f32 %v6198, 0.0
  %v6395 = vmax.f32 %v6199, 0.0
  %v6396 = vmax.f32 %v6200, 0.0
  %v6397 = vmax.f32 %v6201, 0.0
  %v6398 = vmax.f32 %v6202, 0.0
  %v6399 = vmax.f32 %v6203, 0.0
  %v6400 = vmax.f32 %v6204, 0.0
  %v6401 = vmax.f32 %v6205, 0.0
  %v6402 = vmax.f32 %v6206, 0.0
  %v6403 = vmax.f32 %v6207, 0.0
  %v6404 = vmax.f32 %v6208, 0.0
  %v6405 = vmax.f32 %v6209, 0.0
  %v6406 = vmax.f32 %v6210, 0.0
  %v6407 = vmax.f32 %v6211, 0.0
  %v6408 = vmax.f32 %v6212, 0.0
  %v6409 = vmax.f32 %v6213, 0.0
  %v6410 = vmax.f32 %v6214, 0.0
  %v6411 = vmax.f32 %v6215, 0.0
  %v6412 = vmax.f32 %v6216, 0.0
  %v6413 = vmax.f32 %v6217, 0.0
  %v6414 = vmax.f32 %v6218, 0.0
  %v6415 = vmax.f32 %v6219, 0.0
  %v6416 = vmax.f32 %v6220, 0.0
  %v6417 = vmax.f32 %v6221, 0.0
  %v6418 = vmax.f32 %v6222, 0.0
  %v6419 = vmax.f32 %v6223, 0.0
  %v6420 = vmax.f32 %v6224, 0.0
  %v6421 = vmax.f32 %v6225, 0.0
  %v6422 = vmax.f32 %v6226, 0.0
  %v6423 = vmax.f32 %v6227, 0.0
  %v6424 = vmax.f32 %v6228, 0.0
  %v6425 = vmax.f32 %v6229, 0.0
  %v6426 = vmax.f32 %v6230, 0.0
  %v6427 = vmax.f32 %v6231, 0.0
  %v6428 = vmax.f32 %v6232, 0.0
  %v6429 = vmax.f32 %v6233, 0.0
  %v6430 = vmax.f32 %v6234, 0.0
  %v6431 = vmax.f32 %v6235, 0.0
  %v6432 = vmax.f32 %v6236, 0.0
  %v6433 = vmax.f32 %v6237, 0.0
  %v6434 = vmax.f32 %v6238, 0.0
  %v6435 = vmax.f32 %v6239, 0.0
  %v6436 = vmax.f32 %v6240, 0.0
  %v6437 = vmax.f32 %v6241, 0.0
  %v6438 = vmax.f32 %v6242, 0.0
  %v6439 = vmax.f32 %v6243, 0.0
  %v6440 = vmax.f32 %v6244, 0.0
  %v6441 = vmax.f32 %v6245, 0.0
  %v6442 = vmax.f32 %v6246, 0.0
  %v6443 = vmax.f32 %v6247, 0.0
  %v6444 = vmax.f32 %v6248, 0.0
  %v6445 = vmax.f32 %v6249, 0.0
  %v6446 = vmax.f32 %v6250, 0.0
  %v6447 = vmax.f32 %v6251, 0.0
  %v6448 = vmax.f32 %v6252, 0.0
  %v6449 = vmax.f32 %v6253, 0.0
  %v6450 = vmax.f32 %v6254, 0.0
  %v6451 = vmax.f32 %v6255, 0.0
  %v6452 = vmax.f32 %v6256, 0.0
  %v6453 = vmax.f32 %v6257, 0.0
  %v6454 = vmax.f32 %v6258, 0.0
  %v6455 = vmax.f32 %v6259, 0.0
  %v6456 = vmax.f32 %v6260, 0.0
  %v6457 = vmax.f32 %v6261, 0.0
  %v6458 = vmax.f32 %v6262, 0.0
  %v6459 = vmax.f32 %v6263, 0.0
  %v6460 = vmax.f32 %v6264, 0.0
  %v6461 = vmax.f32 %v6265, 0.0
  %v6462 = vmax.f32 %v6266, 0.0
  %v6463 = vmax.f32 %v6267, 0.0
  %v6464 = vmax.f32 %v6268, 0.0
  %v6465 = vmax.f32 %v6269, 0.0
  %v6466 = vmax.f32 %v6270, 0.0
  %v6467 = vmax.f32 %v6271, 0.0
  %v6468 = vmax.f32 %v6272, 0.0
  %v6469 = vmax.f32 %v6273, 0.0
  %v6470 = vmax.f32 %v6274, 0.0
  %v6471 = vmax.f32 %v6275, 0.0
  %v6472 = vmax.f32 %v6276, 0.0
  %v6473 = vmax.f32 %v6277, 0.0
  %v6474 = vmax.f32 %v6278, 0.0
  %v6475 = vmax.f32 %v6279, 0.0
  %v6476 = vmax.f32 %v6280, 0.0
  %v6477 = vmax.f32 %v6281, 0.0
  %v6478 = vmax.f32 %v6282, 0.0
  %v6479 = vmax.f32 %v6283, 0.0
  %v6480 = vmax.f32 %v6284, 0.0
  %v6481 = vmax.f32 %v6285, 0.0
  %v6482 = vmax.f32 %v6286, 0.0
  %v6483 = vmax.f32 %v6287, 0.0
  %v6484 = vmax.f32 %v6288, 0.0
  %v6485 = vmax.f32 %v6289, 0.0
  %v6486 = vmax.f32 %v6290, 0.0
  %v6487 = vmax.f32 %v6291, 0.0
  %v6488 = vmax.f32 %v6292, 0.0
  %v6489 = vmax.f32 %v6293, 0.0
  %v6490 = vmax.f32 %v6294, 0.0
  %v6491 = vmax.f32 %v6295, 0.0
  %v6492 = vmax.f32 %v6296, 0.0
  %v6493 = vmax.f32 %v6297, 0.0
  %v6494 = vmax.f32 %v6298, 0.0
  %v6495 = vmax.f32 %v6299, 0.0
  %v6496 = vmax.f32 %v6300, 0.0
  %v6497 = vmax.f32 %v6301, 0.0
  %v6498 = vmax.f32 %v6302, 0.0
  %v6499 = vmax.f32 %v6303, 0.0
  %v6500 = vmax.f32 %v6304, 0.0
  %v6501 = vmax.f32 %v6305, 0.0
  %v6502 = vmax.f32 %v6306, 0.0
  %v6503 = vmax.f32 %v6307, 0.0
  %v6504 = vmax.f32 %v6308, 0.0
  %v6505 = vmax.f32 %v6309, 0.0
  %v6506 = vmax.f32 %v6310, 0.0
  %v6507 = vmax.f32 %v6311, 0.0
  %v6508 = vmax.f32 %v6312, 0.0
  %v6509 = vmax.f32 %v6313, 0.0
  %v6510 = vmax.f32 %v6314, 0.0
  %v6511 = vmax.f32 %v6315, 0.0
  %v6512 = vmax.f32 %v6316, 0.0
  %v6513 = vmax.f32 %v6317, 0.0
  %v6514 = vmax.f32 %v6318, 0.0
  %v6515 = vmax.f32 %v6319, 0.0
  %v6516 = vmax.f32 %v6320, 0.0
  %v6517 = vmax.f32 %v6321, 0.0
  %vm6518 = vcmask 48128
  %6519 = vst.msk [vmem:[%s3] sm:$0xff] %vm6518, %v6322
  %6520 = vst.msk [vmem:[%s3 + $0x8] sm:$0xff] %vm6518, %v6323
  %6521 = vst.msk [vmem:[%s3 + $0x10] sm:$0xff] %vm6518, %v6324
  %6522 = vst.msk [vmem:[%s3 + $0x18] sm:$0xff] %vm6518, %v6325
  %6523 = vst.msk [vmem:[%s3 + $0x20] sm:$0xff] %vm6518, %v6326
  %6524 = vst.msk [vmem:[%s3 + $0x28] sm:$0xff] %vm6518, %v6327
  %6525 = vst.msk [vmem:[%s3 + $0x30] sm:$0xff] %vm6518, %v6328
  %6526 = vst.msk [vmem:[%s3 + $0x38] sm:$0xff] %vm6518, %v6329
  %6527 = vst.msk [vmem:[%s3 + $0x40] sm:$0xff] %vm6518, %v6330
  %6528 = vst.msk [vmem:[%s3 + $0x48] sm:$0xff] %vm6518, %v6331
  %6529 = vst.msk [vmem:[%s3 + $0x50] sm:$0xff] %vm6518, %v6332
  %6530 = vst.msk [vmem:[%s3 + $0x58] sm:$0xff] %vm6518, %v6333
  %6531 = vst.msk [vmem:[%s3 + $0x60] sm:$0xff] %vm6518, %v6334
  %6532 = vst.msk [vmem:[%s3 + $0x68] sm:$0xff] %vm6518, %v6335
  %6533 = vst.msk [vmem:[%s3 + $0x70] sm:$0xff] %vm6518, %v6336
  %6534 = vst.msk [vmem:[%s3 + $0x78] sm:$0xff] %vm6518, %v6337
  %6535 = vst.msk [vmem:[%s3 + $0x80] sm:$0xff] %vm6518, %v6338
  %6536 = vst.msk [vmem:[%s3 + $0x88] sm:$0xff] %vm6518, %v6339
  %6537 = vst.msk [vmem:[%s3 + $0x90] sm:$0xff] %vm6518, %v6340
  %6538 = vst.msk [vmem:[%s3 + $0x98] sm:$0xff] %vm6518, %v6341
  %6539 = vst.msk [vmem:[%s3 + $0xa0] sm:$0xff] %vm6518, %v6342
  %6540 = vst.msk [vmem:[%s3 + $0xa8] sm:$0xff] %vm6518, %v6343
  %6541 = vst.msk [vmem:[%s3 + $0xb0] sm:$0xff] %vm6518, %v6344
  %6542 = vst.msk [vmem:[%s3 + $0xb8] sm:$0xff] %vm6518, %v6345
  %6543 = vst.msk [vmem:[%s3 + $0xc0] sm:$0xff] %vm6518, %v6346
  %6544 = vst.msk [vmem:[%s3 + $0xc8] sm:$0xff] %vm6518, %v6347
  %6545 = vst.msk [vmem:[%s3 + $0xd0] sm:$0xff] %vm6518, %v6348
  %6546 = vst.msk [vmem:[%s3 + $0xd8] sm:$0xff] %vm6518, %v6349
  %6547 = vst.msk [vmem:[%s3 + $0xe0] sm:$0xff] %vm6518, %v6350
  %6548 = vst.msk [vmem:[%s3 + $0xe8] sm:$0xff] %vm6518, %v6351
  %6549 = vst.msk [vmem:[%s3 + $0xf0] sm:$0xff] %vm6518, %v6352
  %6550 = vst.msk [vmem:[%s3 + $0xf8] sm:$0xff] %vm6518, %v6353
  %6551 = vst.msk [vmem:[%s3 + $0x100] sm:$0xff] %vm6518, %v6354
  %6552 = vst.msk [vmem:[%s3 + $0x108] sm:$0xff] %vm6518, %v6355
  %6553 = vst.msk [vmem:[%s3 + $0x110] sm:$0xff] %vm6518, %v6356
  %6554 = vst.msk [vmem:[%s3 + $0x118] sm:$0xff] %vm6518, %v6357
  %6555 = vst.msk [vmem:[%s3 + $0x120] sm:$0xff] %vm6518, %v6358
  %6556 = vst.msk [vmem:[%s3 + $0x128] sm:$0xff] %vm6518, %v6359
  %6557 = vst.msk [vmem:[%s3 + $0x130] sm:$0xff] %vm6518, %v6360
  %6558 = vst.msk [vmem:[%s3 + $0x138] sm:$0xff] %vm6518, %v6361
  %6559 = vst.msk [vmem:[%s3 + $0x140] sm:$0xff] %vm6518, %v6362
  %6560 = vst.msk [vmem:[%s3 + $0x148] sm:$0xff] %vm6518, %v6363
  %6561 = vst.msk [vmem:[%s3 + $0x150] sm:$0xff] %vm6518, %v6364
  %6562 = vst.msk [vmem:[%s3 + $0x158] sm:$0xff] %vm6518, %v6365
  %6563 = vst.msk [vmem:[%s3 + $0x160] sm:$0xff] %vm6518, %v6366
  %6564 = vst.msk [vmem:[%s3 + $0x168] sm:$0xff] %vm6518, %v6367
  %6565 = vst.msk [vmem:[%s3 + $0x170] sm:$0xff] %vm6518, %v6368
  %6566 = vst.msk [vmem:[%s3 + $0x178] sm:$0xff] %vm6518, %v6369
  %6567 = vst.msk [vmem:[%s3 + $0x180] sm:$0xff] %vm6518, %v6370
  %6568 = vst.msk [vmem:[%s3 + $0x188] sm:$0xff] %vm6518, %v6371
  %6569 = vst.msk [vmem:[%s3 + $0x190] sm:$0xff] %vm6518, %v6372
  %6570 = vst.msk [vmem:[%s3 + $0x198] sm:$0xff] %vm6518, %v6373
  %6571 = vst.msk [vmem:[%s3 + $0x1a0] sm:$0xff] %vm6518, %v6374
  %6572 = vst.msk [vmem:[%s3 + $0x1a8] sm:$0xff] %vm6518, %v6375
  %6573 = vst.msk [vmem:[%s3 + $0x1b0] sm:$0xff] %vm6518, %v6376
  %6574 = vst.msk [vmem:[%s3 + $0x1b8] sm:$0xff] %vm6518, %v6377
  %6575 = vst.msk [vmem:[%s3 + $0x1c0] sm:$0xff] %vm6518, %v6378
  %6576 = vst.msk [vmem:[%s3 + $0x1c8] sm:$0xff] %vm6518, %v6379
  %6577 = vst.msk [vmem:[%s3 + $0x1d0] sm:$0xff] %vm6518, %v6380
  %6578 = vst.msk [vmem:[%s3 + $0x1d8] sm:$0xff] %vm6518, %v6381
  %6579 = vst.msk [vmem:[%s3 + $0x1e0] sm:$0xff] %vm6518, %v6382
  %6580 = vst.msk [vmem:[%s3 + $0x1e8] sm:$0xff] %vm6518, %v6383
  %6581 = vst.msk [vmem:[%s3 + $0x1f0] sm:$0xff] %vm6518, %v6384
  %6582 = vst.msk [vmem:[%s3 + $0x1f8] sm:$0xff] %vm6518, %v6385
  %6583 = vst.msk [vmem:[%s3 + $0x200] sm:$0xff] %vm6518, %v6386
  %6584 = vst.msk [vmem:[%s3 + $0x208] sm:$0xff] %vm6518, %v6387
  %6585 = vst.msk [vmem:[%s3 + $0x210] sm:$0xff] %vm6518, %v6388
  %6586 = vst.msk [vmem:[%s3 + $0x218] sm:$0xff] %vm6518, %v6389
  %6587 = vst.msk [vmem:[%s3 + $0x220] sm:$0xff] %vm6518, %v6390
  %6588 = vst.msk [vmem:[%s3 + $0x228] sm:$0xff] %vm6518, %v6391
  %6589 = vst.msk [vmem:[%s3 + $0x230] sm:$0xff] %vm6518, %v6392
  %6590 = vst.msk [vmem:[%s3 + $0x238] sm:$0xff] %vm6518, %v6393
  %6591 = vst.msk [vmem:[%s3 + $0x240] sm:$0xff] %vm6518, %v6394
  %6592 = vst.msk [vmem:[%s3 + $0x248] sm:$0xff] %vm6518, %v6395
  %6593 = vst.msk [vmem:[%s3 + $0x250] sm:$0xff] %vm6518, %v6396
  %6594 = vst.msk [vmem:[%s3 + $0x258] sm:$0xff] %vm6518, %v6397
  %6595 = vst.msk [vmem:[%s3 + $0x260] sm:$0xff] %vm6518, %v6398
  %6596 = vst.msk [vmem:[%s3 + $0x268] sm:$0xff] %vm6518, %v6399
  %6597 = vst.msk [vmem:[%s3 + $0x270] sm:$0xff] %vm6518, %v6400
  %6598 = vst.msk [vmem:[%s3 + $0x278] sm:$0xff] %vm6518, %v6401
  %6599 = vst.msk [vmem:[%s3 + $0x280] sm:$0xff] %vm6518, %v6402
  %6600 = vst.msk [vmem:[%s3 + $0x288] sm:$0xff] %vm6518, %v6403
  %6601 = vst.msk [vmem:[%s3 + $0x290] sm:$0xff] %vm6518, %v6404
  %6602 = vst.msk [vmem:[%s3 + $0x298] sm:$0xff] %vm6518, %v6405
  %6603 = vst.msk [vmem:[%s3 + $0x2a0] sm:$0xff] %vm6518, %v6406
  %6604 = vst.msk [vmem:[%s3 + $0x2a8] sm:$0xff] %vm6518, %v6407
  %6605 = vst.msk [vmem:[%s3 + $0x2b0] sm:$0xff] %vm6518, %v6408
  %6606 = vst.msk [vmem:[%s3 + $0x2b8] sm:$0xff] %vm6518, %v6409
  %6607 = vst.msk [vmem:[%s3 + $0x2c0] sm:$0xff] %vm6518, %v6410
  %6608 = vst.msk [vmem:[%s3 + $0x2c8] sm:$0xff] %vm6518, %v6411
  %6609 = vst.msk [vmem:[%s3 + $0x2d0] sm:$0xff] %vm6518, %v6412
  %6610 = vst.msk [vmem:[%s3 + $0x2d8] sm:$0xff] %vm6518, %v6413
  %6611 = vst.msk [vmem:[%s3 + $0x2e0] sm:$0xff] %vm6518, %v6414
  %6612 = vst.msk [vmem:[%s3 + $0x2e8] sm:$0xff] %vm6518, %v6415
  %6613 = vst.msk [vmem:[%s3 + $0x2f0] sm:$0xff] %vm6518, %v6416
  %6614 = vst.msk [vmem:[%s3 + $0x2f8] sm:$0xff] %vm6518, %v6417
  %6615 = vst.msk [vmem:[%s3 + $0x300] sm:$0xff] %vm6518, %v6418
  %6616 = vst.msk [vmem:[%s3 + $0x308] sm:$0xff] %vm6518, %v6419
  %6617 = vst.msk [vmem:[%s3 + $0x310] sm:$0xff] %vm6518, %v6420
  %6618 = vst.msk [vmem:[%s3 + $0x318] sm:$0xff] %vm6518, %v6421
  %6619 = vst.msk [vmem:[%s3 + $0x320] sm:$0xff] %vm6518, %v6422
  %6620 = vst.msk [vmem:[%s3 + $0x328] sm:$0xff] %vm6518, %v6423
  %6621 = vst.msk [vmem:[%s3 + $0x330] sm:$0xff] %vm6518, %v6424
  %6622 = vst.msk [vmem:[%s3 + $0x338] sm:$0xff] %vm6518, %v6425
  %6623 = vst.msk [vmem:[%s3 + $0x340] sm:$0xff] %vm6518, %v6426
  %6624 = vst.msk [vmem:[%s3 + $0x348] sm:$0xff] %vm6518, %v6427
  %6625 = vst.msk [vmem:[%s3 + $0x350] sm:$0xff] %vm6518, %v6428
  %6626 = vst.msk [vmem:[%s3 + $0x358] sm:$0xff] %vm6518, %v6429
  %6627 = vst.msk [vmem:[%s3 + $0x360] sm:$0xff] %vm6518, %v6430
  %6628 = vst.msk [vmem:[%s3 + $0x368] sm:$0xff] %vm6518, %v6431
  %6629 = vst.msk [vmem:[%s3 + $0x370] sm:$0xff] %vm6518, %v6432
  %6630 = vst.msk [vmem:[%s3 + $0x378] sm:$0xff] %vm6518, %v6433
  %6631 = vst.msk [vmem:[%s3 + $0x380] sm:$0xff] %vm6518, %v6434
  %6632 = vst.msk [vmem:[%s3 + $0x388] sm:$0xff] %vm6518, %v6435
  %6633 = vst.msk [vmem:[%s3 + $0x390] sm:$0xff] %vm6518, %v6436
  %6634 = vst.msk [vmem:[%s3 + $0x398] sm:$0xff] %vm6518, %v6437
  %6635 = vst.msk [vmem:[%s3 + $0x3a0] sm:$0xff] %vm6518, %v6438
  %6636 = vst.msk [vmem:[%s3 + $0x3a8] sm:$0xff] %vm6518, %v6439
  %6637 = vst.msk [vmem:[%s3 + $0x3b0] sm:$0xff] %vm6518, %v6440
  %6638 = vst.msk [vmem:[%s3 + $0x3b8] sm:$0xff] %vm6518, %v6441
  %6639 = vst.msk [vmem:[%s3 + $0x3c0] sm:$0xff] %vm6518, %v6442
  %6640 = vst.msk [vmem:[%s3 + $0x3c8] sm:$0xff] %vm6518, %v6443
  %6641 = vst.msk [vmem:[%s3 + $0x3d0] sm:$0xff] %vm6518, %v6444
  %6642 = vst.msk [vmem:[%s3 + $0x3d8] sm:$0xff] %vm6518, %v6445
  %6643 = vst.msk [vmem:[%s3 + $0x3e0] sm:$0xff] %vm6518, %v6446
  %6644 = vst.msk [vmem:[%s3 + $0x3e8] sm:$0xff] %vm6518, %v6447
  %6645 = vst.msk [vmem:[%s3 + $0x3f0] sm:$0xff] %vm6518, %v6448
  %6646 = vst.msk [vmem:[%s3 + $0x3f8] sm:$0xff] %vm6518, %v6449
  %6647 = vst.msk [vmem:[%s3 + $0x400] sm:$0xff] %vm6518, %v6450
  %6648 = vst.msk [vmem:[%s3 + $0x408] sm:$0xff] %vm6518, %v6451
  %6649 = vst.msk [vmem:[%s3 + $0x410] sm:$0xff] %vm6518, %v6452
  %6650 = vst.msk [vmem:[%s3 + $0x418] sm:$0xff] %vm6518, %v6453
  %6651 = vst.msk [vmem:[%s3 + $0x420] sm:$0xff] %vm6518, %v6454
  %6652 = vst.msk [vmem:[%s3 + $0x428] sm:$0xff] %vm6518, %v6455
  %6653 = vst.msk [vmem:[%s3 + $0x430] sm:$0xff] %vm6518, %v6456
  %6654 = vst.msk [vmem:[%s3 + $0x438] sm:$0xff] %vm6518, %v6457
  %6655 = vst.msk [vmem:[%s3 + $0x440] sm:$0xff] %vm6518, %v6458
  %6656 = vst.msk [vmem:[%s3 + $0x448] sm:$0xff] %vm6518, %v6459
  %6657 = vst.msk [vmem:[%s3 + $0x450] sm:$0xff] %vm6518, %v6460
  %6658 = vst.msk [vmem:[%s3 + $0x458] sm:$0xff] %vm6518, %v6461
  %6659 = vst.msk [vmem:[%s3 + $0x460] sm:$0xff] %vm6518, %v6462
  %6660 = vst.msk [vmem:[%s3 + $0x468] sm:$0xff] %vm6518, %v6463
  %6661 = vst.msk [vmem:[%s3 + $0x470] sm:$0xff] %vm6518, %v6464
  %6662 = vst.msk [vmem:[%s3 + $0x478] sm:$0xff] %vm6518, %v6465
  %6663 = vst.msk [vmem:[%s3 + $0x480] sm:$0xff] %vm6518, %v6466
  %6664 = vst.msk [vmem:[%s3 + $0x488] sm:$0xff] %vm6518, %v6467
  %6665 = vst.msk [vmem:[%s3 + $0x490] sm:$0xff] %vm6518, %v6468
  %6666 = vst.msk [vmem:[%s3 + $0x498] sm:$0xff] %vm6518, %v6469
  %6667 = vst.msk [vmem:[%s3 + $0x4a0] sm:$0xff] %vm6518, %v6470
  %6668 = vst.msk [vmem:[%s3 + $0x4a8] sm:$0xff] %vm6518, %v6471
  %6669 = vst.msk [vmem:[%s3 + $0x4b0] sm:$0xff] %vm6518, %v6472
  %6670 = vst.msk [vmem:[%s3 + $0x4b8] sm:$0xff] %vm6518, %v6473
  %6671 = vst.msk [vmem:[%s3 + $0x4c0] sm:$0xff] %vm6518, %v6474
  %6672 = vst.msk [vmem:[%s3 + $0x4c8] sm:$0xff] %vm6518, %v6475
  %6673 = vst.msk [vmem:[%s3 + $0x4d0] sm:$0xff] %vm6518, %v6476
  %6674 = vst.msk [vmem:[%s3 + $0x4d8] sm:$0xff] %vm6518, %v6477
  %6675 = vst.msk [vmem:[%s3 + $0x4e0] sm:$0xff] %vm6518, %v6478
  %6676 = vst.msk [vmem:[%s3 + $0x4e8] sm:$0xff] %vm6518, %v6479
  %6677 = vst.msk [vmem:[%s3 + $0x4f0] sm:$0xff] %vm6518, %v6480
  %6678 = vst.msk [vmem:[%s3 + $0x4f8] sm:$0xff] %vm6518, %v6481
  %6679 = vst.msk [vmem:[%s3 + $0x500] sm:$0xff] %vm6518, %v6482
  %6680 = vst.msk [vmem:[%s3 + $0x508] sm:$0xff] %vm6518, %v6483
  %6681 = vst.msk [vmem:[%s3 + $0x510] sm:$0xff] %vm6518, %v6484
  %6682 = vst.msk [vmem:[%s3 + $0x518] sm:$0xff] %vm6518, %v6485
  %6683 = vst.msk [vmem:[%s3 + $0x520] sm:$0xff] %vm6518, %v6486
  %6684 = vst.msk [vmem:[%s3 + $0x528] sm:$0xff] %vm6518, %v6487
  %6685 = vst.msk [vmem:[%s3 + $0x530] sm:$0xff] %vm6518, %v6488
  %6686 = vst.msk [vmem:[%s3 + $0x538] sm:$0xff] %vm6518, %v6489
  %6687 = vst.msk [vmem:[%s3 + $0x540] sm:$0xff] %vm6518, %v6490
  %6688 = vst.msk [vmem:[%s3 + $0x548] sm:$0xff] %vm6518, %v6491
  %6689 = vst.msk [vmem:[%s3 + $0x550] sm:$0xff] %vm6518, %v6492
  %6690 = vst.msk [vmem:[%s3 + $0x558] sm:$0xff] %vm6518, %v6493
  %6691 = vst.msk [vmem:[%s3 + $0x560] sm:$0xff] %vm6518, %v6494
  %6692 = vst.msk [vmem:[%s3 + $0x568] sm:$0xff] %vm6518, %v6495
  %6693 = vst.msk [vmem:[%s3 + $0x570] sm:$0xff] %vm6518, %v6496
  %6694 = vst.msk [vmem:[%s3 + $0x578] sm:$0xff] %vm6518, %v6497
  %6695 = vst.msk [vmem:[%s3 + $0x580] sm:$0xff] %vm6518, %v6498
  %6696 = vst.msk [vmem:[%s3 + $0x588] sm:$0xff] %vm6518, %v6499
  %6697 = vst.msk [vmem:[%s3 + $0x590] sm:$0xff] %vm6518, %v6500
  %6698 = vst.msk [vmem:[%s3 + $0x598] sm:$0xff] %vm6518, %v6501
  %6699 = vst.msk [vmem:[%s3 + $0x5a0] sm:$0xff] %vm6518, %v6502
  %6700 = vst.msk [vmem:[%s3 + $0x5a8] sm:$0xff] %vm6518, %v6503
  %6701 = vst.msk [vmem:[%s3 + $0x5b0] sm:$0xff] %vm6518, %v6504
  %6702 = vst.msk [vmem:[%s3 + $0x5b8] sm:$0xff] %vm6518, %v6505
  %6703 = vst.msk [vmem:[%s3 + $0x5c0] sm:$0xff] %vm6518, %v6506
  %6704 = vst.msk [vmem:[%s3 + $0x5c8] sm:$0xff] %vm6518, %v6507
  %6705 = vst.msk [vmem:[%s3 + $0x5d0] sm:$0xff] %vm6518, %v6508
  %6706 = vst.msk [vmem:[%s3 + $0x5d8] sm:$0xff] %vm6518, %v6509
  %6707 = vst.msk [vmem:[%s3 + $0x5e0] sm:$0xff] %vm6518, %v6510
  %6708 = vst.msk [vmem:[%s3 + $0x5e8] sm:$0xff] %vm6518, %v6511
  %6709 = vst.msk [vmem:[%s3 + $0x5f0] sm:$0xff] %vm6518, %v6512
  %6710 = vst.msk [vmem:[%s3 + $0x5f8] sm:$0xff] %vm6518, %v6513
  %6711 = vst.msk [vmem:[%s3 + $0x600] sm:$0xff] %vm6518, %v6514
  %6712 = vst.msk [vmem:[%s3 + $0x608] sm:$0xff] %vm6518, %v6515
  %6713 = vst.msk [vmem:[%s3 + $0x610] sm:$0xff] %vm6518, %v6516
  %6714 = vst.msk [vmem:[%s3 + $0x618] sm:$0xff] %vm6518, %v6517
  // Predicated region
  $region14: #{lenet_forward.2} parent=0 // pred_check
    _
  $region15: #{lenet_forward.2} parent=0 // pred_check_branch
    %6716 = sbr.rel (0) target = $region17
  $region16: #{lenet_forward.2} parent=0 // pred_region
    _
  $region17: #{lenet_forward.2} parent=0 // pred_fallthru
    _
  // Predicated region
  $region18: #{lenet_forward.2} parent=0 // pred_check
    _
  $region19: #{lenet_forward.2} parent=0 // pred_check_branch
    %6718 = sbr.rel (0) target = $region21
  $region20: #{lenet_forward.2} parent=0 // pred_region
    _
  $region21: #{lenet_forward.2} parent=0 // pred_fallthru
    _

// kernel: lenet_forward.3
$region0: #{lenet_forward.3}
  #allocation0 [shape = 'u32[]', space=smem, size = 0x4, offset = 0x4, fixed_abs, tag = 'smem constant byte address 0x4 - core index']
  #allocation1 [shape = 'u32[72,128]{1,0:T(1,128)}', space=vmem, size = 0x9000, scoped, tag = 'internal scratch']
  %s0 = inlined_call_operand.vmem [shape: f32[4,25,8,150], index: 0, kind: input, shape index: {}]
  %s1 = inlined_call_operand.vmem [shape: f32[150,16], index: 1, kind: input, shape index: {}]
  %s2 = inlined_call_operand.vmem [shape: f32[1,16], index: 2, kind: input, shape index: {}]
  %s3 = inlined_call_operand.vmem [shape: f32[25,16,128], index: 3, kind: input, shape index: {}]
  %s4 = inlined_call_operand.vmem [shape: f32[1,128], index: 4, kind: input, shape index: {}]
  %s5 = inlined_call_operand.vmem [shape: f32[128,128], index: 5, kind: input, shape index: {}]
  %s6 = inlined_call_operand.vmem [shape: f32[1,128], index: 6, kind: input, shape index: {}]
  %s7 = inlined_call_operand.vmem [shape: f32[128,128], index: 7, kind: input, shape index: {}]
  %s8 = inlined_call_operand.vmem [shape: f32[1,128], index: 8, kind: input, shape index: {}]
  %s9 = inlined_call_operand.vmem [shape: f32[8,128], index: 9, kind: output, shape index: {}]
  %s10 = sld [smem:[#allocation0]]
  $region46: #{lenet_forward.3} parent=0
    _
  %s12 = ssub.s32 1, %s10
  %s13 = scalar_select 0, %s12, %s10
  // Predicated region
  $region2: #{lenet_forward.3} parent=0 // pred_check
    _
  $region3: #{lenet_forward.3} parent=0 // pred_check_branch
    %15 = sbr.rel (0) target = $region5
  $region4: #{lenet_forward.3} parent=0 // pred_region
    _
  $region5: #{lenet_forward.3} parent=0 // pred_fallthru
    _
  // Predicated region
  $region6: #{lenet_forward.3} parent=0 // pred_check
    _
  $region7: #{lenet_forward.3} parent=0 // pred_check_branch
    %17 = sbr.rel (0) target = $region9
  $region8: #{lenet_forward.3} parent=0 // pred_region
    _
  $region9: #{lenet_forward.3} parent=0 // pred_fallthru
    _
  // Predicated region
  $region10: #{lenet_forward.3} parent=0 // pred_check
    _
  $region11: #{lenet_forward.3} parent=0 // pred_check_branch
    %19 = sbr.rel (0) target = $region13
  $region12: #{lenet_forward.3} parent=0 // pred_region
    _
  $region13: #{lenet_forward.3} parent=0 // pred_fallthru
    _
  // Predicated region
  $region14: #{lenet_forward.3} parent=0 // pred_check
    _
  $region15: #{lenet_forward.3} parent=0 // pred_check_branch
    %21 = sbr.rel (0) target = $region17
  $region16: #{lenet_forward.3} parent=0 // pred_region
    _
  $region17: #{lenet_forward.3} parent=0 // pred_fallthru
    _
  // Predicated region
  $region18: #{lenet_forward.3} parent=0 // pred_check
    _
  $region19: #{lenet_forward.3} parent=0 // pred_check_branch
    %23 = sbr.rel (0) target = $region21
  $region20: #{lenet_forward.3} parent=0 // pred_region
    _
  $region21: #{lenet_forward.3} parent=0 // pred_fallthru
    _
  // Predicated region
  $region22: #{lenet_forward.3} parent=0 // pred_check
    _
  $region23: #{lenet_forward.3} parent=0 // pred_check_branch
    %25 = sbr.rel (0) target = $region25
  $region24: #{lenet_forward.3} parent=0 // pred_region
    _
  $region25: #{lenet_forward.3} parent=0 // pred_fallthru
    _
  // Predicated region
  $region26: #{lenet_forward.3} parent=0 // pred_check
    _
  $region27: #{lenet_forward.3} parent=0 // pred_check_branch
    %27 = sbr.rel (0) target = $region29
  $region28: #{lenet_forward.3} parent=0 // pred_region
    _
  $region29: #{lenet_forward.3} parent=0 // pred_fallthru
    _
  // Predicated region
  $region30: #{lenet_forward.3} parent=0 // pred_check
    _
  $region31: #{lenet_forward.3} parent=0 // pred_check_branch
    %29 = sbr.rel (0) target = $region33
  $region32: #{lenet_forward.3} parent=0 // pred_region
    _
  $region33: #{lenet_forward.3} parent=0 // pred_fallthru
    _
  // Predicated region
  $region34: #{lenet_forward.3} parent=0 // pred_check
    _
  $region35: #{lenet_forward.3} parent=0 // pred_check_branch
    %31 = sbr.rel (0) target = $region37
  $region36: #{lenet_forward.3} parent=0 // pred_region
    _
  $region37: #{lenet_forward.3} parent=0 // pred_fallthru
    _
  %v32 = vld [vmem:[%s0] sm:$0xff]
  %v33 = vld [vmem:[%s0 + $0x8] sm:$0xff]
  %v34 = vld [vmem:[%s0 + $0x10] sm:$0xff]
  %v35 = vld [vmem:[%s0 + $0x18] sm:$0xff]
  %v36 = vld [vmem:[%s0 + $0x20] sm:$0xff]
  %v37 = vld [vmem:[%s0 + $0x28] sm:$0xff]
  %v38 = vld [vmem:[%s0 + $0x30] sm:$0xff]
  %v39 = vld [vmem:[%s0 + $0x38] sm:$0xff]
  %v40 = vld [vmem:[%s0 + $0x40] sm:$0xff]
  %v41 = vld [vmem:[%s0 + $0x48] sm:$0xff]
  %v42 = vld [vmem:[%s0 + $0x50] sm:$0xff]
  %v43 = vld [vmem:[%s0 + $0x58] sm:$0xff]
  %v44 = vld [vmem:[%s0 + $0x60] sm:$0xff]
  %v45 = vld [vmem:[%s0 + $0x68] sm:$0xff]
  %v46 = vld [vmem:[%s0 + $0x70] sm:$0xff]
  %v47 = vld [vmem:[%s0 + $0x78] sm:$0xff]
  %v48 = vld [vmem:[%s0 + $0x80] sm:$0xff]
  %v49 = vld [vmem:[%s0 + $0x88] sm:$0xff]
  %v50 = vld [vmem:[%s0 + $0x90] sm:$0xff]
  %v51 = vld [vmem:[%s0 + $0x98] sm:$0xff]
  %v52 = vld [vmem:[%s0 + $0xa0] sm:$0xff]
  %v53 = vld [vmem:[%s0 + $0xa8] sm:$0xff]
  %v54 = vld [vmem:[%s0 + $0xb0] sm:$0xff]
  %v55 = vld [vmem:[%s0 + $0xb8] sm:$0xff]
  %v56 = vld [vmem:[%s0 + $0xc0] sm:$0xff]
  %v57 = vld [vmem:[%s0 + $0xc8] sm:$0xff]
  %v58 = vld [vmem:[%s0 + $0xd0] sm:$0xff]
  %v59 = vld [vmem:[%s0 + $0xd8] sm:$0xff]
  %v60 = vld [vmem:[%s0 + $0xe0] sm:$0xff]
  %v61 = vld [vmem:[%s0 + $0xe8] sm:$0xff]
  %v62 = vld [vmem:[%s0 + $0xf0] sm:$0xff]
  %v63 = vld [vmem:[%s0 + $0xf8] sm:$0xff]
  %v64 = vld [vmem:[%s0 + $0x100] sm:$0xff]
  %v65 = vld [vmem:[%s0 + $0x108] sm:$0xff]
  %v66 = vld [vmem:[%s0 + $0x110] sm:$0xff]
  %v67 = vld [vmem:[%s0 + $0x118] sm:$0xff]
  %v68 = vld [vmem:[%s0 + $0x120] sm:$0xff]
  %v69 = vld [vmem:[%s0 + $0x128] sm:$0xff]
  %v70 = vld [vmem:[%s0 + $0x130] sm:$0xff]
  %v71 = vld [vmem:[%s0 + $0x138] sm:$0xff]
  %v72 = vld [vmem:[%s0 + $0x140] sm:$0xff]
  %v73 = vld [vmem:[%s0 + $0x148] sm:$0xff]
  %v74 = vld [vmem:[%s0 + $0x150] sm:$0xff]
  %v75 = vld [vmem:[%s0 + $0x158] sm:$0xff]
  %v76 = vld [vmem:[%s0 + $0x160] sm:$0xff]
  %v77 = vld [vmem:[%s0 + $0x168] sm:$0xff]
  %v78 = vld [vmem:[%s0 + $0x170] sm:$0xff]
  %v79 = vld [vmem:[%s0 + $0x178] sm:$0xff]
  %v80 = vld [vmem:[%s0 + $0x180] sm:$0xff]
  %v81 = vld [vmem:[%s0 + $0x188] sm:$0xff]
  %v82 = vld [vmem:[%s0 + $0x190] sm:$0xff]
  %v83 = vld [vmem:[%s0 + $0x198] sm:$0xff]
  %v84 = vld [vmem:[%s0 + $0x1a0] sm:$0xff]
  %v85 = vld [vmem:[%s0 + $0x1a8] sm:$0xff]
  %v86 = vld [vmem:[%s0 + $0x1b0] sm:$0xff]
  %v87 = vld [vmem:[%s0 + $0x1b8] sm:$0xff]
  %v88 = vld [vmem:[%s0 + $0x1c0] sm:$0xff]
  %v89 = vld [vmem:[%s0 + $0x1c8] sm:$0xff]
  %v90 = vld [vmem:[%s0 + $0x1d0] sm:$0xff]
  %v91 = vld [vmem:[%s0 + $0x1d8] sm:$0xff]
  %v92 = vld [vmem:[%s0 + $0x1e0] sm:$0xff]
  %v93 = vld [vmem:[%s0 + $0x1e8] sm:$0xff]
  %v94 = vld [vmem:[%s0 + $0x1f0] sm:$0xff]
  %v95 = vld [vmem:[%s0 + $0x1f8] sm:$0xff]
  %v96 = vld [vmem:[%s0 + $0x200] sm:$0xff]
  %v97 = vld [vmem:[%s0 + $0x208] sm:$0xff]
  %v98 = vld [vmem:[%s0 + $0x210] sm:$0xff]
  %v99 = vld [vmem:[%s0 + $0x218] sm:$0xff]
  %v100 = vld [vmem:[%s0 + $0x220] sm:$0xff]
  %v101 = vld [vmem:[%s0 + $0x228] sm:$0xff]
  %v102 = vld [vmem:[%s0 + $0x230] sm:$0xff]
  %v103 = vld [vmem:[%s0 + $0x238] sm:$0xff]
  %v104 = vld [vmem:[%s0 + $0x240] sm:$0xff]
  %v105 = vld [vmem:[%s0 + $0x248] sm:$0xff]
  %v106 = vld [vmem:[%s0 + $0x250] sm:$0xff]
  %v107 = vld [vmem:[%s0 + $0x258] sm:$0xff]
  %v108 = vld [vmem:[%s0 + $0x260] sm:$0xff]
  %v109 = vld [vmem:[%s0 + $0x268] sm:$0xff]
  %v110 = vld [vmem:[%s0 + $0x270] sm:$0xff]
  %v111 = vld [vmem:[%s0 + $0x278] sm:$0xff]
  %v112 = vld [vmem:[%s0 + $0x280] sm:$0xff]
  %v113 = vld [vmem:[%s0 + $0x288] sm:$0xff]
  %v114 = vld [vmem:[%s0 + $0x290] sm:$0xff]
  %v115 = vld [vmem:[%s0 + $0x298] sm:$0xff]
  %v116 = vld [vmem:[%s0 + $0x2a0] sm:$0xff]
  %v117 = vld [vmem:[%s0 + $0x2a8] sm:$0xff]
  %v118 = vld [vmem:[%s0 + $0x2b0] sm:$0xff]
  %v119 = vld [vmem:[%s0 + $0x2b8] sm:$0xff]
  %v120 = vld [vmem:[%s0 + $0x2c0] sm:$0xff]
  %v121 = vld [vmem:[%s0 + $0x2c8] sm:$0xff]
  %v122 = vld [vmem:[%s0 + $0x2d0] sm:$0xff]
  %v123 = vld [vmem:[%s0 + $0x2d8] sm:$0xff]
  %v124 = vld [vmem:[%s0 + $0x2e0] sm:$0xff]
  %v125 = vld [vmem:[%s0 + $0x2e8] sm:$0xff]
  %v126 = vld [vmem:[%s0 + $0x2f0] sm:$0xff]
  %v127 = vld [vmem:[%s0 + $0x2f8] sm:$0xff]
  %v128 = vld [vmem:[%s0 + $0x300] sm:$0xff]
  %v129 = vld [vmem:[%s0 + $0x308] sm:$0xff]
  %v130 = vld [vmem:[%s0 + $0x310] sm:$0xff]
  %v131 = vld [vmem:[%s0 + $0x318] sm:$0xff]
  %v132 = vld [vmem:[%s0 + $0x320] sm:$0xff]
  %v133 = vld [vmem:[%s0 + $0x328] sm:$0xff]
  %v134 = vld [vmem:[%s0 + $0x330] sm:$0xff]
  %v135 = vld [vmem:[%s0 + $0x338] sm:$0xff]
  %v136 = vld [vmem:[%s0 + $0x340] sm:$0xff]
  %v137 = vld [vmem:[%s0 + $0x348] sm:$0xff]
  %v138 = vld [vmem:[%s0 + $0x350] sm:$0xff]
  %v139 = vld [vmem:[%s0 + $0x358] sm:$0xff]
  %v140 = vld [vmem:[%s0 + $0x360] sm:$0xff]
  %v141 = vld [vmem:[%s0 + $0x368] sm:$0xff]
  %v142 = vld [vmem:[%s0 + $0x370] sm:$0xff]
  %v143 = vld [vmem:[%s0 + $0x378] sm:$0xff]
  %v144 = vld [vmem:[%s0 + $0x380] sm:$0xff]
  %v145 = vld [vmem:[%s0 + $0x388] sm:$0xff]
  %v146 = vld [vmem:[%s0 + $0x390] sm:$0xff]
  %v147 = vld [vmem:[%s0 + $0x398] sm:$0xff]
  %v148 = vld [vmem:[%s0 + $0x3a0] sm:$0xff]
  %v149 = vld [vmem:[%s0 + $0x3a8] sm:$0xff]
  %v150 = vld [vmem:[%s0 + $0x3b0] sm:$0xff]
  %v151 = vld [vmem:[%s0 + $0x3b8] sm:$0xff]
  %v152 = vld [vmem:[%s0 + $0x3c0] sm:$0xff]
  %v153 = vld [vmem:[%s0 + $0x3c8] sm:$0xff]
  %v154 = vld [vmem:[%s0 + $0x3d0] sm:$0xff]
  %v155 = vld [vmem:[%s0 + $0x3d8] sm:$0xff]
  %v156 = vld [vmem:[%s0 + $0x3e0] sm:$0xff]
  %v157 = vld [vmem:[%s0 + $0x3e8] sm:$0xff]
  %v158 = vld [vmem:[%s0 + $0x3f0] sm:$0xff]
  %v159 = vld [vmem:[%s0 + $0x3f8] sm:$0xff]
  %v160 = vld [vmem:[%s0 + $0x400] sm:$0xff]
  %v161 = vld [vmem:[%s0 + $0x408] sm:$0xff]
  %v162 = vld [vmem:[%s0 + $0x410] sm:$0xff]
  %v163 = vld [vmem:[%s0 + $0x418] sm:$0xff]
  %v164 = vld [vmem:[%s0 + $0x420] sm:$0xff]
  %v165 = vld [vmem:[%s0 + $0x428] sm:$0xff]
  %v166 = vld [vmem:[%s0 + $0x430] sm:$0xff]
  %v167 = vld [vmem:[%s0 + $0x438] sm:$0xff]
  %v168 = vld [vmem:[%s0 + $0x440] sm:$0xff]
  %v169 = vld [vmem:[%s0 + $0x448] sm:$0xff]
  %v170 = vld [vmem:[%s0 + $0x450] sm:$0xff]
  %v171 = vld [vmem:[%s0 + $0x458] sm:$0xff]
  %v172 = vld [vmem:[%s0 + $0x460] sm:$0xff]
  %v173 = vld [vmem:[%s0 + $0x468] sm:$0xff]
  %v174 = vld [vmem:[%s0 + $0x470] sm:$0xff]
  %v175 = vld [vmem:[%s0 + $0x478] sm:$0xff]
  %v176 = vld [vmem:[%s0 + $0x480] sm:$0xff]
  %v177 = vld [vmem:[%s0 + $0x488] sm:$0xff]
  %v178 = vld [vmem:[%s0 + $0x490] sm:$0xff]
  %v179 = vld [vmem:[%s0 + $0x498] sm:$0xff]
  %v180 = vld [vmem:[%s0 + $0x4a0] sm:$0xff]
  %v181 = vld [vmem:[%s0 + $0x4a8] sm:$0xff]
  %v182 = vld [vmem:[%s0 + $0x4b0] sm:$0xff]
  %v183 = vld [vmem:[%s0 + $0x4b8] sm:$0xff]
  %v184 = vld [vmem:[%s0 + $0x4c0] sm:$0xff]
  %v185 = vld [vmem:[%s0 + $0x4c8] sm:$0xff]
  %v186 = vld [vmem:[%s0 + $0x4d0] sm:$0xff]
  %v187 = vld [vmem:[%s0 + $0x4d8] sm:$0xff]
  %v188 = vld [vmem:[%s0 + $0x4e0] sm:$0xff]
  %v189 = vld [vmem:[%s0 + $0x4e8] sm:$0xff]
  %v190 = vld [vmem:[%s0 + $0x4f0] sm:$0xff]
  %v191 = vld [vmem:[%s0 + $0x4f8] sm:$0xff]
  %v192 = vld [vmem:[%s0 + $0x500] sm:$0xff]
  %v193 = vld [vmem:[%s0 + $0x508] sm:$0xff]
  %v194 = vld [vmem:[%s0 + $0x510] sm:$0xff]
  %v195 = vld [vmem:[%s0 + $0x518] sm:$0xff]
  %v196 = vld [vmem:[%s0 + $0x520] sm:$0xff]
  %v197 = vld [vmem:[%s0 + $0x528] sm:$0xff]
  %v198 = vld [vmem:[%s0 + $0x530] sm:$0xff]
  %v199 = vld [vmem:[%s0 + $0x538] sm:$0xff]
  %v200 = vld [vmem:[%s0 + $0x540] sm:$0xff]
  %v201 = vld [vmem:[%s0 + $0x548] sm:$0xff]
  %v202 = vld [vmem:[%s0 + $0x550] sm:$0xff]
  %v203 = vld [vmem:[%s0 + $0x558] sm:$0xff]
  %v204 = vld [vmem:[%s0 + $0x560] sm:$0xff]
  %v205 = vld [vmem:[%s0 + $0x568] sm:$0xff]
  %v206 = vld [vmem:[%s0 + $0x570] sm:$0xff]
  %v207 = vld [vmem:[%s0 + $0x578] sm:$0xff]
  %v208 = vld [vmem:[%s0 + $0x580] sm:$0xff]
  %v209 = vld [vmem:[%s0 + $0x588] sm:$0xff]
  %v210 = vld [vmem:[%s0 + $0x590] sm:$0xff]
  %v211 = vld [vmem:[%s0 + $0x598] sm:$0xff]
  %v212 = vld [vmem:[%s0 + $0x5a0] sm:$0xff]
  %v213 = vld [vmem:[%s0 + $0x5a8] sm:$0xff]
  %v214 = vld [vmem:[%s0 + $0x5b0] sm:$0xff]
  %v215 = vld [vmem:[%s0 + $0x5b8] sm:$0xff]
  %v216 = vld [vmem:[%s0 + $0x5c0] sm:$0xff]
  %v217 = vld [vmem:[%s0 + $0x5c8] sm:$0xff]
  %v218 = vld [vmem:[%s0 + $0x5d0] sm:$0xff]
  %v219 = vld [vmem:[%s0 + $0x5d8] sm:$0xff]
  %v220 = vld [vmem:[%s0 + $0x5e0] sm:$0xff]
  %v221 = vld [vmem:[%s0 + $0x5e8] sm:$0xff]
  %v222 = vld [vmem:[%s0 + $0x5f0] sm:$0xff]
  %v223 = vld [vmem:[%s0 + $0x5f8] sm:$0xff]
  %v224 = vld [vmem:[%s0 + $0x600] sm:$0xff]
  %v225 = vld [vmem:[%s0 + $0x608] sm:$0xff]
  %v226 = vld [vmem:[%s0 + $0x610] sm:$0xff]
  %v227 = vld [vmem:[%s0 + $0x618] sm:$0xff]
  %v228 = vld [vmem:[%s0 + $0x620] sm:$0xff]
  %v229 = vld [vmem:[%s0 + $0x628] sm:$0xff]
  %v230 = vld [vmem:[%s0 + $0x630] sm:$0xff]
  %v231 = vld [vmem:[%s0 + $0x638] sm:$0xff]
  %v232 = vld [vmem:[%s1] sm:$0xff]
  %v233 = vld [vmem:[%s1 + $0x8] sm:$0xff]
  %v234 = vld [vmem:[%s1 + $0x10] sm:$0xff]
  %v235 = vld [vmem:[%s1 + $0x18] sm:$0xff]
  %v236 = vld [vmem:[%s1 + $0x20] sm:$0xff]
  %v237 = vld [vmem:[%s1 + $0x28] sm:$0xff]
  %v238 = vld [vmem:[%s1 + $0x30] sm:$0xff]
  %v239 = vld [vmem:[%s1 + $0x38] sm:$0xff]
  %v240 = vld [vmem:[%s1 + $0x40] sm:$0xff]
  %v241 = vld [vmem:[%s1 + $0x48] sm:$0xff]
  %v242 = vld [vmem:[%s1 + $0x50] sm:$0xff]
  %v243 = vld [vmem:[%s1 + $0x58] sm:$0xff]
  %v244 = vld [vmem:[%s1 + $0x60] sm:$0xff]
  %v245 = vld [vmem:[%s1 + $0x68] sm:$0xff]
  %v246 = vld [vmem:[%s1 + $0x70] sm:$0xff]
  %v247 = vld [vmem:[%s1 + $0x78] sm:$0xff]
  %v248 = vld [vmem:[%s1 + $0x80] sm:$0xff]
  %v249 = vld [vmem:[%s1 + $0x88] sm:$0xff]
  %v250 = vld [vmem:[%s1 + $0x90] sm:$0x3f]
  %vm251 = vcmask 179200
  %v253 = vsel %vm251, %v33, 0
  %v256 = vsel %vm251, %v35, 0
  %v259 = vsel %vm251, %v37, 0
  %v262 = vsel %vm251, %v39, 0
  %v265 = vsel %vm251, %v41, 0
  %v268 = vsel %vm251, %v43, 0
  %v271 = vsel %vm251, %v45, 0
  %v274 = vsel %vm251, %v47, 0
  %v277 = vsel %vm251, %v49, 0
  %v280 = vsel %vm251, %v51, 0
  %v283 = vsel %vm251, %v53, 0
  %v286 = vsel %vm251, %v55, 0
  %v289 = vsel %vm251, %v57, 0
  %v292 = vsel %vm251, %v59, 0
  %v295 = vsel %vm251, %v61, 0
  %v298 = vsel %vm251, %v63, 0
  %v301 = vsel %vm251, %v65, 0
  %v304 = vsel %vm251, %v67, 0
  %v307 = vsel %vm251, %v69, 0
  %v310 = vsel %vm251, %v71, 0
  %v313 = vsel %vm251, %v73, 0
  %v316 = vsel %vm251, %v75, 0
  %v319 = vsel %vm251, %v77, 0
  %v322 = vsel %vm251, %v79, 0
  %v325 = vsel %vm251, %v81, 0
  %v328 = vsel %vm251, %v83, 0
  %v331 = vsel %vm251, %v85, 0
  %v334 = vsel %vm251, %v87, 0
  %v337 = vsel %vm251, %v89, 0
  %v340 = vsel %vm251, %v91, 0
  %v343 = vsel %vm251, %v93, 0
  %v346 = vsel %vm251, %v95, 0
  %v349 = vsel %vm251, %v97, 0
  %v352 = vsel %vm251, %v99, 0
  %v355 = vsel %vm251, %v101, 0
  %v358 = vsel %vm251, %v103, 0
  %v361 = vsel %vm251, %v105, 0
  %v364 = vsel %vm251, %v107, 0
  %v367 = vsel %vm251, %v109, 0
  %v370 = vsel %vm251, %v111, 0
  %v373 = vsel %vm251, %v113, 0
  %v376 = vsel %vm251, %v115, 0
  %v379 = vsel %vm251, %v117, 0
  %v382 = vsel %vm251, %v119, 0
  %v385 = vsel %vm251, %v121, 0
  %v388 = vsel %vm251, %v123, 0
  %v391 = vsel %vm251, %v125, 0
  %v394 = vsel %vm251, %v127, 0
  %v397 = vsel %vm251, %v129, 0
  %v400 = vsel %vm251, %v131, 0
  %v403 = vsel %vm251, %v133, 0
  %v406 = vsel %vm251, %v135, 0
  %v409 = vsel %vm251, %v137, 0
  %v412 = vsel %vm251, %v139, 0
  %v415 = vsel %vm251, %v141, 0
  %v418 = vsel %vm251, %v143, 0
  %v421 = vsel %vm251, %v145, 0
  %v424 = vsel %vm251, %v147, 0
  %v427 = vsel %vm251, %v149, 0
  %v430 = vsel %vm251, %v151, 0
  %v433 = vsel %vm251, %v153, 0
  %v436 = vsel %vm251, %v155, 0
  %v439 = vsel %vm251, %v157, 0
  %v442 = vsel %vm251, %v159, 0
  %v445 = vsel %vm251, %v161, 0
  %v448 = vsel %vm251, %v163, 0
  %v451 = vsel %vm251, %v165, 0
  %v454 = vsel %vm251, %v167, 0
  %v457 = vsel %vm251, %v169, 0
  %v460 = vsel %vm251, %v171, 0
  %v463 = vsel %vm251, %v173, 0
  %v466 = vsel %vm251, %v175, 0
  %v469 = vsel %vm251, %v177, 0
  %v472 = vsel %vm251, %v179, 0
  %v475 = vsel %vm251, %v181, 0
  %v478 = vsel %vm251, %v183, 0
  %v481 = vsel %vm251, %v185, 0
  %v484 = vsel %vm251, %v187, 0
  %v487 = vsel %vm251, %v189, 0
  %v490 = vsel %vm251, %v191, 0
  %v493 = vsel %vm251, %v193, 0
  %v496 = vsel %vm251, %v195, 0
  %v499 = vsel %vm251, %v197, 0
  %v502 = vsel %vm251, %v199, 0
  %v505 = vsel %vm251, %v201, 0
  %v508 = vsel %vm251, %v203, 0
  %v511 = vsel %vm251, %v205, 0
  %v514 = vsel %vm251, %v207, 0
  %v517 = vsel %vm251, %v209, 0
  %v520 = vsel %vm251, %v211, 0
  %v523 = vsel %vm251, %v213, 0
  %v526 = vsel %vm251, %v215, 0
  %v529 = vsel %vm251, %v217, 0
  %v532 = vsel %vm251, %v219, 0
  %v535 = vsel %vm251, %v221, 0
  %v538 = vsel %vm251, %v223, 0
  %v541 = vsel %vm251, %v225, 0
  %v544 = vsel %vm251, %v227, 0
  %v547 = vsel %vm251, %v229, 0
  %v550 = vsel %vm251, %v231, 0
  %vm552 = vcmask 1045504
  %v554 = vsel %vm552, %v250, 0
  %556 = vmatpush.msra.mxu0 %v247
  %557 = vmatpush.msra.mxu0 %v246
  %558 = vmatpush.msra.mxu0 %v245
  %559 = vmatpush.msra.mxu0 %v244
  %560 = vmatpush.msra.mxu0 %v243
  %561 = vmatpush.msra.mxu0 %v242
  %562 = vmatpush.msra.mxu0 %v241
  %563 = vmatpush.msra.mxu0 %v240
  %564 = vmatpush.msra.mxu0 %v239
  %565 = vmatpush.msra.mxu0 %v238
  %566 = vmatpush.msra.mxu0 %v237
  %567 = vmatpush.msra.mxu0 %v236
  %568 = vmatpush.msra.mxu0 %v235
  %569 = vmatpush.msra.mxu0 %v234
  %570 = vmatpush.msra.mxu0 %v233
  %571 = vmatpush.msra.mxu0 %v232
  %572 = vmatmul.f32.gmra.mxu0 %v32
  %v573 = vpop.f32.mrf.mxu0
  %v574 = vadd.f32 0.0, %v573
  %575 = vmatmul.f32.gmra.mxu0 %v34
  %v576 = vpop.f32.mrf.mxu0
  %v577 = vadd.f32 0.0, %v576
  %578 = vmatmul.f32.gmra.mxu0 %v36
  %v579 = vpop.f32.mrf.mxu0
  %v580 = vadd.f32 0.0, %v579
  %581 = vmatmul.f32.gmra.mxu0 %v38
  %v582 = vpop.f32.mrf.mxu0
  %v583 = vadd.f32 0.0, %v582
  %584 = vmatmul.f32.gmra.mxu0 %v40
  %v585 = vpop.f32.mrf.mxu0
  %v586 = vadd.f32 0.0, %v585
  %587 = vmatmul.f32.gmra.mxu0 %v42
  %v588 = vpop.f32.mrf.mxu0
  %v589 = vadd.f32 0.0, %v588
  %590 = vmatmul.f32.gmra.mxu0 %v44
  %v591 = vpop.f32.mrf.mxu0
  %v592 = vadd.f32 0.0, %v591
  %593 = vmatmul.f32.gmra.mxu0 %v46
  %v594 = vpop.f32.mrf.mxu0
  %v595 = vadd.f32 0.0, %v594
  %596 = vmatmul.f32.gmra.mxu0 %v48
  %v597 = vpop.f32.mrf.mxu0
  %v598 = vadd.f32 0.0, %v597
  %599 = vmatmul.f32.gmra.mxu0 %v50
  %v600 = vpop.f32.mrf.mxu0
  %v601 = vadd.f32 0.0, %v600
  %602 = vmatmul.f32.gmra.mxu0 %v52
  %v603 = vpop.f32.mrf.mxu0
  %v604 = vadd.f32 0.0, %v603
  %605 = vmatmul.f32.gmra.mxu0 %v54
  %v606 = vpop.f32.mrf.mxu0
  %v607 = vadd.f32 0.0, %v606
  %608 = vmatmul.f32.gmra.mxu0 %v56
  %v609 = vpop.f32.mrf.mxu0
  %v610 = vadd.f32 0.0, %v609
  %611 = vmatmul.f32.gmra.mxu0 %v58
  %v612 = vpop.f32.mrf.mxu0
  %v613 = vadd.f32 0.0, %v612
  %614 = vmatmul.f32.gmra.mxu0 %v60
  %v615 = vpop.f32.mrf.mxu0
  %v616 = vadd.f32 0.0, %v615
  %617 = vmatmul.f32.gmra.mxu0 %v62
  %v618 = vpop.f32.mrf.mxu0
  %v619 = vadd.f32 0.0, %v618
  %620 = vmatmul.f32.gmra.mxu0 %v64
  %v621 = vpop.f32.mrf.mxu0
  %v622 = vadd.f32 0.0, %v621
  %623 = vmatmul.f32.gmra.mxu0 %v66
  %v624 = vpop.f32.mrf.mxu0
  %v625 = vadd.f32 0.0, %v624
  %626 = vmatmul.f32.gmra.mxu0 %v68
  %v627 = vpop.f32.mrf.mxu0
  %v628 = vadd.f32 0.0, %v627
  %629 = vmatmul.f32.gmra.mxu0 %v70
  %v630 = vpop.f32.mrf.mxu0
  %v631 = vadd.f32 0.0, %v630
  %632 = vmatmul.f32.gmra.mxu0 %v72
  %v633 = vpop.f32.mrf.mxu0
  %v634 = vadd.f32 0.0, %v633
  %635 = vmatmul.f32.gmra.mxu0 %v74
  %v636 = vpop.f32.mrf.mxu0
  %v637 = vadd.f32 0.0, %v636
  %638 = vmatmul.f32.gmra.mxu0 %v76
  %v639 = vpop.f32.mrf.mxu0
  %v640 = vadd.f32 0.0, %v639
  %641 = vmatmul.f32.gmra.mxu0 %v78
  %v642 = vpop.f32.mrf.mxu0
  %v643 = vadd.f32 0.0, %v642
  %644 = vmatmul.f32.gmra.mxu0 %v80
  %v645 = vpop.f32.mrf.mxu0
  %v646 = vadd.f32 0.0, %v645
  %647 = vmatmul.f32.gmra.mxu0 %v82
  %v648 = vpop.f32.mrf.mxu0
  %v649 = vadd.f32 0.0, %v648
  %650 = vmatmul.f32.gmra.mxu0 %v84
  %v651 = vpop.f32.mrf.mxu0
  %v652 = vadd.f32 0.0, %v651
  %653 = vmatmul.f32.gmra.mxu0 %v86
  %v654 = vpop.f32.mrf.mxu0
  %v655 = vadd.f32 0.0, %v654
  %656 = vmatmul.f32.gmra.mxu0 %v88
  %v657 = vpop.f32.mrf.mxu0
  %v658 = vadd.f32 0.0, %v657
  %659 = vmatmul.f32.gmra.mxu0 %v90
  %v660 = vpop.f32.mrf.mxu0
  %v661 = vadd.f32 0.0, %v660
  %662 = vmatmul.f32.gmra.mxu0 %v92
  %v663 = vpop.f32.mrf.mxu0
  %v664 = vadd.f32 0.0, %v663
  %665 = vmatmul.f32.gmra.mxu0 %v94
  %v666 = vpop.f32.mrf.mxu0
  %v667 = vadd.f32 0.0, %v666
  %668 = vmatmul.f32.gmra.mxu0 %v96
  %v669 = vpop.f32.mrf.mxu0
  %v670 = vadd.f32 0.0, %v669
  %671 = vmatmul.f32.gmra.mxu0 %v98
  %v672 = vpop.f32.mrf.mxu0
  %v673 = vadd.f32 0.0, %v672
  %674 = vmatmul.f32.gmra.mxu0 %v100
  %v675 = vpop.f32.mrf.mxu0
  %v676 = vadd.f32 0.0, %v675
  %677 = vmatmul.f32.gmra.mxu0 %v102
  %v678 = vpop.f32.mrf.mxu0
  %v679 = vadd.f32 0.0, %v678
  %680 = vmatmul.f32.gmra.mxu0 %v104
  %v681 = vpop.f32.mrf.mxu0
  %v682 = vadd.f32 0.0, %v681
  %683 = vmatmul.f32.gmra.mxu0 %v106
  %v684 = vpop.f32.mrf.mxu0
  %v685 = vadd.f32 0.0, %v684
  %686 = vmatmul.f32.gmra.mxu0 %v108
  %v687 = vpop.f32.mrf.mxu0
  %v688 = vadd.f32 0.0, %v687
  %689 = vmatmul.f32.gmra.mxu0 %v110
  %v690 = vpop.f32.mrf.mxu0
  %v691 = vadd.f32 0.0, %v690
  %692 = vmatmul.f32.gmra.mxu0 %v112
  %v693 = vpop.f32.mrf.mxu0
  %v694 = vadd.f32 0.0, %v693
  %695 = vmatmul.f32.gmra.mxu0 %v114
  %v696 = vpop.f32.mrf.mxu0
  %v697 = vadd.f32 0.0, %v696
  %698 = vmatmul.f32.gmra.mxu0 %v116
  %v699 = vpop.f32.mrf.mxu0
  %v700 = vadd.f32 0.0, %v699
  %701 = vmatmul.f32.gmra.mxu0 %v118
  %v702 = vpop.f32.mrf.mxu0
  %v703 = vadd.f32 0.0, %v702
  %704 = vmatmul.f32.gmra.mxu0 %v120
  %v705 = vpop.f32.mrf.mxu0
  %v706 = vadd.f32 0.0, %v705
  %707 = vmatmul.f32.gmra.mxu0 %v122
  %v708 = vpop.f32.mrf.mxu0
  %v709 = vadd.f32 0.0, %v708
  %710 = vmatmul.f32.gmra.mxu0 %v124
  %v711 = vpop.f32.mrf.mxu0
  %v712 = vadd.f32 0.0, %v711
  %713 = vmatmul.f32.gmra.mxu0 %v126
  %v714 = vpop.f32.mrf.mxu0
  %v715 = vadd.f32 0.0, %v714
  %716 = vmatmul.f32.gmra.mxu0 %v128
  %v717 = vpop.f32.mrf.mxu0
  %v718 = vadd.f32 0.0, %v717
  %719 = vmatmul.f32.gmra.mxu0 %v130
  %v720 = vpop.f32.mrf.mxu0
  %v721 = vadd.f32 0.0, %v720
  %722 = vmatmul.f32.gmra.mxu0 %v132
  %v723 = vpop.f32.mrf.mxu0
  %v724 = vadd.f32 0.0, %v723
  %725 = vmatmul.f32.gmra.mxu0 %v134
  %v726 = vpop.f32.mrf.mxu0
  %v727 = vadd.f32 0.0, %v726
  %728 = vmatmul.f32.gmra.mxu0 %v136
  %v729 = vpop.f32.mrf.mxu0
  %v730 = vadd.f32 0.0, %v729
  %731 = vmatmul.f32.gmra.mxu0 %v138
  %v732 = vpop.f32.mrf.mxu0
  %v733 = vadd.f32 0.0, %v732
  %734 = vmatmul.f32.gmra.mxu0 %v140
  %v735 = vpop.f32.mrf.mxu0
  %v736 = vadd.f32 0.0, %v735
  %737 = vmatmul.f32.gmra.mxu0 %v142
  %v738 = vpop.f32.mrf.mxu0
  %v739 = vadd.f32 0.0, %v738
  %740 = vmatmul.f32.gmra.mxu0 %v144
  %v741 = vpop.f32.mrf.mxu0
  %v742 = vadd.f32 0.0, %v741
  %743 = vmatmul.f32.gmra.mxu0 %v146
  %v744 = vpop.f32.mrf.mxu0
  %v745 = vadd.f32 0.0, %v744
  %746 = vmatmul.f32.gmra.mxu0 %v148
  %v747 = vpop.f32.mrf.mxu0
  %v748 = vadd.f32 0.0, %v747
  %749 = vmatmul.f32.gmra.mxu0 %v150
  %v750 = vpop.f32.mrf.mxu0
  %v751 = vadd.f32 0.0, %v750
  %752 = vmatmul.f32.gmra.mxu0 %v152
  %v753 = vpop.f32.mrf.mxu0
  %v754 = vadd.f32 0.0, %v753
  %755 = vmatmul.f32.gmra.mxu0 %v154
  %v756 = vpop.f32.mrf.mxu0
  %v757 = vadd.f32 0.0, %v756
  %758 = vmatmul.f32.gmra.mxu0 %v156
  %v759 = vpop.f32.mrf.mxu0
  %v760 = vadd.f32 0.0, %v759
  %761 = vmatmul.f32.gmra.mxu0 %v158
  %v762 = vpop.f32.mrf.mxu0
  %v763 = vadd.f32 0.0, %v762
  %764 = vmatmul.f32.gmra.mxu0 %v160
  %v765 = vpop.f32.mrf.mxu0
  %v766 = vadd.f32 0.0, %v765
  %767 = vmatmul.f32.gmra.mxu0 %v162
  %v768 = vpop.f32.mrf.mxu0
  %v769 = vadd.f32 0.0, %v768
  %770 = vmatmul.f32.gmra.mxu0 %v164
  %v771 = vpop.f32.mrf.mxu0
  %v772 = vadd.f32 0.0, %v771
  %773 = vmatmul.f32.gmra.mxu0 %v166
  %v774 = vpop.f32.mrf.mxu0
  %v775 = vadd.f32 0.0, %v774
  %776 = vmatmul.f32.gmra.mxu0 %v168
  %v777 = vpop.f32.mrf.mxu0
  %v778 = vadd.f32 0.0, %v777
  %779 = vmatmul.f32.gmra.mxu0 %v170
  %v780 = vpop.f32.mrf.mxu0
  %v781 = vadd.f32 0.0, %v780
  %782 = vmatmul.f32.gmra.mxu0 %v172
  %v783 = vpop.f32.mrf.mxu0
  %v784 = vadd.f32 0.0, %v783
  %785 = vmatmul.f32.gmra.mxu0 %v174
  %v786 = vpop.f32.mrf.mxu0
  %v787 = vadd.f32 0.0, %v786
  %788 = vmatmul.f32.gmra.mxu0 %v176
  %v789 = vpop.f32.mrf.mxu0
  %v790 = vadd.f32 0.0, %v789
  %791 = vmatmul.f32.gmra.mxu0 %v178
  %v792 = vpop.f32.mrf.mxu0
  %v793 = vadd.f32 0.0, %v792
  %794 = vmatmul.f32.gmra.mxu0 %v180
  %v795 = vpop.f32.mrf.mxu0
  %v796 = vadd.f32 0.0, %v795
  %797 = vmatmul.f32.gmra.mxu0 %v182
  %v798 = vpop.f32.mrf.mxu0
  %v799 = vadd.f32 0.0, %v798
  %800 = vmatmul.f32.gmra.mxu0 %v184
  %v801 = vpop.f32.mrf.mxu0
  %v802 = vadd.f32 0.0, %v801
  %803 = vmatmul.f32.gmra.mxu0 %v186
  %v804 = vpop.f32.mrf.mxu0
  %v805 = vadd.f32 0.0, %v804
  %806 = vmatmul.f32.gmra.mxu0 %v188
  %v807 = vpop.f32.mrf.mxu0
  %v808 = vadd.f32 0.0, %v807
  %809 = vmatmul.f32.gmra.mxu0 %v190
  %v810 = vpop.f32.mrf.mxu0
  %v811 = vadd.f32 0.0, %v810
  %812 = vmatmul.f32.gmra.mxu0 %v192
  %v813 = vpop.f32.mrf.mxu0
  %v814 = vadd.f32 0.0, %v813
  %815 = vmatmul.f32.gmra.mxu0 %v194
  %v816 = vpop.f32.mrf.mxu0
  %v817 = vadd.f32 0.0, %v816
  %818 = vmatmul.f32.gmra.mxu0 %v196
  %v819 = vpop.f32.mrf.mxu0
  %v820 = vadd.f32 0.0, %v819
  %821 = vmatmul.f32.gmra.mxu0 %v198
  %v822 = vpop.f32.mrf.mxu0
  %v823 = vadd.f32 0.0, %v822
  %824 = vmatmul.f32.gmra.mxu0 %v200
  %v825 = vpop.f32.mrf.mxu0
  %v826 = vadd.f32 0.0, %v825
  %827 = vmatmul.f32.gmra.mxu0 %v202
  %v828 = vpop.f32.mrf.mxu0
  %v829 = vadd.f32 0.0, %v828
  %830 = vmatmul.f32.gmra.mxu0 %v204
  %v831 = vpop.f32.mrf.mxu0
  %v832 = vadd.f32 0.0, %v831
  %833 = vmatmul.f32.gmra.mxu0 %v206
  %v834 = vpop.f32.mrf.mxu0
  %v835 = vadd.f32 0.0, %v834
  %836 = vmatmul.f32.gmra.mxu0 %v208
  %v837 = vpop.f32.mrf.mxu0
  %v838 = vadd.f32 0.0, %v837
  %839 = vmatmul.f32.gmra.mxu0 %v210
  %v840 = vpop.f32.mrf.mxu0
  %v841 = vadd.f32 0.0, %v840
  %842 = vmatmul.f32.gmra.mxu0 %v212
  %v843 = vpop.f32.mrf.mxu0
  %v844 = vadd.f32 0.0, %v843
  %845 = vmatmul.f32.gmra.mxu0 %v214
  %v846 = vpop.f32.mrf.mxu0
  %v847 = vadd.f32 0.0, %v846
  %848 = vmatmul.f32.gmra.mxu0 %v216
  %v849 = vpop.f32.mrf.mxu0
  %v850 = vadd.f32 0.0, %v849
  %851 = vmatmul.f32.gmra.mxu0 %v218
  %v852 = vpop.f32.mrf.mxu0
  %v853 = vadd.f32 0.0, %v852
  %854 = vmatmul.f32.gmra.mxu0 %v220
  %v855 = vpop.f32.mrf.mxu0
  %v856 = vadd.f32 0.0, %v855
  %857 = vmatmul.f32.gmra.mxu0 %v222
  %v858 = vpop.f32.mrf.mxu0
  %v859 = vadd.f32 0.0, %v858
  %860 = vmatmul.f32.gmra.mxu0 %v224
  %v861 = vpop.f32.mrf.mxu0
  %v862 = vadd.f32 0.0, %v861
  %863 = vmatmul.f32.gmra.mxu0 %v226
  %v864 = vpop.f32.mrf.mxu0
  %v865 = vadd.f32 0.0, %v864
  %866 = vmatmul.f32.gmra.mxu0 %v228
  %v867 = vpop.f32.mrf.mxu0
  %v868 = vadd.f32 0.0, %v867
  %869 = vmatmul.f32.gmra.mxu0 %v230
  %v870 = vpop.f32.mrf.mxu0
  %v871 = vadd.f32 0.0, %v870
  %872 = vdwg.mxu0
  %873 = vmatpush.msra.mxu0 0.0
  %874 = vmatpush.msra.mxu0 0.0
  %875 = vmatpush.msra.mxu0 0.0
  %876 = vmatpush.msra.mxu0 0.0
  %877 = vmatpush.msra.mxu0 0.0
  %878 = vmatpush.msra.mxu0 0.0
  %879 = vmatpush.msra.mxu0 0.0
  %880 = vmatpush.msra.mxu0 0.0
  %881 = vmatpush.msra.mxu0 0.0
  %882 = vmatpush.msra.mxu0 0.0
  %883 = vmatpush.msra.mxu0 0.0
  %884 = vmatpush.msra.mxu0 0.0
  %885 = vmatpush.msra.mxu0 0.0
  %886 = vmatpush.msra.mxu0 %v554
  %887 = vmatpush.msra.mxu0 %v249
  %888 = vmatpush.msra.mxu0 %v248
  %889 = vmatmul.f32.gmra.mxu0 %v253
  %v890 = vpop.f32.mrf.mxu0
  %v891 = vadd.f32 %v574, %v890
  %892 = vmatmul.f32.gmra.mxu0 %v256
  %v893 = vpop.f32.mrf.mxu0
  %v894 = vadd.f32 %v577, %v893
  %895 = vmatmul.f32.gmra.mxu0 %v259
  %v896 = vpop.f32.mrf.mxu0
  %v897 = vadd.f32 %v580, %v896
  %898 = vmatmul.f32.gmra.mxu0 %v262
  %v899 = vpop.f32.mrf.mxu0
  %v900 = vadd.f32 %v583, %v899
  %901 = vmatmul.f32.gmra.mxu0 %v265
  %v902 = vpop.f32.mrf.mxu0
  %v903 = vadd.f32 %v586, %v902
  %904 = vmatmul.f32.gmra.mxu0 %v268
  %v905 = vpop.f32.mrf.mxu0
  %v906 = vadd.f32 %v589, %v905
  %907 = vmatmul.f32.gmra.mxu0 %v271
  %v908 = vpop.f32.mrf.mxu0
  %v909 = vadd.f32 %v592, %v908
  %910 = vmatmul.f32.gmra.mxu0 %v274
  %v911 = vpop.f32.mrf.mxu0
  %v912 = vadd.f32 %v595, %v911
  %913 = vmatmul.f32.gmra.mxu0 %v277
  %v914 = vpop.f32.mrf.mxu0
  %v915 = vadd.f32 %v598, %v914
  %916 = vmatmul.f32.gmra.mxu0 %v280
  %v917 = vpop.f32.mrf.mxu0
  %v918 = vadd.f32 %v601, %v917
  %919 = vmatmul.f32.gmra.mxu0 %v283
  %v920 = vpop.f32.mrf.mxu0
  %v921 = vadd.f32 %v604, %v920
  %922 = vmatmul.f32.gmra.mxu0 %v286
  %v923 = vpop.f32.mrf.mxu0
  %v924 = vadd.f32 %v607, %v923
  %925 = vmatmul.f32.gmra.mxu0 %v289
  %v926 = vpop.f32.mrf.mxu0
  %v927 = vadd.f32 %v610, %v926
  %928 = vmatmul.f32.gmra.mxu0 %v292
  %v929 = vpop.f32.mrf.mxu0
  %v930 = vadd.f32 %v613, %v929
  %931 = vmatmul.f32.gmra.mxu0 %v295
  %v932 = vpop.f32.mrf.mxu0
  %v933 = vadd.f32 %v616, %v932
  %934 = vmatmul.f32.gmra.mxu0 %v298
  %v935 = vpop.f32.mrf.mxu0
  %v936 = vadd.f32 %v619, %v935
  %937 = vmatmul.f32.gmra.mxu0 %v301
  %v938 = vpop.f32.mrf.mxu0
  %v939 = vadd.f32 %v622, %v938
  %940 = vmatmul.f32.gmra.mxu0 %v304
  %v941 = vpop.f32.mrf.mxu0
  %v942 = vadd.f32 %v625, %v941
  %943 = vmatmul.f32.gmra.mxu0 %v307
  %v944 = vpop.f32.mrf.mxu0
  %v945 = vadd.f32 %v628, %v944
  %946 = vmatmul.f32.gmra.mxu0 %v310
  %v947 = vpop.f32.mrf.mxu0
  %v948 = vadd.f32 %v631, %v947
  %949 = vmatmul.f32.gmra.mxu0 %v313
  %v950 = vpop.f32.mrf.mxu0
  %v951 = vadd.f32 %v634, %v950
  %952 = vmatmul.f32.gmra.mxu0 %v316
  %v953 = vpop.f32.mrf.mxu0
  %v954 = vadd.f32 %v637, %v953
  %955 = vmatmul.f32.gmra.mxu0 %v319
  %v956 = vpop.f32.mrf.mxu0
  %v957 = vadd.f32 %v640, %v956
  %958 = vmatmul.f32.gmra.mxu0 %v322
  %v959 = vpop.f32.mrf.mxu0
  %v960 = vadd.f32 %v643, %v959
  %961 = vmatmul.f32.gmra.mxu0 %v325
  %v962 = vpop.f32.mrf.mxu0
  %v963 = vadd.f32 %v646, %v962
  %964 = vmatmul.f32.gmra.mxu0 %v328
  %v965 = vpop.f32.mrf.mxu0
  %v966 = vadd.f32 %v649, %v965
  %967 = vmatmul.f32.gmra.mxu0 %v331
  %v968 = vpop.f32.mrf.mxu0
  %v969 = vadd.f32 %v652, %v968
  %970 = vmatmul.f32.gmra.mxu0 %v334
  %v971 = vpop.f32.mrf.mxu0
  %v972 = vadd.f32 %v655, %v971
  %973 = vmatmul.f32.gmra.mxu0 %v337
  %v974 = vpop.f32.mrf.mxu0
  %v975 = vadd.f32 %v658, %v974
  %976 = vmatmul.f32.gmra.mxu0 %v340
  %v977 = vpop.f32.mrf.mxu0
  %v978 = vadd.f32 %v661, %v977
  %979 = vmatmul.f32.gmra.mxu0 %v343
  %v980 = vpop.f32.mrf.mxu0
  %v981 = vadd.f32 %v664, %v980
  %982 = vmatmul.f32.gmra.mxu0 %v346
  %v983 = vpop.f32.mrf.mxu0
  %v984 = vadd.f32 %v667, %v983
  %985 = vmatmul.f32.gmra.mxu0 %v349
  %v986 = vpop.f32.mrf.mxu0
  %v987 = vadd.f32 %v670, %v986
  %988 = vmatmul.f32.gmra.mxu0 %v352
  %v989 = vpop.f32.mrf.mxu0
  %v990 = vadd.f32 %v673, %v989
  %991 = vmatmul.f32.gmra.mxu0 %v355
  %v992 = vpop.f32.mrf.mxu0
  %v993 = vadd.f32 %v676, %v992
  %994 = vmatmul.f32.gmra.mxu0 %v358
  %v995 = vpop.f32.mrf.mxu0
  %v996 = vadd.f32 %v679, %v995
  %997 = vmatmul.f32.gmra.mxu0 %v361
  %v998 = vpop.f32.mrf.mxu0
  %v999 = vadd.f32 %v682, %v998
  %1000 = vmatmul.f32.gmra.mxu0 %v364
  %v1001 = vpop.f32.mrf.mxu0
  %v1002 = vadd.f32 %v685, %v1001
  %1003 = vmatmul.f32.gmra.mxu0 %v367
  %v1004 = vpop.f32.mrf.mxu0
  %v1005 = vadd.f32 %v688, %v1004
  %1006 = vmatmul.f32.gmra.mxu0 %v370
  %v1007 = vpop.f32.mrf.mxu0
  %v1008 = vadd.f32 %v691, %v1007
  %1009 = vmatmul.f32.gmra.mxu0 %v373
  %v1010 = vpop.f32.mrf.mxu0
  %v1011 = vadd.f32 %v694, %v1010
  %1012 = vmatmul.f32.gmra.mxu0 %v376
  %v1013 = vpop.f32.mrf.mxu0
  %v1014 = vadd.f32 %v697, %v1013
  %1015 = vmatmul.f32.gmra.mxu0 %v379
  %v1016 = vpop.f32.mrf.mxu0
  %v1017 = vadd.f32 %v700, %v1016
  %1018 = vmatmul.f32.gmra.mxu0 %v382
  %v1019 = vpop.f32.mrf.mxu0
  %v1020 = vadd.f32 %v703, %v1019
  %1021 = vmatmul.f32.gmra.mxu0 %v385
  %v1022 = vpop.f32.mrf.mxu0
  %v1023 = vadd.f32 %v706, %v1022
  %1024 = vmatmul.f32.gmra.mxu0 %v388
  %v1025 = vpop.f32.mrf.mxu0
  %v1026 = vadd.f32 %v709, %v1025
  %1027 = vmatmul.f32.gmra.mxu0 %v391
  %v1028 = vpop.f32.mrf.mxu0
  %v1029 = vadd.f32 %v712, %v1028
  %1030 = vmatmul.f32.gmra.mxu0 %v394
  %v1031 = vpop.f32.mrf.mxu0
  %v1032 = vadd.f32 %v715, %v1031
  %1033 = vmatmul.f32.gmra.mxu0 %v397
  %v1034 = vpop.f32.mrf.mxu0
  %v1035 = vadd.f32 %v718, %v1034
  %1036 = vmatmul.f32.gmra.mxu0 %v400
  %v1037 = vpop.f32.mrf.mxu0
  %v1038 = vadd.f32 %v721, %v1037
  %1039 = vmatmul.f32.gmra.mxu0 %v403
  %v1040 = vpop.f32.mrf.mxu0
  %v1041 = vadd.f32 %v724, %v1040
  %1042 = vmatmul.f32.gmra.mxu0 %v406
  %v1043 = vpop.f32.mrf.mxu0
  %v1044 = vadd.f32 %v727, %v1043
  %1045 = vmatmul.f32.gmra.mxu0 %v409
  %v1046 = vpop.f32.mrf.mxu0
  %v1047 = vadd.f32 %v730, %v1046
  %1048 = vmatmul.f32.gmra.mxu0 %v412
  %v1049 = vpop.f32.mrf.mxu0
  %v1050 = vadd.f32 %v733, %v1049
  %1051 = vmatmul.f32.gmra.mxu0 %v415
  %v1052 = vpop.f32.mrf.mxu0
  %v1053 = vadd.f32 %v736, %v1052
  %1054 = vmatmul.f32.gmra.mxu0 %v418
  %v1055 = vpop.f32.mrf.mxu0
  %v1056 = vadd.f32 %v739, %v1055
  %1057 = vmatmul.f32.gmra.mxu0 %v421
  %v1058 = vpop.f32.mrf.mxu0
  %v1059 = vadd.f32 %v742, %v1058
  %1060 = vmatmul.f32.gmra.mxu0 %v424
  %v1061 = vpop.f32.mrf.mxu0
  %v1062 = vadd.f32 %v745, %v1061
  %1063 = vmatmul.f32.gmra.mxu0 %v427
  %v1064 = vpop.f32.mrf.mxu0
  %v1065 = vadd.f32 %v748, %v1064
  %1066 = vmatmul.f32.gmra.mxu0 %v430
  %v1067 = vpop.f32.mrf.mxu0
  %v1068 = vadd.f32 %v751, %v1067
  %1069 = vmatmul.f32.gmra.mxu0 %v433
  %v1070 = vpop.f32.mrf.mxu0
  %v1071 = vadd.f32 %v754, %v1070
  %1072 = vmatmul.f32.gmra.mxu0 %v436
  %v1073 = vpop.f32.mrf.mxu0
  %v1074 = vadd.f32 %v757, %v1073
  %1075 = vmatmul.f32.gmra.mxu0 %v439
  %v1076 = vpop.f32.mrf.mxu0
  %v1077 = vadd.f32 %v760, %v1076
  %1078 = vmatmul.f32.gmra.mxu0 %v442
  %v1079 = vpop.f32.mrf.mxu0
  %v1080 = vadd.f32 %v763, %v1079
  %1081 = vmatmul.f32.gmra.mxu0 %v445
  %v1082 = vpop.f32.mrf.mxu0
  %v1083 = vadd.f32 %v766, %v1082
  %1084 = vmatmul.f32.gmra.mxu0 %v448
  %v1085 = vpop.f32.mrf.mxu0
  %v1086 = vadd.f32 %v769, %v1085
  %1087 = vmatmul.f32.gmra.mxu0 %v451
  %v1088 = vpop.f32.mrf.mxu0
  %v1089 = vadd.f32 %v772, %v1088
  %1090 = vmatmul.f32.gmra.mxu0 %v454
  %v1091 = vpop.f32.mrf.mxu0
  %v1092 = vadd.f32 %v775, %v1091
  %1093 = vmatmul.f32.gmra.mxu0 %v457
  %v1094 = vpop.f32.mrf.mxu0
  %v1095 = vadd.f32 %v778, %v1094
  %1096 = vmatmul.f32.gmra.mxu0 %v460
  %v1097 = vpop.f32.mrf.mxu0
  %v1098 = vadd.f32 %v781, %v1097
  %1099 = vmatmul.f32.gmra.mxu0 %v463
  %v1100 = vpop.f32.mrf.mxu0
  %v1101 = vadd.f32 %v784, %v1100
  %1102 = vmatmul.f32.gmra.mxu0 %v466
  %v1103 = vpop.f32.mrf.mxu0
  %v1104 = vadd.f32 %v787, %v1103
  %1105 = vmatmul.f32.gmra.mxu0 %v469
  %v1106 = vpop.f32.mrf.mxu0
  %v1107 = vadd.f32 %v790, %v1106
  %1108 = vmatmul.f32.gmra.mxu0 %v472
  %v1109 = vpop.f32.mrf.mxu0
  %v1110 = vadd.f32 %v793, %v1109
  %1111 = vmatmul.f32.gmra.mxu0 %v475
  %v1112 = vpop.f32.mrf.mxu0
  %v1113 = vadd.f32 %v796, %v1112
  %1114 = vmatmul.f32.gmra.mxu0 %v478
  %v1115 = vpop.f32.mrf.mxu0
  %v1116 = vadd.f32 %v799, %v1115
  %1117 = vmatmul.f32.gmra.mxu0 %v481
  %v1118 = vpop.f32.mrf.mxu0
  %v1119 = vadd.f32 %v802, %v1118
  %1120 = vmatmul.f32.gmra.mxu0 %v484
  %v1121 = vpop.f32.mrf.mxu0
  %v1122 = vadd.f32 %v805, %v1121
  %1123 = vmatmul.f32.gmra.mxu0 %v487
  %v1124 = vpop.f32.mrf.mxu0
  %v1125 = vadd.f32 %v808, %v1124
  %1126 = vmatmul.f32.gmra.mxu0 %v490
  %v1127 = vpop.f32.mrf.mxu0
  %v1128 = vadd.f32 %v811, %v1127
  %1129 = vmatmul.f32.gmra.mxu0 %v493
  %v1130 = vpop.f32.mrf.mxu0
  %v1131 = vadd.f32 %v814, %v1130
  %1132 = vmatmul.f32.gmra.mxu0 %v496
  %v1133 = vpop.f32.mrf.mxu0
  %v1134 = vadd.f32 %v817, %v1133
  %1135 = vmatmul.f32.gmra.mxu0 %v499
  %v1136 = vpop.f32.mrf.mxu0
  %v1137 = vadd.f32 %v820, %v1136
  %1138 = vmatmul.f32.gmra.mxu0 %v502
  %v1139 = vpop.f32.mrf.mxu0
  %v1140 = vadd.f32 %v823, %v1139
  %1141 = vmatmul.f32.gmra.mxu0 %v505
  %v1142 = vpop.f32.mrf.mxu0
  %v1143 = vadd.f32 %v826, %v1142
  %1144 = vmatmul.f32.gmra.mxu0 %v508
  %v1145 = vpop.f32.mrf.mxu0
  %v1146 = vadd.f32 %v829, %v1145
  %1147 = vmatmul.f32.gmra.mxu0 %v511
  %v1148 = vpop.f32.mrf.mxu0
  %v1149 = vadd.f32 %v832, %v1148
  %1150 = vmatmul.f32.gmra.mxu0 %v514
  %v1151 = vpop.f32.mrf.mxu0
  %v1152 = vadd.f32 %v835, %v1151
  %1153 = vmatmul.f32.gmra.mxu0 %v517
  %v1154 = vpop.f32.mrf.mxu0
  %v1155 = vadd.f32 %v838, %v1154
  %1156 = vmatmul.f32.gmra.mxu0 %v520
  %v1157 = vpop.f32.mrf.mxu0
  %v1158 = vadd.f32 %v841, %v1157
  %1159 = vmatmul.f32.gmra.mxu0 %v523
  %v1160 = vpop.f32.mrf.mxu0
  %v1161 = vadd.f32 %v844, %v1160
  %1162 = vmatmul.f32.gmra.mxu0 %v526
  %v1163 = vpop.f32.mrf.mxu0
  %v1164 = vadd.f32 %v847, %v1163
  %1165 = vmatmul.f32.gmra.mxu0 %v529
  %v1166 = vpop.f32.mrf.mxu0
  %v1167 = vadd.f32 %v850, %v1166
  %1168 = vmatmul.f32.gmra.mxu0 %v532
  %v1169 = vpop.f32.mrf.mxu0
  %v1170 = vadd.f32 %v853, %v1169
  %1171 = vmatmul.f32.gmra.mxu0 %v535
  %v1172 = vpop.f32.mrf.mxu0
  %v1173 = vadd.f32 %v856, %v1172
  %1174 = vmatmul.f32.gmra.mxu0 %v538
  %v1175 = vpop.f32.mrf.mxu0
  %v1176 = vadd.f32 %v859, %v1175
  %1177 = vmatmul.f32.gmra.mxu0 %v541
  %v1178 = vpop.f32.mrf.mxu0
  %v1179 = vadd.f32 %v862, %v1178
  %1180 = vmatmul.f32.gmra.mxu0 %v544
  %v1181 = vpop.f32.mrf.mxu0
  %v1182 = vadd.f32 %v865, %v1181
  %1183 = vmatmul.f32.gmra.mxu0 %v547
  %v1184 = vpop.f32.mrf.mxu0
  %v1185 = vadd.f32 %v868, %v1184
  %1186 = vmatmul.f32.gmra.mxu0 %v550
  %v1187 = vpop.f32.mrf.mxu0
  %v1188 = vadd.f32 %v871, %v1187
  %1189 = vdwg.mxu0
  %v1190 = vmax.f32 %v891, %v966
  %v1191 = vmax.f32 %v894, %v969
  %v1192 = vmax.f32 %v897, %v972
  %v1193 = vmax.f32 %v900, %v975
  %v1194 = vmax.f32 %v903, %v978
  %v1195 = vmax.f32 %v906, %v981
  %v1196 = vmax.f32 %v909, %v984
  %v1197 = vmax.f32 %v912, %v987
  %v1198 = vmax.f32 %v915, %v990
  %v1199 = vmax.f32 %v918, %v993
  %v1200 = vmax.f32 %v921, %v996
  %v1201 = vmax.f32 %v924, %v999
  %v1202 = vmax.f32 %v927, %v1002
  %v1203 = vmax.f32 %v930, %v1005
  %v1204 = vmax.f32 %v933, %v1008
  %v1205 = vmax.f32 %v936, %v1011
  %v1206 = vmax.f32 %v939, %v1014
  %v1207 = vmax.f32 %v942, %v1017
  %v1208 = vmax.f32 %v945, %v1020
  %v1209 = vmax.f32 %v948, %v1023
  %v1210 = vmax.f32 %v951, %v1026
  %v1211 = vmax.f32 %v954, %v1029
  %v1212 = vmax.f32 %v957, %v1032
  %v1213 = vmax.f32 %v960, %v1035
  %v1214 = vmax.f32 %v963, %v1038
  %v1215 = vmax.f32 %v1041, %v1116
  %v1216 = vmax.f32 %v1044, %v1119
  %v1217 = vmax.f32 %v1047, %v1122
  %v1218 = vmax.f32 %v1050, %v1125
  %v1219 = vmax.f32 %v1053, %v1128
  %v1220 = vmax.f32 %v1056, %v1131
  %v1221 = vmax.f32 %v1059, %v1134
  %v1222 = vmax.f32 %v1062, %v1137
  %v1223 = vmax.f32 %v1065, %v1140
  %v1224 = vmax.f32 %v1068, %v1143
  %v1225 = vmax.f32 %v1071, %v1146
  %v1226 = vmax.f32 %v1074, %v1149
  %v1227 = vmax.f32 %v1077, %v1152
  %v1228 = vmax.f32 %v1080, %v1155
  %v1229 = vmax.f32 %v1083, %v1158
  %v1230 = vmax.f32 %v1086, %v1161
  %v1231 = vmax.f32 %v1089, %v1164
  %v1232 = vmax.f32 %v1092, %v1167
  %v1233 = vmax.f32 %v1095, %v1170
  %v1234 = vmax.f32 %v1098, %v1173
  %v1235 = vmax.f32 %v1101, %v1176
  %v1236 = vmax.f32 %v1104, %v1179
  %v1237 = vmax.f32 %v1107, %v1182
  %v1238 = vmax.f32 %v1110, %v1185
  %v1239 = vmax.f32 %v1113, %v1188
  %v1240 = vmax.f32 %v1190, %v1215
  %v1241 = vmax.f32 %v1191, %v1216
  %v1242 = vmax.f32 %v1192, %v1217
  %v1243 = vmax.f32 %v1193, %v1218
  %v1244 = vmax.f32 %v1194, %v1219
  %v1245 = vmax.f32 %v1195, %v1220
  %v1246 = vmax.f32 %v1196, %v1221
  %v1247 = vmax.f32 %v1197, %v1222
  %v1248 = vmax.f32 %v1198, %v1223
  %v1249 = vmax.f32 %v1199, %v1224
  %v1250 = vmax.f32 %v1200, %v1225
  %v1251 = vmax.f32 %v1201, %v1226
  %v1252 = vmax.f32 %v1202, %v1227
  %v1253 = vmax.f32 %v1203, %v1228
  %v1254 = vmax.f32 %v1204, %v1229
  %v1255 = vmax.f32 %v1205, %v1230
  %v1256 = vmax.f32 %v1206, %v1231
  %v1257 = vmax.f32 %v1207, %v1232
  %v1258 = vmax.f32 %v1208, %v1233
  %v1259 = vmax.f32 %v1209, %v1234
  %v1260 = vmax.f32 %v1210, %v1235
  %v1261 = vmax.f32 %v1211, %v1236
  %v1262 = vmax.f32 %v1212, %v1237
  %v1263 = vmax.f32 %v1213, %v1238
  %v1264 = vmax.f32 %v1214, %v1239
  %v1265 = vld [vmem:[%s2] sm:$0x1]
  %v1267 = vperm.slane %v1265, 0
  %v1269 = vadd.f32 %v1240, %v1267
  %v1270 = vadd.f32 %v1241, %v1267
  %v1271 = vadd.f32 %v1242, %v1267
  %v1272 = vadd.f32 %v1243, %v1267
  %v1273 = vadd.f32 %v1244, %v1267
  %v1274 = vadd.f32 %v1245, %v1267
  %v1275 = vadd.f32 %v1246, %v1267
  %v1276 = vadd.f32 %v1247, %v1267
  %v1277 = vadd.f32 %v1248, %v1267
  %v1278 = vadd.f32 %v1249, %v1267
  %v1279 = vadd.f32 %v1250, %v1267
  %v1280 = vadd.f32 %v1251, %v1267
  %v1281 = vadd.f32 %v1252, %v1267
  %v1282 = vadd.f32 %v1253, %v1267
  %v1283 = vadd.f32 %v1254, %v1267
  %v1284 = vadd.f32 %v1255, %v1267
  %v1285 = vadd.f32 %v1256, %v1267
  %v1286 = vadd.f32 %v1257, %v1267
  %v1287 = vadd.f32 %v1258, %v1267
  %v1288 = vadd.f32 %v1259, %v1267
  %v1289 = vadd.f32 %v1260, %v1267
  %v1290 = vadd.f32 %v1261, %v1267
  %v1291 = vadd.f32 %v1262, %v1267
  %v1292 = vadd.f32 %v1263, %v1267
  %v1293 = vadd.f32 %v1264, %v1267
  %v1294 = vmax.f32 %v1269, 0.0
  %v1295 = vmax.f32 %v1270, 0.0
  %v1296 = vmax.f32 %v1271, 0.0
  %v1297 = vmax.f32 %v1272, 0.0
  %v1298 = vmax.f32 %v1273, 0.0
  %v1299 = vmax.f32 %v1274, 0.0
  %v1300 = vmax.f32 %v1275, 0.0
  %v1301 = vmax.f32 %v1276, 0.0
  %v1302 = vmax.f32 %v1277, 0.0
  %v1303 = vmax.f32 %v1278, 0.0
  %v1304 = vmax.f32 %v1279, 0.0
  %v1305 = vmax.f32 %v1280, 0.0
  %v1306 = vmax.f32 %v1281, 0.0
  %v1307 = vmax.f32 %v1282, 0.0
  %v1308 = vmax.f32 %v1283, 0.0
  %v1309 = vmax.f32 %v1284, 0.0
  %v1310 = vmax.f32 %v1285, 0.0
  %v1311 = vmax.f32 %v1286, 0.0
  %v1312 = vmax.f32 %v1287, 0.0
  %v1313 = vmax.f32 %v1288, 0.0
  %v1314 = vmax.f32 %v1289, 0.0
  %v1315 = vmax.f32 %v1290, 0.0
  %v1316 = vmax.f32 %v1291, 0.0
  %v1317 = vmax.f32 %v1292, 0.0
  %v1318 = vmax.f32 %v1293, 0.0
  %v1319 = vld [vmem:[%s3] sm:$0xff]
  %v1320 = vld [vmem:[%s3 + $0x8] sm:$0xff]
  %s1321 = scalar_lea.vmem %s3, 16
  %v1322 = vld [vmem:[%s1321] sm:$0xff]
  %v1323 = vld [vmem:[%s1321 + $0x8] sm:$0xff]
  %vm1324 = vcmask 130048
  %v1326 = vsel %vm1324, %v1295, 0
  %1328 = vmatpush.msra.mxu0 0.0
  %1329 = vmatpush.msra.mxu0 0.0
  %1330 = vmatpush.msra.mxu0 0.0
  %1331 = vmatpush.msra.mxu0 0.0
  %1332 = vmatpush.msra.mxu0 0.0
  %1333 = vmatpush.msra.mxu0 0.0
  %1334 = vmatpush.msra.mxu0 0.0
  %1335 = vmatpush.msra.mxu0 0.0
  %1336 = vmatpush.msra.mxu0 0.0
  %1337 = vmatpush.msra.mxu0 0.0
  %1338 = vmatpush.msra.mxu0 0.0
  %1339 = vmatpush.msra.mxu0 0.0
  %1340 = vmatpush.msra.mxu0 0.0
  %1341 = vmatpush.msra.mxu0 0.0
  %1342 = vmatpush.msra.mxu0 %v1323
  %1343 = vmatpush.msra.mxu0 %v1322
  %1344 = vmatmul.f32.gmra.mxu0 %v1326
  %v1345 = vpop.f32.mrf.mxu0
  %v1346 = vadd.f32 0.0, %v1345
  %1347 = vdwg.mxu0
  %v1349 = vsel %vm1324, %v1294, 0
  %1351 = vmatpush.msra.mxu0 0.0
  %1352 = vmatpush.msra.mxu0 0.0
  %1353 = vmatpush.msra.mxu0 0.0
  %1354 = vmatpush.msra.mxu0 0.0
  %1355 = vmatpush.msra.mxu0 0.0
  %1356 = vmatpush.msra.mxu0 0.0
  %1357 = vmatpush.msra.mxu0 0.0
  %1358 = vmatpush.msra.mxu0 0.0
  %1359 = vmatpush.msra.mxu0 0.0
  %1360 = vmatpush.msra.mxu0 0.0
  %1361 = vmatpush.msra.mxu0 0.0
  %1362 = vmatpush.msra.mxu0 0.0
  %1363 = vmatpush.msra.mxu0 0.0
  %1364 = vmatpush.msra.mxu0 0.0
  %1365 = vmatpush.msra.mxu0 %v1320
  %1366 = vmatpush.msra.mxu0 %v1319
  %1367 = vmatmul.f32.gmra.mxu0 %v1349
  %v1368 = vpop.f32.mrf.mxu0
  %v1369 = vadd.f32 %v1346, %v1368
  %1370 = vdwg.mxu0
  %s1371 = scalar_lea.vmem %s3, 32
  %v1372 = vld [vmem:[%s1371] sm:$0xff]
  %v1373 = vld [vmem:[%s1371 + $0x8] sm:$0xff]
  %v1375 = vsel %vm1324, %v1296, 0
  %1377 = vmatpush.msra.mxu0 0.0
  %1378 = vmatpush.msra.mxu0 0.0
  %1379 = vmatpush.msra.mxu0 0.0
  %1380 = vmatpush.msra.mxu0 0.0
  %1381 = vmatpush.msra.mxu0 0.0
  %1382 = vmatpush.msra.mxu0 0.0
  %1383 = vmatpush.msra.mxu0 0.0
  %1384 = vmatpush.msra.mxu0 0.0
  %1385 = vmatpush.msra.mxu0 0.0
  %1386 = vmatpush.msra.mxu0 0.0
  %1387 = vmatpush.msra.mxu0 0.0
  %1388 = vmatpush.msra.mxu0 0.0
  %1389 = vmatpush.msra.mxu0 0.0
  %1390 = vmatpush.msra.mxu0 0.0
  %1391 = vmatpush.msra.mxu0 %v1373
  %1392 = vmatpush.msra.mxu0 %v1372
  %1393 = vmatmul.f32.gmra.mxu0 %v1375
  %v1394 = vpop.f32.mrf.mxu0
  %v1395 = vadd.f32 0.0, %v1394
  %1396 = vdwg.mxu0
  %v1397 = vadd.f32 %v1369, %v1395
  %s1398 = scalar_lea.vmem %s3, 48
  %v1399 = vld [vmem:[%s1398] sm:$0xff]
  %v1400 = vld [vmem:[%s1398 + $0x8] sm:$0xff]
  %v1402 = vsel %vm1324, %v1297, 0
  %1404 = vmatpush.msra.mxu0 0.0
  %1405 = vmatpush.msra.mxu0 0.0
  %1406 = vmatpush.msra.mxu0 0.0
  %1407 = vmatpush.msra.mxu0 0.0
  %1408 = vmatpush.msra.mxu0 0.0
  %1409 = vmatpush.msra.mxu0 0.0
  %1410 = vmatpush.msra.mxu0 0.0
  %1411 = vmatpush.msra.mxu0 0.0
  %1412 = vmatpush.msra.mxu0 0.0
  %1413 = vmatpush.msra.mxu0 0.0
  %1414 = vmatpush.msra.mxu0 0.0
  %1415 = vmatpush.msra.mxu0 0.0
  %1416 = vmatpush.msra.mxu0 0.0
  %1417 = vmatpush.msra.mxu0 0.0
  %1418 = vmatpush.msra.mxu0 %v1400
  %1419 = vmatpush.msra.mxu0 %v1399
  %1420 = vmatmul.f32.gmra.mxu0 %v1402
  %v1421 = vpop.f32.mrf.mxu0
  %v1422 = vadd.f32 0.0, %v1421
  %1423 = vdwg.mxu0
  %v1424 = vadd.f32 %v1397, %v1422
  %s1425 = scalar_lea.vmem %s3, 64
  %v1426 = vld [vmem:[%s1425] sm:$0xff]
  %v1427 = vld [vmem:[%s1425 + $0x8] sm:$0xff]
  %v1429 = vsel %vm1324, %v1298, 0
  %1431 = vmatpush.msra.mxu0 0.0
  %1432 = vmatpush.msra.mxu0 0.0
  %1433 = vmatpush.msra.mxu0 0.0
  %1434 = vmatpush.msra.mxu0 0.0
  %1435 = vmatpush.msra.mxu0 0.0
  %1436 = vmatpush.msra.mxu0 0.0
  %1437 = vmatpush.msra.mxu0 0.0
  %1438 = vmatpush.msra.mxu0 0.0
  %1439 = vmatpush.msra.mxu0 0.0
  %1440 = vmatpush.msra.mxu0 0.0
  %1441 = vmatpush.msra.mxu0 0.0
  %1442 = vmatpush.msra.mxu0 0.0
  %1443 = vmatpush.msra.mxu0 0.0
  %1444 = vmatpush.msra.mxu0 0.0
  %1445 = vmatpush.msra.mxu0 %v1427
  %1446 = vmatpush.msra.mxu0 %v1426
  %1447 = vmatmul.f32.gmra.mxu0 %v1429
  %v1448 = vpop.f32.mrf.mxu0
  %v1449 = vadd.f32 0.0, %v1448
  %1450 = vdwg.mxu0
  %v1451 = vadd.f32 %v1424, %v1449
  %s1452 = scalar_lea.vmem %s3, 80
  %v1453 = vld [vmem:[%s1452] sm:$0xff]
  %v1454 = vld [vmem:[%s1452 + $0x8] sm:$0xff]
  %v1456 = vsel %vm1324, %v1299, 0
  %1458 = vmatpush.msra.mxu0 0.0
  %1459 = vmatpush.msra.mxu0 0.0
  %1460 = vmatpush.msra.mxu0 0.0
  %1461 = vmatpush.msra.mxu0 0.0
  %1462 = vmatpush.msra.mxu0 0.0
  %1463 = vmatpush.msra.mxu0 0.0
  %1464 = vmatpush.msra.mxu0 0.0
  %1465 = vmatpush.msra.mxu0 0.0
  %1466 = vmatpush.msra.mxu0 0.0
  %1467 = vmatpush.msra.mxu0 0.0
  %1468 = vmatpush.msra.mxu0 0.0
  %1469 = vmatpush.msra.mxu0 0.0
  %1470 = vmatpush.msra.mxu0 0.0
  %1471 = vmatpush.msra.mxu0 0.0
  %1472 = vmatpush.msra.mxu0 %v1454
  %1473 = vmatpush.msra.mxu0 %v1453
  %1474 = vmatmul.f32.gmra.mxu0 %v1456
  %v1475 = vpop.f32.mrf.mxu0
  %v1476 = vadd.f32 0.0, %v1475
  %1477 = vdwg.mxu0
  %v1478 = vadd.f32 %v1451, %v1476
  %s1479 = scalar_lea.vmem %s3, 96
  %v1480 = vld [vmem:[%s1479] sm:$0xff]
  %v1481 = vld [vmem:[%s1479 + $0x8] sm:$0xff]
  %v1483 = vsel %vm1324, %v1300, 0
  %1485 = vmatpush.msra.mxu0 0.0
  %1486 = vmatpush.msra.mxu0 0.0
  %1487 = vmatpush.msra.mxu0 0.0
  %1488 = vmatpush.msra.mxu0 0.0
  %1489 = vmatpush.msra.mxu0 0.0
  %1490 = vmatpush.msra.mxu0 0.0
  %1491 = vmatpush.msra.mxu0 0.0
  %1492 = vmatpush.msra.mxu0 0.0
  %1493 = vmatpush.msra.mxu0 0.0
  %1494 = vmatpush.msra.mxu0 0.0
  %1495 = vmatpush.msra.mxu0 0.0
  %1496 = vmatpush.msra.mxu0 0.0
  %1497 = vmatpush.msra.mxu0 0.0
  %1498 = vmatpush.msra.mxu0 0.0
  %1499 = vmatpush.msra.mxu0 %v1481
  %1500 = vmatpush.msra.mxu0 %v1480
  %1501 = vmatmul.f32.gmra.mxu0 %v1483
  %v1502 = vpop.f32.mrf.mxu0
  %v1503 = vadd.f32 0.0, %v1502
  %1504 = vdwg.mxu0
  %v1505 = vadd.f32 %v1478, %v1503
  %s1506 = scalar_lea.vmem %s3, 112
  %v1507 = vld [vmem:[%s1506] sm:$0xff]
  %v1508 = vld [vmem:[%s1506 + $0x8] sm:$0xff]
  %v1510 = vsel %vm1324, %v1301, 0
  %1512 = vmatpush.msra.mxu0 0.0
  %1513 = vmatpush.msra.mxu0 0.0
  %1514 = vmatpush.msra.mxu0 0.0
  %1515 = vmatpush.msra.mxu0 0.0
  %1516 = vmatpush.msra.mxu0 0.0
  %1517 = vmatpush.msra.mxu0 0.0
  %1518 = vmatpush.msra.mxu0 0.0
  %1519 = vmatpush.msra.mxu0 0.0
  %1520 = vmatpush.msra.mxu0 0.0
  %1521 = vmatpush.msra.mxu0 0.0
  %1522 = vmatpush.msra.mxu0 0.0
  %1523 = vmatpush.msra.mxu0 0.0
  %1524 = vmatpush.msra.mxu0 0.0
  %1525 = vmatpush.msra.mxu0 0.0
  %1526 = vmatpush.msra.mxu0 %v1508
  %1527 = vmatpush.msra.mxu0 %v1507
  %1528 = vmatmul.f32.gmra.mxu0 %v1510
  %v1529 = vpop.f32.mrf.mxu0
  %v1530 = vadd.f32 0.0, %v1529
  %1531 = vdwg.mxu0
  %v1532 = vadd.f32 %v1505, %v1530
  %s1533 = scalar_lea.vmem %s3, 128
  %v1534 = vld [vmem:[%s1533] sm:$0xff]
  %v1535 = vld [vmem:[%s1533 + $0x8] sm:$0xff]
  %v1537 = vsel %vm1324, %v1302, 0
  %1539 = vmatpush.msra.mxu0 0.0
  %1540 = vmatpush.msra.mxu0 0.0
  %1541 = vmatpush.msra.mxu0 0.0
  %1542 = vmatpush.msra.mxu0 0.0
  %1543 = vmatpush.msra.mxu0 0.0
  %1544 = vmatpush.msra.mxu0 0.0
  %1545 = vmatpush.msra.mxu0 0.0
  %1546 = vmatpush.msra.mxu0 0.0
  %1547 = vmatpush.msra.mxu0 0.0
  %1548 = vmatpush.msra.mxu0 0.0
  %1549 = vmatpush.msra.mxu0 0.0
  %1550 = vmatpush.msra.mxu0 0.0
  %1551 = vmatpush.msra.mxu0 0.0
  %1552 = vmatpush.msra.mxu0 0.0
  %1553 = vmatpush.msra.mxu0 %v1535
  %1554 = vmatpush.msra.mxu0 %v1534
  %1555 = vmatmul.f32.gmra.mxu0 %v1537
  %v1556 = vpop.f32.mrf.mxu0
  %v1557 = vadd.f32 0.0, %v1556
  %1558 = vdwg.mxu0
  %v1559 = vadd.f32 %v1532, %v1557
  %s1560 = scalar_lea.vmem %s3, 144
  %v1561 = vld [vmem:[%s1560] sm:$0xff]
  %v1562 = vld [vmem:[%s1560 + $0x8] sm:$0xff]
  %v1564 = vsel %vm1324, %v1303, 0
  %1566 = vmatpush.msra.mxu0 0.0
  %1567 = vmatpush.msra.mxu0 0.0
  %1568 = vmatpush.msra.mxu0 0.0
  %1569 = vmatpush.msra.mxu0 0.0
  %1570 = vmatpush.msra.mxu0 0.0
  %1571 = vmatpush.msra.mxu0 0.0
  %1572 = vmatpush.msra.mxu0 0.0
  %1573 = vmatpush.msra.mxu0 0.0
  %1574 = vmatpush.msra.mxu0 0.0
  %1575 = vmatpush.msra.mxu0 0.0
  %1576 = vmatpush.msra.mxu0 0.0
  %1577 = vmatpush.msra.mxu0 0.0
  %1578 = vmatpush.msra.mxu0 0.0
  %1579 = vmatpush.msra.mxu0 0.0
  %1580 = vmatpush.msra.mxu0 %v1562
  %1581 = vmatpush.msra.mxu0 %v1561
  %1582 = vmatmul.f32.gmra.mxu0 %v1564
  %v1583 = vpop.f32.mrf.mxu0
  %v1584 = vadd.f32 0.0, %v1583
  %1585 = vdwg.mxu0
  %v1586 = vadd.f32 %v1559, %v1584
  %s1587 = scalar_lea.vmem %s3, 160
  %v1588 = vld [vmem:[%s1587] sm:$0xff]
  %v1589 = vld [vmem:[%s1587 + $0x8] sm:$0xff]
  %v1591 = vsel %vm1324, %v1304, 0
  %1593 = vmatpush.msra.mxu0 0.0
  %1594 = vmatpush.msra.mxu0 0.0
  %1595 = vmatpush.msra.mxu0 0.0
  %1596 = vmatpush.msra.mxu0 0.0
  %1597 = vmatpush.msra.mxu0 0.0
  %1598 = vmatpush.msra.mxu0 0.0
  %1599 = vmatpush.msra.mxu0 0.0
  %1600 = vmatpush.msra.mxu0 0.0
  %1601 = vmatpush.msra.mxu0 0.0
  %1602 = vmatpush.msra.mxu0 0.0
  %1603 = vmatpush.msra.mxu0 0.0
  %1604 = vmatpush.msra.mxu0 0.0
  %1605 = vmatpush.msra.mxu0 0.0
  %1606 = vmatpush.msra.mxu0 0.0
  %1607 = vmatpush.msra.mxu0 %v1589
  %1608 = vmatpush.msra.mxu0 %v1588
  %1609 = vmatmul.f32.gmra.mxu0 %v1591
  %v1610 = vpop.f32.mrf.mxu0
  %v1611 = vadd.f32 0.0, %v1610
  %1612 = vdwg.mxu0
  %v1613 = vadd.f32 %v1586, %v1611
  %s1614 = scalar_lea.vmem %s3, 176
  %v1615 = vld [vmem:[%s1614] sm:$0xff]
  %v1616 = vld [vmem:[%s1614 + $0x8] sm:$0xff]
  %v1618 = vsel %vm1324, %v1305, 0
  %1620 = vmatpush.msra.mxu0 0.0
  %1621 = vmatpush.msra.mxu0 0.0
  %1622 = vmatpush.msra.mxu0 0.0
  %1623 = vmatpush.msra.mxu0 0.0
  %1624 = vmatpush.msra.mxu0 0.0
  %1625 = vmatpush.msra.mxu0 0.0
  %1626 = vmatpush.msra.mxu0 0.0
  %1627 = vmatpush.msra.mxu0 0.0
  %1628 = vmatpush.msra.mxu0 0.0
  %1629 = vmatpush.msra.mxu0 0.0
  %1630 = vmatpush.msra.mxu0 0.0
  %1631 = vmatpush.msra.mxu0 0.0
  %1632 = vmatpush.msra.mxu0 0.0
  %1633 = vmatpush.msra.mxu0 0.0
  %1634 = vmatpush.msra.mxu0 %v1616
  %1635 = vmatpush.msra.mxu0 %v1615
  %1636 = vmatmul.f32.gmra.mxu0 %v1618
  %v1637 = vpop.f32.mrf.mxu0
  %v1638 = vadd.f32 0.0, %v1637
  %1639 = vdwg.mxu0
  %v1640 = vadd.f32 %v1613, %v1638
  %s1641 = scalar_lea.vmem %s3, 192
  %v1642 = vld [vmem:[%s1641] sm:$0xff]
  %v1643 = vld [vmem:[%s1641 + $0x8] sm:$0xff]
  %v1645 = vsel %vm1324, %v1306, 0
  %1647 = vmatpush.msra.mxu0 0.0
  %1648 = vmatpush.msra.mxu0 0.0
  %1649 = vmatpush.msra.mxu0 0.0
  %1650 = vmatpush.msra.mxu0 0.0
  %1651 = vmatpush.msra.mxu0 0.0
  %1652 = vmatpush.msra.mxu0 0.0
  %1653 = vmatpush.msra.mxu0 0.0
  %1654 = vmatpush.msra.mxu0 0.0
  %1655 = vmatpush.msra.mxu0 0.0
  %1656 = vmatpush.msra.mxu0 0.0
  %1657 = vmatpush.msra.mxu0 0.0
  %1658 = vmatpush.msra.mxu0 0.0
  %1659 = vmatpush.msra.mxu0 0.0
  %1660 = vmatpush.msra.mxu0 0.0
  %1661 = vmatpush.msra.mxu0 %v1643
  %1662 = vmatpush.msra.mxu0 %v1642
  %1663 = vmatmul.f32.gmra.mxu0 %v1645
  %v1664 = vpop.f32.mrf.mxu0
  %v1665 = vadd.f32 0.0, %v1664
  %1666 = vdwg.mxu0
  %v1667 = vadd.f32 %v1640, %v1665
  %s1668 = scalar_lea.vmem %s3, 208
  %v1669 = vld [vmem:[%s1668] sm:$0xff]
  %v1670 = vld [vmem:[%s1668 + $0x8] sm:$0xff]
  %v1672 = vsel %vm1324, %v1307, 0
  %1674 = vmatpush.msra.mxu0 0.0
  %1675 = vmatpush.msra.mxu0 0.0
  %1676 = vmatpush.msra.mxu0 0.0
  %1677 = vmatpush.msra.mxu0 0.0
  %1678 = vmatpush.msra.mxu0 0.0
  %1679 = vmatpush.msra.mxu0 0.0
  %1680 = vmatpush.msra.mxu0 0.0
  %1681 = vmatpush.msra.mxu0 0.0
  %1682 = vmatpush.msra.mxu0 0.0
  %1683 = vmatpush.msra.mxu0 0.0
  %1684 = vmatpush.msra.mxu0 0.0
  %1685 = vmatpush.msra.mxu0 0.0
  %1686 = vmatpush.msra.mxu0 0.0
  %1687 = vmatpush.msra.mxu0 0.0
  %1688 = vmatpush.msra.mxu0 %v1670
  %1689 = vmatpush.msra.mxu0 %v1669
  %1690 = vmatmul.f32.gmra.mxu0 %v1672
  %v1691 = vpop.f32.mrf.mxu0
  %v1692 = vadd.f32 0.0, %v1691
  %1693 = vdwg.mxu0
  %v1694 = vadd.f32 %v1667, %v1692
  %s1695 = scalar_lea.vmem %s3, 224
  %v1696 = vld [vmem:[%s1695] sm:$0xff]
  %v1697 = vld [vmem:[%s1695 + $0x8] sm:$0xff]
  %v1699 = vsel %vm1324, %v1308, 0
  %1701 = vmatpush.msra.mxu0 0.0
  %1702 = vmatpush.msra.mxu0 0.0
  %1703 = vmatpush.msra.mxu0 0.0
  %1704 = vmatpush.msra.mxu0 0.0
  %1705 = vmatpush.msra.mxu0 0.0
  %1706 = vmatpush.msra.mxu0 0.0
  %1707 = vmatpush.msra.mxu0 0.0
  %1708 = vmatpush.msra.mxu0 0.0
  %1709 = vmatpush.msra.mxu0 0.0
  %1710 = vmatpush.msra.mxu0 0.0
  %1711 = vmatpush.msra.mxu0 0.0
  %1712 = vmatpush.msra.mxu0 0.0
  %1713 = vmatpush.msra.mxu0 0.0
  %1714 = vmatpush.msra.mxu0 0.0
  %1715 = vmatpush.msra.mxu0 %v1697
  %1716 = vmatpush.msra.mxu0 %v1696
  %1717 = vmatmul.f32.gmra.mxu0 %v1699
  %v1718 = vpop.f32.mrf.mxu0
  %v1719 = vadd.f32 0.0, %v1718
  %1720 = vdwg.mxu0
  %v1721 = vadd.f32 %v1694, %v1719
  %s1722 = scalar_lea.vmem %s3, 240
  %v1723 = vld [vmem:[%s1722] sm:$0xff]
  %v1724 = vld [vmem:[%s1722 + $0x8] sm:$0xff]
  %v1726 = vsel %vm1324, %v1309, 0
  %1728 = vmatpush.msra.mxu0 0.0
  %1729 = vmatpush.msra.mxu0 0.0
  %1730 = vmatpush.msra.mxu0 0.0
  %1731 = vmatpush.msra.mxu0 0.0
  %1732 = vmatpush.msra.mxu0 0.0
  %1733 = vmatpush.msra.mxu0 0.0
  %1734 = vmatpush.msra.mxu0 0.0
  %1735 = vmatpush.msra.mxu0 0.0
  %1736 = vmatpush.msra.mxu0 0.0
  %1737 = vmatpush.msra.mxu0 0.0
  %1738 = vmatpush.msra.mxu0 0.0
  %1739 = vmatpush.msra.mxu0 0.0
  %1740 = vmatpush.msra.mxu0 0.0
  %1741 = vmatpush.msra.mxu0 0.0
  %1742 = vmatpush.msra.mxu0 %v1724
  %1743 = vmatpush.msra.mxu0 %v1723
  %1744 = vmatmul.f32.gmra.mxu0 %v1726
  %v1745 = vpop.f32.mrf.mxu0
  %v1746 = vadd.f32 0.0, %v1745
  %1747 = vdwg.mxu0
  %v1748 = vadd.f32 %v1721, %v1746
  %s1749 = scalar_lea.vmem %s3, 256
  %v1750 = vld [vmem:[%s1749] sm:$0xff]
  %v1751 = vld [vmem:[%s1749 + $0x8] sm:$0xff]
  %v1753 = vsel %vm1324, %v1310, 0
  %1755 = vmatpush.msra.mxu0 0.0
  %1756 = vmatpush.msra.mxu0 0.0
  %1757 = vmatpush.msra.mxu0 0.0
  %1758 = vmatpush.msra.mxu0 0.0
  %1759 = vmatpush.msra.mxu0 0.0
  %1760 = vmatpush.msra.mxu0 0.0
  %1761 = vmatpush.msra.mxu0 0.0
  %1762 = vmatpush.msra.mxu0 0.0
  %1763 = vmatpush.msra.mxu0 0.0
  %1764 = vmatpush.msra.mxu0 0.0
  %1765 = vmatpush.msra.mxu0 0.0
  %1766 = vmatpush.msra.mxu0 0.0
  %1767 = vmatpush.msra.mxu0 0.0
  %1768 = vmatpush.msra.mxu0 0.0
  %1769 = vmatpush.msra.mxu0 %v1751
  %1770 = vmatpush.msra.mxu0 %v1750
  %1771 = vmatmul.f32.gmra.mxu0 %v1753
  %v1772 = vpop.f32.mrf.mxu0
  %v1773 = vadd.f32 0.0, %v1772
  %1774 = vdwg.mxu0
  %v1775 = vadd.f32 %v1748, %v1773
  %s1776 = scalar_lea.vmem %s3, 272
  %v1777 = vld [vmem:[%s1776] sm:$0xff]
  %v1778 = vld [vmem:[%s1776 + $0x8] sm:$0xff]
  %v1780 = vsel %vm1324, %v1311, 0
  %1782 = vmatpush.msra.mxu0 0.0
  %1783 = vmatpush.msra.mxu0 0.0
  %1784 = vmatpush.msra.mxu0 0.0
  %1785 = vmatpush.msra.mxu0 0.0
  %1786 = vmatpush.msra.mxu0 0.0
  %1787 = vmatpush.msra.mxu0 0.0
  %1788 = vmatpush.msra.mxu0 0.0
  %1789 = vmatpush.msra.mxu0 0.0
  %1790 = vmatpush.msra.mxu0 0.0
  %1791 = vmatpush.msra.mxu0 0.0
  %1792 = vmatpush.msra.mxu0 0.0
  %1793 = vmatpush.msra.mxu0 0.0
  %1794 = vmatpush.msra.mxu0 0.0
  %1795 = vmatpush.msra.mxu0 0.0
  %1796 = vmatpush.msra.mxu0 %v1778
  %1797 = vmatpush.msra.mxu0 %v1777
  %1798 = vmatmul.f32.gmra.mxu0 %v1780
  %v1799 = vpop.f32.mrf.mxu0
  %v1800 = vadd.f32 0.0, %v1799
  %1801 = vdwg.mxu0
  %v1802 = vadd.f32 %v1775, %v1800
  %s1803 = scalar_lea.vmem %s3, 288
  %v1804 = vld [vmem:[%s1803] sm:$0xff]
  %v1805 = vld [vmem:[%s1803 + $0x8] sm:$0xff]
  %v1807 = vsel %vm1324, %v1312, 0
  %1809 = vmatpush.msra.mxu0 0.0
  %1810 = vmatpush.msra.mxu0 0.0
  %1811 = vmatpush.msra.mxu0 0.0
  %1812 = vmatpush.msra.mxu0 0.0
  %1813 = vmatpush.msra.mxu0 0.0
  %1814 = vmatpush.msra.mxu0 0.0
  %1815 = vmatpush.msra.mxu0 0.0
  %1816 = vmatpush.msra.mxu0 0.0
  %1817 = vmatpush.msra.mxu0 0.0
  %1818 = vmatpush.msra.mxu0 0.0
  %1819 = vmatpush.msra.mxu0 0.0
  %1820 = vmatpush.msra.mxu0 0.0
  %1821 = vmatpush.msra.mxu0 0.0
  %1822 = vmatpush.msra.mxu0 0.0
  %1823 = vmatpush.msra.mxu0 %v1805
  %1824 = vmatpush.msra.mxu0 %v1804
  %1825 = vmatmul.f32.gmra.mxu0 %v1807
  %v1826 = vpop.f32.mrf.mxu0
  %v1827 = vadd.f32 0.0, %v1826
  %1828 = vdwg.mxu0
  %v1829 = vadd.f32 %v1802, %v1827
  %s1830 = scalar_lea.vmem %s3, 304
  %v1831 = vld [vmem:[%s1830] sm:$0xff]
  %v1832 = vld [vmem:[%s1830 + $0x8] sm:$0xff]
  %v1834 = vsel %vm1324, %v1313, 0
  %1836 = vmatpush.msra.mxu0 0.0
  %1837 = vmatpush.msra.mxu0 0.0
  %1838 = vmatpush.msra.mxu0 0.0
  %1839 = vmatpush.msra.mxu0 0.0
  %1840 = vmatpush.msra.mxu0 0.0
  %1841 = vmatpush.msra.mxu0 0.0
  %1842 = vmatpush.msra.mxu0 0.0
  %1843 = vmatpush.msra.mxu0 0.0
  %1844 = vmatpush.msra.mxu0 0.0
  %1845 = vmatpush.msra.mxu0 0.0
  %1846 = vmatpush.msra.mxu0 0.0
  %1847 = vmatpush.msra.mxu0 0.0
  %1848 = vmatpush.msra.mxu0 0.0
  %1849 = vmatpush.msra.mxu0 0.0
  %1850 = vmatpush.msra.mxu0 %v1832
  %1851 = vmatpush.msra.mxu0 %v1831
  %1852 = vmatmul.f32.gmra.mxu0 %v1834
  %v1853 = vpop.f32.mrf.mxu0
  %v1854 = vadd.f32 0.0, %v1853
  %1855 = vdwg.mxu0
  %v1856 = vadd.f32 %v1829, %v1854
  %s1857 = scalar_lea.vmem %s3, 320
  %v1858 = vld [vmem:[%s1857] sm:$0xff]
  %v1859 = vld [vmem:[%s1857 + $0x8] sm:$0xff]
  %v1861 = vsel %vm1324, %v1314, 0
  %1863 = vmatpush.msra.mxu0 0.0
  %1864 = vmatpush.msra.mxu0 0.0
  %1865 = vmatpush.msra.mxu0 0.0
  %1866 = vmatpush.msra.mxu0 0.0
  %1867 = vmatpush.msra.mxu0 0.0
  %1868 = vmatpush.msra.mxu0 0.0
  %1869 = vmatpush.msra.mxu0 0.0
  %1870 = vmatpush.msra.mxu0 0.0
  %1871 = vmatpush.msra.mxu0 0.0
  %1872 = vmatpush.msra.mxu0 0.0
  %1873 = vmatpush.msra.mxu0 0.0
  %1874 = vmatpush.msra.mxu0 0.0
  %1875 = vmatpush.msra.mxu0 0.0
  %1876 = vmatpush.msra.mxu0 0.0
  %1877 = vmatpush.msra.mxu0 %v1859
  %1878 = vmatpush.msra.mxu0 %v1858
  %1879 = vmatmul.f32.gmra.mxu0 %v1861
  %v1880 = vpop.f32.mrf.mxu0
  %v1881 = vadd.f32 0.0, %v1880
  %1882 = vdwg.mxu0
  %v1883 = vadd.f32 %v1856, %v1881
  %s1884 = scalar_lea.vmem %s3, 336
  %v1885 = vld [vmem:[%s1884] sm:$0xff]
  %v1886 = vld [vmem:[%s1884 + $0x8] sm:$0xff]
  %v1888 = vsel %vm1324, %v1315, 0
  %1890 = vmatpush.msra.mxu0 0.0
  %1891 = vmatpush.msra.mxu0 0.0
  %1892 = vmatpush.msra.mxu0 0.0
  %1893 = vmatpush.msra.mxu0 0.0
  %1894 = vmatpush.msra.mxu0 0.0
  %1895 = vmatpush.msra.mxu0 0.0
  %1896 = vmatpush.msra.mxu0 0.0
  %1897 = vmatpush.msra.mxu0 0.0
  %1898 = vmatpush.msra.mxu0 0.0
  %1899 = vmatpush.msra.mxu0 0.0
  %1900 = vmatpush.msra.mxu0 0.0
  %1901 = vmatpush.msra.mxu0 0.0
  %1902 = vmatpush.msra.mxu0 0.0
  %1903 = vmatpush.msra.mxu0 0.0
  %1904 = vmatpush.msra.mxu0 %v1886
  %1905 = vmatpush.msra.mxu0 %v1885
  %1906 = vmatmul.f32.gmra.mxu0 %v1888
  %v1907 = vpop.f32.mrf.mxu0
  %v1908 = vadd.f32 0.0, %v1907
  %1909 = vdwg.mxu0
  %v1910 = vadd.f32 %v1883, %v1908
  %s1911 = scalar_lea.vmem %s3, 352
  %v1912 = vld [vmem:[%s1911] sm:$0xff]
  %v1913 = vld [vmem:[%s1911 + $0x8] sm:$0xff]
  %v1915 = vsel %vm1324, %v1316, 0
  %1917 = vmatpush.msra.mxu0 0.0
  %1918 = vmatpush.msra.mxu0 0.0
  %1919 = vmatpush.msra.mxu0 0.0
  %1920 = vmatpush.msra.mxu0 0.0
  %1921 = vmatpush.msra.mxu0 0.0
  %1922 = vmatpush.msra.mxu0 0.0
  %1923 = vmatpush.msra.mxu0 0.0
  %1924 = vmatpush.msra.mxu0 0.0
  %1925 = vmatpush.msra.mxu0 0.0
  %1926 = vmatpush.msra.mxu0 0.0
  %1927 = vmatpush.msra.mxu0 0.0
  %1928 = vmatpush.msra.mxu0 0.0
  %1929 = vmatpush.msra.mxu0 0.0
  %1930 = vmatpush.msra.mxu0 0.0
  %1931 = vmatpush.msra.mxu0 %v1913
  %1932 = vmatpush.msra.mxu0 %v1912
  %1933 = vmatmul.f32.gmra.mxu0 %v1915
  %v1934 = vpop.f32.mrf.mxu0
  %v1935 = vadd.f32 0.0, %v1934
  %1936 = vdwg.mxu0
  %v1937 = vadd.f32 %v1910, %v1935
  %s1938 = scalar_lea.vmem %s3, 368
  %v1939 = vld [vmem:[%s1938] sm:$0xff]
  %v1940 = vld [vmem:[%s1938 + $0x8] sm:$0xff]
  %v1942 = vsel %vm1324, %v1317, 0
  %1944 = vmatpush.msra.mxu0 0.0
  %1945 = vmatpush.msra.mxu0 0.0
  %1946 = vmatpush.msra.mxu0 0.0
  %1947 = vmatpush.msra.mxu0 0.0
  %1948 = vmatpush.msra.mxu0 0.0
  %1949 = vmatpush.msra.mxu0 0.0
  %1950 = vmatpush.msra.mxu0 0.0
  %1951 = vmatpush.msra.mxu0 0.0
  %1952 = vmatpush.msra.mxu0 0.0
  %1953 = vmatpush.msra.mxu0 0.0
  %1954 = vmatpush.msra.mxu0 0.0
  %1955 = vmatpush.msra.mxu0 0.0
  %1956 = vmatpush.msra.mxu0 0.0
  %1957 = vmatpush.msra.mxu0 0.0
  %1958 = vmatpush.msra.mxu0 %v1940
  %1959 = vmatpush.msra.mxu0 %v1939
  %1960 = vmatmul.f32.gmra.mxu0 %v1942
  %v1961 = vpop.f32.mrf.mxu0
  %v1962 = vadd.f32 0.0, %v1961
  %1963 = vdwg.mxu0
  %v1964 = vadd.f32 %v1937, %v1962
  %s1965 = scalar_lea.vmem %s3, 384
  %v1966 = vld [vmem:[%s1965] sm:$0xff]
  %v1967 = vld [vmem:[%s1965 + $0x8] sm:$0xff]
  %v1969 = vsel %vm1324, %v1318, 0
  %1971 = vmatpush.msra.mxu0 0.0
  %1972 = vmatpush.msra.mxu0 0.0
  %1973 = vmatpush.msra.mxu0 0.0
  %1974 = vmatpush.msra.mxu0 0.0
  %1975 = vmatpush.msra.mxu0 0.0
  %1976 = vmatpush.msra.mxu0 0.0
  %1977 = vmatpush.msra.mxu0 0.0
  %1978 = vmatpush.msra.mxu0 0.0
  %1979 = vmatpush.msra.mxu0 0.0
  %1980 = vmatpush.msra.mxu0 0.0
  %1981 = vmatpush.msra.mxu0 0.0
  %1982 = vmatpush.msra.mxu0 0.0
  %1983 = vmatpush.msra.mxu0 0.0
  %1984 = vmatpush.msra.mxu0 0.0
  %1985 = vmatpush.msra.mxu0 %v1967
  %1986 = vmatpush.msra.mxu0 %v1966
  %1987 = vmatmul.f32.gmra.mxu0 %v1969
  %v1988 = vpop.f32.mrf.mxu0
  %v1989 = vadd.f32 0.0, %v1988
  %1990 = vdwg.mxu0
  %v1991 = vadd.f32 %v1964, %v1989
  %v1992 = vld [vmem:[%s4] sm:$0x1]
  %v1994 = vperm.slane %v1992, 0
  %v1996 = vadd.f32 %v1991, %v1994
  %v1997 = vmax.f32 %v1996, 0.0
  %v1998 = vld [vmem:[%s5] sm:$0xff]
  %v1999 = vld [vmem:[%s5 + $0x8] sm:$0xff]
  %v2000 = vld [vmem:[%s5 + $0x10] sm:$0xff]
  %v2001 = vld [vmem:[%s5 + $0x18] sm:$0xff]
  %v2002 = vld [vmem:[%s5 + $0x20] sm:$0xff]
  %v2003 = vld [vmem:[%s5 + $0x28] sm:$0xff]
  %v2004 = vld [vmem:[%s5 + $0x30] sm:$0xff]
  %v2005 = vld [vmem:[%s5 + $0x38] sm:$0xff]
  %v2006 = vld [vmem:[%s5 + $0x40] sm:$0xff]
  %v2007 = vld [vmem:[%s5 + $0x48] sm:$0xff]
  %v2008 = vld [vmem:[%s5 + $0x50] sm:$0xff]
  %v2009 = vld [vmem:[%s5 + $0x58] sm:$0xff]
  %v2010 = vld [vmem:[%s5 + $0x60] sm:$0xff]
  %v2011 = vld [vmem:[%s5 + $0x68] sm:$0xff]
  %v2012 = vld [vmem:[%s5 + $0x70] sm:$0xff]
  %v2013 = vld [vmem:[%s5 + $0x78] sm:$0xff]
  %v2014 = vld [vmem:[%s6] sm:$0x1]
  %v2016 = vperm.slane %v2014, 0
  %2018 = vmatpush.msra.mxu0 %v2013
  %2019 = vmatpush.msra.mxu0 %v2012
  %2020 = vmatpush.msra.mxu0 %v2011
  %2021 = vmatpush.msra.mxu0 %v2010
  %2022 = vmatpush.msra.mxu0 %v2009
  %2023 = vmatpush.msra.mxu0 %v2008
  %2024 = vmatpush.msra.mxu0 %v2007
  %2025 = vmatpush.msra.mxu0 %v2006
  %2026 = vmatpush.msra.mxu0 %v2005
  %2027 = vmatpush.msra.mxu0 %v2004
  %2028 = vmatpush.msra.mxu0 %v2003
  %2029 = vmatpush.msra.mxu0 %v2002
  %2030 = vmatpush.msra.mxu0 %v2001
  %2031 = vmatpush.msra.mxu0 %v2000
  %2032 = vmatpush.msra.mxu0 %v1999
  %2033 = vmatpush.msra.mxu0 %v1998
  %2034 = vmatmul.f32.gmra.mxu0 %v1997
  %v2035 = vpop.f32.mrf.mxu0
  %v2036 = vadd.f32 %v2016, %v2035
  %2037 = vdwg.mxu0
  %v2038 = vmax.f32 %v2036, 0.0
  %v2039 = vld [vmem:[%s7] sm:$0xff]
  %v2040 = vld [vmem:[%s7 + $0x8] sm:$0xff]
  %v2041 = vld [vmem:[%s7 + $0x10] sm:$0xff]
  %v2042 = vld [vmem:[%s7 + $0x18] sm:$0xff]
  %v2043 = vld [vmem:[%s7 + $0x20] sm:$0xff]
  %v2044 = vld [vmem:[%s7 + $0x28] sm:$0xff]
  %v2045 = vld [vmem:[%s7 + $0x30] sm:$0xff]
  %v2046 = vld [vmem:[%s7 + $0x38] sm:$0xff]
  %v2047 = vld [vmem:[%s7 + $0x40] sm:$0xff]
  %v2048 = vld [vmem:[%s7 + $0x48] sm:$0xff]
  %v2049 = vld [vmem:[%s7 + $0x50] sm:$0xff]
  %v2050 = vld [vmem:[%s7 + $0x58] sm:$0xff]
  %v2051 = vld [vmem:[%s7 + $0x60] sm:$0xff]
  %v2052 = vld [vmem:[%s7 + $0x68] sm:$0xff]
  %v2053 = vld [vmem:[%s7 + $0x70] sm:$0xff]
  %v2054 = vld [vmem:[%s7 + $0x78] sm:$0xff]
  %v2055 = vld [vmem:[%s8] sm:$0x1]
  %v2057 = vperm.slane %v2055, 0
  %2059 = vmatpush.msra.mxu0 %v2054
  %2060 = vmatpush.msra.mxu0 %v2053
  %2061 = vmatpush.msra.mxu0 %v2052
  %2062 = vmatpush.msra.mxu0 %v2051
  %2063 = vmatpush.msra.mxu0 %v2050
  %2064 = vmatpush.msra.mxu0 %v2049
  %2065 = vmatpush.msra.mxu0 %v2048
  %2066 = vmatpush.msra.mxu0 %v2047
  %2067 = vmatpush.msra.mxu0 %v2046
  %2068 = vmatpush.msra.mxu0 %v2045
  %2069 = vmatpush.msra.mxu0 %v2044
  %2070 = vmatpush.msra.mxu0 %v2043
  %2071 = vmatpush.msra.mxu0 %v2042
  %2072 = vmatpush.msra.mxu0 %v2041
  %2073 = vmatpush.msra.mxu0 %v2040
  %2074 = vmatpush.msra.mxu0 %v2039
  %2075 = vmatmul.f32.gmra.mxu0 %v2038
  %v2076 = vpop.f32.mrf.mxu0
  %v2077 = vadd.f32 %v2057, %v2076
  %2078 = vdwg.mxu0
  %2079 = vst [vmem:[%s9] sm:$0xff] %v2077
  // Predicated region
  $region38: #{lenet_forward.3} parent=0 // pred_check
    _
  $region39: #{lenet_forward.3} parent=0 // pred_check_branch
    %2081 = sbr.rel (0) target = $region41
  $region40: #{lenet_forward.3} parent=0 // pred_region
    _
  $region41: #{lenet_forward.3} parent=0 // pred_fallthru
    _
  // Predicated region
  $region42: #{lenet_forward.3} parent=0 // pred_check
    _
  $region43: #{lenet_forward.3} parent=0 // pred_check_branch
    %2083 = sbr.rel (0) target = $region45
  $region44: #{lenet_forward.3} parent=0 // pred_region
    _
  $region45: #{lenet_forward.3} parent=0 // pred_fallthru
    _

</llo_original>
